<compile_context>
chip_gen: v7x
topology: tpu7x:2x2x1
jax: 0.10.0
libtpu: 0.0.40
codegen_flags: <defaults>
</compile_context>

<pallas_src>
import functools

import jax
import jax.numpy as jnp
from jax import lax
from jax.experimental import pallas as pl
from jax.experimental.pallas import tpu as pltpu

# ----------------------------- padded tile sizes --------------------------- #
B_PAD = 8      # f32 sublane width
H_PAD = 128    # lane width  -> 4*H_PAD = 512 gate lanes
E_PAD = 128    # must equal H_PAD (inputs of layers >0 are h)
V_PAD = 128
_NEG = -1e9    # bias for padded vocab columns (never wins argmax)


# ------------------------------- kernel math -------------------------------- #
def _lstm_stack_step(x_bf16, h, c, w_ref, b_ref, n_layers):
    """One time step through the whole LSTM stack.

    x_bf16 : [B_PAD, E_PAD] bf16 layer-0 input
    h      : list of n_layers [B_PAD, H_PAD] bf16 hidden states
    c      : list of n_layers [B_PAD, H_PAD] f32  cell states
    w_ref  : [n_layers, E_PAD + H_PAD, 4*H_PAD] bf16 (Wih stacked over Whh)
    b_ref  : [n_layers, 1, 4*H_PAD] f32 (bias_ih + bias_hh folded)
    PyTorch gate order: i, f, g, o.  Returns (top_h_bf16, new_h, new_c).
    """
    layer_in = x_bf16
    new_h, new_c = [], []
    for l in range(n_layers):
        xh = jnp.concatenate([layer_in, h[l]], axis=-1)            # [B, 2*H_PAD] bf16
        gates = jnp.dot(xh, w_ref[l],
                        preferred_element_type=jnp.float32) + b_ref[l]
        i = jax.nn.sigmoid(gates[:, 0 * H_PAD:1 * H_PAD])
        f = jax.nn.sigmoid(gates[:, 1 * H_PAD:2 * H_PAD])
        g = jnp.tanh(gates[:, 2 * H_PAD:3 * H_PAD])
        o = jax.nn.sigmoid(gates[:, 3 * H_PAD:4 * H_PAD])
        c_new = f * c[l] + i * g                                    # f32 state
        h_new = (o * jnp.tanh(c_new)).astype(jnp.bfloat16)          # h only feeds MXU
        new_h.append(h_new)
        new_c.append(c_new)
        layer_in = h_new
    return layer_in, new_h, new_c


def _seq2seq_kernel(n_layers, src_len, n_steps,
                    emb_ref, x0_ref,
                    enc_w_ref, enc_b_ref,
                    dec_w_ref, dec_b_ref,
                    fc_w_ref, fc_b_ref, dec_emb_ref,
                    out_ref):
    """Fused encoder + greedy decoder.  Everything VMEM-resident; h/c are
    loop-carried values (vregs), never touching HBM between phases/steps."""
    # ----- encoder: h, c start at zero -------------------------------------- #
    h = [jnp.zeros((B_PAD, H_PAD), jnp.bfloat16) for _ in range(n_layers)]
    c = [jnp.zeros((B_PAD, H_PAD), jnp.float32) for _ in range(n_layers)]

    # src_len / n_steps are small static ints: Python loops == full unroll.
    for t in range(src_len):
        _, h, c = _lstm_stack_step(emb_ref[t], h, c,
                                   enc_w_ref, enc_b_ref, n_layers)

    # ----- greedy decoder ---------------------------------------------------- #
    x = x0_ref[...]                                                 # bf16 [B, E_PAD]
    for t in range(n_steps):
        top_h, h, c = _lstm_stack_step(x, h, c,
                                       dec_w_ref, dec_b_ref, n_layers)
        logits = jnp.dot(top_h, fc_w_ref[...],
                         preferred_element_type=jnp.float32) + fc_b_ref[...]
        out_ref[t] = logits                                         # lane-dense store

        # Greedy top-1 (first-max tie-break == torch.argmax) and the next-token
        # embedding gather as a one-hot MXU matmul, all in VMEM / vregs.
        col = lax.broadcasted_iota(jnp.int32, logits.shape, 1).astype(jnp.float32)
        max_val = jnp.max(logits, axis=-1, keepdims=True)
        idx = jnp.min(jnp.where(logits == max_val, col, float(V_PAD)),
                      axis=-1, keepdims=True)
        onehot = (col == idx).astype(jnp.bfloat16)
        x = jnp.dot(onehot, dec_emb_ref[...],
                    preferred_element_type=jnp.float32).astype(jnp.bfloat16)


# ------------------------------ pallas wrapper ------------------------------ #
def _full_spec(a):
    ndim = a.ndim
    return pl.BlockSpec(a.shape, lambda i: (0,) * ndim)


def seq2seq_pallas(prepared, emb, x0, n_layers, n_steps):
    src_len = emb.shape[0]
    kernel = functools.partial(_seq2seq_kernel, n_layers, src_len, n_steps)
    args = (emb, x0,
            prepared["enc_w"], prepared["enc_b"],
            prepared["dec_w"], prepared["dec_b"],
            prepared["fc_w"], prepared["fc_b"], prepared["dec_emb"])
    return pl.pallas_call(
        kernel,
        grid=(1,),
        in_specs=[_full_spec(a) for a in args],
        out_specs=pl.BlockSpec((n_steps, B_PAD, V_PAD), lambda i: (0, 0, 0)),
        out_shape=jax.ShapeDtypeStruct((n_steps, B_PAD, V_PAD), jnp.float32),
        compiler_params=pltpu.CompilerParams(
            dimension_semantics=("arbitrary",)),
    )(*args)


# ----------------------------- parameter handling --------------------------- #
def init_params(key, src_vocab, trg_vocab, emb_dim, hidden_dim, n_layers):
    keys = [key]

    def nxt():
        keys[0], sub = jax.random.split(keys[0])
        return sub

    def u(shape, scale=0.1):
        return (jax.random.uniform(nxt(), shape, jnp.float32) - 0.5) * 2.0 * scale

    params = {
        "enc_emb": u((src_vocab, emb_dim)),
        "dec_emb": u((trg_vocab, emb_dim)),
        "fc_w": u((hidden_dim, trg_vocab)),
        "fc_b": u((1, trg_vocab)),
        "enc_lstm": [],
        "dec_lstm": [],
    }
    for layer in range(n_layers):
        in_dim = emb_dim if layer == 0 else hidden_dim
        for name in ("enc_lstm", "dec_lstm"):
            params[name].append({
                "wih": u((in_dim, 4 * hidden_dim)),
                "whh": u((hidden_dim, 4 * hidden_dim)),
                "b": u((1, 4 * hidden_dim)),   # bias_ih + bias_hh folded
            })
    return params


def _pad_gates(w, h):
    """Pad each of the 4 gate blocks (last axis) from width h to H_PAD."""
    blocks = [w[..., k * h:(k + 1) * h] for k in range(4)]
    pad = [(0, 0)] * (w.ndim - 1) + [(0, H_PAD - h)]
    return jnp.concatenate([jnp.pad(b, pad) for b in blocks], axis=-1)


def prepare_params(params, emb_dim, hidden_dim):
    """Pad/stack params into the fused-kernel layout.

    Each LSTM layer gets ONE [E_PAD + H_PAD, 4*H_PAD] bf16 weight (Wih stacked
    over Whh) so the per-layer gate matmul is a single K=256 MXU pass.
    Zero padding keeps padded hidden lanes exactly 0 through the recurrence;
    padded vocab columns get a -1e9 bias so they never win the argmax.
    """
    assert E_PAD == H_PAD
    H, E = hidden_dim, emb_dim
    V_trg = params["dec_emb"].shape[0]

    def pad_lstm(layers):
        ws, bs = [], []
        for p in layers:
            in_dim = p["wih"].shape[0]
            wih = jnp.pad(_pad_gates(p["wih"], H), [(0, E_PAD - in_dim), (0, 0)])
            whh = jnp.pad(_pad_gates(p["whh"], H), [(0, H_PAD - H), (0, 0)])
            ws.append(jnp.concatenate([wih, whh], axis=0).astype(jnp.bfloat16))
            bs.append(_pad_gates(p["b"], H))
        return jnp.stack(ws), jnp.stack(bs)

    enc_w, enc_b = pad_lstm(params["enc_lstm"])
    dec_w, dec_b = pad_lstm(params["dec_lstm"])
    return {
        "enc_w": enc_w, "enc_b": enc_b,
        "dec_w": dec_w, "dec_b": dec_b,
        "fc_w": jnp.pad(params["fc_w"],
                        [(0, H_PAD - H), (0, V_PAD - V_trg)]).astype(jnp.bfloat16),
        "fc_b": jnp.pad(params["fc_b"], [(0, 0), (0, V_PAD - V_trg)],
                        constant_values=_NEG),
        "enc_emb": jnp.pad(params["enc_emb"],
                           [(0, 0), (0, E_PAD - E)]).astype(jnp.bfloat16),
        "dec_emb": jnp.pad(params["dec_emb"],
                           [(0, V_PAD - V_trg), (0, E_PAD - E)]).astype(jnp.bfloat16),
    }


# ------------------------------ model forward ------------------------------ #
@functools.partial(jax.jit, static_argnums=(3, 4))
def seq2seq_forward(prepared, src, trg, n_layers, trg_vocab):
    """Matches Seq2Seq.forward: outputs[0] stays zeros, greedy (argmax) feed."""
    _, B = src.shape
    trg_len, _ = trg.shape

    # Embedding gathers stay in XLA; batch is zero-padded to 8 sublanes.
    emb = jnp.pad(prepared["enc_emb"][src], [(0, 0), (0, B_PAD - B), (0, 0)])
    x0 = jnp.pad(prepared["dec_emb"][trg[0]], [(0, B_PAD - B), (0, 0)])

    logits = seq2seq_pallas(prepared, emb, x0, n_layers, trg_len - 1)

    out0 = jnp.zeros((1, B, trg_vocab), jnp.float32)
    return jnp.concatenate([out0, logits[:, :B, :trg_vocab]], axis=0)


# ---------------------------------- main ----------------------------------- #
if __name__ == "__main__":
    SRC_VOCAB = 16
    TRG_VOCAB = 16
    EMB_DIM = 16
    HIDDEN_DIM = 32
    N_LAYERS = 2
    SRC_LEN = 8
    TRG_LEN = 8
    BATCH = 2

    key = jax.random.PRNGKey(0)
    k_params, k_src, k_trg = jax.random.split(key, 3)

    params = init_params(k_params, SRC_VOCAB, TRG_VOCAB,
                         EMB_DIM, HIDDEN_DIM, N_LAYERS)
    prepared = prepare_params(params, EMB_DIM, HIDDEN_DIM)

    src = jax.random.randint(k_src, (SRC_LEN, BATCH), 0, SRC_VOCAB, jnp.int32)
    trg = jax.random.randint(k_trg, (TRG_LEN, BATCH), 0, TRG_VOCAB, jnp.int32)

    outputs = seq2seq_forward(prepared, src, trg, N_LAYERS, TRG_VOCAB)
    outputs = jax.block_until_ready(outputs)

    assert outputs.shape == (TRG_LEN, BATCH, TRG_VOCAB)
    assert bool(jnp.all(outputs[0] == 0.0))
    assert bool(jnp.all(jnp.isfinite(outputs)))
    print("KERNEL_OK")
</pallas_src>

<mosaic_0001>
module attributes {stable_mosaic.version = 11 : i64} {
  func.func @_seq2seq_kernel(%arg0: i32, %arg1: memref<8x8x128xbf16, #tpu.memory_space<vmem>>, %arg2: memref<8x128xbf16, #tpu.memory_space<vmem>>, %arg3: memref<2x256x512xbf16, #tpu.memory_space<vmem>>, %arg4: memref<2x1x512xf32, #tpu.memory_space<vmem>>, %arg5: memref<2x256x512xbf16, #tpu.memory_space<vmem>>, %arg6: memref<2x1x512xf32, #tpu.memory_space<vmem>>, %arg7: memref<128x128xbf16, #tpu.memory_space<vmem>>, %arg8: memref<1x128xf32, #tpu.memory_space<vmem>>, %arg9: memref<128x128xbf16, #tpu.memory_space<vmem>>, %arg10: memref<7x8x128xf32, #tpu.memory_space<vmem>>) attributes {dimension_semantics = [#tpu.dimension_semantics<arbitrary>], iteration_bounds = array<i64: 1>, scalar_prefetch = 0 : i64, scratch_operands = 0 : i64, tpu.core_type = #tpu.core_type<tc>, window_params = [{pipeline_mode = #tpu.pipeline_mode<synchronous>, transform_indices = @transform_0, window_bounds = array<i64: 8, 8, 128>}, {pipeline_mode = #tpu.pipeline_mode<synchronous>, transform_indices = @transform_1, window_bounds = array<i64: 8, 128>}, {pipeline_mode = #tpu.pipeline_mode<synchronous>, transform_indices = @transform_2, window_bounds = array<i64: 2, 256, 512>}, {pipeline_mode = #tpu.pipeline_mode<synchronous>, transform_indices = @transform_3, window_bounds = array<i64: 2, 1, 512>}, {pipeline_mode = #tpu.pipeline_mode<synchronous>, transform_indices = @transform_4, window_bounds = array<i64: 2, 256, 512>}, {pipeline_mode = #tpu.pipeline_mode<synchronous>, transform_indices = @transform_5, window_bounds = array<i64: 2, 1, 512>}, {pipeline_mode = #tpu.pipeline_mode<synchronous>, transform_indices = @transform_6, window_bounds = array<i64: 128, 128>}, {pipeline_mode = #tpu.pipeline_mode<synchronous>, transform_indices = @transform_7, window_bounds = array<i64: 1, 128>}, {pipeline_mode = #tpu.pipeline_mode<synchronous>, transform_indices = @transform_8, window_bounds = array<i64: 128, 128>}, {pipeline_mode = #tpu.pipeline_mode<synchronous>, transform_indices = @transform_9, window_bounds = array<i64: 7, 8, 128>}]} {
    %cst = arith.constant 0.000000e+00 : bf16
    %0 = vector.broadcast %cst : bf16 to vector<8x128xbf16>
    %cst_0 = arith.constant 0.000000e+00 : bf16
    %1 = vector.broadcast %cst_0 : bf16 to vector<8x128xbf16>
    %cst_1 = arith.constant 0.000000e+00 : f32
    %2 = vector.broadcast %cst_1 : f32 to vector<8x128xf32>
    %cst_2 = arith.constant 0.000000e+00 : f32
    %3 = vector.broadcast %cst_2 : f32 to vector<8x128xf32>
    %c0 = arith.constant 0 : index
    %c0_3 = arith.constant 0 : index
    %c0_4 = arith.constant 0 : index
    %4 = vector.load %arg1[%c0, %c0_3, %c0_4] : memref<8x8x128xbf16, #tpu.memory_space<vmem>>, vector<1x8x128xbf16>
    %5 = vector.shape_cast %4 : vector<1x8x128xbf16> to vector<8x128xbf16>
    %6 = tpu.concatenate %5, %0 in 1 : vector<8x128xbf16>, vector<8x128xbf16> -> vector<8x256xbf16>
    %c0_5 = arith.constant 0 : index
    %c0_6 = arith.constant 0 : index
    %c0_7 = arith.constant 0 : index
    %7 = vector.load %arg3[%c0_5, %c0_6, %c0_7] : memref<2x256x512xbf16, #tpu.memory_space<vmem>>, vector<1x256x512xbf16>
    %8 = vector.shape_cast %7 : vector<1x256x512xbf16> to vector<256x512xbf16>
    %cst_8 = arith.constant dense<0.000000e+00> : vector<8x512xf32>
    %9 = tpu.matmul %6, %8, %cst_8 {dimension_numbers = #tpu.dot_dimension_numbers<[1], [0], [0], [1], [0, 0, 1, 1], [], []>} : vector<8x256xbf16>, vector<256x512xbf16>, vector<8x512xf32> -> vector<8x512xf32>
    %c0_9 = arith.constant 0 : index
    %c0_10 = arith.constant 0 : index
    %c0_11 = arith.constant 0 : index
    %10 = vector.load %arg4[%c0_9, %c0_10, %c0_11] : memref<2x1x512xf32, #tpu.memory_space<vmem>>, vector<1x1x512xf32>
    %11 = vector.shape_cast %10 : vector<1x1x512xf32> to vector<1x512xf32>
    %12 = vector.broadcast %11 : vector<1x512xf32> to vector<8x512xf32>
    %13 = arith.addf %9, %12 : vector<8x512xf32>
    %14 = vector.extract_strided_slice %13 {offsets = [0, 0], sizes = [8, 128], strides = [1, 1]} : vector<8x512xf32> to vector<8x128xf32>
    %15 = arith.negf %14 : vector<8x128xf32>
    %16 = math.exp %15 : vector<8x128xf32>
    %cst_12 = arith.constant 1.000000e+00 : f32
    %17 = vector.broadcast %cst_12 : f32 to vector<8x128xf32>
    %18 = arith.addf %17, %16 : vector<8x128xf32>
    %19 = arith.divf %17, %18 : vector<8x128xf32>
    %20 = vector.extract_strided_slice %13 {offsets = [0, 128], sizes = [8, 128], strides = [1, 1]} : vector<8x512xf32> to vector<8x128xf32>
    %21 = arith.negf %20 : vector<8x128xf32>
    %22 = math.exp %21 : vector<8x128xf32>
    %cst_13 = arith.constant 1.000000e+00 : f32
    %23 = vector.broadcast %cst_13 : f32 to vector<8x128xf32>
    %24 = arith.addf %23, %22 : vector<8x128xf32>
    %25 = arith.divf %23, %24 : vector<8x128xf32>
    %26 = vector.extract_strided_slice %13 {offsets = [0, 256], sizes = [8, 128], strides = [1, 1]} : vector<8x512xf32> to vector<8x128xf32>
    %27 = math.tanh %26 : vector<8x128xf32>
    %28 = vector.extract_strided_slice %13 {offsets = [0, 384], sizes = [8, 128], strides = [1, 1]} : vector<8x512xf32> to vector<8x128xf32>
    %29 = arith.negf %28 : vector<8x128xf32>
    %30 = math.exp %29 : vector<8x128xf32>
    %cst_14 = arith.constant 1.000000e+00 : f32
    %31 = vector.broadcast %cst_14 : f32 to vector<8x128xf32>
    %32 = arith.addf %31, %30 : vector<8x128xf32>
    %33 = arith.divf %31, %32 : vector<8x128xf32>
    %34 = arith.mulf %25, %2 : vector<8x128xf32>
    %35 = arith.mulf %19, %27 : vector<8x128xf32>
    %36 = arith.addf %34, %35 : vector<8x128xf32>
    %37 = math.tanh %36 : vector<8x128xf32>
    %38 = arith.mulf %33, %37 : vector<8x128xf32>
    %39 = arith.truncf %38 : vector<8x128xf32> to vector<8x128xbf16>
    %40 = tpu.concatenate %39, %1 in 1 : vector<8x128xbf16>, vector<8x128xbf16> -> vector<8x256xbf16>
    %c1 = arith.constant 1 : index
    %c0_15 = arith.constant 0 : index
    %c0_16 = arith.constant 0 : index
    %41 = vector.load %arg3[%c1, %c0_15, %c0_16] : memref<2x256x512xbf16, #tpu.memory_space<vmem>>, vector<1x256x512xbf16>
    %42 = vector.shape_cast %41 : vector<1x256x512xbf16> to vector<256x512xbf16>
    %cst_17 = arith.constant dense<0.000000e+00> : vector<8x512xf32>
    %43 = tpu.matmul %40, %42, %cst_17 {dimension_numbers = #tpu.dot_dimension_numbers<[1], [0], [0], [1], [0, 0, 1, 1], [], []>} : vector<8x256xbf16>, vector<256x512xbf16>, vector<8x512xf32> -> vector<8x512xf32>
    %c1_18 = arith.constant 1 : index
    %c0_19 = arith.constant 0 : index
    %c0_20 = arith.constant 0 : index
    %44 = vector.load %arg4[%c1_18, %c0_19, %c0_20] : memref<2x1x512xf32, #tpu.memory_space<vmem>>, vector<1x1x512xf32>
    %45 = vector.shape_cast %44 : vector<1x1x512xf32> to vector<1x512xf32>
    %46 = vector.broadcast %45 : vector<1x512xf32> to vector<8x512xf32>
    %47 = arith.addf %43, %46 : vector<8x512xf32>
    %48 = vector.extract_strided_slice %47 {offsets = [0, 0], sizes = [8, 128], strides = [1, 1]} : vector<8x512xf32> to vector<8x128xf32>
    %49 = arith.negf %48 : vector<8x128xf32>
    %50 = math.exp %49 : vector<8x128xf32>
    %cst_21 = arith.constant 1.000000e+00 : f32
    %51 = vector.broadcast %cst_21 : f32 to vector<8x128xf32>
    %52 = arith.addf %51, %50 : vector<8x128xf32>
    %53 = arith.divf %51, %52 : vector<8x128xf32>
    %54 = vector.extract_strided_slice %47 {offsets = [0, 128], sizes = [8, 128], strides = [1, 1]} : vector<8x512xf32> to vector<8x128xf32>
    %55 = arith.negf %54 : vector<8x128xf32>
    %56 = math.exp %55 : vector<8x128xf32>
    %cst_22 = arith.constant 1.000000e+00 : f32
    %57 = vector.broadcast %cst_22 : f32 to vector<8x128xf32>
    %58 = arith.addf %57, %56 : vector<8x128xf32>
    %59 = arith.divf %57, %58 : vector<8x128xf32>
    %60 = vector.extract_strided_slice %47 {offsets = [0, 256], sizes = [8, 128], strides = [1, 1]} : vector<8x512xf32> to vector<8x128xf32>
    %61 = math.tanh %60 : vector<8x128xf32>
    %62 = vector.extract_strided_slice %47 {offsets = [0, 384], sizes = [8, 128], strides = [1, 1]} : vector<8x512xf32> to vector<8x128xf32>
    %63 = arith.negf %62 : vector<8x128xf32>
    %64 = math.exp %63 : vector<8x128xf32>
    %cst_23 = arith.constant 1.000000e+00 : f32
    %65 = vector.broadcast %cst_23 : f32 to vector<8x128xf32>
    %66 = arith.addf %65, %64 : vector<8x128xf32>
    %67 = arith.divf %65, %66 : vector<8x128xf32>
    %68 = arith.mulf %59, %3 : vector<8x128xf32>
    %69 = arith.mulf %53, %61 : vector<8x128xf32>
    %70 = arith.addf %68, %69 : vector<8x128xf32>
    %71 = math.tanh %70 : vector<8x128xf32>
    %72 = arith.mulf %67, %71 : vector<8x128xf32>
    %73 = arith.truncf %72 : vector<8x128xf32> to vector<8x128xbf16>
    %c1_24 = arith.constant 1 : index
    %c0_25 = arith.constant 0 : index
    %c0_26 = arith.constant 0 : index
    %74 = vector.load %arg1[%c1_24, %c0_25, %c0_26] : memref<8x8x128xbf16, #tpu.memory_space<vmem>>, vector<1x8x128xbf16>
    %75 = vector.shape_cast %74 : vector<1x8x128xbf16> to vector<8x128xbf16>
    %76 = tpu.concatenate %75, %39 in 1 : vector<8x128xbf16>, vector<8x128xbf16> -> vector<8x256xbf16>
    %c0_27 = arith.constant 0 : index
    %c0_28 = arith.constant 0 : index
    %c0_29 = arith.constant 0 : index
    %77 = vector.load %arg3[%c0_27, %c0_28, %c0_29] : memref<2x256x512xbf16, #tpu.memory_space<vmem>>, vector<1x256x512xbf16>
    %78 = vector.shape_cast %77 : vector<1x256x512xbf16> to vector<256x512xbf16>
    %cst_30 = arith.constant dense<0.000000e+00> : vector<8x512xf32>
    %79 = tpu.matmul %76, %78, %cst_30 {dimension_numbers = #tpu.dot_dimension_numbers<[1], [0], [0], [1], [0, 0, 1, 1], [], []>} : vector<8x256xbf16>, vector<256x512xbf16>, vector<8x512xf32> -> vector<8x512xf32>
    %c0_31 = arith.constant 0 : index
    %c0_32 = arith.constant 0 : index
    %c0_33 = arith.constant 0 : index
    %80 = vector.load %arg4[%c0_31, %c0_32, %c0_33] : memref<2x1x512xf32, #tpu.memory_space<vmem>>, vector<1x1x512xf32>
    %81 = vector.shape_cast %80 : vector<1x1x512xf32> to vector<1x512xf32>
    %82 = vector.broadcast %81 : vector<1x512xf32> to vector<8x512xf32>
    %83 = arith.addf %79, %82 : vector<8x512xf32>
    %84 = vector.extract_strided_slice %83 {offsets = [0, 0], sizes = [8, 128], strides = [1, 1]} : vector<8x512xf32> to vector<8x128xf32>
    %85 = arith.negf %84 : vector<8x128xf32>
    %86 = math.exp %85 : vector<8x128xf32>
    %cst_34 = arith.constant 1.000000e+00 : f32
    %87 = vector.broadcast %cst_34 : f32 to vector<8x128xf32>
    %88 = arith.addf %87, %86 : vector<8x128xf32>
    %89 = arith.divf %87, %88 : vector<8x128xf32>
    %90 = vector.extract_strided_slice %83 {offsets = [0, 128], sizes = [8, 128], strides = [1, 1]} : vector<8x512xf32> to vector<8x128xf32>
    %91 = arith.negf %90 : vector<8x128xf32>
    %92 = math.exp %91 : vector<8x128xf32>
    %cst_35 = arith.constant 1.000000e+00 : f32
    %93 = vector.broadcast %cst_35 : f32 to vector<8x128xf32>
    %94 = arith.addf %93, %92 : vector<8x128xf32>
    %95 = arith.divf %93, %94 : vector<8x128xf32>
    %96 = vector.extract_strided_slice %83 {offsets = [0, 256], sizes = [8, 128], strides = [1, 1]} : vector<8x512xf32> to vector<8x128xf32>
    %97 = math.tanh %96 : vector<8x128xf32>
    %98 = vector.extract_strided_slice %83 {offsets = [0, 384], sizes = [8, 128], strides = [1, 1]} : vector<8x512xf32> to vector<8x128xf32>
    %99 = arith.negf %98 : vector<8x128xf32>
    %100 = math.exp %99 : vector<8x128xf32>
    %cst_36 = arith.constant 1.000000e+00 : f32
    %101 = vector.broadcast %cst_36 : f32 to vector<8x128xf32>
    %102 = arith.addf %101, %100 : vector<8x128xf32>
    %103 = arith.divf %101, %102 : vector<8x128xf32>
    %104 = arith.mulf %95, %36 : vector<8x128xf32>
    %105 = arith.mulf %89, %97 : vector<8x128xf32>
    %106 = arith.addf %104, %105 : vector<8x128xf32>
    %107 = math.tanh %106 : vector<8x128xf32>
    %108 = arith.mulf %103, %107 : vector<8x128xf32>
    %109 = arith.truncf %108 : vector<8x128xf32> to vector<8x128xbf16>
    %110 = tpu.concatenate %109, %73 in 1 : vector<8x128xbf16>, vector<8x128xbf16> -> vector<8x256xbf16>
    %c1_37 = arith.constant 1 : index
    %c0_38 = arith.constant 0 : index
    %c0_39 = arith.constant 0 : index
    %111 = vector.load %arg3[%c1_37, %c0_38, %c0_39] : memref<2x256x512xbf16, #tpu.memory_space<vmem>>, vector<1x256x512xbf16>
    %112 = vector.shape_cast %111 : vector<1x256x512xbf16> to vector<256x512xbf16>
    %cst_40 = arith.constant dense<0.000000e+00> : vector<8x512xf32>
    %113 = tpu.matmul %110, %112, %cst_40 {dimension_numbers = #tpu.dot_dimension_numbers<[1], [0], [0], [1], [0, 0, 1, 1], [], []>} : vector<8x256xbf16>, vector<256x512xbf16>, vector<8x512xf32> -> vector<8x512xf32>
    %c1_41 = arith.constant 1 : index
    %c0_42 = arith.constant 0 : index
    %c0_43 = arith.constant 0 : index
    %114 = vector.load %arg4[%c1_41, %c0_42, %c0_43] : memref<2x1x512xf32, #tpu.memory_space<vmem>>, vector<1x1x512xf32>
    %115 = vector.shape_cast %114 : vector<1x1x512xf32> to vector<1x512xf32>
    %116 = vector.broadcast %115 : vector<1x512xf32> to vector<8x512xf32>
    %117 = arith.addf %113, %116 : vector<8x512xf32>
    %118 = vector.extract_strided_slice %117 {offsets = [0, 0], sizes = [8, 128], strides = [1, 1]} : vector<8x512xf32> to vector<8x128xf32>
    %119 = arith.negf %118 : vector<8x128xf32>
    %120 = math.exp %119 : vector<8x128xf32>
    %cst_44 = arith.constant 1.000000e+00 : f32
    %121 = vector.broadcast %cst_44 : f32 to vector<8x128xf32>
    %122 = arith.addf %121, %120 : vector<8x128xf32>
    %123 = arith.divf %121, %122 : vector<8x128xf32>
    %124 = vector.extract_strided_slice %117 {offsets = [0, 128], sizes = [8, 128], strides = [1, 1]} : vector<8x512xf32> to vector<8x128xf32>
    %125 = arith.negf %124 : vector<8x128xf32>
    %126 = math.exp %125 : vector<8x128xf32>
    %cst_45 = arith.constant 1.000000e+00 : f32
    %127 = vector.broadcast %cst_45 : f32 to vector<8x128xf32>
    %128 = arith.addf %127, %126 : vector<8x128xf32>
    %129 = arith.divf %127, %128 : vector<8x128xf32>
    %130 = vector.extract_strided_slice %117 {offsets = [0, 256], sizes = [8, 128], strides = [1, 1]} : vector<8x512xf32> to vector<8x128xf32>
    %131 = math.tanh %130 : vector<8x128xf32>
    %132 = vector.extract_strided_slice %117 {offsets = [0, 384], sizes = [8, 128], strides = [1, 1]} : vector<8x512xf32> to vector<8x128xf32>
    %133 = arith.negf %132 : vector<8x128xf32>
    %134 = math.exp %133 : vector<8x128xf32>
    %cst_46 = arith.constant 1.000000e+00 : f32
    %135 = vector.broadcast %cst_46 : f32 to vector<8x128xf32>
    %136 = arith.addf %135, %134 : vector<8x128xf32>
    %137 = arith.divf %135, %136 : vector<8x128xf32>
    %138 = arith.mulf %129, %70 : vector<8x128xf32>
    %139 = arith.mulf %123, %131 : vector<8x128xf32>
    %140 = arith.addf %138, %139 : vector<8x128xf32>
    %141 = math.tanh %140 : vector<8x128xf32>
    %142 = arith.mulf %137, %141 : vector<8x128xf32>
    %143 = arith.truncf %142 : vector<8x128xf32> to vector<8x128xbf16>
    %c2 = arith.constant 2 : index
    %c0_47 = arith.constant 0 : index
    %c0_48 = arith.constant 0 : index
    %144 = vector.load %arg1[%c2, %c0_47, %c0_48] : memref<8x8x128xbf16, #tpu.memory_space<vmem>>, vector<1x8x128xbf16>
    %145 = vector.shape_cast %144 : vector<1x8x128xbf16> to vector<8x128xbf16>
    %146 = tpu.concatenate %145, %109 in 1 : vector<8x128xbf16>, vector<8x128xbf16> -> vector<8x256xbf16>
    %c0_49 = arith.constant 0 : index
    %c0_50 = arith.constant 0 : index
    %c0_51 = arith.constant 0 : index
    %147 = vector.load %arg3[%c0_49, %c0_50, %c0_51] : memref<2x256x512xbf16, #tpu.memory_space<vmem>>, vector<1x256x512xbf16>
    %148 = vector.shape_cast %147 : vector<1x256x512xbf16> to vector<256x512xbf16>
    %cst_52 = arith.constant dense<0.000000e+00> : vector<8x512xf32>
    %149 = tpu.matmul %146, %148, %cst_52 {dimension_numbers = #tpu.dot_dimension_numbers<[1], [0], [0], [1], [0, 0, 1, 1], [], []>} : vector<8x256xbf16>, vector<256x512xbf16>, vector<8x512xf32> -> vector<8x512xf32>
    %c0_53 = arith.constant 0 : index
    %c0_54 = arith.constant 0 : index
    %c0_55 = arith.constant 0 : index
    %150 = vector.load %arg4[%c0_53, %c0_54, %c0_55] : memref<2x1x512xf32, #tpu.memory_space<vmem>>, vector<1x1x512xf32>
    %151 = vector.shape_cast %150 : vector<1x1x512xf32> to vector<1x512xf32>
    %152 = vector.broadcast %151 : vector<1x512xf32> to vector<8x512xf32>
    %153 = arith.addf %149, %152 : vector<8x512xf32>
    %154 = vector.extract_strided_slice %153 {offsets = [0, 0], sizes = [8, 128], strides = [1, 1]} : vector<8x512xf32> to vector<8x128xf32>
    %155 = arith.negf %154 : vector<8x128xf32>
    %156 = math.exp %155 : vector<8x128xf32>
    %cst_56 = arith.constant 1.000000e+00 : f32
    %157 = vector.broadcast %cst_56 : f32 to vector<8x128xf32>
    %158 = arith.addf %157, %156 : vector<8x128xf32>
    %159 = arith.divf %157, %158 : vector<8x128xf32>
    %160 = vector.extract_strided_slice %153 {offsets = [0, 128], sizes = [8, 128], strides = [1, 1]} : vector<8x512xf32> to vector<8x128xf32>
    %161 = arith.negf %160 : vector<8x128xf32>
    %162 = math.exp %161 : vector<8x128xf32>
    %cst_57 = arith.constant 1.000000e+00 : f32
    %163 = vector.broadcast %cst_57 : f32 to vector<8x128xf32>
    %164 = arith.addf %163, %162 : vector<8x128xf32>
    %165 = arith.divf %163, %164 : vector<8x128xf32>
    %166 = vector.extract_strided_slice %153 {offsets = [0, 256], sizes = [8, 128], strides = [1, 1]} : vector<8x512xf32> to vector<8x128xf32>
    %167 = math.tanh %166 : vector<8x128xf32>
    %168 = vector.extract_strided_slice %153 {offsets = [0, 384], sizes = [8, 128], strides = [1, 1]} : vector<8x512xf32> to vector<8x128xf32>
    %169 = arith.negf %168 : vector<8x128xf32>
    %170 = math.exp %169 : vector<8x128xf32>
    %cst_58 = arith.constant 1.000000e+00 : f32
    %171 = vector.broadcast %cst_58 : f32 to vector<8x128xf32>
    %172 = arith.addf %171, %170 : vector<8x128xf32>
    %173 = arith.divf %171, %172 : vector<8x128xf32>
    %174 = arith.mulf %165, %106 : vector<8x128xf32>
    %175 = arith.mulf %159, %167 : vector<8x128xf32>
    %176 = arith.addf %174, %175 : vector<8x128xf32>
    %177 = math.tanh %176 : vector<8x128xf32>
    %178 = arith.mulf %173, %177 : vector<8x128xf32>
    %179 = arith.truncf %178 : vector<8x128xf32> to vector<8x128xbf16>
    %180 = tpu.concatenate %179, %143 in 1 : vector<8x128xbf16>, vector<8x128xbf16> -> vector<8x256xbf16>
    %c1_59 = arith.constant 1 : index
    %c0_60 = arith.constant 0 : index
    %c0_61 = arith.constant 0 : index
    %181 = vector.load %arg3[%c1_59, %c0_60, %c0_61] : memref<2x256x512xbf16, #tpu.memory_space<vmem>>, vector<1x256x512xbf16>
    %182 = vector.shape_cast %181 : vector<1x256x512xbf16> to vector<256x512xbf16>
    %cst_62 = arith.constant dense<0.000000e+00> : vector<8x512xf32>
    %183 = tpu.matmul %180, %182, %cst_62 {dimension_numbers = #tpu.dot_dimension_numbers<[1], [0], [0], [1], [0, 0, 1, 1], [], []>} : vector<8x256xbf16>, vector<256x512xbf16>, vector<8x512xf32> -> vector<8x512xf32>
    %c1_63 = arith.constant 1 : index
    %c0_64 = arith.constant 0 : index
    %c0_65 = arith.constant 0 : index
    %184 = vector.load %arg4[%c1_63, %c0_64, %c0_65] : memref<2x1x512xf32, #tpu.memory_space<vmem>>, vector<1x1x512xf32>
    %185 = vector.shape_cast %184 : vector<1x1x512xf32> to vector<1x512xf32>
    %186 = vector.broadcast %185 : vector<1x512xf32> to vector<8x512xf32>
    %187 = arith.addf %183, %186 : vector<8x512xf32>
    %188 = vector.extract_strided_slice %187 {offsets = [0, 0], sizes = [8, 128], strides = [1, 1]} : vector<8x512xf32> to vector<8x128xf32>
    %189 = arith.negf %188 : vector<8x128xf32>
    %190 = math.exp %189 : vector<8x128xf32>
    %cst_66 = arith.constant 1.000000e+00 : f32
    %191 = vector.broadcast %cst_66 : f32 to vector<8x128xf32>
    %192 = arith.addf %191, %190 : vector<8x128xf32>
    %193 = arith.divf %191, %192 : vector<8x128xf32>
    %194 = vector.extract_strided_slice %187 {offsets = [0, 128], sizes = [8, 128], strides = [1, 1]} : vector<8x512xf32> to vector<8x128xf32>
    %195 = arith.negf %194 : vector<8x128xf32>
    %196 = math.exp %195 : vector<8x128xf32>
    %cst_67 = arith.constant 1.000000e+00 : f32
    %197 = vector.broadcast %cst_67 : f32 to vector<8x128xf32>
    %198 = arith.addf %197, %196 : vector<8x128xf32>
    %199 = arith.divf %197, %198 : vector<8x128xf32>
    %200 = vector.extract_strided_slice %187 {offsets = [0, 256], sizes = [8, 128], strides = [1, 1]} : vector<8x512xf32> to vector<8x128xf32>
    %201 = math.tanh %200 : vector<8x128xf32>
    %202 = vector.extract_strided_slice %187 {offsets = [0, 384], sizes = [8, 128], strides = [1, 1]} : vector<8x512xf32> to vector<8x128xf32>
    %203 = arith.negf %202 : vector<8x128xf32>
    %204 = math.exp %203 : vector<8x128xf32>
    %cst_68 = arith.constant 1.000000e+00 : f32
    %205 = vector.broadcast %cst_68 : f32 to vector<8x128xf32>
    %206 = arith.addf %205, %204 : vector<8x128xf32>
    %207 = arith.divf %205, %206 : vector<8x128xf32>
    %208 = arith.mulf %199, %140 : vector<8x128xf32>
    %209 = arith.mulf %193, %201 : vector<8x128xf32>
    %210 = arith.addf %208, %209 : vector<8x128xf32>
    %211 = math.tanh %210 : vector<8x128xf32>
    %212 = arith.mulf %207, %211 : vector<8x128xf32>
    %213 = arith.truncf %212 : vector<8x128xf32> to vector<8x128xbf16>
    %c3 = arith.constant 3 : index
    %c0_69 = arith.constant 0 : index
    %c0_70 = arith.constant 0 : index
    %214 = vector.load %arg1[%c3, %c0_69, %c0_70] : memref<8x8x128xbf16, #tpu.memory_space<vmem>>, vector<1x8x128xbf16>
    %215 = vector.shape_cast %214 : vector<1x8x128xbf16> to vector<8x128xbf16>
    %216 = tpu.concatenate %215, %179 in 1 : vector<8x128xbf16>, vector<8x128xbf16> -> vector<8x256xbf16>
    %c0_71 = arith.constant 0 : index
    %c0_72 = arith.constant 0 : index
    %c0_73 = arith.constant 0 : index
    %217 = vector.load %arg3[%c0_71, %c0_72, %c0_73] : memref<2x256x512xbf16, #tpu.memory_space<vmem>>, vector<1x256x512xbf16>
    %218 = vector.shape_cast %217 : vector<1x256x512xbf16> to vector<256x512xbf16>
    %cst_74 = arith.constant dense<0.000000e+00> : vector<8x512xf32>
    %219 = tpu.matmul %216, %218, %cst_74 {dimension_numbers = #tpu.dot_dimension_numbers<[1], [0], [0], [1], [0, 0, 1, 1], [], []>} : vector<8x256xbf16>, vector<256x512xbf16>, vector<8x512xf32> -> vector<8x512xf32>
    %c0_75 = arith.constant 0 : index
    %c0_76 = arith.constant 0 : index
    %c0_77 = arith.constant 0 : index
    %220 = vector.load %arg4[%c0_75, %c0_76, %c0_77] : memref<2x1x512xf32, #tpu.memory_space<vmem>>, vector<1x1x512xf32>
    %221 = vector.shape_cast %220 : vector<1x1x512xf32> to vector<1x512xf32>
    %222 = vector.broadcast %221 : vector<1x512xf32> to vector<8x512xf32>
    %223 = arith.addf %219, %222 : vector<8x512xf32>
    %224 = vector.extract_strided_slice %223 {offsets = [0, 0], sizes = [8, 128], strides = [1, 1]} : vector<8x512xf32> to vector<8x128xf32>
    %225 = arith.negf %224 : vector<8x128xf32>
    %226 = math.exp %225 : vector<8x128xf32>
    %cst_78 = arith.constant 1.000000e+00 : f32
    %227 = vector.broadcast %cst_78 : f32 to vector<8x128xf32>
    %228 = arith.addf %227, %226 : vector<8x128xf32>
    %229 = arith.divf %227, %228 : vector<8x128xf32>
    %230 = vector.extract_strided_slice %223 {offsets = [0, 128], sizes = [8, 128], strides = [1, 1]} : vector<8x512xf32> to vector<8x128xf32>
    %231 = arith.negf %230 : vector<8x128xf32>
    %232 = math.exp %231 : vector<8x128xf32>
    %cst_79 = arith.constant 1.000000e+00 : f32
    %233 = vector.broadcast %cst_79 : f32 to vector<8x128xf32>
    %234 = arith.addf %233, %232 : vector<8x128xf32>
    %235 = arith.divf %233, %234 : vector<8x128xf32>
    %236 = vector.extract_strided_slice %223 {offsets = [0, 256], sizes = [8, 128], strides = [1, 1]} : vector<8x512xf32> to vector<8x128xf32>
    %237 = math.tanh %236 : vector<8x128xf32>
    %238 = vector.extract_strided_slice %223 {offsets = [0, 384], sizes = [8, 128], strides = [1, 1]} : vector<8x512xf32> to vector<8x128xf32>
    %239 = arith.negf %238 : vector<8x128xf32>
    %240 = math.exp %239 : vector<8x128xf32>
    %cst_80 = arith.constant 1.000000e+00 : f32
    %241 = vector.broadcast %cst_80 : f32 to vector<8x128xf32>
    %242 = arith.addf %241, %240 : vector<8x128xf32>
    %243 = arith.divf %241, %242 : vector<8x128xf32>
    %244 = arith.mulf %235, %176 : vector<8x128xf32>
    %245 = arith.mulf %229, %237 : vector<8x128xf32>
    %246 = arith.addf %244, %245 : vector<8x128xf32>
    %247 = math.tanh %246 : vector<8x128xf32>
    %248 = arith.mulf %243, %247 : vector<8x128xf32>
    %249 = arith.truncf %248 : vector<8x128xf32> to vector<8x128xbf16>
    %250 = tpu.concatenate %249, %213 in 1 : vector<8x128xbf16>, vector<8x128xbf16> -> vector<8x256xbf16>
    %c1_81 = arith.constant 1 : index
    %c0_82 = arith.constant 0 : index
    %c0_83 = arith.constant 0 : index
    %251 = vector.load %arg3[%c1_81, %c0_82, %c0_83] : memref<2x256x512xbf16, #tpu.memory_space<vmem>>, vector<1x256x512xbf16>
    %252 = vector.shape_cast %251 : vector<1x256x512xbf16> to vector<256x512xbf16>
    %cst_84 = arith.constant dense<0.000000e+00> : vector<8x512xf32>
    %253 = tpu.matmul %250, %252, %cst_84 {dimension_numbers = #tpu.dot_dimension_numbers<[1], [0], [0], [1], [0, 0, 1, 1], [], []>} : vector<8x256xbf16>, vector<256x512xbf16>, vector<8x512xf32> -> vector<8x512xf32>
    %c1_85 = arith.constant 1 : index
    %c0_86 = arith.constant 0 : index
    %c0_87 = arith.constant 0 : index
    %254 = vector.load %arg4[%c1_85, %c0_86, %c0_87] : memref<2x1x512xf32, #tpu.memory_space<vmem>>, vector<1x1x512xf32>
    %255 = vector.shape_cast %254 : vector<1x1x512xf32> to vector<1x512xf32>
    %256 = vector.broadcast %255 : vector<1x512xf32> to vector<8x512xf32>
    %257 = arith.addf %253, %256 : vector<8x512xf32>
    %258 = vector.extract_strided_slice %257 {offsets = [0, 0], sizes = [8, 128], strides = [1, 1]} : vector<8x512xf32> to vector<8x128xf32>
    %259 = arith.negf %258 : vector<8x128xf32>
    %260 = math.exp %259 : vector<8x128xf32>
    %cst_88 = arith.constant 1.000000e+00 : f32
    %261 = vector.broadcast %cst_88 : f32 to vector<8x128xf32>
    %262 = arith.addf %261, %260 : vector<8x128xf32>
    %263 = arith.divf %261, %262 : vector<8x128xf32>
    %264 = vector.extract_strided_slice %257 {offsets = [0, 128], sizes = [8, 128], strides = [1, 1]} : vector<8x512xf32> to vector<8x128xf32>
    %265 = arith.negf %264 : vector<8x128xf32>
    %266 = math.exp %265 : vector<8x128xf32>
    %cst_89 = arith.constant 1.000000e+00 : f32
    %267 = vector.broadcast %cst_89 : f32 to vector<8x128xf32>
    %268 = arith.addf %267, %266 : vector<8x128xf32>
    %269 = arith.divf %267, %268 : vector<8x128xf32>
    %270 = vector.extract_strided_slice %257 {offsets = [0, 256], sizes = [8, 128], strides = [1, 1]} : vector<8x512xf32> to vector<8x128xf32>
    %271 = math.tanh %270 : vector<8x128xf32>
    %272 = vector.extract_strided_slice %257 {offsets = [0, 384], sizes = [8, 128], strides = [1, 1]} : vector<8x512xf32> to vector<8x128xf32>
    %273 = arith.negf %272 : vector<8x128xf32>
    %274 = math.exp %273 : vector<8x128xf32>
    %cst_90 = arith.constant 1.000000e+00 : f32
    %275 = vector.broadcast %cst_90 : f32 to vector<8x128xf32>
    %276 = arith.addf %275, %274 : vector<8x128xf32>
    %277 = arith.divf %275, %276 : vector<8x128xf32>
    %278 = arith.mulf %269, %210 : vector<8x128xf32>
    %279 = arith.mulf %263, %271 : vector<8x128xf32>
    %280 = arith.addf %278, %279 : vector<8x128xf32>
    %281 = math.tanh %280 : vector<8x128xf32>
    %282 = arith.mulf %277, %281 : vector<8x128xf32>
    %283 = arith.truncf %282 : vector<8x128xf32> to vector<8x128xbf16>
    %c4 = arith.constant 4 : index
    %c0_91 = arith.constant 0 : index
    %c0_92 = arith.constant 0 : index
    %284 = vector.load %arg1[%c4, %c0_91, %c0_92] : memref<8x8x128xbf16, #tpu.memory_space<vmem>>, vector<1x8x128xbf16>
    %285 = vector.shape_cast %284 : vector<1x8x128xbf16> to vector<8x128xbf16>
    %286 = tpu.concatenate %285, %249 in 1 : vector<8x128xbf16>, vector<8x128xbf16> -> vector<8x256xbf16>
    %c0_93 = arith.constant 0 : index
    %c0_94 = arith.constant 0 : index
    %c0_95 = arith.constant 0 : index
    %287 = vector.load %arg3[%c0_93, %c0_94, %c0_95] : memref<2x256x512xbf16, #tpu.memory_space<vmem>>, vector<1x256x512xbf16>
    %288 = vector.shape_cast %287 : vector<1x256x512xbf16> to vector<256x512xbf16>
    %cst_96 = arith.constant dense<0.000000e+00> : vector<8x512xf32>
    %289 = tpu.matmul %286, %288, %cst_96 {dimension_numbers = #tpu.dot_dimension_numbers<[1], [0], [0], [1], [0, 0, 1, 1], [], []>} : vector<8x256xbf16>, vector<256x512xbf16>, vector<8x512xf32> -> vector<8x512xf32>
    %c0_97 = arith.constant 0 : index
    %c0_98 = arith.constant 0 : index
    %c0_99 = arith.constant 0 : index
    %290 = vector.load %arg4[%c0_97, %c0_98, %c0_99] : memref<2x1x512xf32, #tpu.memory_space<vmem>>, vector<1x1x512xf32>
    %291 = vector.shape_cast %290 : vector<1x1x512xf32> to vector<1x512xf32>
    %292 = vector.broadcast %291 : vector<1x512xf32> to vector<8x512xf32>
    %293 = arith.addf %289, %292 : vector<8x512xf32>
    %294 = vector.extract_strided_slice %293 {offsets = [0, 0], sizes = [8, 128], strides = [1, 1]} : vector<8x512xf32> to vector<8x128xf32>
    %295 = arith.negf %294 : vector<8x128xf32>
    %296 = math.exp %295 : vector<8x128xf32>
    %cst_100 = arith.constant 1.000000e+00 : f32
    %297 = vector.broadcast %cst_100 : f32 to vector<8x128xf32>
    %298 = arith.addf %297, %296 : vector<8x128xf32>
    %299 = arith.divf %297, %298 : vector<8x128xf32>
    %300 = vector.extract_strided_slice %293 {offsets = [0, 128], sizes = [8, 128], strides = [1, 1]} : vector<8x512xf32> to vector<8x128xf32>
    %301 = arith.negf %300 : vector<8x128xf32>
    %302 = math.exp %301 : vector<8x128xf32>
    %cst_101 = arith.constant 1.000000e+00 : f32
    %303 = vector.broadcast %cst_101 : f32 to vector<8x128xf32>
    %304 = arith.addf %303, %302 : vector<8x128xf32>
    %305 = arith.divf %303, %304 : vector<8x128xf32>
    %306 = vector.extract_strided_slice %293 {offsets = [0, 256], sizes = [8, 128], strides = [1, 1]} : vector<8x512xf32> to vector<8x128xf32>
    %307 = math.tanh %306 : vector<8x128xf32>
    %308 = vector.extract_strided_slice %293 {offsets = [0, 384], sizes = [8, 128], strides = [1, 1]} : vector<8x512xf32> to vector<8x128xf32>
    %309 = arith.negf %308 : vector<8x128xf32>
    %310 = math.exp %309 : vector<8x128xf32>
    %cst_102 = arith.constant 1.000000e+00 : f32
    %311 = vector.broadcast %cst_102 : f32 to vector<8x128xf32>
    %312 = arith.addf %311, %310 : vector<8x128xf32>
    %313 = arith.divf %311, %312 : vector<8x128xf32>
    %314 = arith.mulf %305, %246 : vector<8x128xf32>
    %315 = arith.mulf %299, %307 : vector<8x128xf32>
    %316 = arith.addf %314, %315 : vector<8x128xf32>
    %317 = math.tanh %316 : vector<8x128xf32>
    %318 = arith.mulf %313, %317 : vector<8x128xf32>
    %319 = arith.truncf %318 : vector<8x128xf32> to vector<8x128xbf16>
    %320 = tpu.concatenate %319, %283 in 1 : vector<8x128xbf16>, vector<8x128xbf16> -> vector<8x256xbf16>
    %c1_103 = arith.constant 1 : index
    %c0_104 = arith.constant 0 : index
    %c0_105 = arith.constant 0 : index
    %321 = vector.load %arg3[%c1_103, %c0_104, %c0_105] : memref<2x256x512xbf16, #tpu.memory_space<vmem>>, vector<1x256x512xbf16>
    %322 = vector.shape_cast %321 : vector<1x256x512xbf16> to vector<256x512xbf16>
    %cst_106 = arith.constant dense<0.000000e+00> : vector<8x512xf32>
    %323 = tpu.matmul %320, %322, %cst_106 {dimension_numbers = #tpu.dot_dimension_numbers<[1], [0], [0], [1], [0, 0, 1, 1], [], []>} : vector<8x256xbf16>, vector<256x512xbf16>, vector<8x512xf32> -> vector<8x512xf32>
    %c1_107 = arith.constant 1 : index
    %c0_108 = arith.constant 0 : index
    %c0_109 = arith.constant 0 : index
    %324 = vector.load %arg4[%c1_107, %c0_108, %c0_109] : memref<2x1x512xf32, #tpu.memory_space<vmem>>, vector<1x1x512xf32>
    %325 = vector.shape_cast %324 : vector<1x1x512xf32> to vector<1x512xf32>
    %326 = vector.broadcast %325 : vector<1x512xf32> to vector<8x512xf32>
    %327 = arith.addf %323, %326 : vector<8x512xf32>
    %328 = vector.extract_strided_slice %327 {offsets = [0, 0], sizes = [8, 128], strides = [1, 1]} : vector<8x512xf32> to vector<8x128xf32>
    %329 = arith.negf %328 : vector<8x128xf32>
    %330 = math.exp %329 : vector<8x128xf32>
    %cst_110 = arith.constant 1.000000e+00 : f32
    %331 = vector.broadcast %cst_110 : f32 to vector<8x128xf32>
    %332 = arith.addf %331, %330 : vector<8x128xf32>
    %333 = arith.divf %331, %332 : vector<8x128xf32>
    %334 = vector.extract_strided_slice %327 {offsets = [0, 128], sizes = [8, 128], strides = [1, 1]} : vector<8x512xf32> to vector<8x128xf32>
    %335 = arith.negf %334 : vector<8x128xf32>
    %336 = math.exp %335 : vector<8x128xf32>
    %cst_111 = arith.constant 1.000000e+00 : f32
    %337 = vector.broadcast %cst_111 : f32 to vector<8x128xf32>
    %338 = arith.addf %337, %336 : vector<8x128xf32>
    %339 = arith.divf %337, %338 : vector<8x128xf32>
    %340 = vector.extract_strided_slice %327 {offsets = [0, 256], sizes = [8, 128], strides = [1, 1]} : vector<8x512xf32> to vector<8x128xf32>
    %341 = math.tanh %340 : vector<8x128xf32>
    %342 = vector.extract_strided_slice %327 {offsets = [0, 384], sizes = [8, 128], strides = [1, 1]} : vector<8x512xf32> to vector<8x128xf32>
    %343 = arith.negf %342 : vector<8x128xf32>
    %344 = math.exp %343 : vector<8x128xf32>
    %cst_112 = arith.constant 1.000000e+00 : f32
    %345 = vector.broadcast %cst_112 : f32 to vector<8x128xf32>
    %346 = arith.addf %345, %344 : vector<8x128xf32>
    %347 = arith.divf %345, %346 : vector<8x128xf32>
    %348 = arith.mulf %339, %280 : vector<8x128xf32>
    %349 = arith.mulf %333, %341 : vector<8x128xf32>
    %350 = arith.addf %348, %349 : vector<8x128xf32>
    %351 = math.tanh %350 : vector<8x128xf32>
    %352 = arith.mulf %347, %351 : vector<8x128xf32>
    %353 = arith.truncf %352 : vector<8x128xf32> to vector<8x128xbf16>
    %c5 = arith.constant 5 : index
    %c0_113 = arith.constant 0 : index
    %c0_114 = arith.constant 0 : index
    %354 = vector.load %arg1[%c5, %c0_113, %c0_114] : memref<8x8x128xbf16, #tpu.memory_space<vmem>>, vector<1x8x128xbf16>
    %355 = vector.shape_cast %354 : vector<1x8x128xbf16> to vector<8x128xbf16>
    %356 = tpu.concatenate %355, %319 in 1 : vector<8x128xbf16>, vector<8x128xbf16> -> vector<8x256xbf16>
    %c0_115 = arith.constant 0 : index
    %c0_116 = arith.constant 0 : index
    %c0_117 = arith.constant 0 : index
    %357 = vector.load %arg3[%c0_115, %c0_116, %c0_117] : memref<2x256x512xbf16, #tpu.memory_space<vmem>>, vector<1x256x512xbf16>
    %358 = vector.shape_cast %357 : vector<1x256x512xbf16> to vector<256x512xbf16>
    %cst_118 = arith.constant dense<0.000000e+00> : vector<8x512xf32>
    %359 = tpu.matmul %356, %358, %cst_118 {dimension_numbers = #tpu.dot_dimension_numbers<[1], [0], [0], [1], [0, 0, 1, 1], [], []>} : vector<8x256xbf16>, vector<256x512xbf16>, vector<8x512xf32> -> vector<8x512xf32>
    %c0_119 = arith.constant 0 : index
    %c0_120 = arith.constant 0 : index
    %c0_121 = arith.constant 0 : index
    %360 = vector.load %arg4[%c0_119, %c0_120, %c0_121] : memref<2x1x512xf32, #tpu.memory_space<vmem>>, vector<1x1x512xf32>
    %361 = vector.shape_cast %360 : vector<1x1x512xf32> to vector<1x512xf32>
    %362 = vector.broadcast %361 : vector<1x512xf32> to vector<8x512xf32>
    %363 = arith.addf %359, %362 : vector<8x512xf32>
    %364 = vector.extract_strided_slice %363 {offsets = [0, 0], sizes = [8, 128], strides = [1, 1]} : vector<8x512xf32> to vector<8x128xf32>
    %365 = arith.negf %364 : vector<8x128xf32>
    %366 = math.exp %365 : vector<8x128xf32>
    %cst_122 = arith.constant 1.000000e+00 : f32
    %367 = vector.broadcast %cst_122 : f32 to vector<8x128xf32>
    %368 = arith.addf %367, %366 : vector<8x128xf32>
    %369 = arith.divf %367, %368 : vector<8x128xf32>
    %370 = vector.extract_strided_slice %363 {offsets = [0, 128], sizes = [8, 128], strides = [1, 1]} : vector<8x512xf32> to vector<8x128xf32>
    %371 = arith.negf %370 : vector<8x128xf32>
    %372 = math.exp %371 : vector<8x128xf32>
    %cst_123 = arith.constant 1.000000e+00 : f32
    %373 = vector.broadcast %cst_123 : f32 to vector<8x128xf32>
    %374 = arith.addf %373, %372 : vector<8x128xf32>
    %375 = arith.divf %373, %374 : vector<8x128xf32>
    %376 = vector.extract_strided_slice %363 {offsets = [0, 256], sizes = [8, 128], strides = [1, 1]} : vector<8x512xf32> to vector<8x128xf32>
    %377 = math.tanh %376 : vector<8x128xf32>
    %378 = vector.extract_strided_slice %363 {offsets = [0, 384], sizes = [8, 128], strides = [1, 1]} : vector<8x512xf32> to vector<8x128xf32>
    %379 = arith.negf %378 : vector<8x128xf32>
    %380 = math.exp %379 : vector<8x128xf32>
    %cst_124 = arith.constant 1.000000e+00 : f32
    %381 = vector.broadcast %cst_124 : f32 to vector<8x128xf32>
    %382 = arith.addf %381, %380 : vector<8x128xf32>
    %383 = arith.divf %381, %382 : vector<8x128xf32>
    %384 = arith.mulf %375, %316 : vector<8x128xf32>
    %385 = arith.mulf %369, %377 : vector<8x128xf32>
    %386 = arith.addf %384, %385 : vector<8x128xf32>
    %387 = math.tanh %386 : vector<8x128xf32>
    %388 = arith.mulf %383, %387 : vector<8x128xf32>
    %389 = arith.truncf %388 : vector<8x128xf32> to vector<8x128xbf16>
    %390 = tpu.concatenate %389, %353 in 1 : vector<8x128xbf16>, vector<8x128xbf16> -> vector<8x256xbf16>
    %c1_125 = arith.constant 1 : index
    %c0_126 = arith.constant 0 : index
    %c0_127 = arith.constant 0 : index
    %391 = vector.load %arg3[%c1_125, %c0_126, %c0_127] : memref<2x256x512xbf16, #tpu.memory_space<vmem>>, vector<1x256x512xbf16>
    %392 = vector.shape_cast %391 : vector<1x256x512xbf16> to vector<256x512xbf16>
    %cst_128 = arith.constant dense<0.000000e+00> : vector<8x512xf32>
    %393 = tpu.matmul %390, %392, %cst_128 {dimension_numbers = #tpu.dot_dimension_numbers<[1], [0], [0], [1], [0, 0, 1, 1], [], []>} : vector<8x256xbf16>, vector<256x512xbf16>, vector<8x512xf32> -> vector<8x512xf32>
    %c1_129 = arith.constant 1 : index
    %c0_130 = arith.constant 0 : index
    %c0_131 = arith.constant 0 : index
    %394 = vector.load %arg4[%c1_129, %c0_130, %c0_131] : memref<2x1x512xf32, #tpu.memory_space<vmem>>, vector<1x1x512xf32>
    %395 = vector.shape_cast %394 : vector<1x1x512xf32> to vector<1x512xf32>
    %396 = vector.broadcast %395 : vector<1x512xf32> to vector<8x512xf32>
    %397 = arith.addf %393, %396 : vector<8x512xf32>
    %398 = vector.extract_strided_slice %397 {offsets = [0, 0], sizes = [8, 128], strides = [1, 1]} : vector<8x512xf32> to vector<8x128xf32>
    %399 = arith.negf %398 : vector<8x128xf32>
    %400 = math.exp %399 : vector<8x128xf32>
    %cst_132 = arith.constant 1.000000e+00 : f32
    %401 = vector.broadcast %cst_132 : f32 to vector<8x128xf32>
    %402 = arith.addf %401, %400 : vector<8x128xf32>
    %403 = arith.divf %401, %402 : vector<8x128xf32>
    %404 = vector.extract_strided_slice %397 {offsets = [0, 128], sizes = [8, 128], strides = [1, 1]} : vector<8x512xf32> to vector<8x128xf32>
    %405 = arith.negf %404 : vector<8x128xf32>
    %406 = math.exp %405 : vector<8x128xf32>
    %cst_133 = arith.constant 1.000000e+00 : f32
    %407 = vector.broadcast %cst_133 : f32 to vector<8x128xf32>
    %408 = arith.addf %407, %406 : vector<8x128xf32>
    %409 = arith.divf %407, %408 : vector<8x128xf32>
    %410 = vector.extract_strided_slice %397 {offsets = [0, 256], sizes = [8, 128], strides = [1, 1]} : vector<8x512xf32> to vector<8x128xf32>
    %411 = math.tanh %410 : vector<8x128xf32>
    %412 = vector.extract_strided_slice %397 {offsets = [0, 384], sizes = [8, 128], strides = [1, 1]} : vector<8x512xf32> to vector<8x128xf32>
    %413 = arith.negf %412 : vector<8x128xf32>
    %414 = math.exp %413 : vector<8x128xf32>
    %cst_134 = arith.constant 1.000000e+00 : f32
    %415 = vector.broadcast %cst_134 : f32 to vector<8x128xf32>
    %416 = arith.addf %415, %414 : vector<8x128xf32>
    %417 = arith.divf %415, %416 : vector<8x128xf32>
    %418 = arith.mulf %409, %350 : vector<8x128xf32>
    %419 = arith.mulf %403, %411 : vector<8x128xf32>
    %420 = arith.addf %418, %419 : vector<8x128xf32>
    %421 = math.tanh %420 : vector<8x128xf32>
    %422 = arith.mulf %417, %421 : vector<8x128xf32>
    %423 = arith.truncf %422 : vector<8x128xf32> to vector<8x128xbf16>
    %c6 = arith.constant 6 : index
    %c0_135 = arith.constant 0 : index
    %c0_136 = arith.constant 0 : index
    %424 = vector.load %arg1[%c6, %c0_135, %c0_136] : memref<8x8x128xbf16, #tpu.memory_space<vmem>>, vector<1x8x128xbf16>
    %425 = vector.shape_cast %424 : vector<1x8x128xbf16> to vector<8x128xbf16>
    %426 = tpu.concatenate %425, %389 in 1 : vector<8x128xbf16>, vector<8x128xbf16> -> vector<8x256xbf16>
    %c0_137 = arith.constant 0 : index
    %c0_138 = arith.constant 0 : index
    %c0_139 = arith.constant 0 : index
    %427 = vector.load %arg3[%c0_137, %c0_138, %c0_139] : memref<2x256x512xbf16, #tpu.memory_space<vmem>>, vector<1x256x512xbf16>
    %428 = vector.shape_cast %427 : vector<1x256x512xbf16> to vector<256x512xbf16>
    %cst_140 = arith.constant dense<0.000000e+00> : vector<8x512xf32>
    %429 = tpu.matmul %426, %428, %cst_140 {dimension_numbers = #tpu.dot_dimension_numbers<[1], [0], [0], [1], [0, 0, 1, 1], [], []>} : vector<8x256xbf16>, vector<256x512xbf16>, vector<8x512xf32> -> vector<8x512xf32>
    %c0_141 = arith.constant 0 : index
    %c0_142 = arith.constant 0 : index
    %c0_143 = arith.constant 0 : index
    %430 = vector.load %arg4[%c0_141, %c0_142, %c0_143] : memref<2x1x512xf32, #tpu.memory_space<vmem>>, vector<1x1x512xf32>
    %431 = vector.shape_cast %430 : vector<1x1x512xf32> to vector<1x512xf32>
    %432 = vector.broadcast %431 : vector<1x512xf32> to vector<8x512xf32>
    %433 = arith.addf %429, %432 : vector<8x512xf32>
    %434 = vector.extract_strided_slice %433 {offsets = [0, 0], sizes = [8, 128], strides = [1, 1]} : vector<8x512xf32> to vector<8x128xf32>
    %435 = arith.negf %434 : vector<8x128xf32>
    %436 = math.exp %435 : vector<8x128xf32>
    %cst_144 = arith.constant 1.000000e+00 : f32
    %437 = vector.broadcast %cst_144 : f32 to vector<8x128xf32>
    %438 = arith.addf %437, %436 : vector<8x128xf32>
    %439 = arith.divf %437, %438 : vector<8x128xf32>
    %440 = vector.extract_strided_slice %433 {offsets = [0, 128], sizes = [8, 128], strides = [1, 1]} : vector<8x512xf32> to vector<8x128xf32>
    %441 = arith.negf %440 : vector<8x128xf32>
    %442 = math.exp %441 : vector<8x128xf32>
    %cst_145 = arith.constant 1.000000e+00 : f32
    %443 = vector.broadcast %cst_145 : f32 to vector<8x128xf32>
    %444 = arith.addf %443, %442 : vector<8x128xf32>
    %445 = arith.divf %443, %444 : vector<8x128xf32>
    %446 = vector.extract_strided_slice %433 {offsets = [0, 256], sizes = [8, 128], strides = [1, 1]} : vector<8x512xf32> to vector<8x128xf32>
    %447 = math.tanh %446 : vector<8x128xf32>
    %448 = vector.extract_strided_slice %433 {offsets = [0, 384], sizes = [8, 128], strides = [1, 1]} : vector<8x512xf32> to vector<8x128xf32>
    %449 = arith.negf %448 : vector<8x128xf32>
    %450 = math.exp %449 : vector<8x128xf32>
    %cst_146 = arith.constant 1.000000e+00 : f32
    %451 = vector.broadcast %cst_146 : f32 to vector<8x128xf32>
    %452 = arith.addf %451, %450 : vector<8x128xf32>
    %453 = arith.divf %451, %452 : vector<8x128xf32>
    %454 = arith.mulf %445, %386 : vector<8x128xf32>
    %455 = arith.mulf %439, %447 : vector<8x128xf32>
    %456 = arith.addf %454, %455 : vector<8x128xf32>
    %457 = math.tanh %456 : vector<8x128xf32>
    %458 = arith.mulf %453, %457 : vector<8x128xf32>
    %459 = arith.truncf %458 : vector<8x128xf32> to vector<8x128xbf16>
    %460 = tpu.concatenate %459, %423 in 1 : vector<8x128xbf16>, vector<8x128xbf16> -> vector<8x256xbf16>
    %c1_147 = arith.constant 1 : index
    %c0_148 = arith.constant 0 : index
    %c0_149 = arith.constant 0 : index
    %461 = vector.load %arg3[%c1_147, %c0_148, %c0_149] : memref<2x256x512xbf16, #tpu.memory_space<vmem>>, vector<1x256x512xbf16>
    %462 = vector.shape_cast %461 : vector<1x256x512xbf16> to vector<256x512xbf16>
    %cst_150 = arith.constant dense<0.000000e+00> : vector<8x512xf32>
    %463 = tpu.matmul %460, %462, %cst_150 {dimension_numbers = #tpu.dot_dimension_numbers<[1], [0], [0], [1], [0, 0, 1, 1], [], []>} : vector<8x256xbf16>, vector<256x512xbf16>, vector<8x512xf32> -> vector<8x512xf32>
    %c1_151 = arith.constant 1 : index
    %c0_152 = arith.constant 0 : index
    %c0_153 = arith.constant 0 : index
    %464 = vector.load %arg4[%c1_151, %c0_152, %c0_153] : memref<2x1x512xf32, #tpu.memory_space<vmem>>, vector<1x1x512xf32>
    %465 = vector.shape_cast %464 : vector<1x1x512xf32> to vector<1x512xf32>
    %466 = vector.broadcast %465 : vector<1x512xf32> to vector<8x512xf32>
    %467 = arith.addf %463, %466 : vector<8x512xf32>
    %468 = vector.extract_strided_slice %467 {offsets = [0, 0], sizes = [8, 128], strides = [1, 1]} : vector<8x512xf32> to vector<8x128xf32>
    %469 = arith.negf %468 : vector<8x128xf32>
    %470 = math.exp %469 : vector<8x128xf32>
    %cst_154 = arith.constant 1.000000e+00 : f32
    %471 = vector.broadcast %cst_154 : f32 to vector<8x128xf32>
    %472 = arith.addf %471, %470 : vector<8x128xf32>
    %473 = arith.divf %471, %472 : vector<8x128xf32>
    %474 = vector.extract_strided_slice %467 {offsets = [0, 128], sizes = [8, 128], strides = [1, 1]} : vector<8x512xf32> to vector<8x128xf32>
    %475 = arith.negf %474 : vector<8x128xf32>
    %476 = math.exp %475 : vector<8x128xf32>
    %cst_155 = arith.constant 1.000000e+00 : f32
    %477 = vector.broadcast %cst_155 : f32 to vector<8x128xf32>
    %478 = arith.addf %477, %476 : vector<8x128xf32>
    %479 = arith.divf %477, %478 : vector<8x128xf32>
    %480 = vector.extract_strided_slice %467 {offsets = [0, 256], sizes = [8, 128], strides = [1, 1]} : vector<8x512xf32> to vector<8x128xf32>
    %481 = math.tanh %480 : vector<8x128xf32>
    %482 = vector.extract_strided_slice %467 {offsets = [0, 384], sizes = [8, 128], strides = [1, 1]} : vector<8x512xf32> to vector<8x128xf32>
    %483 = arith.negf %482 : vector<8x128xf32>
    %484 = math.exp %483 : vector<8x128xf32>
    %cst_156 = arith.constant 1.000000e+00 : f32
    %485 = vector.broadcast %cst_156 : f32 to vector<8x128xf32>
    %486 = arith.addf %485, %484 : vector<8x128xf32>
    %487 = arith.divf %485, %486 : vector<8x128xf32>
    %488 = arith.mulf %479, %420 : vector<8x128xf32>
    %489 = arith.mulf %473, %481 : vector<8x128xf32>
    %490 = arith.addf %488, %489 : vector<8x128xf32>
    %491 = math.tanh %490 : vector<8x128xf32>
    %492 = arith.mulf %487, %491 : vector<8x128xf32>
    %493 = arith.truncf %492 : vector<8x128xf32> to vector<8x128xbf16>
    %c7 = arith.constant 7 : index
    %c0_157 = arith.constant 0 : index
    %c0_158 = arith.constant 0 : index
    %494 = vector.load %arg1[%c7, %c0_157, %c0_158] : memref<8x8x128xbf16, #tpu.memory_space<vmem>>, vector<1x8x128xbf16>
    %495 = vector.shape_cast %494 : vector<1x8x128xbf16> to vector<8x128xbf16>
    %496 = tpu.concatenate %495, %459 in 1 : vector<8x128xbf16>, vector<8x128xbf16> -> vector<8x256xbf16>
    %c0_159 = arith.constant 0 : index
    %c0_160 = arith.constant 0 : index
    %c0_161 = arith.constant 0 : index
    %497 = vector.load %arg3[%c0_159, %c0_160, %c0_161] : memref<2x256x512xbf16, #tpu.memory_space<vmem>>, vector<1x256x512xbf16>
    %498 = vector.shape_cast %497 : vector<1x256x512xbf16> to vector<256x512xbf16>
    %cst_162 = arith.constant dense<0.000000e+00> : vector<8x512xf32>
    %499 = tpu.matmul %496, %498, %cst_162 {dimension_numbers = #tpu.dot_dimension_numbers<[1], [0], [0], [1], [0, 0, 1, 1], [], []>} : vector<8x256xbf16>, vector<256x512xbf16>, vector<8x512xf32> -> vector<8x512xf32>
    %c0_163 = arith.constant 0 : index
    %c0_164 = arith.constant 0 : index
    %c0_165 = arith.constant 0 : index
    %500 = vector.load %arg4[%c0_163, %c0_164, %c0_165] : memref<2x1x512xf32, #tpu.memory_space<vmem>>, vector<1x1x512xf32>
    %501 = vector.shape_cast %500 : vector<1x1x512xf32> to vector<1x512xf32>
    %502 = vector.broadcast %501 : vector<1x512xf32> to vector<8x512xf32>
    %503 = arith.addf %499, %502 : vector<8x512xf32>
    %504 = vector.extract_strided_slice %503 {offsets = [0, 0], sizes = [8, 128], strides = [1, 1]} : vector<8x512xf32> to vector<8x128xf32>
    %505 = arith.negf %504 : vector<8x128xf32>
    %506 = math.exp %505 : vector<8x128xf32>
    %cst_166 = arith.constant 1.000000e+00 : f32
    %507 = vector.broadcast %cst_166 : f32 to vector<8x128xf32>
    %508 = arith.addf %507, %506 : vector<8x128xf32>
    %509 = arith.divf %507, %508 : vector<8x128xf32>
    %510 = vector.extract_strided_slice %503 {offsets = [0, 128], sizes = [8, 128], strides = [1, 1]} : vector<8x512xf32> to vector<8x128xf32>
    %511 = arith.negf %510 : vector<8x128xf32>
    %512 = math.exp %511 : vector<8x128xf32>
    %cst_167 = arith.constant 1.000000e+00 : f32
    %513 = vector.broadcast %cst_167 : f32 to vector<8x128xf32>
    %514 = arith.addf %513, %512 : vector<8x128xf32>
    %515 = arith.divf %513, %514 : vector<8x128xf32>
    %516 = vector.extract_strided_slice %503 {offsets = [0, 256], sizes = [8, 128], strides = [1, 1]} : vector<8x512xf32> to vector<8x128xf32>
    %517 = math.tanh %516 : vector<8x128xf32>
    %518 = vector.extract_strided_slice %503 {offsets = [0, 384], sizes = [8, 128], strides = [1, 1]} : vector<8x512xf32> to vector<8x128xf32>
    %519 = arith.negf %518 : vector<8x128xf32>
    %520 = math.exp %519 : vector<8x128xf32>
    %cst_168 = arith.constant 1.000000e+00 : f32
    %521 = vector.broadcast %cst_168 : f32 to vector<8x128xf32>
    %522 = arith.addf %521, %520 : vector<8x128xf32>
    %523 = arith.divf %521, %522 : vector<8x128xf32>
    %524 = arith.mulf %515, %456 : vector<8x128xf32>
    %525 = arith.mulf %509, %517 : vector<8x128xf32>
    %526 = arith.addf %524, %525 : vector<8x128xf32>
    %527 = math.tanh %526 : vector<8x128xf32>
    %528 = arith.mulf %523, %527 : vector<8x128xf32>
    %529 = arith.truncf %528 : vector<8x128xf32> to vector<8x128xbf16>
    %530 = tpu.concatenate %529, %493 in 1 : vector<8x128xbf16>, vector<8x128xbf16> -> vector<8x256xbf16>
    %c1_169 = arith.constant 1 : index
    %c0_170 = arith.constant 0 : index
    %c0_171 = arith.constant 0 : index
    %531 = vector.load %arg3[%c1_169, %c0_170, %c0_171] : memref<2x256x512xbf16, #tpu.memory_space<vmem>>, vector<1x256x512xbf16>
    %532 = vector.shape_cast %531 : vector<1x256x512xbf16> to vector<256x512xbf16>
    %cst_172 = arith.constant dense<0.000000e+00> : vector<8x512xf32>
    %533 = tpu.matmul %530, %532, %cst_172 {dimension_numbers = #tpu.dot_dimension_numbers<[1], [0], [0], [1], [0, 0, 1, 1], [], []>} : vector<8x256xbf16>, vector<256x512xbf16>, vector<8x512xf32> -> vector<8x512xf32>
    %c1_173 = arith.constant 1 : index
    %c0_174 = arith.constant 0 : index
    %c0_175 = arith.constant 0 : index
    %534 = vector.load %arg4[%c1_173, %c0_174, %c0_175] : memref<2x1x512xf32, #tpu.memory_space<vmem>>, vector<1x1x512xf32>
    %535 = vector.shape_cast %534 : vector<1x1x512xf32> to vector<1x512xf32>
    %536 = vector.broadcast %535 : vector<1x512xf32> to vector<8x512xf32>
    %537 = arith.addf %533, %536 : vector<8x512xf32>
    %538 = vector.extract_strided_slice %537 {offsets = [0, 0], sizes = [8, 128], strides = [1, 1]} : vector<8x512xf32> to vector<8x128xf32>
    %539 = arith.negf %538 : vector<8x128xf32>
    %540 = math.exp %539 : vector<8x128xf32>
    %cst_176 = arith.constant 1.000000e+00 : f32
    %541 = vector.broadcast %cst_176 : f32 to vector<8x128xf32>
    %542 = arith.addf %541, %540 : vector<8x128xf32>
    %543 = arith.divf %541, %542 : vector<8x128xf32>
    %544 = vector.extract_strided_slice %537 {offsets = [0, 128], sizes = [8, 128], strides = [1, 1]} : vector<8x512xf32> to vector<8x128xf32>
    %545 = arith.negf %544 : vector<8x128xf32>
    %546 = math.exp %545 : vector<8x128xf32>
    %cst_177 = arith.constant 1.000000e+00 : f32
    %547 = vector.broadcast %cst_177 : f32 to vector<8x128xf32>
    %548 = arith.addf %547, %546 : vector<8x128xf32>
    %549 = arith.divf %547, %548 : vector<8x128xf32>
    %550 = vector.extract_strided_slice %537 {offsets = [0, 256], sizes = [8, 128], strides = [1, 1]} : vector<8x512xf32> to vector<8x128xf32>
    %551 = math.tanh %550 : vector<8x128xf32>
    %552 = vector.extract_strided_slice %537 {offsets = [0, 384], sizes = [8, 128], strides = [1, 1]} : vector<8x512xf32> to vector<8x128xf32>
    %553 = arith.negf %552 : vector<8x128xf32>
    %554 = math.exp %553 : vector<8x128xf32>
    %cst_178 = arith.constant 1.000000e+00 : f32
    %555 = vector.broadcast %cst_178 : f32 to vector<8x128xf32>
    %556 = arith.addf %555, %554 : vector<8x128xf32>
    %557 = arith.divf %555, %556 : vector<8x128xf32>
    %558 = arith.mulf %549, %490 : vector<8x128xf32>
    %559 = arith.mulf %543, %551 : vector<8x128xf32>
    %560 = arith.addf %558, %559 : vector<8x128xf32>
    %561 = math.tanh %560 : vector<8x128xf32>
    %562 = arith.mulf %557, %561 : vector<8x128xf32>
    %563 = arith.truncf %562 : vector<8x128xf32> to vector<8x128xbf16>
    %c0_179 = arith.constant 0 : index
    %c0_180 = arith.constant 0 : index
    %564 = vector.load %arg2[%c0_179, %c0_180] : memref<8x128xbf16, #tpu.memory_space<vmem>>, vector<8x128xbf16>
    %565 = tpu.concatenate %564, %529 in 1 : vector<8x128xbf16>, vector<8x128xbf16> -> vector<8x256xbf16>
    %c0_181 = arith.constant 0 : index
    %c0_182 = arith.constant 0 : index
    %c0_183 = arith.constant 0 : index
    %566 = vector.load %arg5[%c0_181, %c0_182, %c0_183] : memref<2x256x512xbf16, #tpu.memory_space<vmem>>, vector<1x256x512xbf16>
    %567 = vector.shape_cast %566 : vector<1x256x512xbf16> to vector<256x512xbf16>
    %cst_184 = arith.constant dense<0.000000e+00> : vector<8x512xf32>
    %568 = tpu.matmul %565, %567, %cst_184 {dimension_numbers = #tpu.dot_dimension_numbers<[1], [0], [0], [1], [0, 0, 1, 1], [], []>} : vector<8x256xbf16>, vector<256x512xbf16>, vector<8x512xf32> -> vector<8x512xf32>
    %c0_185 = arith.constant 0 : index
    %c0_186 = arith.constant 0 : index
    %c0_187 = arith.constant 0 : index
    %569 = vector.load %arg6[%c0_185, %c0_186, %c0_187] : memref<2x1x512xf32, #tpu.memory_space<vmem>>, vector<1x1x512xf32>
    %570 = vector.shape_cast %569 : vector<1x1x512xf32> to vector<1x512xf32>
    %571 = vector.broadcast %570 : vector<1x512xf32> to vector<8x512xf32>
    %572 = arith.addf %568, %571 : vector<8x512xf32>
    %573 = vector.extract_strided_slice %572 {offsets = [0, 0], sizes = [8, 128], strides = [1, 1]} : vector<8x512xf32> to vector<8x128xf32>
    %574 = arith.negf %573 : vector<8x128xf32>
    %575 = math.exp %574 : vector<8x128xf32>
    %cst_188 = arith.constant 1.000000e+00 : f32
    %576 = vector.broadcast %cst_188 : f32 to vector<8x128xf32>
    %577 = arith.addf %576, %575 : vector<8x128xf32>
    %578 = arith.divf %576, %577 : vector<8x128xf32>
    %579 = vector.extract_strided_slice %572 {offsets = [0, 128], sizes = [8, 128], strides = [1, 1]} : vector<8x512xf32> to vector<8x128xf32>
    %580 = arith.negf %579 : vector<8x128xf32>
    %581 = math.exp %580 : vector<8x128xf32>
    %cst_189 = arith.constant 1.000000e+00 : f32
    %582 = vector.broadcast %cst_189 : f32 to vector<8x128xf32>
    %583 = arith.addf %582, %581 : vector<8x128xf32>
    %584 = arith.divf %582, %583 : vector<8x128xf32>
    %585 = vector.extract_strided_slice %572 {offsets = [0, 256], sizes = [8, 128], strides = [1, 1]} : vector<8x512xf32> to vector<8x128xf32>
    %586 = math.tanh %585 : vector<8x128xf32>
    %587 = vector.extract_strided_slice %572 {offsets = [0, 384], sizes = [8, 128], strides = [1, 1]} : vector<8x512xf32> to vector<8x128xf32>
    %588 = arith.negf %587 : vector<8x128xf32>
    %589 = math.exp %588 : vector<8x128xf32>
    %cst_190 = arith.constant 1.000000e+00 : f32
    %590 = vector.broadcast %cst_190 : f32 to vector<8x128xf32>
    %591 = arith.addf %590, %589 : vector<8x128xf32>
    %592 = arith.divf %590, %591 : vector<8x128xf32>
    %593 = arith.mulf %584, %526 : vector<8x128xf32>
    %594 = arith.mulf %578, %586 : vector<8x128xf32>
    %595 = arith.addf %593, %594 : vector<8x128xf32>
    %596 = math.tanh %595 : vector<8x128xf32>
    %597 = arith.mulf %592, %596 : vector<8x128xf32>
    %598 = arith.truncf %597 : vector<8x128xf32> to vector<8x128xbf16>
    %599 = tpu.concatenate %598, %563 in 1 : vector<8x128xbf16>, vector<8x128xbf16> -> vector<8x256xbf16>
    %c1_191 = arith.constant 1 : index
    %c0_192 = arith.constant 0 : index
    %c0_193 = arith.constant 0 : index
    %600 = vector.load %arg5[%c1_191, %c0_192, %c0_193] : memref<2x256x512xbf16, #tpu.memory_space<vmem>>, vector<1x256x512xbf16>
    %601 = vector.shape_cast %600 : vector<1x256x512xbf16> to vector<256x512xbf16>
    %cst_194 = arith.constant dense<0.000000e+00> : vector<8x512xf32>
    %602 = tpu.matmul %599, %601, %cst_194 {dimension_numbers = #tpu.dot_dimension_numbers<[1], [0], [0], [1], [0, 0, 1, 1], [], []>} : vector<8x256xbf16>, vector<256x512xbf16>, vector<8x512xf32> -> vector<8x512xf32>
    %c1_195 = arith.constant 1 : index
    %c0_196 = arith.constant 0 : index
    %c0_197 = arith.constant 0 : index
    %603 = vector.load %arg6[%c1_195, %c0_196, %c0_197] : memref<2x1x512xf32, #tpu.memory_space<vmem>>, vector<1x1x512xf32>
    %604 = vector.shape_cast %603 : vector<1x1x512xf32> to vector<1x512xf32>
    %605 = vector.broadcast %604 : vector<1x512xf32> to vector<8x512xf32>
    %606 = arith.addf %602, %605 : vector<8x512xf32>
    %607 = vector.extract_strided_slice %606 {offsets = [0, 0], sizes = [8, 128], strides = [1, 1]} : vector<8x512xf32> to vector<8x128xf32>
    %608 = arith.negf %607 : vector<8x128xf32>
    %609 = math.exp %608 : vector<8x128xf32>
    %cst_198 = arith.constant 1.000000e+00 : f32
    %610 = vector.broadcast %cst_198 : f32 to vector<8x128xf32>
    %611 = arith.addf %610, %609 : vector<8x128xf32>
    %612 = arith.divf %610, %611 : vector<8x128xf32>
    %613 = vector.extract_strided_slice %606 {offsets = [0, 128], sizes = [8, 128], strides = [1, 1]} : vector<8x512xf32> to vector<8x128xf32>
    %614 = arith.negf %613 : vector<8x128xf32>
    %615 = math.exp %614 : vector<8x128xf32>
    %cst_199 = arith.constant 1.000000e+00 : f32
    %616 = vector.broadcast %cst_199 : f32 to vector<8x128xf32>
    %617 = arith.addf %616, %615 : vector<8x128xf32>
    %618 = arith.divf %616, %617 : vector<8x128xf32>
    %619 = vector.extract_strided_slice %606 {offsets = [0, 256], sizes = [8, 128], strides = [1, 1]} : vector<8x512xf32> to vector<8x128xf32>
    %620 = math.tanh %619 : vector<8x128xf32>
    %621 = vector.extract_strided_slice %606 {offsets = [0, 384], sizes = [8, 128], strides = [1, 1]} : vector<8x512xf32> to vector<8x128xf32>
    %622 = arith.negf %621 : vector<8x128xf32>
    %623 = math.exp %622 : vector<8x128xf32>
    %cst_200 = arith.constant 1.000000e+00 : f32
    %624 = vector.broadcast %cst_200 : f32 to vector<8x128xf32>
    %625 = arith.addf %624, %623 : vector<8x128xf32>
    %626 = arith.divf %624, %625 : vector<8x128xf32>
    %627 = arith.mulf %618, %560 : vector<8x128xf32>
    %628 = arith.mulf %612, %620 : vector<8x128xf32>
    %629 = arith.addf %627, %628 : vector<8x128xf32>
    %630 = math.tanh %629 : vector<8x128xf32>
    %631 = arith.mulf %626, %630 : vector<8x128xf32>
    %632 = arith.truncf %631 : vector<8x128xf32> to vector<8x128xbf16>
    %c0_201 = arith.constant 0 : index
    %c0_202 = arith.constant 0 : index
    %633 = vector.load %arg7[%c0_201, %c0_202] : memref<128x128xbf16, #tpu.memory_space<vmem>>, vector<128x128xbf16>
    %cst_203 = arith.constant dense<0.000000e+00> : vector<8x128xf32>
    %634 = tpu.matmul %632, %633, %cst_203 {dimension_numbers = #tpu.dot_dimension_numbers<[1], [0], [0], [1], [0, 0, 1, 1], [], []>} : vector<8x128xbf16>, vector<128x128xbf16>, vector<8x128xf32> -> vector<8x128xf32>
    %c0_204 = arith.constant 0 : index
    %c0_205 = arith.constant 0 : index
    %635 = vector.load %arg8[%c0_204, %c0_205] : memref<1x128xf32, #tpu.memory_space<vmem>>, vector<1x128xf32>
    %636 = vector.broadcast %635 : vector<1x128xf32> to vector<8x128xf32>
    %637 = arith.addf %634, %636 : vector<8x128xf32>
    %c0_206 = arith.constant 0 : index
    %c0_207 = arith.constant 0 : index
    %c0_208 = arith.constant 0 : index
    %638 = vector.load %arg10[%c0_206, %c0_207, %c0_208] : memref<7x8x128xf32, #tpu.memory_space<vmem>>, vector<1x8x128xf32>
    %639 = vector.shape_cast %638 : vector<1x8x128xf32> to vector<8x128xf32>
    %640 = vector.shape_cast %637 : vector<8x128xf32> to vector<1x8x128xf32>
    tpu.vector_store %arg10[%c0_206, %c0_207, %c0_208], %640 {strides = array<i32>} : memref<7x8x128xf32, #tpu.memory_space<vmem>>, vector<1x8x128xf32>,
    %641 = tpu.iota {dimensions = array<i32: 1>} : vector<8x128xi32>
    %642 = arith.sitofp %641 : vector<8x128xi32> to vector<8x128xf32>
    %cst_209 = arith.constant dense<0xFF800000> : vector<8xf32>
    %643 = vector.multi_reduction <maximumf>, %637, %cst_209 [1] : vector<8x128xf32> to vector<8xf32>
    %644 = vector.shape_cast %643 : vector<8xf32> to vector<8x1xf32>
    %645 = vector.broadcast %644 : vector<8x1xf32> to vector<8x128xf32>
    %646 = arith.cmpf oeq, %637, %645 : vector<8x128xf32>
    %cst_210 = arith.constant 1.280000e+02 : f32
    %647 = vector.broadcast %cst_210 : f32 to vector<8x128xf32>
    %648 = arith.select %646, %642, %647 : vector<8x128xi1>, vector<8x128xf32>
    %cst_211 = arith.constant dense<0x7F800000> : vector<8xf32>
    %649 = vector.multi_reduction <minimumf>, %648, %cst_211 [1] : vector<8x128xf32> to vector<8xf32>
    %650 = vector.shape_cast %649 : vector<8xf32> to vector<8x1xf32>
    %651 = vector.broadcast %650 : vector<8x1xf32> to vector<8x128xf32>
    %652 = arith.cmpf oeq, %642, %651 : vector<8x128xf32>
    %653 = arith.extui %652 : vector<8x128xi1> to vector<8x128xi32>
    %654 = arith.sitofp %653 : vector<8x128xi32> to vector<8x128xf32>
    %655 = arith.truncf %654 : vector<8x128xf32> to vector<8x128xbf16>
    %c0_212 = arith.constant 0 : index
    %c0_213 = arith.constant 0 : index
    %656 = vector.load %arg9[%c0_212, %c0_213] : memref<128x128xbf16, #tpu.memory_space<vmem>>, vector<128x128xbf16>
    %cst_214 = arith.constant dense<0.000000e+00> : vector<8x128xf32>
    %657 = tpu.matmul %655, %656, %cst_214 {dimension_numbers = #tpu.dot_dimension_numbers<[1], [0], [0], [1], [0, 0, 1, 1], [], []>} : vector<8x128xbf16>, vector<128x128xbf16>, vector<8x128xf32> -> vector<8x128xf32>
    %658 = arith.truncf %657 : vector<8x128xf32> to vector<8x128xbf16>
    %659 = tpu.concatenate %658, %598 in 1 : vector<8x128xbf16>, vector<8x128xbf16> -> vector<8x256xbf16>
    %c0_215 = arith.constant 0 : index
    %c0_216 = arith.constant 0 : index
    %c0_217 = arith.constant 0 : index
    %660 = vector.load %arg5[%c0_215, %c0_216, %c0_217] : memref<2x256x512xbf16, #tpu.memory_space<vmem>>, vector<1x256x512xbf16>
    %661 = vector.shape_cast %660 : vector<1x256x512xbf16> to vector<256x512xbf16>
    %cst_218 = arith.constant dense<0.000000e+00> : vector<8x512xf32>
    %662 = tpu.matmul %659, %661, %cst_218 {dimension_numbers = #tpu.dot_dimension_numbers<[1], [0], [0], [1], [0, 0, 1, 1], [], []>} : vector<8x256xbf16>, vector<256x512xbf16>, vector<8x512xf32> -> vector<8x512xf32>
    %c0_219 = arith.constant 0 : index
    %c0_220 = arith.constant 0 : index
    %c0_221 = arith.constant 0 : index
    %663 = vector.load %arg6[%c0_219, %c0_220, %c0_221] : memref<2x1x512xf32, #tpu.memory_space<vmem>>, vector<1x1x512xf32>
    %664 = vector.shape_cast %663 : vector<1x1x512xf32> to vector<1x512xf32>
    %665 = vector.broadcast %664 : vector<1x512xf32> to vector<8x512xf32>
    %666 = arith.addf %662, %665 : vector<8x512xf32>
    %667 = vector.extract_strided_slice %666 {offsets = [0, 0], sizes = [8, 128], strides = [1, 1]} : vector<8x512xf32> to vector<8x128xf32>
    %668 = arith.negf %667 : vector<8x128xf32>
    %669 = math.exp %668 : vector<8x128xf32>
    %cst_222 = arith.constant 1.000000e+00 : f32
    %670 = vector.broadcast %cst_222 : f32 to vector<8x128xf32>
    %671 = arith.addf %670, %669 : vector<8x128xf32>
    %672 = arith.divf %670, %671 : vector<8x128xf32>
    %673 = vector.extract_strided_slice %666 {offsets = [0, 128], sizes = [8, 128], strides = [1, 1]} : vector<8x512xf32> to vector<8x128xf32>
    %674 = arith.negf %673 : vector<8x128xf32>
    %675 = math.exp %674 : vector<8x128xf32>
    %cst_223 = arith.constant 1.000000e+00 : f32
    %676 = vector.broadcast %cst_223 : f32 to vector<8x128xf32>
    %677 = arith.addf %676, %675 : vector<8x128xf32>
    %678 = arith.divf %676, %677 : vector<8x128xf32>
    %679 = vector.extract_strided_slice %666 {offsets = [0, 256], sizes = [8, 128], strides = [1, 1]} : vector<8x512xf32> to vector<8x128xf32>
    %680 = math.tanh %679 : vector<8x128xf32>
    %681 = vector.extract_strided_slice %666 {offsets = [0, 384], sizes = [8, 128], strides = [1, 1]} : vector<8x512xf32> to vector<8x128xf32>
    %682 = arith.negf %681 : vector<8x128xf32>
    %683 = math.exp %682 : vector<8x128xf32>
    %cst_224 = arith.constant 1.000000e+00 : f32
    %684 = vector.broadcast %cst_224 : f32 to vector<8x128xf32>
    %685 = arith.addf %684, %683 : vector<8x128xf32>
    %686 = arith.divf %684, %685 : vector<8x128xf32>
    %687 = arith.mulf %678, %595 : vector<8x128xf32>
    %688 = arith.mulf %672, %680 : vector<8x128xf32>
    %689 = arith.addf %687, %688 : vector<8x128xf32>
    %690 = math.tanh %689 : vector<8x128xf32>
    %691 = arith.mulf %686, %690 : vector<8x128xf32>
    %692 = arith.truncf %691 : vector<8x128xf32> to vector<8x128xbf16>
    %693 = tpu.concatenate %692, %632 in 1 : vector<8x128xbf16>, vector<8x128xbf16> -> vector<8x256xbf16>
    %c1_225 = arith.constant 1 : index
    %c0_226 = arith.constant 0 : index
    %c0_227 = arith.constant 0 : index
    %694 = vector.load %arg5[%c1_225, %c0_226, %c0_227] : memref<2x256x512xbf16, #tpu.memory_space<vmem>>, vector<1x256x512xbf16>
    %695 = vector.shape_cast %694 : vector<1x256x512xbf16> to vector<256x512xbf16>
    %cst_228 = arith.constant dense<0.000000e+00> : vector<8x512xf32>
    %696 = tpu.matmul %693, %695, %cst_228 {dimension_numbers = #tpu.dot_dimension_numbers<[1], [0], [0], [1], [0, 0, 1, 1], [], []>} : vector<8x256xbf16>, vector<256x512xbf16>, vector<8x512xf32> -> vector<8x512xf32>
    %c1_229 = arith.constant 1 : index
    %c0_230 = arith.constant 0 : index
    %c0_231 = arith.constant 0 : index
    %697 = vector.load %arg6[%c1_229, %c0_230, %c0_231] : memref<2x1x512xf32, #tpu.memory_space<vmem>>, vector<1x1x512xf32>
    %698 = vector.shape_cast %697 : vector<1x1x512xf32> to vector<1x512xf32>
    %699 = vector.broadcast %698 : vector<1x512xf32> to vector<8x512xf32>
    %700 = arith.addf %696, %699 : vector<8x512xf32>
    %701 = vector.extract_strided_slice %700 {offsets = [0, 0], sizes = [8, 128], strides = [1, 1]} : vector<8x512xf32> to vector<8x128xf32>
    %702 = arith.negf %701 : vector<8x128xf32>
    %703 = math.exp %702 : vector<8x128xf32>
    %cst_232 = arith.constant 1.000000e+00 : f32
    %704 = vector.broadcast %cst_232 : f32 to vector<8x128xf32>
    %705 = arith.addf %704, %703 : vector<8x128xf32>
    %706 = arith.divf %704, %705 : vector<8x128xf32>
    %707 = vector.extract_strided_slice %700 {offsets = [0, 128], sizes = [8, 128], strides = [1, 1]} : vector<8x512xf32> to vector<8x128xf32>
    %708 = arith.negf %707 : vector<8x128xf32>
    %709 = math.exp %708 : vector<8x128xf32>
    %cst_233 = arith.constant 1.000000e+00 : f32
    %710 = vector.broadcast %cst_233 : f32 to vector<8x128xf32>
    %711 = arith.addf %710, %709 : vector<8x128xf32>
    %712 = arith.divf %710, %711 : vector<8x128xf32>
    %713 = vector.extract_strided_slice %700 {offsets = [0, 256], sizes = [8, 128], strides = [1, 1]} : vector<8x512xf32> to vector<8x128xf32>
    %714 = math.tanh %713 : vector<8x128xf32>
    %715 = vector.extract_strided_slice %700 {offsets = [0, 384], sizes = [8, 128], strides = [1, 1]} : vector<8x512xf32> to vector<8x128xf32>
    %716 = arith.negf %715 : vector<8x128xf32>
    %717 = math.exp %716 : vector<8x128xf32>
    %cst_234 = arith.constant 1.000000e+00 : f32
    %718 = vector.broadcast %cst_234 : f32 to vector<8x128xf32>
    %719 = arith.addf %718, %717 : vector<8x128xf32>
    %720 = arith.divf %718, %719 : vector<8x128xf32>
    %721 = arith.mulf %712, %629 : vector<8x128xf32>
    %722 = arith.mulf %706, %714 : vector<8x128xf32>
    %723 = arith.addf %721, %722 : vector<8x128xf32>
    %724 = math.tanh %723 : vector<8x128xf32>
    %725 = arith.mulf %720, %724 : vector<8x128xf32>
    %726 = arith.truncf %725 : vector<8x128xf32> to vector<8x128xbf16>
    %c0_235 = arith.constant 0 : index
    %c0_236 = arith.constant 0 : index
    %727 = vector.load %arg7[%c0_235, %c0_236] : memref<128x128xbf16, #tpu.memory_space<vmem>>, vector<128x128xbf16>
    %cst_237 = arith.constant dense<0.000000e+00> : vector<8x128xf32>
    %728 = tpu.matmul %726, %727, %cst_237 {dimension_numbers = #tpu.dot_dimension_numbers<[1], [0], [0], [1], [0, 0, 1, 1], [], []>} : vector<8x128xbf16>, vector<128x128xbf16>, vector<8x128xf32> -> vector<8x128xf32>
    %c0_238 = arith.constant 0 : index
    %c0_239 = arith.constant 0 : index
    %729 = vector.load %arg8[%c0_238, %c0_239] : memref<1x128xf32, #tpu.memory_space<vmem>>, vector<1x128xf32>
    %730 = vector.broadcast %729 : vector<1x128xf32> to vector<8x128xf32>
    %731 = arith.addf %728, %730 : vector<8x128xf32>
    %c1_240 = arith.constant 1 : index
    %c0_241 = arith.constant 0 : index
    %c0_242 = arith.constant 0 : index
    %732 = vector.load %arg10[%c1_240, %c0_241, %c0_242] : memref<7x8x128xf32, #tpu.memory_space<vmem>>, vector<1x8x128xf32>
    %733 = vector.shape_cast %732 : vector<1x8x128xf32> to vector<8x128xf32>
    %734 = vector.shape_cast %731 : vector<8x128xf32> to vector<1x8x128xf32>
    tpu.vector_store %arg10[%c1_240, %c0_241, %c0_242], %734 {strides = array<i32>} : memref<7x8x128xf32, #tpu.memory_space<vmem>>, vector<1x8x128xf32>,
    %735 = tpu.iota {dimensions = array<i32: 1>} : vector<8x128xi32>
    %736 = arith.sitofp %735 : vector<8x128xi32> to vector<8x128xf32>
    %cst_243 = arith.constant dense<0xFF800000> : vector<8xf32>
    %737 = vector.multi_reduction <maximumf>, %731, %cst_243 [1] : vector<8x128xf32> to vector<8xf32>
    %738 = vector.shape_cast %737 : vector<8xf32> to vector<8x1xf32>
    %739 = vector.broadcast %738 : vector<8x1xf32> to vector<8x128xf32>
    %740 = arith.cmpf oeq, %731, %739 : vector<8x128xf32>
    %cst_244 = arith.constant 1.280000e+02 : f32
    %741 = vector.broadcast %cst_244 : f32 to vector<8x128xf32>
    %742 = arith.select %740, %736, %741 : vector<8x128xi1>, vector<8x128xf32>
    %cst_245 = arith.constant dense<0x7F800000> : vector<8xf32>
    %743 = vector.multi_reduction <minimumf>, %742, %cst_245 [1] : vector<8x128xf32> to vector<8xf32>
    %744 = vector.shape_cast %743 : vector<8xf32> to vector<8x1xf32>
    %745 = vector.broadcast %744 : vector<8x1xf32> to vector<8x128xf32>
    %746 = arith.cmpf oeq, %736, %745 : vector<8x128xf32>
    %747 = arith.extui %746 : vector<8x128xi1> to vector<8x128xi32>
    %748 = arith.sitofp %747 : vector<8x128xi32> to vector<8x128xf32>
    %749 = arith.truncf %748 : vector<8x128xf32> to vector<8x128xbf16>
    %c0_246 = arith.constant 0 : index
    %c0_247 = arith.constant 0 : index
    %750 = vector.load %arg9[%c0_246, %c0_247] : memref<128x128xbf16, #tpu.memory_space<vmem>>, vector<128x128xbf16>
    %cst_248 = arith.constant dense<0.000000e+00> : vector<8x128xf32>
    %751 = tpu.matmul %749, %750, %cst_248 {dimension_numbers = #tpu.dot_dimension_numbers<[1], [0], [0], [1], [0, 0, 1, 1], [], []>} : vector<8x128xbf16>, vector<128x128xbf16>, vector<8x128xf32> -> vector<8x128xf32>
    %752 = arith.truncf %751 : vector<8x128xf32> to vector<8x128xbf16>
    %753 = tpu.concatenate %752, %692 in 1 : vector<8x128xbf16>, vector<8x128xbf16> -> vector<8x256xbf16>
    %c0_249 = arith.constant 0 : index
    %c0_250 = arith.constant 0 : index
    %c0_251 = arith.constant 0 : index
    %754 = vector.load %arg5[%c0_249, %c0_250, %c0_251] : memref<2x256x512xbf16, #tpu.memory_space<vmem>>, vector<1x256x512xbf16>
    %755 = vector.shape_cast %754 : vector<1x256x512xbf16> to vector<256x512xbf16>
    %cst_252 = arith.constant dense<0.000000e+00> : vector<8x512xf32>
    %756 = tpu.matmul %753, %755, %cst_252 {dimension_numbers = #tpu.dot_dimension_numbers<[1], [0], [0], [1], [0, 0, 1, 1], [], []>} : vector<8x256xbf16>, vector<256x512xbf16>, vector<8x512xf32> -> vector<8x512xf32>
    %c0_253 = arith.constant 0 : index
    %c0_254 = arith.constant 0 : index
    %c0_255 = arith.constant 0 : index
    %757 = vector.load %arg6[%c0_253, %c0_254, %c0_255] : memref<2x1x512xf32, #tpu.memory_space<vmem>>, vector<1x1x512xf32>
    %758 = vector.shape_cast %757 : vector<1x1x512xf32> to vector<1x512xf32>
    %759 = vector.broadcast %758 : vector<1x512xf32> to vector<8x512xf32>
    %760 = arith.addf %756, %759 : vector<8x512xf32>
    %761 = vector.extract_strided_slice %760 {offsets = [0, 0], sizes = [8, 128], strides = [1, 1]} : vector<8x512xf32> to vector<8x128xf32>
    %762 = arith.negf %761 : vector<8x128xf32>
    %763 = math.exp %762 : vector<8x128xf32>
    %cst_256 = arith.constant 1.000000e+00 : f32
    %764 = vector.broadcast %cst_256 : f32 to vector<8x128xf32>
    %765 = arith.addf %764, %763 : vector<8x128xf32>
    %766 = arith.divf %764, %765 : vector<8x128xf32>
    %767 = vector.extract_strided_slice %760 {offsets = [0, 128], sizes = [8, 128], strides = [1, 1]} : vector<8x512xf32> to vector<8x128xf32>
    %768 = arith.negf %767 : vector<8x128xf32>
    %769 = math.exp %768 : vector<8x128xf32>
    %cst_257 = arith.constant 1.000000e+00 : f32
    %770 = vector.broadcast %cst_257 : f32 to vector<8x128xf32>
    %771 = arith.addf %770, %769 : vector<8x128xf32>
    %772 = arith.divf %770, %771 : vector<8x128xf32>
    %773 = vector.extract_strided_slice %760 {offsets = [0, 256], sizes = [8, 128], strides = [1, 1]} : vector<8x512xf32> to vector<8x128xf32>
    %774 = math.tanh %773 : vector<8x128xf32>
    %775 = vector.extract_strided_slice %760 {offsets = [0, 384], sizes = [8, 128], strides = [1, 1]} : vector<8x512xf32> to vector<8x128xf32>
    %776 = arith.negf %775 : vector<8x128xf32>
    %777 = math.exp %776 : vector<8x128xf32>
    %cst_258 = arith.constant 1.000000e+00 : f32
    %778 = vector.broadcast %cst_258 : f32 to vector<8x128xf32>
    %779 = arith.addf %778, %777 : vector<8x128xf32>
    %780 = arith.divf %778, %779 : vector<8x128xf32>
    %781 = arith.mulf %772, %689 : vector<8x128xf32>
    %782 = arith.mulf %766, %774 : vector<8x128xf32>
    %783 = arith.addf %781, %782 : vector<8x128xf32>
    %784 = math.tanh %783 : vector<8x128xf32>
    %785 = arith.mulf %780, %784 : vector<8x128xf32>
    %786 = arith.truncf %785 : vector<8x128xf32> to vector<8x128xbf16>
    %787 = tpu.concatenate %786, %726 in 1 : vector<8x128xbf16>, vector<8x128xbf16> -> vector<8x256xbf16>
    %c1_259 = arith.constant 1 : index
    %c0_260 = arith.constant 0 : index
    %c0_261 = arith.constant 0 : index
    %788 = vector.load %arg5[%c1_259, %c0_260, %c0_261] : memref<2x256x512xbf16, #tpu.memory_space<vmem>>, vector<1x256x512xbf16>
    %789 = vector.shape_cast %788 : vector<1x256x512xbf16> to vector<256x512xbf16>
    %cst_262 = arith.constant dense<0.000000e+00> : vector<8x512xf32>
    %790 = tpu.matmul %787, %789, %cst_262 {dimension_numbers = #tpu.dot_dimension_numbers<[1], [0], [0], [1], [0, 0, 1, 1], [], []>} : vector<8x256xbf16>, vector<256x512xbf16>, vector<8x512xf32> -> vector<8x512xf32>
    %c1_263 = arith.constant 1 : index
    %c0_264 = arith.constant 0 : index
    %c0_265 = arith.constant 0 : index
    %791 = vector.load %arg6[%c1_263, %c0_264, %c0_265] : memref<2x1x512xf32, #tpu.memory_space<vmem>>, vector<1x1x512xf32>
    %792 = vector.shape_cast %791 : vector<1x1x512xf32> to vector<1x512xf32>
    %793 = vector.broadcast %792 : vector<1x512xf32> to vector<8x512xf32>
    %794 = arith.addf %790, %793 : vector<8x512xf32>
    %795 = vector.extract_strided_slice %794 {offsets = [0, 0], sizes = [8, 128], strides = [1, 1]} : vector<8x512xf32> to vector<8x128xf32>
    %796 = arith.negf %795 : vector<8x128xf32>
    %797 = math.exp %796 : vector<8x128xf32>
    %cst_266 = arith.constant 1.000000e+00 : f32
    %798 = vector.broadcast %cst_266 : f32 to vector<8x128xf32>
    %799 = arith.addf %798, %797 : vector<8x128xf32>
    %800 = arith.divf %798, %799 : vector<8x128xf32>
    %801 = vector.extract_strided_slice %794 {offsets = [0, 128], sizes = [8, 128], strides = [1, 1]} : vector<8x512xf32> to vector<8x128xf32>
    %802 = arith.negf %801 : vector<8x128xf32>
    %803 = math.exp %802 : vector<8x128xf32>
    %cst_267 = arith.constant 1.000000e+00 : f32
    %804 = vector.broadcast %cst_267 : f32 to vector<8x128xf32>
    %805 = arith.addf %804, %803 : vector<8x128xf32>
    %806 = arith.divf %804, %805 : vector<8x128xf32>
    %807 = vector.extract_strided_slice %794 {offsets = [0, 256], sizes = [8, 128], strides = [1, 1]} : vector<8x512xf32> to vector<8x128xf32>
    %808 = math.tanh %807 : vector<8x128xf32>
    %809 = vector.extract_strided_slice %794 {offsets = [0, 384], sizes = [8, 128], strides = [1, 1]} : vector<8x512xf32> to vector<8x128xf32>
    %810 = arith.negf %809 : vector<8x128xf32>
    %811 = math.exp %810 : vector<8x128xf32>
    %cst_268 = arith.constant 1.000000e+00 : f32
    %812 = vector.broadcast %cst_268 : f32 to vector<8x128xf32>
    %813 = arith.addf %812, %811 : vector<8x128xf32>
    %814 = arith.divf %812, %813 : vector<8x128xf32>
    %815 = arith.mulf %806, %723 : vector<8x128xf32>
    %816 = arith.mulf %800, %808 : vector<8x128xf32>
    %817 = arith.addf %815, %816 : vector<8x128xf32>
    %818 = math.tanh %817 : vector<8x128xf32>
    %819 = arith.mulf %814, %818 : vector<8x128xf32>
    %820 = arith.truncf %819 : vector<8x128xf32> to vector<8x128xbf16>
    %c0_269 = arith.constant 0 : index
    %c0_270 = arith.constant 0 : index
    %821 = vector.load %arg7[%c0_269, %c0_270] : memref<128x128xbf16, #tpu.memory_space<vmem>>, vector<128x128xbf16>
    %cst_271 = arith.constant dense<0.000000e+00> : vector<8x128xf32>
    %822 = tpu.matmul %820, %821, %cst_271 {dimension_numbers = #tpu.dot_dimension_numbers<[1], [0], [0], [1], [0, 0, 1, 1], [], []>} : vector<8x128xbf16>, vector<128x128xbf16>, vector<8x128xf32> -> vector<8x128xf32>
    %c0_272 = arith.constant 0 : index
    %c0_273 = arith.constant 0 : index
    %823 = vector.load %arg8[%c0_272, %c0_273] : memref<1x128xf32, #tpu.memory_space<vmem>>, vector<1x128xf32>
    %824 = vector.broadcast %823 : vector<1x128xf32> to vector<8x128xf32>
    %825 = arith.addf %822, %824 : vector<8x128xf32>
    %c2_274 = arith.constant 2 : index
    %c0_275 = arith.constant 0 : index
    %c0_276 = arith.constant 0 : index
    %826 = vector.load %arg10[%c2_274, %c0_275, %c0_276] : memref<7x8x128xf32, #tpu.memory_space<vmem>>, vector<1x8x128xf32>
    %827 = vector.shape_cast %826 : vector<1x8x128xf32> to vector<8x128xf32>
    %828 = vector.shape_cast %825 : vector<8x128xf32> to vector<1x8x128xf32>
    tpu.vector_store %arg10[%c2_274, %c0_275, %c0_276], %828 {strides = array<i32>} : memref<7x8x128xf32, #tpu.memory_space<vmem>>, vector<1x8x128xf32>,
    %829 = tpu.iota {dimensions = array<i32: 1>} : vector<8x128xi32>
    %830 = arith.sitofp %829 : vector<8x128xi32> to vector<8x128xf32>
    %cst_277 = arith.constant dense<0xFF800000> : vector<8xf32>
    %831 = vector.multi_reduction <maximumf>, %825, %cst_277 [1] : vector<8x128xf32> to vector<8xf32>
    %832 = vector.shape_cast %831 : vector<8xf32> to vector<8x1xf32>
    %833 = vector.broadcast %832 : vector<8x1xf32> to vector<8x128xf32>
    %834 = arith.cmpf oeq, %825, %833 : vector<8x128xf32>
    %cst_278 = arith.constant 1.280000e+02 : f32
    %835 = vector.broadcast %cst_278 : f32 to vector<8x128xf32>
    %836 = arith.select %834, %830, %835 : vector<8x128xi1>, vector<8x128xf32>
    %cst_279 = arith.constant dense<0x7F800000> : vector<8xf32>
    %837 = vector.multi_reduction <minimumf>, %836, %cst_279 [1] : vector<8x128xf32> to vector<8xf32>
    %838 = vector.shape_cast %837 : vector<8xf32> to vector<8x1xf32>
    %839 = vector.broadcast %838 : vector<8x1xf32> to vector<8x128xf32>
    %840 = arith.cmpf oeq, %830, %839 : vector<8x128xf32>
    %841 = arith.extui %840 : vector<8x128xi1> to vector<8x128xi32>
    %842 = arith.sitofp %841 : vector<8x128xi32> to vector<8x128xf32>
    %843 = arith.truncf %842 : vector<8x128xf32> to vector<8x128xbf16>
    %c0_280 = arith.constant 0 : index
    %c0_281 = arith.constant 0 : index
    %844 = vector.load %arg9[%c0_280, %c0_281] : memref<128x128xbf16, #tpu.memory_space<vmem>>, vector<128x128xbf16>
    %cst_282 = arith.constant dense<0.000000e+00> : vector<8x128xf32>
    %845 = tpu.matmul %843, %844, %cst_282 {dimension_numbers = #tpu.dot_dimension_numbers<[1], [0], [0], [1], [0, 0, 1, 1], [], []>} : vector<8x128xbf16>, vector<128x128xbf16>, vector<8x128xf32> -> vector<8x128xf32>
    %846 = arith.truncf %845 : vector<8x128xf32> to vector<8x128xbf16>
    %847 = tpu.concatenate %846, %786 in 1 : vector<8x128xbf16>, vector<8x128xbf16> -> vector<8x256xbf16>
    %c0_283 = arith.constant 0 : index
    %c0_284 = arith.constant 0 : index
    %c0_285 = arith.constant 0 : index
    %848 = vector.load %arg5[%c0_283, %c0_284, %c0_285] : memref<2x256x512xbf16, #tpu.memory_space<vmem>>, vector<1x256x512xbf16>
    %849 = vector.shape_cast %848 : vector<1x256x512xbf16> to vector<256x512xbf16>
    %cst_286 = arith.constant dense<0.000000e+00> : vector<8x512xf32>
    %850 = tpu.matmul %847, %849, %cst_286 {dimension_numbers = #tpu.dot_dimension_numbers<[1], [0], [0], [1], [0, 0, 1, 1], [], []>} : vector<8x256xbf16>, vector<256x512xbf16>, vector<8x512xf32> -> vector<8x512xf32>
    %c0_287 = arith.constant 0 : index
    %c0_288 = arith.constant 0 : index
    %c0_289 = arith.constant 0 : index
    %851 = vector.load %arg6[%c0_287, %c0_288, %c0_289] : memref<2x1x512xf32, #tpu.memory_space<vmem>>, vector<1x1x512xf32>
    %852 = vector.shape_cast %851 : vector<1x1x512xf32> to vector<1x512xf32>
    %853 = vector.broadcast %852 : vector<1x512xf32> to vector<8x512xf32>
    %854 = arith.addf %850, %853 : vector<8x512xf32>
    %855 = vector.extract_strided_slice %854 {offsets = [0, 0], sizes = [8, 128], strides = [1, 1]} : vector<8x512xf32> to vector<8x128xf32>
    %856 = arith.negf %855 : vector<8x128xf32>
    %857 = math.exp %856 : vector<8x128xf32>
    %cst_290 = arith.constant 1.000000e+00 : f32
    %858 = vector.broadcast %cst_290 : f32 to vector<8x128xf32>
    %859 = arith.addf %858, %857 : vector<8x128xf32>
    %860 = arith.divf %858, %859 : vector<8x128xf32>
    %861 = vector.extract_strided_slice %854 {offsets = [0, 128], sizes = [8, 128], strides = [1, 1]} : vector<8x512xf32> to vector<8x128xf32>
    %862 = arith.negf %861 : vector<8x128xf32>
    %863 = math.exp %862 : vector<8x128xf32>
    %cst_291 = arith.constant 1.000000e+00 : f32
    %864 = vector.broadcast %cst_291 : f32 to vector<8x128xf32>
    %865 = arith.addf %864, %863 : vector<8x128xf32>
    %866 = arith.divf %864, %865 : vector<8x128xf32>
    %867 = vector.extract_strided_slice %854 {offsets = [0, 256], sizes = [8, 128], strides = [1, 1]} : vector<8x512xf32> to vector<8x128xf32>
    %868 = math.tanh %867 : vector<8x128xf32>
    %869 = vector.extract_strided_slice %854 {offsets = [0, 384], sizes = [8, 128], strides = [1, 1]} : vector<8x512xf32> to vector<8x128xf32>
    %870 = arith.negf %869 : vector<8x128xf32>
    %871 = math.exp %870 : vector<8x128xf32>
    %cst_292 = arith.constant 1.000000e+00 : f32
    %872 = vector.broadcast %cst_292 : f32 to vector<8x128xf32>
    %873 = arith.addf %872, %871 : vector<8x128xf32>
    %874 = arith.divf %872, %873 : vector<8x128xf32>
    %875 = arith.mulf %866, %783 : vector<8x128xf32>
    %876 = arith.mulf %860, %868 : vector<8x128xf32>
    %877 = arith.addf %875, %876 : vector<8x128xf32>
    %878 = math.tanh %877 : vector<8x128xf32>
    %879 = arith.mulf %874, %878 : vector<8x128xf32>
    %880 = arith.truncf %879 : vector<8x128xf32> to vector<8x128xbf16>
    %881 = tpu.concatenate %880, %820 in 1 : vector<8x128xbf16>, vector<8x128xbf16> -> vector<8x256xbf16>
    %c1_293 = arith.constant 1 : index
    %c0_294 = arith.constant 0 : index
    %c0_295 = arith.constant 0 : index
    %882 = vector.load %arg5[%c1_293, %c0_294, %c0_295] : memref<2x256x512xbf16, #tpu.memory_space<vmem>>, vector<1x256x512xbf16>
    %883 = vector.shape_cast %882 : vector<1x256x512xbf16> to vector<256x512xbf16>
    %cst_296 = arith.constant dense<0.000000e+00> : vector<8x512xf32>
    %884 = tpu.matmul %881, %883, %cst_296 {dimension_numbers = #tpu.dot_dimension_numbers<[1], [0], [0], [1], [0, 0, 1, 1], [], []>} : vector<8x256xbf16>, vector<256x512xbf16>, vector<8x512xf32> -> vector<8x512xf32>
    %c1_297 = arith.constant 1 : index
    %c0_298 = arith.constant 0 : index
    %c0_299 = arith.constant 0 : index
    %885 = vector.load %arg6[%c1_297, %c0_298, %c0_299] : memref<2x1x512xf32, #tpu.memory_space<vmem>>, vector<1x1x512xf32>
    %886 = vector.shape_cast %885 : vector<1x1x512xf32> to vector<1x512xf32>
    %887 = vector.broadcast %886 : vector<1x512xf32> to vector<8x512xf32>
    %888 = arith.addf %884, %887 : vector<8x512xf32>
    %889 = vector.extract_strided_slice %888 {offsets = [0, 0], sizes = [8, 128], strides = [1, 1]} : vector<8x512xf32> to vector<8x128xf32>
    %890 = arith.negf %889 : vector<8x128xf32>
    %891 = math.exp %890 : vector<8x128xf32>
    %cst_300 = arith.constant 1.000000e+00 : f32
    %892 = vector.broadcast %cst_300 : f32 to vector<8x128xf32>
    %893 = arith.addf %892, %891 : vector<8x128xf32>
    %894 = arith.divf %892, %893 : vector<8x128xf32>
    %895 = vector.extract_strided_slice %888 {offsets = [0, 128], sizes = [8, 128], strides = [1, 1]} : vector<8x512xf32> to vector<8x128xf32>
    %896 = arith.negf %895 : vector<8x128xf32>
    %897 = math.exp %896 : vector<8x128xf32>
    %cst_301 = arith.constant 1.000000e+00 : f32
    %898 = vector.broadcast %cst_301 : f32 to vector<8x128xf32>
    %899 = arith.addf %898, %897 : vector<8x128xf32>
    %900 = arith.divf %898, %899 : vector<8x128xf32>
    %901 = vector.extract_strided_slice %888 {offsets = [0, 256], sizes = [8, 128], strides = [1, 1]} : vector<8x512xf32> to vector<8x128xf32>
    %902 = math.tanh %901 : vector<8x128xf32>
    %903 = vector.extract_strided_slice %888 {offsets = [0, 384], sizes = [8, 128], strides = [1, 1]} : vector<8x512xf32> to vector<8x128xf32>
    %904 = arith.negf %903 : vector<8x128xf32>
    %905 = math.exp %904 : vector<8x128xf32>
    %cst_302 = arith.constant 1.000000e+00 : f32
    %906 = vector.broadcast %cst_302 : f32 to vector<8x128xf32>
    %907 = arith.addf %906, %905 : vector<8x128xf32>
    %908 = arith.divf %906, %907 : vector<8x128xf32>
    %909 = arith.mulf %900, %817 : vector<8x128xf32>
    %910 = arith.mulf %894, %902 : vector<8x128xf32>
    %911 = arith.addf %909, %910 : vector<8x128xf32>
    %912 = math.tanh %911 : vector<8x128xf32>
    %913 = arith.mulf %908, %912 : vector<8x128xf32>
    %914 = arith.truncf %913 : vector<8x128xf32> to vector<8x128xbf16>
    %c0_303 = arith.constant 0 : index
    %c0_304 = arith.constant 0 : index
    %915 = vector.load %arg7[%c0_303, %c0_304] : memref<128x128xbf16, #tpu.memory_space<vmem>>, vector<128x128xbf16>
    %cst_305 = arith.constant dense<0.000000e+00> : vector<8x128xf32>
    %916 = tpu.matmul %914, %915, %cst_305 {dimension_numbers = #tpu.dot_dimension_numbers<[1], [0], [0], [1], [0, 0, 1, 1], [], []>} : vector<8x128xbf16>, vector<128x128xbf16>, vector<8x128xf32> -> vector<8x128xf32>
    %c0_306 = arith.constant 0 : index
    %c0_307 = arith.constant 0 : index
    %917 = vector.load %arg8[%c0_306, %c0_307] : memref<1x128xf32, #tpu.memory_space<vmem>>, vector<1x128xf32>
    %918 = vector.broadcast %917 : vector<1x128xf32> to vector<8x128xf32>
    %919 = arith.addf %916, %918 : vector<8x128xf32>
    %c3_308 = arith.constant 3 : index
    %c0_309 = arith.constant 0 : index
    %c0_310 = arith.constant 0 : index
    %920 = vector.load %arg10[%c3_308, %c0_309, %c0_310] : memref<7x8x128xf32, #tpu.memory_space<vmem>>, vector<1x8x128xf32>
    %921 = vector.shape_cast %920 : vector<1x8x128xf32> to vector<8x128xf32>
    %922 = vector.shape_cast %919 : vector<8x128xf32> to vector<1x8x128xf32>
    tpu.vector_store %arg10[%c3_308, %c0_309, %c0_310], %922 {strides = array<i32>} : memref<7x8x128xf32, #tpu.memory_space<vmem>>, vector<1x8x128xf32>,
    %923 = tpu.iota {dimensions = array<i32: 1>} : vector<8x128xi32>
    %924 = arith.sitofp %923 : vector<8x128xi32> to vector<8x128xf32>
    %cst_311 = arith.constant dense<0xFF800000> : vector<8xf32>
    %925 = vector.multi_reduction <maximumf>, %919, %cst_311 [1] : vector<8x128xf32> to vector<8xf32>
    %926 = vector.shape_cast %925 : vector<8xf32> to vector<8x1xf32>
    %927 = vector.broadcast %926 : vector<8x1xf32> to vector<8x128xf32>
    %928 = arith.cmpf oeq, %919, %927 : vector<8x128xf32>
    %cst_312 = arith.constant 1.280000e+02 : f32
    %929 = vector.broadcast %cst_312 : f32 to vector<8x128xf32>
    %930 = arith.select %928, %924, %929 : vector<8x128xi1>, vector<8x128xf32>
    %cst_313 = arith.constant dense<0x7F800000> : vector<8xf32>
    %931 = vector.multi_reduction <minimumf>, %930, %cst_313 [1] : vector<8x128xf32> to vector<8xf32>
    %932 = vector.shape_cast %931 : vector<8xf32> to vector<8x1xf32>
    %933 = vector.broadcast %932 : vector<8x1xf32> to vector<8x128xf32>
    %934 = arith.cmpf oeq, %924, %933 : vector<8x128xf32>
    %935 = arith.extui %934 : vector<8x128xi1> to vector<8x128xi32>
    %936 = arith.sitofp %935 : vector<8x128xi32> to vector<8x128xf32>
    %937 = arith.truncf %936 : vector<8x128xf32> to vector<8x128xbf16>
    %c0_314 = arith.constant 0 : index
    %c0_315 = arith.constant 0 : index
    %938 = vector.load %arg9[%c0_314, %c0_315] : memref<128x128xbf16, #tpu.memory_space<vmem>>, vector<128x128xbf16>
    %cst_316 = arith.constant dense<0.000000e+00> : vector<8x128xf32>
    %939 = tpu.matmul %937, %938, %cst_316 {dimension_numbers = #tpu.dot_dimension_numbers<[1], [0], [0], [1], [0, 0, 1, 1], [], []>} : vector<8x128xbf16>, vector<128x128xbf16>, vector<8x128xf32> -> vector<8x128xf32>
    %940 = arith.truncf %939 : vector<8x128xf32> to vector<8x128xbf16>
    %941 = tpu.concatenate %940, %880 in 1 : vector<8x128xbf16>, vector<8x128xbf16> -> vector<8x256xbf16>
    %c0_317 = arith.constant 0 : index
    %c0_318 = arith.constant 0 : index
    %c0_319 = arith.constant 0 : index
    %942 = vector.load %arg5[%c0_317, %c0_318, %c0_319] : memref<2x256x512xbf16, #tpu.memory_space<vmem>>, vector<1x256x512xbf16>
    %943 = vector.shape_cast %942 : vector<1x256x512xbf16> to vector<256x512xbf16>
    %cst_320 = arith.constant dense<0.000000e+00> : vector<8x512xf32>
    %944 = tpu.matmul %941, %943, %cst_320 {dimension_numbers = #tpu.dot_dimension_numbers<[1], [0], [0], [1], [0, 0, 1, 1], [], []>} : vector<8x256xbf16>, vector<256x512xbf16>, vector<8x512xf32> -> vector<8x512xf32>
    %c0_321 = arith.constant 0 : index
    %c0_322 = arith.constant 0 : index
    %c0_323 = arith.constant 0 : index
    %945 = vector.load %arg6[%c0_321, %c0_322, %c0_323] : memref<2x1x512xf32, #tpu.memory_space<vmem>>, vector<1x1x512xf32>
    %946 = vector.shape_cast %945 : vector<1x1x512xf32> to vector<1x512xf32>
    %947 = vector.broadcast %946 : vector<1x512xf32> to vector<8x512xf32>
    %948 = arith.addf %944, %947 : vector<8x512xf32>
    %949 = vector.extract_strided_slice %948 {offsets = [0, 0], sizes = [8, 128], strides = [1, 1]} : vector<8x512xf32> to vector<8x128xf32>
    %950 = arith.negf %949 : vector<8x128xf32>
    %951 = math.exp %950 : vector<8x128xf32>
    %cst_324 = arith.constant 1.000000e+00 : f32
    %952 = vector.broadcast %cst_324 : f32 to vector<8x128xf32>
    %953 = arith.addf %952, %951 : vector<8x128xf32>
    %954 = arith.divf %952, %953 : vector<8x128xf32>
    %955 = vector.extract_strided_slice %948 {offsets = [0, 128], sizes = [8, 128], strides = [1, 1]} : vector<8x512xf32> to vector<8x128xf32>
    %956 = arith.negf %955 : vector<8x128xf32>
    %957 = math.exp %956 : vector<8x128xf32>
    %cst_325 = arith.constant 1.000000e+00 : f32
    %958 = vector.broadcast %cst_325 : f32 to vector<8x128xf32>
    %959 = arith.addf %958, %957 : vector<8x128xf32>
    %960 = arith.divf %958, %959 : vector<8x128xf32>
    %961 = vector.extract_strided_slice %948 {offsets = [0, 256], sizes = [8, 128], strides = [1, 1]} : vector<8x512xf32> to vector<8x128xf32>
    %962 = math.tanh %961 : vector<8x128xf32>
    %963 = vector.extract_strided_slice %948 {offsets = [0, 384], sizes = [8, 128], strides = [1, 1]} : vector<8x512xf32> to vector<8x128xf32>
    %964 = arith.negf %963 : vector<8x128xf32>
    %965 = math.exp %964 : vector<8x128xf32>
    %cst_326 = arith.constant 1.000000e+00 : f32
    %966 = vector.broadcast %cst_326 : f32 to vector<8x128xf32>
    %967 = arith.addf %966, %965 : vector<8x128xf32>
    %968 = arith.divf %966, %967 : vector<8x128xf32>
    %969 = arith.mulf %960, %877 : vector<8x128xf32>
    %970 = arith.mulf %954, %962 : vector<8x128xf32>
    %971 = arith.addf %969, %970 : vector<8x128xf32>
    %972 = math.tanh %971 : vector<8x128xf32>
    %973 = arith.mulf %968, %972 : vector<8x128xf32>
    %974 = arith.truncf %973 : vector<8x128xf32> to vector<8x128xbf16>
    %975 = tpu.concatenate %974, %914 in 1 : vector<8x128xbf16>, vector<8x128xbf16> -> vector<8x256xbf16>
    %c1_327 = arith.constant 1 : index
    %c0_328 = arith.constant 0 : index
    %c0_329 = arith.constant 0 : index
    %976 = vector.load %arg5[%c1_327, %c0_328, %c0_329] : memref<2x256x512xbf16, #tpu.memory_space<vmem>>, vector<1x256x512xbf16>
    %977 = vector.shape_cast %976 : vector<1x256x512xbf16> to vector<256x512xbf16>
    %cst_330 = arith.constant dense<0.000000e+00> : vector<8x512xf32>
    %978 = tpu.matmul %975, %977, %cst_330 {dimension_numbers = #tpu.dot_dimension_numbers<[1], [0], [0], [1], [0, 0, 1, 1], [], []>} : vector<8x256xbf16>, vector<256x512xbf16>, vector<8x512xf32> -> vector<8x512xf32>
    %c1_331 = arith.constant 1 : index
    %c0_332 = arith.constant 0 : index
    %c0_333 = arith.constant 0 : index
    %979 = vector.load %arg6[%c1_331, %c0_332, %c0_333] : memref<2x1x512xf32, #tpu.memory_space<vmem>>, vector<1x1x512xf32>
    %980 = vector.shape_cast %979 : vector<1x1x512xf32> to vector<1x512xf32>
    %981 = vector.broadcast %980 : vector<1x512xf32> to vector<8x512xf32>
    %982 = arith.addf %978, %981 : vector<8x512xf32>
    %983 = vector.extract_strided_slice %982 {offsets = [0, 0], sizes = [8, 128], strides = [1, 1]} : vector<8x512xf32> to vector<8x128xf32>
    %984 = arith.negf %983 : vector<8x128xf32>
    %985 = math.exp %984 : vector<8x128xf32>
    %cst_334 = arith.constant 1.000000e+00 : f32
    %986 = vector.broadcast %cst_334 : f32 to vector<8x128xf32>
    %987 = arith.addf %986, %985 : vector<8x128xf32>
    %988 = arith.divf %986, %987 : vector<8x128xf32>
    %989 = vector.extract_strided_slice %982 {offsets = [0, 128], sizes = [8, 128], strides = [1, 1]} : vector<8x512xf32> to vector<8x128xf32>
    %990 = arith.negf %989 : vector<8x128xf32>
    %991 = math.exp %990 : vector<8x128xf32>
    %cst_335 = arith.constant 1.000000e+00 : f32
    %992 = vector.broadcast %cst_335 : f32 to vector<8x128xf32>
    %993 = arith.addf %992, %991 : vector<8x128xf32>
    %994 = arith.divf %992, %993 : vector<8x128xf32>
    %995 = vector.extract_strided_slice %982 {offsets = [0, 256], sizes = [8, 128], strides = [1, 1]} : vector<8x512xf32> to vector<8x128xf32>
    %996 = math.tanh %995 : vector<8x128xf32>
    %997 = vector.extract_strided_slice %982 {offsets = [0, 384], sizes = [8, 128], strides = [1, 1]} : vector<8x512xf32> to vector<8x128xf32>
    %998 = arith.negf %997 : vector<8x128xf32>
    %999 = math.exp %998 : vector<8x128xf32>
    %cst_336 = arith.constant 1.000000e+00 : f32
    %1000 = vector.broadcast %cst_336 : f32 to vector<8x128xf32>
    %1001 = arith.addf %1000, %999 : vector<8x128xf32>
    %1002 = arith.divf %1000, %1001 : vector<8x128xf32>
    %1003 = arith.mulf %994, %911 : vector<8x128xf32>
    %1004 = arith.mulf %988, %996 : vector<8x128xf32>
    %1005 = arith.addf %1003, %1004 : vector<8x128xf32>
    %1006 = math.tanh %1005 : vector<8x128xf32>
    %1007 = arith.mulf %1002, %1006 : vector<8x128xf32>
    %1008 = arith.truncf %1007 : vector<8x128xf32> to vector<8x128xbf16>
    %c0_337 = arith.constant 0 : index
    %c0_338 = arith.constant 0 : index
    %1009 = vector.load %arg7[%c0_337, %c0_338] : memref<128x128xbf16, #tpu.memory_space<vmem>>, vector<128x128xbf16>
    %cst_339 = arith.constant dense<0.000000e+00> : vector<8x128xf32>
    %1010 = tpu.matmul %1008, %1009, %cst_339 {dimension_numbers = #tpu.dot_dimension_numbers<[1], [0], [0], [1], [0, 0, 1, 1], [], []>} : vector<8x128xbf16>, vector<128x128xbf16>, vector<8x128xf32> -> vector<8x128xf32>
    %c0_340 = arith.constant 0 : index
    %c0_341 = arith.constant 0 : index
    %1011 = vector.load %arg8[%c0_340, %c0_341] : memref<1x128xf32, #tpu.memory_space<vmem>>, vector<1x128xf32>
    %1012 = vector.broadcast %1011 : vector<1x128xf32> to vector<8x128xf32>
    %1013 = arith.addf %1010, %1012 : vector<8x128xf32>
    %c4_342 = arith.constant 4 : index
    %c0_343 = arith.constant 0 : index
    %c0_344 = arith.constant 0 : index
    %1014 = vector.load %arg10[%c4_342, %c0_343, %c0_344] : memref<7x8x128xf32, #tpu.memory_space<vmem>>, vector<1x8x128xf32>
    %1015 = vector.shape_cast %1014 : vector<1x8x128xf32> to vector<8x128xf32>
    %1016 = vector.shape_cast %1013 : vector<8x128xf32> to vector<1x8x128xf32>
    tpu.vector_store %arg10[%c4_342, %c0_343, %c0_344], %1016 {strides = array<i32>} : memref<7x8x128xf32, #tpu.memory_space<vmem>>, vector<1x8x128xf32>,
    %1017 = tpu.iota {dimensions = array<i32: 1>} : vector<8x128xi32>
    %1018 = arith.sitofp %1017 : vector<8x128xi32> to vector<8x128xf32>
    %cst_345 = arith.constant dense<0xFF800000> : vector<8xf32>
    %1019 = vector.multi_reduction <maximumf>, %1013, %cst_345 [1] : vector<8x128xf32> to vector<8xf32>
    %1020 = vector.shape_cast %1019 : vector<8xf32> to vector<8x1xf32>
    %1021 = vector.broadcast %1020 : vector<8x1xf32> to vector<8x128xf32>
    %1022 = arith.cmpf oeq, %1013, %1021 : vector<8x128xf32>
    %cst_346 = arith.constant 1.280000e+02 : f32
    %1023 = vector.broadcast %cst_346 : f32 to vector<8x128xf32>
    %1024 = arith.select %1022, %1018, %1023 : vector<8x128xi1>, vector<8x128xf32>
    %cst_347 = arith.constant dense<0x7F800000> : vector<8xf32>
    %1025 = vector.multi_reduction <minimumf>, %1024, %cst_347 [1] : vector<8x128xf32> to vector<8xf32>
    %1026 = vector.shape_cast %1025 : vector<8xf32> to vector<8x1xf32>
    %1027 = vector.broadcast %1026 : vector<8x1xf32> to vector<8x128xf32>
    %1028 = arith.cmpf oeq, %1018, %1027 : vector<8x128xf32>
    %1029 = arith.extui %1028 : vector<8x128xi1> to vector<8x128xi32>
    %1030 = arith.sitofp %1029 : vector<8x128xi32> to vector<8x128xf32>
    %1031 = arith.truncf %1030 : vector<8x128xf32> to vector<8x128xbf16>
    %c0_348 = arith.constant 0 : index
    %c0_349 = arith.constant 0 : index
    %1032 = vector.load %arg9[%c0_348, %c0_349] : memref<128x128xbf16, #tpu.memory_space<vmem>>, vector<128x128xbf16>
    %cst_350 = arith.constant dense<0.000000e+00> : vector<8x128xf32>
    %1033 = tpu.matmul %1031, %1032, %cst_350 {dimension_numbers = #tpu.dot_dimension_numbers<[1], [0], [0], [1], [0, 0, 1, 1], [], []>} : vector<8x128xbf16>, vector<128x128xbf16>, vector<8x128xf32> -> vector<8x128xf32>
    %1034 = arith.truncf %1033 : vector<8x128xf32> to vector<8x128xbf16>
    %1035 = tpu.concatenate %1034, %974 in 1 : vector<8x128xbf16>, vector<8x128xbf16> -> vector<8x256xbf16>
    %c0_351 = arith.constant 0 : index
    %c0_352 = arith.constant 0 : index
    %c0_353 = arith.constant 0 : index
    %1036 = vector.load %arg5[%c0_351, %c0_352, %c0_353] : memref<2x256x512xbf16, #tpu.memory_space<vmem>>, vector<1x256x512xbf16>
    %1037 = vector.shape_cast %1036 : vector<1x256x512xbf16> to vector<256x512xbf16>
    %cst_354 = arith.constant dense<0.000000e+00> : vector<8x512xf32>
    %1038 = tpu.matmul %1035, %1037, %cst_354 {dimension_numbers = #tpu.dot_dimension_numbers<[1], [0], [0], [1], [0, 0, 1, 1], [], []>} : vector<8x256xbf16>, vector<256x512xbf16>, vector<8x512xf32> -> vector<8x512xf32>
    %c0_355 = arith.constant 0 : index
    %c0_356 = arith.constant 0 : index
    %c0_357 = arith.constant 0 : index
    %1039 = vector.load %arg6[%c0_355, %c0_356, %c0_357] : memref<2x1x512xf32, #tpu.memory_space<vmem>>, vector<1x1x512xf32>
    %1040 = vector.shape_cast %1039 : vector<1x1x512xf32> to vector<1x512xf32>
    %1041 = vector.broadcast %1040 : vector<1x512xf32> to vector<8x512xf32>
    %1042 = arith.addf %1038, %1041 : vector<8x512xf32>
    %1043 = vector.extract_strided_slice %1042 {offsets = [0, 0], sizes = [8, 128], strides = [1, 1]} : vector<8x512xf32> to vector<8x128xf32>
    %1044 = arith.negf %1043 : vector<8x128xf32>
    %1045 = math.exp %1044 : vector<8x128xf32>
    %cst_358 = arith.constant 1.000000e+00 : f32
    %1046 = vector.broadcast %cst_358 : f32 to vector<8x128xf32>
    %1047 = arith.addf %1046, %1045 : vector<8x128xf32>
    %1048 = arith.divf %1046, %1047 : vector<8x128xf32>
    %1049 = vector.extract_strided_slice %1042 {offsets = [0, 128], sizes = [8, 128], strides = [1, 1]} : vector<8x512xf32> to vector<8x128xf32>
    %1050 = arith.negf %1049 : vector<8x128xf32>
    %1051 = math.exp %1050 : vector<8x128xf32>
    %cst_359 = arith.constant 1.000000e+00 : f32
    %1052 = vector.broadcast %cst_359 : f32 to vector<8x128xf32>
    %1053 = arith.addf %1052, %1051 : vector<8x128xf32>
    %1054 = arith.divf %1052, %1053 : vector<8x128xf32>
    %1055 = vector.extract_strided_slice %1042 {offsets = [0, 256], sizes = [8, 128], strides = [1, 1]} : vector<8x512xf32> to vector<8x128xf32>
    %1056 = math.tanh %1055 : vector<8x128xf32>
    %1057 = vector.extract_strided_slice %1042 {offsets = [0, 384], sizes = [8, 128], strides = [1, 1]} : vector<8x512xf32> to vector<8x128xf32>
    %1058 = arith.negf %1057 : vector<8x128xf32>
    %1059 = math.exp %1058 : vector<8x128xf32>
    %cst_360 = arith.constant 1.000000e+00 : f32
    %1060 = vector.broadcast %cst_360 : f32 to vector<8x128xf32>
    %1061 = arith.addf %1060, %1059 : vector<8x128xf32>
    %1062 = arith.divf %1060, %1061 : vector<8x128xf32>
    %1063 = arith.mulf %1054, %971 : vector<8x128xf32>
    %1064 = arith.mulf %1048, %1056 : vector<8x128xf32>
    %1065 = arith.addf %1063, %1064 : vector<8x128xf32>
    %1066 = math.tanh %1065 : vector<8x128xf32>
    %1067 = arith.mulf %1062, %1066 : vector<8x128xf32>
    %1068 = arith.truncf %1067 : vector<8x128xf32> to vector<8x128xbf16>
    %1069 = tpu.concatenate %1068, %1008 in 1 : vector<8x128xbf16>, vector<8x128xbf16> -> vector<8x256xbf16>
    %c1_361 = arith.constant 1 : index
    %c0_362 = arith.constant 0 : index
    %c0_363 = arith.constant 0 : index
    %1070 = vector.load %arg5[%c1_361, %c0_362, %c0_363] : memref<2x256x512xbf16, #tpu.memory_space<vmem>>, vector<1x256x512xbf16>
    %1071 = vector.shape_cast %1070 : vector<1x256x512xbf16> to vector<256x512xbf16>
    %cst_364 = arith.constant dense<0.000000e+00> : vector<8x512xf32>
    %1072 = tpu.matmul %1069, %1071, %cst_364 {dimension_numbers = #tpu.dot_dimension_numbers<[1], [0], [0], [1], [0, 0, 1, 1], [], []>} : vector<8x256xbf16>, vector<256x512xbf16>, vector<8x512xf32> -> vector<8x512xf32>
    %c1_365 = arith.constant 1 : index
    %c0_366 = arith.constant 0 : index
    %c0_367 = arith.constant 0 : index
    %1073 = vector.load %arg6[%c1_365, %c0_366, %c0_367] : memref<2x1x512xf32, #tpu.memory_space<vmem>>, vector<1x1x512xf32>
    %1074 = vector.shape_cast %1073 : vector<1x1x512xf32> to vector<1x512xf32>
    %1075 = vector.broadcast %1074 : vector<1x512xf32> to vector<8x512xf32>
    %1076 = arith.addf %1072, %1075 : vector<8x512xf32>
    %1077 = vector.extract_strided_slice %1076 {offsets = [0, 0], sizes = [8, 128], strides = [1, 1]} : vector<8x512xf32> to vector<8x128xf32>
    %1078 = arith.negf %1077 : vector<8x128xf32>
    %1079 = math.exp %1078 : vector<8x128xf32>
    %cst_368 = arith.constant 1.000000e+00 : f32
    %1080 = vector.broadcast %cst_368 : f32 to vector<8x128xf32>
    %1081 = arith.addf %1080, %1079 : vector<8x128xf32>
    %1082 = arith.divf %1080, %1081 : vector<8x128xf32>
    %1083 = vector.extract_strided_slice %1076 {offsets = [0, 128], sizes = [8, 128], strides = [1, 1]} : vector<8x512xf32> to vector<8x128xf32>
    %1084 = arith.negf %1083 : vector<8x128xf32>
    %1085 = math.exp %1084 : vector<8x128xf32>
    %cst_369 = arith.constant 1.000000e+00 : f32
    %1086 = vector.broadcast %cst_369 : f32 to vector<8x128xf32>
    %1087 = arith.addf %1086, %1085 : vector<8x128xf32>
    %1088 = arith.divf %1086, %1087 : vector<8x128xf32>
    %1089 = vector.extract_strided_slice %1076 {offsets = [0, 256], sizes = [8, 128], strides = [1, 1]} : vector<8x512xf32> to vector<8x128xf32>
    %1090 = math.tanh %1089 : vector<8x128xf32>
    %1091 = vector.extract_strided_slice %1076 {offsets = [0, 384], sizes = [8, 128], strides = [1, 1]} : vector<8x512xf32> to vector<8x128xf32>
    %1092 = arith.negf %1091 : vector<8x128xf32>
    %1093 = math.exp %1092 : vector<8x128xf32>
    %cst_370 = arith.constant 1.000000e+00 : f32
    %1094 = vector.broadcast %cst_370 : f32 to vector<8x128xf32>
    %1095 = arith.addf %1094, %1093 : vector<8x128xf32>
    %1096 = arith.divf %1094, %1095 : vector<8x128xf32>
    %1097 = arith.mulf %1088, %1005 : vector<8x128xf32>
    %1098 = arith.mulf %1082, %1090 : vector<8x128xf32>
    %1099 = arith.addf %1097, %1098 : vector<8x128xf32>
    %1100 = math.tanh %1099 : vector<8x128xf32>
    %1101 = arith.mulf %1096, %1100 : vector<8x128xf32>
    %1102 = arith.truncf %1101 : vector<8x128xf32> to vector<8x128xbf16>
    %c0_371 = arith.constant 0 : index
    %c0_372 = arith.constant 0 : index
    %1103 = vector.load %arg7[%c0_371, %c0_372] : memref<128x128xbf16, #tpu.memory_space<vmem>>, vector<128x128xbf16>
    %cst_373 = arith.constant dense<0.000000e+00> : vector<8x128xf32>
    %1104 = tpu.matmul %1102, %1103, %cst_373 {dimension_numbers = #tpu.dot_dimension_numbers<[1], [0], [0], [1], [0, 0, 1, 1], [], []>} : vector<8x128xbf16>, vector<128x128xbf16>, vector<8x128xf32> -> vector<8x128xf32>
    %c0_374 = arith.constant 0 : index
    %c0_375 = arith.constant 0 : index
    %1105 = vector.load %arg8[%c0_374, %c0_375] : memref<1x128xf32, #tpu.memory_space<vmem>>, vector<1x128xf32>
    %1106 = vector.broadcast %1105 : vector<1x128xf32> to vector<8x128xf32>
    %1107 = arith.addf %1104, %1106 : vector<8x128xf32>
    %c5_376 = arith.constant 5 : index
    %c0_377 = arith.constant 0 : index
    %c0_378 = arith.constant 0 : index
    %1108 = vector.load %arg10[%c5_376, %c0_377, %c0_378] : memref<7x8x128xf32, #tpu.memory_space<vmem>>, vector<1x8x128xf32>
    %1109 = vector.shape_cast %1108 : vector<1x8x128xf32> to vector<8x128xf32>
    %1110 = vector.shape_cast %1107 : vector<8x128xf32> to vector<1x8x128xf32>
    tpu.vector_store %arg10[%c5_376, %c0_377, %c0_378], %1110 {strides = array<i32>} : memref<7x8x128xf32, #tpu.memory_space<vmem>>, vector<1x8x128xf32>,
    %1111 = tpu.iota {dimensions = array<i32: 1>} : vector<8x128xi32>
    %1112 = arith.sitofp %1111 : vector<8x128xi32> to vector<8x128xf32>
    %cst_379 = arith.constant dense<0xFF800000> : vector<8xf32>
    %1113 = vector.multi_reduction <maximumf>, %1107, %cst_379 [1] : vector<8x128xf32> to vector<8xf32>
    %1114 = vector.shape_cast %1113 : vector<8xf32> to vector<8x1xf32>
    %1115 = vector.broadcast %1114 : vector<8x1xf32> to vector<8x128xf32>
    %1116 = arith.cmpf oeq, %1107, %1115 : vector<8x128xf32>
    %cst_380 = arith.constant 1.280000e+02 : f32
    %1117 = vector.broadcast %cst_380 : f32 to vector<8x128xf32>
    %1118 = arith.select %1116, %1112, %1117 : vector<8x128xi1>, vector<8x128xf32>
    %cst_381 = arith.constant dense<0x7F800000> : vector<8xf32>
    %1119 = vector.multi_reduction <minimumf>, %1118, %cst_381 [1] : vector<8x128xf32> to vector<8xf32>
    %1120 = vector.shape_cast %1119 : vector<8xf32> to vector<8x1xf32>
    %1121 = vector.broadcast %1120 : vector<8x1xf32> to vector<8x128xf32>
    %1122 = arith.cmpf oeq, %1112, %1121 : vector<8x128xf32>
    %1123 = arith.extui %1122 : vector<8x128xi1> to vector<8x128xi32>
    %1124 = arith.sitofp %1123 : vector<8x128xi32> to vector<8x128xf32>
    %1125 = arith.truncf %1124 : vector<8x128xf32> to vector<8x128xbf16>
    %c0_382 = arith.constant 0 : index
    %c0_383 = arith.constant 0 : index
    %1126 = vector.load %arg9[%c0_382, %c0_383] : memref<128x128xbf16, #tpu.memory_space<vmem>>, vector<128x128xbf16>
    %cst_384 = arith.constant dense<0.000000e+00> : vector<8x128xf32>
    %1127 = tpu.matmul %1125, %1126, %cst_384 {dimension_numbers = #tpu.dot_dimension_numbers<[1], [0], [0], [1], [0, 0, 1, 1], [], []>} : vector<8x128xbf16>, vector<128x128xbf16>, vector<8x128xf32> -> vector<8x128xf32>
    %1128 = arith.truncf %1127 : vector<8x128xf32> to vector<8x128xbf16>
    %1129 = tpu.concatenate %1128, %1068 in 1 : vector<8x128xbf16>, vector<8x128xbf16> -> vector<8x256xbf16>
    %c0_385 = arith.constant 0 : index
    %c0_386 = arith.constant 0 : index
    %c0_387 = arith.constant 0 : index
    %1130 = vector.load %arg5[%c0_385, %c0_386, %c0_387] : memref<2x256x512xbf16, #tpu.memory_space<vmem>>, vector<1x256x512xbf16>
    %1131 = vector.shape_cast %1130 : vector<1x256x512xbf16> to vector<256x512xbf16>
    %cst_388 = arith.constant dense<0.000000e+00> : vector<8x512xf32>
    %1132 = tpu.matmul %1129, %1131, %cst_388 {dimension_numbers = #tpu.dot_dimension_numbers<[1], [0], [0], [1], [0, 0, 1, 1], [], []>} : vector<8x256xbf16>, vector<256x512xbf16>, vector<8x512xf32> -> vector<8x512xf32>
    %c0_389 = arith.constant 0 : index
    %c0_390 = arith.constant 0 : index
    %c0_391 = arith.constant 0 : index
    %1133 = vector.load %arg6[%c0_389, %c0_390, %c0_391] : memref<2x1x512xf32, #tpu.memory_space<vmem>>, vector<1x1x512xf32>
    %1134 = vector.shape_cast %1133 : vector<1x1x512xf32> to vector<1x512xf32>
    %1135 = vector.broadcast %1134 : vector<1x512xf32> to vector<8x512xf32>
    %1136 = arith.addf %1132, %1135 : vector<8x512xf32>
    %1137 = vector.extract_strided_slice %1136 {offsets = [0, 0], sizes = [8, 128], strides = [1, 1]} : vector<8x512xf32> to vector<8x128xf32>
    %1138 = arith.negf %1137 : vector<8x128xf32>
    %1139 = math.exp %1138 : vector<8x128xf32>
    %cst_392 = arith.constant 1.000000e+00 : f32
    %1140 = vector.broadcast %cst_392 : f32 to vector<8x128xf32>
    %1141 = arith.addf %1140, %1139 : vector<8x128xf32>
    %1142 = arith.divf %1140, %1141 : vector<8x128xf32>
    %1143 = vector.extract_strided_slice %1136 {offsets = [0, 128], sizes = [8, 128], strides = [1, 1]} : vector<8x512xf32> to vector<8x128xf32>
    %1144 = arith.negf %1143 : vector<8x128xf32>
    %1145 = math.exp %1144 : vector<8x128xf32>
    %cst_393 = arith.constant 1.000000e+00 : f32
    %1146 = vector.broadcast %cst_393 : f32 to vector<8x128xf32>
    %1147 = arith.addf %1146, %1145 : vector<8x128xf32>
    %1148 = arith.divf %1146, %1147 : vector<8x128xf32>
    %1149 = vector.extract_strided_slice %1136 {offsets = [0, 256], sizes = [8, 128], strides = [1, 1]} : vector<8x512xf32> to vector<8x128xf32>
    %1150 = math.tanh %1149 : vector<8x128xf32>
    %1151 = vector.extract_strided_slice %1136 {offsets = [0, 384], sizes = [8, 128], strides = [1, 1]} : vector<8x512xf32> to vector<8x128xf32>
    %1152 = arith.negf %1151 : vector<8x128xf32>
    %1153 = math.exp %1152 : vector<8x128xf32>
    %cst_394 = arith.constant 1.000000e+00 : f32
    %1154 = vector.broadcast %cst_394 : f32 to vector<8x128xf32>
    %1155 = arith.addf %1154, %1153 : vector<8x128xf32>
    %1156 = arith.divf %1154, %1155 : vector<8x128xf32>
    %1157 = arith.mulf %1148, %1065 : vector<8x128xf32>
    %1158 = arith.mulf %1142, %1150 : vector<8x128xf32>
    %1159 = arith.addf %1157, %1158 : vector<8x128xf32>
    %1160 = math.tanh %1159 : vector<8x128xf32>
    %1161 = arith.mulf %1156, %1160 : vector<8x128xf32>
    %1162 = arith.truncf %1161 : vector<8x128xf32> to vector<8x128xbf16>
    %1163 = tpu.concatenate %1162, %1102 in 1 : vector<8x128xbf16>, vector<8x128xbf16> -> vector<8x256xbf16>
    %c1_395 = arith.constant 1 : index
    %c0_396 = arith.constant 0 : index
    %c0_397 = arith.constant 0 : index
    %1164 = vector.load %arg5[%c1_395, %c0_396, %c0_397] : memref<2x256x512xbf16, #tpu.memory_space<vmem>>, vector<1x256x512xbf16>
    %1165 = vector.shape_cast %1164 : vector<1x256x512xbf16> to vector<256x512xbf16>
    %cst_398 = arith.constant dense<0.000000e+00> : vector<8x512xf32>
    %1166 = tpu.matmul %1163, %1165, %cst_398 {dimension_numbers = #tpu.dot_dimension_numbers<[1], [0], [0], [1], [0, 0, 1, 1], [], []>} : vector<8x256xbf16>, vector<256x512xbf16>, vector<8x512xf32> -> vector<8x512xf32>
    %c1_399 = arith.constant 1 : index
    %c0_400 = arith.constant 0 : index
    %c0_401 = arith.constant 0 : index
    %1167 = vector.load %arg6[%c1_399, %c0_400, %c0_401] : memref<2x1x512xf32, #tpu.memory_space<vmem>>, vector<1x1x512xf32>
    %1168 = vector.shape_cast %1167 : vector<1x1x512xf32> to vector<1x512xf32>
    %1169 = vector.broadcast %1168 : vector<1x512xf32> to vector<8x512xf32>
    %1170 = arith.addf %1166, %1169 : vector<8x512xf32>
    %1171 = vector.extract_strided_slice %1170 {offsets = [0, 0], sizes = [8, 128], strides = [1, 1]} : vector<8x512xf32> to vector<8x128xf32>
    %1172 = arith.negf %1171 : vector<8x128xf32>
    %1173 = math.exp %1172 : vector<8x128xf32>
    %cst_402 = arith.constant 1.000000e+00 : f32
    %1174 = vector.broadcast %cst_402 : f32 to vector<8x128xf32>
    %1175 = arith.addf %1174, %1173 : vector<8x128xf32>
    %1176 = arith.divf %1174, %1175 : vector<8x128xf32>
    %1177 = vector.extract_strided_slice %1170 {offsets = [0, 128], sizes = [8, 128], strides = [1, 1]} : vector<8x512xf32> to vector<8x128xf32>
    %1178 = arith.negf %1177 : vector<8x128xf32>
    %1179 = math.exp %1178 : vector<8x128xf32>
    %cst_403 = arith.constant 1.000000e+00 : f32
    %1180 = vector.broadcast %cst_403 : f32 to vector<8x128xf32>
    %1181 = arith.addf %1180, %1179 : vector<8x128xf32>
    %1182 = arith.divf %1180, %1181 : vector<8x128xf32>
    %1183 = vector.extract_strided_slice %1170 {offsets = [0, 256], sizes = [8, 128], strides = [1, 1]} : vector<8x512xf32> to vector<8x128xf32>
    %1184 = math.tanh %1183 : vector<8x128xf32>
    %1185 = vector.extract_strided_slice %1170 {offsets = [0, 384], sizes = [8, 128], strides = [1, 1]} : vector<8x512xf32> to vector<8x128xf32>
    %1186 = arith.negf %1185 : vector<8x128xf32>
    %1187 = math.exp %1186 : vector<8x128xf32>
    %cst_404 = arith.constant 1.000000e+00 : f32
    %1188 = vector.broadcast %cst_404 : f32 to vector<8x128xf32>
    %1189 = arith.addf %1188, %1187 : vector<8x128xf32>
    %1190 = arith.divf %1188, %1189 : vector<8x128xf32>
    %1191 = arith.mulf %1182, %1099 : vector<8x128xf32>
    %1192 = arith.mulf %1176, %1184 : vector<8x128xf32>
    %1193 = arith.addf %1191, %1192 : vector<8x128xf32>
    %1194 = math.tanh %1193 : vector<8x128xf32>
    %1195 = arith.mulf %1190, %1194 : vector<8x128xf32>
    %1196 = arith.truncf %1195 : vector<8x128xf32> to vector<8x128xbf16>
    %c0_405 = arith.constant 0 : index
    %c0_406 = arith.constant 0 : index
    %1197 = vector.load %arg7[%c0_405, %c0_406] : memref<128x128xbf16, #tpu.memory_space<vmem>>, vector<128x128xbf16>
    %cst_407 = arith.constant dense<0.000000e+00> : vector<8x128xf32>
    %1198 = tpu.matmul %1196, %1197, %cst_407 {dimension_numbers = #tpu.dot_dimension_numbers<[1], [0], [0], [1], [0, 0, 1, 1], [], []>} : vector<8x128xbf16>, vector<128x128xbf16>, vector<8x128xf32> -> vector<8x128xf32>
    %c0_408 = arith.constant 0 : index
    %c0_409 = arith.constant 0 : index
    %1199 = vector.load %arg8[%c0_408, %c0_409] : memref<1x128xf32, #tpu.memory_space<vmem>>, vector<1x128xf32>
    %1200 = vector.broadcast %1199 : vector<1x128xf32> to vector<8x128xf32>
    %1201 = arith.addf %1198, %1200 : vector<8x128xf32>
    %c6_410 = arith.constant 6 : index
    %c0_411 = arith.constant 0 : index
    %c0_412 = arith.constant 0 : index
    %1202 = vector.load %arg10[%c6_410, %c0_411, %c0_412] : memref<7x8x128xf32, #tpu.memory_space<vmem>>, vector<1x8x128xf32>
    %1203 = vector.shape_cast %1202 : vector<1x8x128xf32> to vector<8x128xf32>
    %1204 = vector.shape_cast %1201 : vector<8x128xf32> to vector<1x8x128xf32>
    tpu.vector_store %arg10[%c6_410, %c0_411, %c0_412], %1204 {strides = array<i32>} : memref<7x8x128xf32, #tpu.memory_space<vmem>>, vector<1x8x128xf32>,
    return
  }
  func.func @transform_0(%arg0: i32) -> (i32, i32, i32) {
    %c0_i32 = arith.constant 0 : i32
    %c0_i32_0 = arith.constant 0 : i32
    %c0_i32_1 = arith.constant 0 : i32
    %c0_i32_2 = arith.constant 0 : i32
    return %c0_i32, %c0_i32_0, %c0_i32_1 : i32, i32, i32
  }
  func.func @transform_1(%arg0: i32) -> (i32, i32) {
    %c0_i32 = arith.constant 0 : i32
    %c0_i32_0 = arith.constant 0 : i32
    %c0_i32_1 = arith.constant 0 : i32
    return %c0_i32, %c0_i32_0 : i32, i32
  }
  func.func @transform_2(%arg0: i32) -> (i32, i32, i32) {
    %c0_i32 = arith.constant 0 : i32
    %c0_i32_0 = arith.constant 0 : i32
    %c0_i32_1 = arith.constant 0 : i32
    %c0_i32_2 = arith.constant 0 : i32
    return %c0_i32, %c0_i32_0, %c0_i32_1 : i32, i32, i32
  }
  func.func @transform_3(%arg0: i32) -> (i32, i32, i32) {
    %c0_i32 = arith.constant 0 : i32
    %c0_i32_0 = arith.constant 0 : i32
    %c0_i32_1 = arith.constant 0 : i32
    %c0_i32_2 = arith.constant 0 : i32
    return %c0_i32, %c0_i32_0, %c0_i32_1 : i32, i32, i32
  }
  func.func @transform_4(%arg0: i32) -> (i32, i32, i32) {
    %c0_i32 = arith.constant 0 : i32
    %c0_i32_0 = arith.constant 0 : i32
    %c0_i32_1 = arith.constant 0 : i32
    %c0_i32_2 = arith.constant 0 : i32
    return %c0_i32, %c0_i32_0, %c0_i32_1 : i32, i32, i32
  }
  func.func @transform_5(%arg0: i32) -> (i32, i32, i32) {
    %c0_i32 = arith.constant 0 : i32
    %c0_i32_0 = arith.constant 0 : i32
    %c0_i32_1 = arith.constant 0 : i32
    %c0_i32_2 = arith.constant 0 : i32
    return %c0_i32, %c0_i32_0, %c0_i32_1 : i32, i32, i32
  }
  func.func @transform_6(%arg0: i32) -> (i32, i32) {
    %c0_i32 = arith.constant 0 : i32
    %c0_i32_0 = arith.constant 0 : i32
    %c0_i32_1 = arith.constant 0 : i32
    return %c0_i32, %c0_i32_0 : i32, i32
  }
  func.func @transform_7(%arg0: i32) -> (i32, i32) {
    %c0_i32 = arith.constant 0 : i32
    %c0_i32_0 = arith.constant 0 : i32
    %c0_i32_1 = arith.constant 0 : i32
    return %c0_i32, %c0_i32_0 : i32, i32
  }
  func.func @transform_8(%arg0: i32) -> (i32, i32) {
    %c0_i32 = arith.constant 0 : i32
    %c0_i32_0 = arith.constant 0 : i32
    %c0_i32_1 = arith.constant 0 : i32
    return %c0_i32, %c0_i32_0 : i32, i32
  }
  func.func @transform_9(%arg0: i32) -> (i32, i32, i32) {
    %c0_i32 = arith.constant 0 : i32
    %c0_i32_0 = arith.constant 0 : i32
    %c0_i32_1 = arith.constant 0 : i32
    %c0_i32_2 = arith.constant 0 : i32
    return %c0_i32, %c0_i32_0, %c0_i32_1 : i32, i32, i32
  }
}

</mosaic_0001>

<llo_original>
// kernel: seq2seq_forward.1
$region0: #{seq2seq_forward.1}
  #allocation0 [shape = 'u32[]', space=smem, size = 0x4, offset = 0x4, fixed_abs, tag = 'smem constant byte address 0x4 - core index']
  #allocation1 [shape = 'u32[144,128]{1,0:T(1,128)}', space=vmem, size = 0x12000, scoped, tag = 'internal scratch']
  %s0 = inlined_call_operand.vmem [shape: bf16[8,8,128], index: 0, kind: input, shape index: {}]
  %s1 = inlined_call_operand.vmem [shape: bf16[8,128], index: 1, kind: input, shape index: {}]
  %s2 = inlined_call_operand.hbm [shape: bf16[2,256,512], index: 2, kind: input, shape index: {}]
  %s3 = inlined_call_operand.vmem [shape: f32[2,1,512], index: 3, kind: input, shape index: {}]
  %s4 = inlined_call_operand.hbm [shape: bf16[2,256,512], index: 4, kind: input, shape index: {}]
  %s5 = inlined_call_operand.vmem [shape: f32[2,1,512], index: 5, kind: input, shape index: {}]
  %s6 = inlined_call_operand.vmem [shape: bf16[128,128], index: 6, kind: input, shape index: {}]
  %s7 = inlined_call_operand.vmem [shape: f32[1,128], index: 7, kind: input, shape index: {}]
  %s8 = inlined_call_operand.vmem [shape: bf16[128,128], index: 8, kind: input, shape index: {}]
  %s9 = inlined_call_operand.vmem [shape: f32[7,8,128], index: 9, kind: output, shape index: {}]
  %s10 = sld [smem:[#allocation0]]
  $region54: #{seq2seq_forward.1} parent=0
    _
  %s12 = ssub.s32 1, %s10
  %s13 = scalar_select 0, %s12, %s10
  $region1: #{seq2seq_forward.1} parent=0
    #allocation2 [shape = 'u8[524288]{0}', space=vmem, size = 0x80000, scoped, tag = 'input window, operand 2, single buffered']
    #allocation3 [shape = 's32[1]{0}', space=sflag, size = 0x4, scoped, tag = 'scoped memory for seq2seq_forward.1']
    #allocation4 [shape = 'u8[524288]{0}', space=vmem, size = 0x80000, scoped, tag = 'input window, operand 4, single buffered']
    #allocation5 [shape = 's32[1]{0}', space=sflag, size = 0x4, scoped, tag = 'scoped memory for seq2seq_forward.1']
    %14 = vsyncpa [#allocation3], 0
    %15 = vsyncpa [#allocation5], 0
    // Predicated region
    $region2: #{seq2seq_forward.1} parent=1 // pred_check
      _
    $region3: #{seq2seq_forward.1} parent=1 // pred_check_branch
      %17 = sbr.rel (0) target = $region5
    $region4: #{seq2seq_forward.1} parent=1 // pred_region
      _
    $region5: #{seq2seq_forward.1} parent=1 // pred_fallthru
      _
    // Predicated region
    $region6: #{seq2seq_forward.1} parent=1 // pred_check
      _
    $region7: #{seq2seq_forward.1} parent=1 // pred_check_branch
      %19 = sbr.rel (0) target = $region9
    $region8: #{seq2seq_forward.1} parent=1 // pred_region
      _
    $region9: #{seq2seq_forward.1} parent=1 // pred_fallthru
      _
    // Predicated region
    $region10: #{seq2seq_forward.1} parent=1 // pred_check
      _
    $region11: #{seq2seq_forward.1} parent=1 // pred_check_branch
      %21 = sbr.rel (0) target = $region13
    $region12: #{seq2seq_forward.1} parent=1 // pred_region
      %s23 = ssub.s32 16384, 16384
      %24 = vsyncadd [#allocation3], %s23
      %s25 = sshll.u32 [#allocation2], 4
      %s26 = int_to_ptr.vmem [resolvable:$true] %s25
      %31 = dma.hbm_to_vmem [thread:$0]  %s2, 16384, %s26, [#allocation3], 256, 256, 16
    $region13: #{seq2seq_forward.1} parent=1 // pred_fallthru
      _
    // Predicated region
    $region14: #{seq2seq_forward.1} parent=1 // pred_check
      _
    $region15: #{seq2seq_forward.1} parent=1 // pred_check_branch
      %33 = sbr.rel (0) target = $region17
    $region16: #{seq2seq_forward.1} parent=1 // pred_region
      _
    $region17: #{seq2seq_forward.1} parent=1 // pred_fallthru
      _
    // Predicated region
    $region18: #{seq2seq_forward.1} parent=1 // pred_check
      _
    $region19: #{seq2seq_forward.1} parent=1 // pred_check_branch
      %35 = sbr.rel (0) target = $region21
    $region20: #{seq2seq_forward.1} parent=1 // pred_region
      %s37 = ssub.s32 16384, 16384
      %38 = vsyncadd [#allocation5], %s37
      %s39 = sshll.u32 [#allocation4], 4
      %s40 = int_to_ptr.vmem [resolvable:$true] %s39
      %45 = dma.hbm_to_vmem [thread:$0]  %s4, 16384, %s40, [#allocation5], 256, 256, 16
    $region21: #{seq2seq_forward.1} parent=1 // pred_fallthru
      _
    // Predicated region
    $region22: #{seq2seq_forward.1} parent=1 // pred_check
      _
    $region23: #{seq2seq_forward.1} parent=1 // pred_check_branch
      %47 = sbr.rel (0) target = $region25
    $region24: #{seq2seq_forward.1} parent=1 // pred_region
      _
    $region25: #{seq2seq_forward.1} parent=1 // pred_fallthru
      _
    // Predicated region
    $region26: #{seq2seq_forward.1} parent=1 // pred_check
      _
    $region27: #{seq2seq_forward.1} parent=1 // pred_check_branch
      %49 = sbr.rel (0) target = $region29
    $region28: #{seq2seq_forward.1} parent=1 // pred_region
      _
    $region29: #{seq2seq_forward.1} parent=1 // pred_fallthru
      _
    // Predicated region
    $region30: #{seq2seq_forward.1} parent=1 // pred_check
      _
    $region31: #{seq2seq_forward.1} parent=1 // pred_check_branch
      %51 = sbr.rel (0) target = $region33
    $region32: #{seq2seq_forward.1} parent=1 // pred_region
      _
    $region33: #{seq2seq_forward.1} parent=1 // pred_fallthru
      _
    // Predicated region
    $region34: #{seq2seq_forward.1} parent=1 // pred_check
      _
    $region35: #{seq2seq_forward.1} parent=1 // pred_check_branch
      %53 = sbr.rel (0) target = $region37
    $region36: #{seq2seq_forward.1} parent=1 // pred_region
      _
    $region37: #{seq2seq_forward.1} parent=1 // pred_fallthru
      _
    // Predicated region
    $region38: #{seq2seq_forward.1} parent=1 // pred_check
      _
    $region39: #{seq2seq_forward.1} parent=1 // pred_check_branch
      %55 = sbr.rel (0) target = $region41
    $region40: #{seq2seq_forward.1} parent=1 // pred_region
      %56 = dma.done [#allocation3], 16384
    $region41: #{seq2seq_forward.1} parent=1 // pred_fallthru
      _
    // Predicated region
    $region42: #{seq2seq_forward.1} parent=1 // pred_check
      _
    $region43: #{seq2seq_forward.1} parent=1 // pred_check_branch
      %58 = sbr.rel (0) target = $region45
    $region44: #{seq2seq_forward.1} parent=1 // pred_region
      %59 = dma.done [#allocation5], 16384
    $region45: #{seq2seq_forward.1} parent=1 // pred_fallthru
      _
    %v61 = vld [vmem:[%s0] sm:$0xf]
    %v62 = vld [vmem:[#allocation2] sm:$0xff]
    %v63 = vld [vmem:[#allocation2 + $0x8] sm:$0xff]
    %v64 = vld [vmem:[#allocation2 + $0x10] sm:$0xff]
    %v65 = vld [vmem:[#allocation2 + $0x18] sm:$0xff]
    %v66 = vld [vmem:[#allocation2 + $0x20] sm:$0xff]
    %v67 = vld [vmem:[#allocation2 + $0x28] sm:$0xff]
    %v68 = vld [vmem:[#allocation2 + $0x30] sm:$0xff]
    %v69 = vld [vmem:[#allocation2 + $0x38] sm:$0xff]
    %v70 = vld [vmem:[#allocation2 + $0x40] sm:$0xff]
    %v71 = vld [vmem:[#allocation2 + $0x48] sm:$0xff]
    %v72 = vld [vmem:[#allocation2 + $0x50] sm:$0xff]
    %v73 = vld [vmem:[#allocation2 + $0x58] sm:$0xff]
    %v74 = vld [vmem:[#allocation2 + $0x60] sm:$0xff]
    %v75 = vld [vmem:[#allocation2 + $0x68] sm:$0xff]
    %v76 = vld [vmem:[#allocation2 + $0x70] sm:$0xff]
    %v77 = vld [vmem:[#allocation2 + $0x78] sm:$0xff]
    %v78 = vld [vmem:[#allocation2 + $0x80] sm:$0xff]
    %v79 = vld [vmem:[#allocation2 + $0x88] sm:$0xff]
    %v80 = vld [vmem:[#allocation2 + $0x90] sm:$0xff]
    %v81 = vld [vmem:[#allocation2 + $0x98] sm:$0xff]
    %v82 = vld [vmem:[#allocation2 + $0xa0] sm:$0xff]
    %v83 = vld [vmem:[#allocation2 + $0xa8] sm:$0xff]
    %v84 = vld [vmem:[#allocation2 + $0xb0] sm:$0xff]
    %v85 = vld [vmem:[#allocation2 + $0xb8] sm:$0xff]
    %v86 = vld [vmem:[#allocation2 + $0xc0] sm:$0xff]
    %v87 = vld [vmem:[#allocation2 + $0xc8] sm:$0xff]
    %v88 = vld [vmem:[#allocation2 + $0xd0] sm:$0xff]
    %v89 = vld [vmem:[#allocation2 + $0xd8] sm:$0xff]
    %v90 = vld [vmem:[#allocation2 + $0xe0] sm:$0xff]
    %v91 = vld [vmem:[#allocation2 + $0xe8] sm:$0xff]
    %v92 = vld [vmem:[#allocation2 + $0xf0] sm:$0xff]
    %v93 = vld [vmem:[#allocation2 + $0xf8] sm:$0xff]
    %v94 = vld [vmem:[#allocation2 + $0x100] sm:$0xff]
    %v95 = vld [vmem:[#allocation2 + $0x108] sm:$0xff]
    %v96 = vld [vmem:[#allocation2 + $0x110] sm:$0xff]
    %v97 = vld [vmem:[#allocation2 + $0x118] sm:$0xff]
    %v98 = vld [vmem:[#allocation2 + $0x120] sm:$0xff]
    %v99 = vld [vmem:[#allocation2 + $0x128] sm:$0xff]
    %v100 = vld [vmem:[#allocation2 + $0x130] sm:$0xff]
    %v101 = vld [vmem:[#allocation2 + $0x138] sm:$0xff]
    %v102 = vld [vmem:[#allocation2 + $0x140] sm:$0xff]
    %v103 = vld [vmem:[#allocation2 + $0x148] sm:$0xff]
    %v104 = vld [vmem:[#allocation2 + $0x150] sm:$0xff]
    %v105 = vld [vmem:[#allocation2 + $0x158] sm:$0xff]
    %v106 = vld [vmem:[#allocation2 + $0x160] sm:$0xff]
    %v107 = vld [vmem:[#allocation2 + $0x168] sm:$0xff]
    %v108 = vld [vmem:[#allocation2 + $0x170] sm:$0xff]
    %v109 = vld [vmem:[#allocation2 + $0x178] sm:$0xff]
    %v110 = vld [vmem:[#allocation2 + $0x180] sm:$0xff]
    %v111 = vld [vmem:[#allocation2 + $0x188] sm:$0xff]
    %v112 = vld [vmem:[#allocation2 + $0x190] sm:$0xff]
    %v113 = vld [vmem:[#allocation2 + $0x198] sm:$0xff]
    %v114 = vld [vmem:[#allocation2 + $0x1a0] sm:$0xff]
    %v115 = vld [vmem:[#allocation2 + $0x1a8] sm:$0xff]
    %v116 = vld [vmem:[#allocation2 + $0x1b0] sm:$0xff]
    %v117 = vld [vmem:[#allocation2 + $0x1b8] sm:$0xff]
    %v118 = vld [vmem:[#allocation2 + $0x1c0] sm:$0xff]
    %v119 = vld [vmem:[#allocation2 + $0x1c8] sm:$0xff]
    %v120 = vld [vmem:[#allocation2 + $0x1d0] sm:$0xff]
    %v121 = vld [vmem:[#allocation2 + $0x1d8] sm:$0xff]
    %v122 = vld [vmem:[#allocation2 + $0x1e0] sm:$0xff]
    %v123 = vld [vmem:[#allocation2 + $0x1e8] sm:$0xff]
    %v124 = vld [vmem:[#allocation2 + $0x1f0] sm:$0xff]
    %v125 = vld [vmem:[#allocation2 + $0x1f8] sm:$0xff]
    %v126 = vld [vmem:[%s3] sm:$0xf]
    %v128 = vlaneseq
    %v129 = vshrl.u32 %v128, 7
    %v130 = vsub.s32 0, %v129
    %v131 = vrot.slane %v126, %v130
    %v132 = vlaneseq
    %v133 = vshrl.u32 %v132, 7
    %v134 = vsub.s32 1, %v133
    %v135 = vrot.slane %v126, %v134
    %v136 = vlaneseq
    %v137 = vshrl.u32 %v136, 7
    %v138 = vsub.s32 2, %v137
    %v139 = vrot.slane %v126, %v138
    %v140 = vlaneseq
    %v141 = vshrl.u32 %v140, 7
    %v142 = vsub.s32 3, %v141
    %v143 = vrot.slane %v126, %v142
    %v212 = vunpack.c.l.b16 %v62
    %v213 = vunpack.c.h.b16 %v62
    %v214 = vunpack.c.l.b16 %v63
    %v215 = vunpack.c.h.b16 %v63
    %v216 = vunpack.c.l.b16 %v64
    %v217 = vunpack.c.h.b16 %v64
    %v218 = vunpack.c.l.b16 %v65
    %v219 = vunpack.c.h.b16 %v65
    %v220 = vunpack.c.l.b16 %v66
    %v221 = vunpack.c.h.b16 %v66
    %v222 = vunpack.c.l.b16 %v67
    %v223 = vunpack.c.h.b16 %v67
    %v224 = vunpack.c.l.b16 %v68
    %v225 = vunpack.c.h.b16 %v68
    %v226 = vunpack.c.l.b16 %v69
    %v227 = vunpack.c.h.b16 %v69
    %v228 = vunpack.c.l.b16 %v70
    %v229 = vunpack.c.h.b16 %v70
    %v230 = vunpack.c.l.b16 %v71
    %v231 = vunpack.c.h.b16 %v71
    %v232 = vunpack.c.l.b16 %v72
    %v233 = vunpack.c.h.b16 %v72
    %v234 = vunpack.c.l.b16 %v73
    %v235 = vunpack.c.h.b16 %v73
    %v236 = vunpack.c.l.b16 %v74
    %v237 = vunpack.c.h.b16 %v74
    %v238 = vunpack.c.l.b16 %v75
    %v239 = vunpack.c.h.b16 %v75
    %v240 = vunpack.c.l.b16 %v76
    %v241 = vunpack.c.h.b16 %v76
    %v242 = vunpack.c.l.b16 %v77
    %v243 = vunpack.c.h.b16 %v77
    %v244 = vunpack.c.l.b16 %v78
    %v245 = vunpack.c.h.b16 %v78
    %v246 = vunpack.c.l.b16 %v79
    %v247 = vunpack.c.h.b16 %v79
    %v248 = vunpack.c.l.b16 %v80
    %v249 = vunpack.c.h.b16 %v80
    %v250 = vunpack.c.l.b16 %v81
    %v251 = vunpack.c.h.b16 %v81
    %v252 = vunpack.c.l.b16 %v82
    %v253 = vunpack.c.h.b16 %v82
    %v254 = vunpack.c.l.b16 %v83
    %v255 = vunpack.c.h.b16 %v83
    %v256 = vunpack.c.l.b16 %v84
    %v257 = vunpack.c.h.b16 %v84
    %v258 = vunpack.c.l.b16 %v85
    %v259 = vunpack.c.h.b16 %v85
    %v260 = vunpack.c.l.b16 %v86
    %v261 = vunpack.c.h.b16 %v86
    %v262 = vunpack.c.l.b16 %v87
    %v263 = vunpack.c.h.b16 %v87
    %v264 = vunpack.c.l.b16 %v88
    %v265 = vunpack.c.h.b16 %v88
    %v266 = vunpack.c.l.b16 %v89
    %v267 = vunpack.c.h.b16 %v89
    %v268 = vunpack.c.l.b16 %v90
    %v269 = vunpack.c.h.b16 %v90
    %v270 = vunpack.c.l.b16 %v91
    %v271 = vunpack.c.h.b16 %v91
    %v272 = vunpack.c.l.b16 %v92
    %v273 = vunpack.c.h.b16 %v92
    %v274 = vunpack.c.l.b16 %v93
    %v275 = vunpack.c.h.b16 %v93
    %v276 = vunpack.c.l.b16 %v94
    %v277 = vunpack.c.h.b16 %v94
    %v278 = vunpack.c.l.b16 %v95
    %v279 = vunpack.c.h.b16 %v95
    %v280 = vunpack.c.l.b16 %v96
    %v281 = vunpack.c.h.b16 %v96
    %v282 = vunpack.c.l.b16 %v97
    %v283 = vunpack.c.h.b16 %v97
    %v284 = vunpack.c.l.b16 %v98
    %v285 = vunpack.c.h.b16 %v98
    %v286 = vunpack.c.l.b16 %v99
    %v287 = vunpack.c.h.b16 %v99
    %v288 = vunpack.c.l.b16 %v100
    %v289 = vunpack.c.h.b16 %v100
    %v290 = vunpack.c.l.b16 %v101
    %v291 = vunpack.c.h.b16 %v101
    %v292 = vunpack.c.l.b16 %v102
    %v293 = vunpack.c.h.b16 %v102
    %v294 = vunpack.c.l.b16 %v103
    %v295 = vunpack.c.h.b16 %v103
    %v296 = vunpack.c.l.b16 %v104
    %v297 = vunpack.c.h.b16 %v104
    %v298 = vunpack.c.l.b16 %v105
    %v299 = vunpack.c.h.b16 %v105
    %v300 = vunpack.c.l.b16 %v106
    %v301 = vunpack.c.h.b16 %v106
    %v302 = vunpack.c.l.b16 %v107
    %v303 = vunpack.c.h.b16 %v107
    %v304 = vunpack.c.l.b16 %v108
    %v305 = vunpack.c.h.b16 %v108
    %v306 = vunpack.c.l.b16 %v109
    %v307 = vunpack.c.h.b16 %v109
    %v308 = vunpack.c.l.b16 %v110
    %v309 = vunpack.c.h.b16 %v110
    %v310 = vunpack.c.l.b16 %v111
    %v311 = vunpack.c.h.b16 %v111
    %v312 = vunpack.c.l.b16 %v112
    %v313 = vunpack.c.h.b16 %v112
    %v314 = vunpack.c.l.b16 %v113
    %v315 = vunpack.c.h.b16 %v113
    %v316 = vunpack.c.l.b16 %v114
    %v317 = vunpack.c.h.b16 %v114
    %v318 = vunpack.c.l.b16 %v115
    %v319 = vunpack.c.h.b16 %v115
    %v320 = vunpack.c.l.b16 %v116
    %v321 = vunpack.c.h.b16 %v116
    %v322 = vunpack.c.l.b16 %v117
    %v323 = vunpack.c.h.b16 %v117
    %v324 = vunpack.c.l.b16 %v118
    %v325 = vunpack.c.h.b16 %v118
    %v326 = vunpack.c.l.b16 %v119
    %v327 = vunpack.c.h.b16 %v119
    %v328 = vunpack.c.l.b16 %v120
    %v329 = vunpack.c.h.b16 %v120
    %v330 = vunpack.c.l.b16 %v121
    %v331 = vunpack.c.h.b16 %v121
    %v332 = vunpack.c.l.b16 %v122
    %v333 = vunpack.c.h.b16 %v122
    %v334 = vunpack.c.l.b16 %v123
    %v335 = vunpack.c.h.b16 %v123
    %v336 = vunpack.c.l.b16 %v124
    %v337 = vunpack.c.h.b16 %v124
    %v338 = vunpack.c.l.b16 %v125
    %v339 = vunpack.c.h.b16 %v125
    %v340 = vpack.c.b16 %v216, %v212
    %v341 = vpack.c.b16 %v217, %v213
    %v342 = vpack.c.b16 %v218, %v214
    %v343 = vpack.c.b16 %v219, %v215
    %v344 = vpack.c.b16 %v224, %v220
    %v345 = vpack.c.b16 %v225, %v221
    %v346 = vpack.c.b16 %v226, %v222
    %v347 = vpack.c.b16 %v227, %v223
    %v348 = vpack.c.b16 %v232, %v228
    %v349 = vpack.c.b16 %v233, %v229
    %v350 = vpack.c.b16 %v234, %v230
    %v351 = vpack.c.b16 %v235, %v231
    %v352 = vpack.c.b16 %v240, %v236
    %v353 = vpack.c.b16 %v241, %v237
    %v354 = vpack.c.b16 %v242, %v238
    %v355 = vpack.c.b16 %v243, %v239
    %v356 = vpack.c.b16 %v248, %v244
    %v357 = vpack.c.b16 %v249, %v245
    %v358 = vpack.c.b16 %v250, %v246
    %v359 = vpack.c.b16 %v251, %v247
    %v360 = vpack.c.b16 %v256, %v252
    %v361 = vpack.c.b16 %v257, %v253
    %v362 = vpack.c.b16 %v258, %v254
    %v363 = vpack.c.b16 %v259, %v255
    %v364 = vpack.c.b16 %v264, %v260
    %v365 = vpack.c.b16 %v265, %v261
    %v366 = vpack.c.b16 %v266, %v262
    %v367 = vpack.c.b16 %v267, %v263
    %v368 = vpack.c.b16 %v272, %v268
    %v369 = vpack.c.b16 %v273, %v269
    %v370 = vpack.c.b16 %v274, %v270
    %v371 = vpack.c.b16 %v275, %v271
    %v372 = vpack.c.b16 %v280, %v276
    %v373 = vpack.c.b16 %v281, %v277
    %v374 = vpack.c.b16 %v282, %v278
    %v375 = vpack.c.b16 %v283, %v279
    %v376 = vpack.c.b16 %v288, %v284
    %v377 = vpack.c.b16 %v289, %v285
    %v378 = vpack.c.b16 %v290, %v286
    %v379 = vpack.c.b16 %v291, %v287
    %v380 = vpack.c.b16 %v296, %v292
    %v381 = vpack.c.b16 %v297, %v293
    %v382 = vpack.c.b16 %v298, %v294
    %v383 = vpack.c.b16 %v299, %v295
    %v384 = vpack.c.b16 %v304, %v300
    %v385 = vpack.c.b16 %v305, %v301
    %v386 = vpack.c.b16 %v306, %v302
    %v387 = vpack.c.b16 %v307, %v303
    %v388 = vpack.c.b16 %v312, %v308
    %v389 = vpack.c.b16 %v313, %v309
    %v390 = vpack.c.b16 %v314, %v310
    %v391 = vpack.c.b16 %v315, %v311
    %v392 = vpack.c.b16 %v320, %v316
    %v393 = vpack.c.b16 %v321, %v317
    %v394 = vpack.c.b16 %v322, %v318
    %v395 = vpack.c.b16 %v323, %v319
    %v396 = vpack.c.b16 %v328, %v324
    %v397 = vpack.c.b16 %v329, %v325
    %v398 = vpack.c.b16 %v330, %v326
    %v399 = vpack.c.b16 %v331, %v327
    %v400 = vpack.c.b16 %v336, %v332
    %v401 = vpack.c.b16 %v337, %v333
    %v402 = vpack.c.b16 %v338, %v334
    %v403 = vpack.c.b16 %v339, %v335
    %468 = vmatprep.subr.bf16.mxu0 %v341
    %469 = vmatpush1.bf16.msra.mxu0 %v340
    %470 = vmatprep.subr.bf16.mxu0 %v345
    %471 = vmatpush1.bf16.msra.mxu0 %v344
    %472 = vmatprep.subr.bf16.mxu0 %v349
    %473 = vmatpush1.bf16.msra.mxu0 %v348
    %474 = vmatprep.subr.bf16.mxu0 %v353
    %475 = vmatpush1.bf16.msra.mxu0 %v352
    %476 = vmatprep.subr.bf16.mxu0 %v357
    %477 = vmatpush1.bf16.msra.mxu0 %v356
    %478 = vmatprep.subr.bf16.mxu0 %v361
    %479 = vmatpush1.bf16.msra.mxu0 %v360
    %480 = vmatprep.subr.bf16.mxu0 %v365
    %481 = vmatpush1.bf16.msra.mxu0 %v364
    %482 = vmatprep.subr.bf16.mxu0 %v369
    %483 = vmatpush1.bf16.msra.mxu0 %v368
    %484 = vmatprep.subr.bf16.mxu0 %v373
    %485 = vmatpush1.bf16.msra.mxu0 %v372
    %486 = vmatprep.subr.bf16.mxu0 %v377
    %487 = vmatpush1.bf16.msra.mxu0 %v376
    %488 = vmatprep.subr.bf16.mxu0 %v381
    %489 = vmatpush1.bf16.msra.mxu0 %v380
    %490 = vmatprep.subr.bf16.mxu0 %v385
    %491 = vmatpush1.bf16.msra.mxu0 %v384
    %492 = vmatprep.subr.bf16.mxu0 %v389
    %493 = vmatpush1.bf16.msra.mxu0 %v388
    %494 = vmatprep.subr.bf16.mxu0 %v393
    %495 = vmatpush1.bf16.msra.mxu0 %v392
    %496 = vmatprep.subr.bf16.mxu0 %v397
    %497 = vmatpush1.bf16.msra.mxu0 %v396
    %498 = vmatprep.subr.bf16.mxu0 %v401
    %499 = vmatpush1.bf16.msra.mxu0 %v400
    %500 = vmatprep.mubr.bf16.mxu0 0
    %501 = vmatmul.mubr.bf16.gmra.mrb[0].mxu0 %v61
    %v502 = vpop.f32.mrb[0].mxu0
    %v503 = vadd.f32 %v131, %v502
    %v504 = vpop.f32.mrb[0].mxu0
    %v505 = vadd.f32 %v135, %v504
    %v506 = vpop.f32.mrb[0].mxu0
    %v507 = vpop.f32.mrb[0].mxu0
    %508 = vdwg.mxu0
    %509 = vmatprep.subr.bf16.mxu0 %v343
    %510 = vmatpush1.bf16.msra.mxu0 %v342
    %511 = vmatprep.subr.bf16.mxu0 %v347
    %512 = vmatpush1.bf16.msra.mxu0 %v346
    %513 = vmatprep.subr.bf16.mxu0 %v351
    %514 = vmatpush1.bf16.msra.mxu0 %v350
    %515 = vmatprep.subr.bf16.mxu0 %v355
    %516 = vmatpush1.bf16.msra.mxu0 %v354
    %517 = vmatprep.subr.bf16.mxu0 %v359
    %518 = vmatpush1.bf16.msra.mxu0 %v358
    %519 = vmatprep.subr.bf16.mxu0 %v363
    %520 = vmatpush1.bf16.msra.mxu0 %v362
    %521 = vmatprep.subr.bf16.mxu0 %v367
    %522 = vmatpush1.bf16.msra.mxu0 %v366
    %523 = vmatprep.subr.bf16.mxu0 %v371
    %524 = vmatpush1.bf16.msra.mxu0 %v370
    %525 = vmatprep.subr.bf16.mxu0 %v375
    %526 = vmatpush1.bf16.msra.mxu0 %v374
    %527 = vmatprep.subr.bf16.mxu0 %v379
    %528 = vmatpush1.bf16.msra.mxu0 %v378
    %529 = vmatprep.subr.bf16.mxu0 %v383
    %530 = vmatpush1.bf16.msra.mxu0 %v382
    %531 = vmatprep.subr.bf16.mxu0 %v387
    %532 = vmatpush1.bf16.msra.mxu0 %v386
    %533 = vmatprep.subr.bf16.mxu0 %v391
    %534 = vmatpush1.bf16.msra.mxu0 %v390
    %535 = vmatprep.subr.bf16.mxu0 %v395
    %536 = vmatpush1.bf16.msra.mxu0 %v394
    %537 = vmatprep.subr.bf16.mxu0 %v399
    %538 = vmatpush1.bf16.msra.mxu0 %v398
    %539 = vmatprep.subr.bf16.mxu0 %v403
    %540 = vmatpush1.bf16.msra.mxu0 %v402
    %541 = vmatprep.mubr.bf16.mxu0 0
    %542 = vmatmul.mubr.bf16.gmra.mrb[0].mxu0 %v61
    %v543 = vpop.f32.mrb[0].mxu0
    %v544 = vadd.f32 %v139, %v543
    %v545 = vpop.f32.mrb[0].mxu0
    %v546 = vadd.f32 %v143, %v545
    %v547 = vpop.f32.mrb[0].mxu0
    %v548 = vpop.f32.mrb[0].mxu0
    %549 = vdwg.mxu0
    %v550 = vxor.u32 %v503, 2147483648
    %v551 = vmul.f32 %v550, 1.442695
    %v552 = vpow.pop %v551
    %v553 = vadd.f32 %v552, 1.0
    %v554 = vrcp.pop %v553
    %v555 = vmul.f32 1.0, %v554
    %v556 = vxor.u32 %v505, 2147483648
    %v557 = vmul.f32 %v556, 1.442695
    %v558 = vpow.pop %v557
    %v559 = vadd.f32 %v558, 1.0
    %v560 = vrcp.pop %v559
    %v561 = vmul.f32 1.0, %v560
    %v562 = vtanh.pop %v544
    %v563 = vxor.u32 %v546, 2147483648
    %v564 = vmul.f32 %v563, 1.442695
    %v565 = vpow.pop %v564
    %v566 = vadd.f32 %v565, 1.0
    %v567 = vrcp.pop %v566
    %v568 = vmul.f32 1.0, %v567
    %v569 = vmul.f32 %v561, 0.0
    %v570 = vmul.f32 %v555, %v562
    %v571 = vadd.f32 %v569, %v570
    %v572 = vtanh.pop %v571
    %v573 = vmul.f32 %v568, %v572
    %v574 = vpack.c.bf16 %v573, %v573
    %s575 = scalar_lea.vmem [#allocation2], 512
    %v576 = vld [vmem:[%s575] sm:$0xff]
    %v577 = vld [vmem:[%s575 + $0x8] sm:$0xff]
    %v578 = vld [vmem:[%s575 + $0x10] sm:$0xff]
    %v579 = vld [vmem:[%s575 + $0x18] sm:$0xff]
    %v580 = vld [vmem:[%s575 + $0x20] sm:$0xff]
    %v581 = vld [vmem:[%s575 + $0x28] sm:$0xff]
    %v582 = vld [vmem:[%s575 + $0x30] sm:$0xff]
    %v583 = vld [vmem:[%s575 + $0x38] sm:$0xff]
    %v584 = vld [vmem:[%s575 + $0x40] sm:$0xff]
    %v585 = vld [vmem:[%s575 + $0x48] sm:$0xff]
    %v586 = vld [vmem:[%s575 + $0x50] sm:$0xff]
    %v587 = vld [vmem:[%s575 + $0x58] sm:$0xff]
    %v588 = vld [vmem:[%s575 + $0x60] sm:$0xff]
    %v589 = vld [vmem:[%s575 + $0x68] sm:$0xff]
    %v590 = vld [vmem:[%s575 + $0x70] sm:$0xff]
    %v591 = vld [vmem:[%s575 + $0x78] sm:$0xff]
    %v592 = vld [vmem:[%s575 + $0x80] sm:$0xff]
    %v593 = vld [vmem:[%s575 + $0x88] sm:$0xff]
    %v594 = vld [vmem:[%s575 + $0x90] sm:$0xff]
    %v595 = vld [vmem:[%s575 + $0x98] sm:$0xff]
    %v596 = vld [vmem:[%s575 + $0xa0] sm:$0xff]
    %v597 = vld [vmem:[%s575 + $0xa8] sm:$0xff]
    %v598 = vld [vmem:[%s575 + $0xb0] sm:$0xff]
    %v599 = vld [vmem:[%s575 + $0xb8] sm:$0xff]
    %v600 = vld [vmem:[%s575 + $0xc0] sm:$0xff]
    %v601 = vld [vmem:[%s575 + $0xc8] sm:$0xff]
    %v602 = vld [vmem:[%s575 + $0xd0] sm:$0xff]
    %v603 = vld [vmem:[%s575 + $0xd8] sm:$0xff]
    %v604 = vld [vmem:[%s575 + $0xe0] sm:$0xff]
    %v605 = vld [vmem:[%s575 + $0xe8] sm:$0xff]
    %v606 = vld [vmem:[%s575 + $0xf0] sm:$0xff]
    %v607 = vld [vmem:[%s575 + $0xf8] sm:$0xff]
    %v608 = vld [vmem:[%s575 + $0x100] sm:$0xff]
    %v609 = vld [vmem:[%s575 + $0x108] sm:$0xff]
    %v610 = vld [vmem:[%s575 + $0x110] sm:$0xff]
    %v611 = vld [vmem:[%s575 + $0x118] sm:$0xff]
    %v612 = vld [vmem:[%s575 + $0x120] sm:$0xff]
    %v613 = vld [vmem:[%s575 + $0x128] sm:$0xff]
    %v614 = vld [vmem:[%s575 + $0x130] sm:$0xff]
    %v615 = vld [vmem:[%s575 + $0x138] sm:$0xff]
    %v616 = vld [vmem:[%s575 + $0x140] sm:$0xff]
    %v617 = vld [vmem:[%s575 + $0x148] sm:$0xff]
    %v618 = vld [vmem:[%s575 + $0x150] sm:$0xff]
    %v619 = vld [vmem:[%s575 + $0x158] sm:$0xff]
    %v620 = vld [vmem:[%s575 + $0x160] sm:$0xff]
    %v621 = vld [vmem:[%s575 + $0x168] sm:$0xff]
    %v622 = vld [vmem:[%s575 + $0x170] sm:$0xff]
    %v623 = vld [vmem:[%s575 + $0x178] sm:$0xff]
    %v624 = vld [vmem:[%s575 + $0x180] sm:$0xff]
    %v625 = vld [vmem:[%s575 + $0x188] sm:$0xff]
    %v626 = vld [vmem:[%s575 + $0x190] sm:$0xff]
    %v627 = vld [vmem:[%s575 + $0x198] sm:$0xff]
    %v628 = vld [vmem:[%s575 + $0x1a0] sm:$0xff]
    %v629 = vld [vmem:[%s575 + $0x1a8] sm:$0xff]
    %v630 = vld [vmem:[%s575 + $0x1b0] sm:$0xff]
    %v631 = vld [vmem:[%s575 + $0x1b8] sm:$0xff]
    %v632 = vld [vmem:[%s575 + $0x1c0] sm:$0xff]
    %v633 = vld [vmem:[%s575 + $0x1c8] sm:$0xff]
    %v634 = vld [vmem:[%s575 + $0x1d0] sm:$0xff]
    %v635 = vld [vmem:[%s575 + $0x1d8] sm:$0xff]
    %v636 = vld [vmem:[%s575 + $0x1e0] sm:$0xff]
    %v637 = vld [vmem:[%s575 + $0x1e8] sm:$0xff]
    %v638 = vld [vmem:[%s575 + $0x1f0] sm:$0xff]
    %v639 = vld [vmem:[%s575 + $0x1f8] sm:$0xff]
    %s640 = scalar_lea.vmem %s3, 4
    %v641 = vld [vmem:[%s640] sm:$0xf]
    %v643 = vlaneseq
    %v644 = vshrl.u32 %v643, 7
    %v645 = vsub.s32 0, %v644
    %v646 = vrot.slane %v641, %v645
    %v647 = vlaneseq
    %v648 = vshrl.u32 %v647, 7
    %v649 = vsub.s32 1, %v648
    %v650 = vrot.slane %v641, %v649
    %v651 = vlaneseq
    %v652 = vshrl.u32 %v651, 7
    %v653 = vsub.s32 2, %v652
    %v654 = vrot.slane %v641, %v653
    %v655 = vlaneseq
    %v656 = vshrl.u32 %v655, 7
    %v657 = vsub.s32 3, %v656
    %v658 = vrot.slane %v641, %v657
    %v727 = vunpack.c.l.b16 %v576
    %v728 = vunpack.c.h.b16 %v576
    %v729 = vunpack.c.l.b16 %v577
    %v730 = vunpack.c.h.b16 %v577
    %v731 = vunpack.c.l.b16 %v578
    %v732 = vunpack.c.h.b16 %v578
    %v733 = vunpack.c.l.b16 %v579
    %v734 = vunpack.c.h.b16 %v579
    %v735 = vunpack.c.l.b16 %v580
    %v736 = vunpack.c.h.b16 %v580
    %v737 = vunpack.c.l.b16 %v581
    %v738 = vunpack.c.h.b16 %v581
    %v739 = vunpack.c.l.b16 %v582
    %v740 = vunpack.c.h.b16 %v582
    %v741 = vunpack.c.l.b16 %v583
    %v742 = vunpack.c.h.b16 %v583
    %v743 = vunpack.c.l.b16 %v584
    %v744 = vunpack.c.h.b16 %v584
    %v745 = vunpack.c.l.b16 %v585
    %v746 = vunpack.c.h.b16 %v585
    %v747 = vunpack.c.l.b16 %v586
    %v748 = vunpack.c.h.b16 %v586
    %v749 = vunpack.c.l.b16 %v587
    %v750 = vunpack.c.h.b16 %v587
    %v751 = vunpack.c.l.b16 %v588
    %v752 = vunpack.c.h.b16 %v588
    %v753 = vunpack.c.l.b16 %v589
    %v754 = vunpack.c.h.b16 %v589
    %v755 = vunpack.c.l.b16 %v590
    %v756 = vunpack.c.h.b16 %v590
    %v757 = vunpack.c.l.b16 %v591
    %v758 = vunpack.c.h.b16 %v591
    %v759 = vunpack.c.l.b16 %v592
    %v760 = vunpack.c.h.b16 %v592
    %v761 = vunpack.c.l.b16 %v593
    %v762 = vunpack.c.h.b16 %v593
    %v763 = vunpack.c.l.b16 %v594
    %v764 = vunpack.c.h.b16 %v594
    %v765 = vunpack.c.l.b16 %v595
    %v766 = vunpack.c.h.b16 %v595
    %v767 = vunpack.c.l.b16 %v596
    %v768 = vunpack.c.h.b16 %v596
    %v769 = vunpack.c.l.b16 %v597
    %v770 = vunpack.c.h.b16 %v597
    %v771 = vunpack.c.l.b16 %v598
    %v772 = vunpack.c.h.b16 %v598
    %v773 = vunpack.c.l.b16 %v599
    %v774 = vunpack.c.h.b16 %v599
    %v775 = vunpack.c.l.b16 %v600
    %v776 = vunpack.c.h.b16 %v600
    %v777 = vunpack.c.l.b16 %v601
    %v778 = vunpack.c.h.b16 %v601
    %v779 = vunpack.c.l.b16 %v602
    %v780 = vunpack.c.h.b16 %v602
    %v781 = vunpack.c.l.b16 %v603
    %v782 = vunpack.c.h.b16 %v603
    %v783 = vunpack.c.l.b16 %v604
    %v784 = vunpack.c.h.b16 %v604
    %v785 = vunpack.c.l.b16 %v605
    %v786 = vunpack.c.h.b16 %v605
    %v787 = vunpack.c.l.b16 %v606
    %v788 = vunpack.c.h.b16 %v606
    %v789 = vunpack.c.l.b16 %v607
    %v790 = vunpack.c.h.b16 %v607
    %v791 = vunpack.c.l.b16 %v608
    %v792 = vunpack.c.h.b16 %v608
    %v793 = vunpack.c.l.b16 %v609
    %v794 = vunpack.c.h.b16 %v609
    %v795 = vunpack.c.l.b16 %v610
    %v796 = vunpack.c.h.b16 %v610
    %v797 = vunpack.c.l.b16 %v611
    %v798 = vunpack.c.h.b16 %v611
    %v799 = vunpack.c.l.b16 %v612
    %v800 = vunpack.c.h.b16 %v612
    %v801 = vunpack.c.l.b16 %v613
    %v802 = vunpack.c.h.b16 %v613
    %v803 = vunpack.c.l.b16 %v614
    %v804 = vunpack.c.h.b16 %v614
    %v805 = vunpack.c.l.b16 %v615
    %v806 = vunpack.c.h.b16 %v615
    %v807 = vunpack.c.l.b16 %v616
    %v808 = vunpack.c.h.b16 %v616
    %v809 = vunpack.c.l.b16 %v617
    %v810 = vunpack.c.h.b16 %v617
    %v811 = vunpack.c.l.b16 %v618
    %v812 = vunpack.c.h.b16 %v618
    %v813 = vunpack.c.l.b16 %v619
    %v814 = vunpack.c.h.b16 %v619
    %v815 = vunpack.c.l.b16 %v620
    %v816 = vunpack.c.h.b16 %v620
    %v817 = vunpack.c.l.b16 %v621
    %v818 = vunpack.c.h.b16 %v621
    %v819 = vunpack.c.l.b16 %v622
    %v820 = vunpack.c.h.b16 %v622
    %v821 = vunpack.c.l.b16 %v623
    %v822 = vunpack.c.h.b16 %v623
    %v823 = vunpack.c.l.b16 %v624
    %v824 = vunpack.c.h.b16 %v624
    %v825 = vunpack.c.l.b16 %v625
    %v826 = vunpack.c.h.b16 %v625
    %v827 = vunpack.c.l.b16 %v626
    %v828 = vunpack.c.h.b16 %v626
    %v829 = vunpack.c.l.b16 %v627
    %v830 = vunpack.c.h.b16 %v627
    %v831 = vunpack.c.l.b16 %v628
    %v832 = vunpack.c.h.b16 %v628
    %v833 = vunpack.c.l.b16 %v629
    %v834 = vunpack.c.h.b16 %v629
    %v835 = vunpack.c.l.b16 %v630
    %v836 = vunpack.c.h.b16 %v630
    %v837 = vunpack.c.l.b16 %v631
    %v838 = vunpack.c.h.b16 %v631
    %v839 = vunpack.c.l.b16 %v632
    %v840 = vunpack.c.h.b16 %v632
    %v841 = vunpack.c.l.b16 %v633
    %v842 = vunpack.c.h.b16 %v633
    %v843 = vunpack.c.l.b16 %v634
    %v844 = vunpack.c.h.b16 %v634
    %v845 = vunpack.c.l.b16 %v635
    %v846 = vunpack.c.h.b16 %v635
    %v847 = vunpack.c.l.b16 %v636
    %v848 = vunpack.c.h.b16 %v636
    %v849 = vunpack.c.l.b16 %v637
    %v850 = vunpack.c.h.b16 %v637
    %v851 = vunpack.c.l.b16 %v638
    %v852 = vunpack.c.h.b16 %v638
    %v853 = vunpack.c.l.b16 %v639
    %v854 = vunpack.c.h.b16 %v639
    %v855 = vpack.c.b16 %v731, %v727
    %v856 = vpack.c.b16 %v732, %v728
    %v857 = vpack.c.b16 %v733, %v729
    %v858 = vpack.c.b16 %v734, %v730
    %v859 = vpack.c.b16 %v739, %v735
    %v860 = vpack.c.b16 %v740, %v736
    %v861 = vpack.c.b16 %v741, %v737
    %v862 = vpack.c.b16 %v742, %v738
    %v863 = vpack.c.b16 %v747, %v743
    %v864 = vpack.c.b16 %v748, %v744
    %v865 = vpack.c.b16 %v749, %v745
    %v866 = vpack.c.b16 %v750, %v746
    %v867 = vpack.c.b16 %v755, %v751
    %v868 = vpack.c.b16 %v756, %v752
    %v869 = vpack.c.b16 %v757, %v753
    %v870 = vpack.c.b16 %v758, %v754
    %v871 = vpack.c.b16 %v763, %v759
    %v872 = vpack.c.b16 %v764, %v760
    %v873 = vpack.c.b16 %v765, %v761
    %v874 = vpack.c.b16 %v766, %v762
    %v875 = vpack.c.b16 %v771, %v767
    %v876 = vpack.c.b16 %v772, %v768
    %v877 = vpack.c.b16 %v773, %v769
    %v878 = vpack.c.b16 %v774, %v770
    %v879 = vpack.c.b16 %v779, %v775
    %v880 = vpack.c.b16 %v780, %v776
    %v881 = vpack.c.b16 %v781, %v777
    %v882 = vpack.c.b16 %v782, %v778
    %v883 = vpack.c.b16 %v787, %v783
    %v884 = vpack.c.b16 %v788, %v784
    %v885 = vpack.c.b16 %v789, %v785
    %v886 = vpack.c.b16 %v790, %v786
    %v887 = vpack.c.b16 %v795, %v791
    %v888 = vpack.c.b16 %v796, %v792
    %v889 = vpack.c.b16 %v797, %v793
    %v890 = vpack.c.b16 %v798, %v794
    %v891 = vpack.c.b16 %v803, %v799
    %v892 = vpack.c.b16 %v804, %v800
    %v893 = vpack.c.b16 %v805, %v801
    %v894 = vpack.c.b16 %v806, %v802
    %v895 = vpack.c.b16 %v811, %v807
    %v896 = vpack.c.b16 %v812, %v808
    %v897 = vpack.c.b16 %v813, %v809
    %v898 = vpack.c.b16 %v814, %v810
    %v899 = vpack.c.b16 %v819, %v815
    %v900 = vpack.c.b16 %v820, %v816
    %v901 = vpack.c.b16 %v821, %v817
    %v902 = vpack.c.b16 %v822, %v818
    %v903 = vpack.c.b16 %v827, %v823
    %v904 = vpack.c.b16 %v828, %v824
    %v905 = vpack.c.b16 %v829, %v825
    %v906 = vpack.c.b16 %v830, %v826
    %v907 = vpack.c.b16 %v835, %v831
    %v908 = vpack.c.b16 %v836, %v832
    %v909 = vpack.c.b16 %v837, %v833
    %v910 = vpack.c.b16 %v838, %v834
    %v911 = vpack.c.b16 %v843, %v839
    %v912 = vpack.c.b16 %v844, %v840
    %v913 = vpack.c.b16 %v845, %v841
    %v914 = vpack.c.b16 %v846, %v842
    %v915 = vpack.c.b16 %v851, %v847
    %v916 = vpack.c.b16 %v852, %v848
    %v917 = vpack.c.b16 %v853, %v849
    %v918 = vpack.c.b16 %v854, %v850
    %983 = vmatprep.subr.bf16.mxu0 %v856
    %984 = vmatpush1.bf16.msra.mxu0 %v855
    %985 = vmatprep.subr.bf16.mxu0 %v860
    %986 = vmatpush1.bf16.msra.mxu0 %v859
    %987 = vmatprep.subr.bf16.mxu0 %v864
    %988 = vmatpush1.bf16.msra.mxu0 %v863
    %989 = vmatprep.subr.bf16.mxu0 %v868
    %990 = vmatpush1.bf16.msra.mxu0 %v867
    %991 = vmatprep.subr.bf16.mxu0 %v872
    %992 = vmatpush1.bf16.msra.mxu0 %v871
    %993 = vmatprep.subr.bf16.mxu0 %v876
    %994 = vmatpush1.bf16.msra.mxu0 %v875
    %995 = vmatprep.subr.bf16.mxu0 %v880
    %996 = vmatpush1.bf16.msra.mxu0 %v879
    %997 = vmatprep.subr.bf16.mxu0 %v884
    %998 = vmatpush1.bf16.msra.mxu0 %v883
    %999 = vmatprep.subr.bf16.mxu0 %v888
    %1000 = vmatpush1.bf16.msra.mxu0 %v887
    %1001 = vmatprep.subr.bf16.mxu0 %v892
    %1002 = vmatpush1.bf16.msra.mxu0 %v891
    %1003 = vmatprep.subr.bf16.mxu0 %v896
    %1004 = vmatpush1.bf16.msra.mxu0 %v895
    %1005 = vmatprep.subr.bf16.mxu0 %v900
    %1006 = vmatpush1.bf16.msra.mxu0 %v899
    %1007 = vmatprep.subr.bf16.mxu0 %v904
    %1008 = vmatpush1.bf16.msra.mxu0 %v903
    %1009 = vmatprep.subr.bf16.mxu0 %v908
    %1010 = vmatpush1.bf16.msra.mxu0 %v907
    %1011 = vmatprep.subr.bf16.mxu0 %v912
    %1012 = vmatpush1.bf16.msra.mxu0 %v911
    %1013 = vmatprep.subr.bf16.mxu0 %v916
    %1014 = vmatpush1.bf16.msra.mxu0 %v915
    %1015 = vmatprep.mubr.bf16.mxu0 0
    %1016 = vmatmul.mubr.bf16.gmra.mrb[0].mxu0 %v574
    %v1017 = vpop.f32.mrb[0].mxu0
    %v1018 = vadd.f32 %v646, %v1017
    %v1019 = vpop.f32.mrb[0].mxu0
    %v1020 = vadd.f32 %v650, %v1019
    %v1021 = vpop.f32.mrb[0].mxu0
    %v1022 = vpop.f32.mrb[0].mxu0
    %1023 = vdwg.mxu0
    %1024 = vmatprep.subr.bf16.mxu0 %v858
    %1025 = vmatpush1.bf16.msra.mxu0 %v857
    %1026 = vmatprep.subr.bf16.mxu0 %v862
    %1027 = vmatpush1.bf16.msra.mxu0 %v861
    %1028 = vmatprep.subr.bf16.mxu0 %v866
    %1029 = vmatpush1.bf16.msra.mxu0 %v865
    %1030 = vmatprep.subr.bf16.mxu0 %v870
    %1031 = vmatpush1.bf16.msra.mxu0 %v869
    %1032 = vmatprep.subr.bf16.mxu0 %v874
    %1033 = vmatpush1.bf16.msra.mxu0 %v873
    %1034 = vmatprep.subr.bf16.mxu0 %v878
    %1035 = vmatpush1.bf16.msra.mxu0 %v877
    %1036 = vmatprep.subr.bf16.mxu0 %v882
    %1037 = vmatpush1.bf16.msra.mxu0 %v881
    %1038 = vmatprep.subr.bf16.mxu0 %v886
    %1039 = vmatpush1.bf16.msra.mxu0 %v885
    %1040 = vmatprep.subr.bf16.mxu0 %v890
    %1041 = vmatpush1.bf16.msra.mxu0 %v889
    %1042 = vmatprep.subr.bf16.mxu0 %v894
    %1043 = vmatpush1.bf16.msra.mxu0 %v893
    %1044 = vmatprep.subr.bf16.mxu0 %v898
    %1045 = vmatpush1.bf16.msra.mxu0 %v897
    %1046 = vmatprep.subr.bf16.mxu0 %v902
    %1047 = vmatpush1.bf16.msra.mxu0 %v901
    %1048 = vmatprep.subr.bf16.mxu0 %v906
    %1049 = vmatpush1.bf16.msra.mxu0 %v905
    %1050 = vmatprep.subr.bf16.mxu0 %v910
    %1051 = vmatpush1.bf16.msra.mxu0 %v909
    %1052 = vmatprep.subr.bf16.mxu0 %v914
    %1053 = vmatpush1.bf16.msra.mxu0 %v913
    %1054 = vmatprep.subr.bf16.mxu0 %v918
    %1055 = vmatpush1.bf16.msra.mxu0 %v917
    %1056 = vmatprep.mubr.bf16.mxu0 0
    %1057 = vmatmul.mubr.bf16.gmra.mrb[0].mxu0 %v574
    %v1058 = vpop.f32.mrb[0].mxu0
    %v1059 = vadd.f32 %v654, %v1058
    %v1060 = vpop.f32.mrb[0].mxu0
    %v1061 = vadd.f32 %v658, %v1060
    %v1062 = vpop.f32.mrb[0].mxu0
    %v1063 = vpop.f32.mrb[0].mxu0
    %1064 = vdwg.mxu0
    %v1065 = vxor.u32 %v1018, 2147483648
    %v1066 = vmul.f32 %v1065, 1.442695
    %v1067 = vpow.pop %v1066
    %v1068 = vadd.f32 %v1067, 1.0
    %v1069 = vrcp.pop %v1068
    %v1070 = vmul.f32 1.0, %v1069
    %v1071 = vxor.u32 %v1020, 2147483648
    %v1072 = vmul.f32 %v1071, 1.442695
    %v1073 = vpow.pop %v1072
    %v1074 = vadd.f32 %v1073, 1.0
    %v1075 = vrcp.pop %v1074
    %v1076 = vmul.f32 1.0, %v1075
    %v1077 = vtanh.pop %v1059
    %v1078 = vxor.u32 %v1061, 2147483648
    %v1079 = vmul.f32 %v1078, 1.442695
    %v1080 = vpow.pop %v1079
    %v1081 = vadd.f32 %v1080, 1.0
    %v1082 = vrcp.pop %v1081
    %v1083 = vmul.f32 1.0, %v1082
    %v1084 = vmul.f32 %v1076, 0.0
    %v1085 = vmul.f32 %v1070, %v1077
    %v1086 = vadd.f32 %v1084, %v1085
    %v1087 = vtanh.pop %v1086
    %v1088 = vmul.f32 %v1083, %v1087
    %v1089 = vpack.c.bf16 %v1088, %v1088
    %s1090 = scalar_lea.vmem %s0, 4
    %v1091 = vld [vmem:[%s1090] sm:$0xf]
    %1092 = vmatprep.subr.bf16.mxu0 %v341
    %1093 = vmatpush1.bf16.msra.mxu0 %v340
    %1094 = vmatprep.subr.bf16.mxu0 %v345
    %1095 = vmatpush1.bf16.msra.mxu0 %v344
    %1096 = vmatprep.subr.bf16.mxu0 %v349
    %1097 = vmatpush1.bf16.msra.mxu0 %v348
    %1098 = vmatprep.subr.bf16.mxu0 %v353
    %1099 = vmatpush1.bf16.msra.mxu0 %v352
    %1100 = vmatprep.subr.bf16.mxu0 %v357
    %1101 = vmatpush1.bf16.msra.mxu0 %v356
    %1102 = vmatprep.subr.bf16.mxu0 %v361
    %1103 = vmatpush1.bf16.msra.mxu0 %v360
    %1104 = vmatprep.subr.bf16.mxu0 %v365
    %1105 = vmatpush1.bf16.msra.mxu0 %v364
    %1106 = vmatprep.subr.bf16.mxu0 %v369
    %1107 = vmatpush1.bf16.msra.mxu0 %v368
    %1108 = vmatprep.subr.bf16.mxu0 %v373
    %1109 = vmatpush1.bf16.msra.mxu0 %v372
    %1110 = vmatprep.subr.bf16.mxu0 %v377
    %1111 = vmatpush1.bf16.msra.mxu0 %v376
    %1112 = vmatprep.subr.bf16.mxu0 %v381
    %1113 = vmatpush1.bf16.msra.mxu0 %v380
    %1114 = vmatprep.subr.bf16.mxu0 %v385
    %1115 = vmatpush1.bf16.msra.mxu0 %v384
    %1116 = vmatprep.subr.bf16.mxu0 %v389
    %1117 = vmatpush1.bf16.msra.mxu0 %v388
    %1118 = vmatprep.subr.bf16.mxu0 %v393
    %1119 = vmatpush1.bf16.msra.mxu0 %v392
    %1120 = vmatprep.subr.bf16.mxu0 %v397
    %1121 = vmatpush1.bf16.msra.mxu0 %v396
    %1122 = vmatprep.subr.bf16.mxu0 %v401
    %1123 = vmatpush1.bf16.msra.mxu0 %v400
    %1124 = vmatprep.mubr.bf16.mxu0 %v574
    %1125 = vmatmul.mubr.bf16.gmra.mrb[0].mxu0 %v1091
    %v1126 = vpop.f32.mrb[0].mxu0
    %v1127 = vadd.f32 %v131, %v1126
    %v1128 = vpop.f32.mrb[0].mxu0
    %v1129 = vadd.f32 %v135, %v1128
    %v1130 = vpop.f32.mrb[0].mxu0
    %v1131 = vpop.f32.mrb[0].mxu0
    %1132 = vdwg.mxu0
    %1133 = vmatprep.subr.bf16.mxu0 %v343
    %1134 = vmatpush1.bf16.msra.mxu0 %v342
    %1135 = vmatprep.subr.bf16.mxu0 %v347
    %1136 = vmatpush1.bf16.msra.mxu0 %v346
    %1137 = vmatprep.subr.bf16.mxu0 %v351
    %1138 = vmatpush1.bf16.msra.mxu0 %v350
    %1139 = vmatprep.subr.bf16.mxu0 %v355
    %1140 = vmatpush1.bf16.msra.mxu0 %v354
    %1141 = vmatprep.subr.bf16.mxu0 %v359
    %1142 = vmatpush1.bf16.msra.mxu0 %v358
    %1143 = vmatprep.subr.bf16.mxu0 %v363
    %1144 = vmatpush1.bf16.msra.mxu0 %v362
    %1145 = vmatprep.subr.bf16.mxu0 %v367
    %1146 = vmatpush1.bf16.msra.mxu0 %v366
    %1147 = vmatprep.subr.bf16.mxu0 %v371
    %1148 = vmatpush1.bf16.msra.mxu0 %v370
    %1149 = vmatprep.subr.bf16.mxu0 %v375
    %1150 = vmatpush1.bf16.msra.mxu0 %v374
    %1151 = vmatprep.subr.bf16.mxu0 %v379
    %1152 = vmatpush1.bf16.msra.mxu0 %v378
    %1153 = vmatprep.subr.bf16.mxu0 %v383
    %1154 = vmatpush1.bf16.msra.mxu0 %v382
    %1155 = vmatprep.subr.bf16.mxu0 %v387
    %1156 = vmatpush1.bf16.msra.mxu0 %v386
    %1157 = vmatprep.subr.bf16.mxu0 %v391
    %1158 = vmatpush1.bf16.msra.mxu0 %v390
    %1159 = vmatprep.subr.bf16.mxu0 %v395
    %1160 = vmatpush1.bf16.msra.mxu0 %v394
    %1161 = vmatprep.subr.bf16.mxu0 %v399
    %1162 = vmatpush1.bf16.msra.mxu0 %v398
    %1163 = vmatprep.subr.bf16.mxu0 %v403
    %1164 = vmatpush1.bf16.msra.mxu0 %v402
    %1165 = vmatprep.mubr.bf16.mxu0 %v574
    %1166 = vmatmul.mubr.bf16.gmra.mrb[0].mxu0 %v1091
    %v1167 = vpop.f32.mrb[0].mxu0
    %v1168 = vadd.f32 %v139, %v1167
    %v1169 = vpop.f32.mrb[0].mxu0
    %v1170 = vadd.f32 %v143, %v1169
    %v1171 = vpop.f32.mrb[0].mxu0
    %v1172 = vpop.f32.mrb[0].mxu0
    %1173 = vdwg.mxu0
    %v1174 = vxor.u32 %v1127, 2147483648
    %v1175 = vmul.f32 %v1174, 1.442695
    %v1176 = vpow.pop %v1175
    %v1177 = vadd.f32 %v1176, 1.0
    %v1178 = vrcp.pop %v1177
    %v1179 = vmul.f32 1.0, %v1178
    %v1180 = vxor.u32 %v1129, 2147483648
    %v1181 = vmul.f32 %v1180, 1.442695
    %v1182 = vpow.pop %v1181
    %v1183 = vadd.f32 %v1182, 1.0
    %v1184 = vrcp.pop %v1183
    %v1185 = vmul.f32 1.0, %v1184
    %v1186 = vtanh.pop %v1168
    %v1187 = vxor.u32 %v1170, 2147483648
    %v1188 = vmul.f32 %v1187, 1.442695
    %v1189 = vpow.pop %v1188
    %v1190 = vadd.f32 %v1189, 1.0
    %v1191 = vrcp.pop %v1190
    %v1192 = vmul.f32 1.0, %v1191
    %v1193 = vmul.f32 %v1185, %v571
    %v1194 = vmul.f32 %v1179, %v1186
    %v1195 = vadd.f32 %v1193, %v1194
    %v1196 = vtanh.pop %v1195
    %v1197 = vmul.f32 %v1192, %v1196
    %v1198 = vpack.c.bf16 %v1197, %v1197
    %1199 = vmatprep.subr.bf16.mxu0 %v856
    %1200 = vmatpush1.bf16.msra.mxu0 %v855
    %1201 = vmatprep.subr.bf16.mxu0 %v860
    %1202 = vmatpush1.bf16.msra.mxu0 %v859
    %1203 = vmatprep.subr.bf16.mxu0 %v864
    %1204 = vmatpush1.bf16.msra.mxu0 %v863
    %1205 = vmatprep.subr.bf16.mxu0 %v868
    %1206 = vmatpush1.bf16.msra.mxu0 %v867
    %1207 = vmatprep.subr.bf16.mxu0 %v872
    %1208 = vmatpush1.bf16.msra.mxu0 %v871
    %1209 = vmatprep.subr.bf16.mxu0 %v876
    %1210 = vmatpush1.bf16.msra.mxu0 %v875
    %1211 = vmatprep.subr.bf16.mxu0 %v880
    %1212 = vmatpush1.bf16.msra.mxu0 %v879
    %1213 = vmatprep.subr.bf16.mxu0 %v884
    %1214 = vmatpush1.bf16.msra.mxu0 %v883
    %1215 = vmatprep.subr.bf16.mxu0 %v888
    %1216 = vmatpush1.bf16.msra.mxu0 %v887
    %1217 = vmatprep.subr.bf16.mxu0 %v892
    %1218 = vmatpush1.bf16.msra.mxu0 %v891
    %1219 = vmatprep.subr.bf16.mxu0 %v896
    %1220 = vmatpush1.bf16.msra.mxu0 %v895
    %1221 = vmatprep.subr.bf16.mxu0 %v900
    %1222 = vmatpush1.bf16.msra.mxu0 %v899
    %1223 = vmatprep.subr.bf16.mxu0 %v904
    %1224 = vmatpush1.bf16.msra.mxu0 %v903
    %1225 = vmatprep.subr.bf16.mxu0 %v908
    %1226 = vmatpush1.bf16.msra.mxu0 %v907
    %1227 = vmatprep.subr.bf16.mxu0 %v912
    %1228 = vmatpush1.bf16.msra.mxu0 %v911
    %1229 = vmatprep.subr.bf16.mxu0 %v916
    %1230 = vmatpush1.bf16.msra.mxu0 %v915
    %1231 = vmatprep.mubr.bf16.mxu0 %v1089
    %1232 = vmatmul.mubr.bf16.gmra.mrb[0].mxu0 %v1198
    %v1233 = vpop.f32.mrb[0].mxu0
    %v1234 = vadd.f32 %v646, %v1233
    %v1235 = vpop.f32.mrb[0].mxu0
    %v1236 = vadd.f32 %v650, %v1235
    %v1237 = vpop.f32.mrb[0].mxu0
    %v1238 = vpop.f32.mrb[0].mxu0
    %1239 = vdwg.mxu0
    %1240 = vmatprep.subr.bf16.mxu0 %v858
    %1241 = vmatpush1.bf16.msra.mxu0 %v857
    %1242 = vmatprep.subr.bf16.mxu0 %v862
    %1243 = vmatpush1.bf16.msra.mxu0 %v861
    %1244 = vmatprep.subr.bf16.mxu0 %v866
    %1245 = vmatpush1.bf16.msra.mxu0 %v865
    %1246 = vmatprep.subr.bf16.mxu0 %v870
    %1247 = vmatpush1.bf16.msra.mxu0 %v869
    %1248 = vmatprep.subr.bf16.mxu0 %v874
    %1249 = vmatpush1.bf16.msra.mxu0 %v873
    %1250 = vmatprep.subr.bf16.mxu0 %v878
    %1251 = vmatpush1.bf16.msra.mxu0 %v877
    %1252 = vmatprep.subr.bf16.mxu0 %v882
    %1253 = vmatpush1.bf16.msra.mxu0 %v881
    %1254 = vmatprep.subr.bf16.mxu0 %v886
    %1255 = vmatpush1.bf16.msra.mxu0 %v885
    %1256 = vmatprep.subr.bf16.mxu0 %v890
    %1257 = vmatpush1.bf16.msra.mxu0 %v889
    %1258 = vmatprep.subr.bf16.mxu0 %v894
    %1259 = vmatpush1.bf16.msra.mxu0 %v893
    %1260 = vmatprep.subr.bf16.mxu0 %v898
    %1261 = vmatpush1.bf16.msra.mxu0 %v897
    %1262 = vmatprep.subr.bf16.mxu0 %v902
    %1263 = vmatpush1.bf16.msra.mxu0 %v901
    %1264 = vmatprep.subr.bf16.mxu0 %v906
    %1265 = vmatpush1.bf16.msra.mxu0 %v905
    %1266 = vmatprep.subr.bf16.mxu0 %v910
    %1267 = vmatpush1.bf16.msra.mxu0 %v909
    %1268 = vmatprep.subr.bf16.mxu0 %v914
    %1269 = vmatpush1.bf16.msra.mxu0 %v913
    %1270 = vmatprep.subr.bf16.mxu0 %v918
    %1271 = vmatpush1.bf16.msra.mxu0 %v917
    %1272 = vmatprep.mubr.bf16.mxu0 %v1089
    %1273 = vmatmul.mubr.bf16.gmra.mrb[0].mxu0 %v1198
    %v1274 = vpop.f32.mrb[0].mxu0
    %v1275 = vadd.f32 %v654, %v1274
    %v1276 = vpop.f32.mrb[0].mxu0
    %v1277 = vadd.f32 %v658, %v1276
    %v1278 = vpop.f32.mrb[0].mxu0
    %v1279 = vpop.f32.mrb[0].mxu0
    %1280 = vdwg.mxu0
    %v1281 = vxor.u32 %v1234, 2147483648
    %v1282 = vmul.f32 %v1281, 1.442695
    %v1283 = vpow.pop %v1282
    %v1284 = vadd.f32 %v1283, 1.0
    %v1285 = vrcp.pop %v1284
    %v1286 = vmul.f32 1.0, %v1285
    %v1287 = vxor.u32 %v1236, 2147483648
    %v1288 = vmul.f32 %v1287, 1.442695
    %v1289 = vpow.pop %v1288
    %v1290 = vadd.f32 %v1289, 1.0
    %v1291 = vrcp.pop %v1290
    %v1292 = vmul.f32 1.0, %v1291
    %v1293 = vtanh.pop %v1275
    %v1294 = vxor.u32 %v1277, 2147483648
    %v1295 = vmul.f32 %v1294, 1.442695
    %v1296 = vpow.pop %v1295
    %v1297 = vadd.f32 %v1296, 1.0
    %v1298 = vrcp.pop %v1297
    %v1299 = vmul.f32 1.0, %v1298
    %v1300 = vmul.f32 %v1292, %v1086
    %v1301 = vmul.f32 %v1286, %v1293
    %v1302 = vadd.f32 %v1300, %v1301
    %v1303 = vtanh.pop %v1302
    %v1304 = vmul.f32 %v1299, %v1303
    %v1305 = vpack.c.bf16 %v1304, %v1304
    %s1306 = scalar_lea.vmem %s0, 8
    %v1307 = vld [vmem:[%s1306] sm:$0xf]
    %1308 = vmatprep.subr.bf16.mxu0 %v341
    %1309 = vmatpush1.bf16.msra.mxu0 %v340
    %1310 = vmatprep.subr.bf16.mxu0 %v345
    %1311 = vmatpush1.bf16.msra.mxu0 %v344
    %1312 = vmatprep.subr.bf16.mxu0 %v349
    %1313 = vmatpush1.bf16.msra.mxu0 %v348
    %1314 = vmatprep.subr.bf16.mxu0 %v353
    %1315 = vmatpush1.bf16.msra.mxu0 %v352
    %1316 = vmatprep.subr.bf16.mxu0 %v357
    %1317 = vmatpush1.bf16.msra.mxu0 %v356
    %1318 = vmatprep.subr.bf16.mxu0 %v361
    %1319 = vmatpush1.bf16.msra.mxu0 %v360
    %1320 = vmatprep.subr.bf16.mxu0 %v365
    %1321 = vmatpush1.bf16.msra.mxu0 %v364
    %1322 = vmatprep.subr.bf16.mxu0 %v369
    %1323 = vmatpush1.bf16.msra.mxu0 %v368
    %1324 = vmatprep.subr.bf16.mxu0 %v373
    %1325 = vmatpush1.bf16.msra.mxu0 %v372
    %1326 = vmatprep.subr.bf16.mxu0 %v377
    %1327 = vmatpush1.bf16.msra.mxu0 %v376
    %1328 = vmatprep.subr.bf16.mxu0 %v381
    %1329 = vmatpush1.bf16.msra.mxu0 %v380
    %1330 = vmatprep.subr.bf16.mxu0 %v385
    %1331 = vmatpush1.bf16.msra.mxu0 %v384
    %1332 = vmatprep.subr.bf16.mxu0 %v389
    %1333 = vmatpush1.bf16.msra.mxu0 %v388
    %1334 = vmatprep.subr.bf16.mxu0 %v393
    %1335 = vmatpush1.bf16.msra.mxu0 %v392
    %1336 = vmatprep.subr.bf16.mxu0 %v397
    %1337 = vmatpush1.bf16.msra.mxu0 %v396
    %1338 = vmatprep.subr.bf16.mxu0 %v401
    %1339 = vmatpush1.bf16.msra.mxu0 %v400
    %1340 = vmatprep.mubr.bf16.mxu0 %v1198
    %1341 = vmatmul.mubr.bf16.gmra.mrb[0].mxu0 %v1307
    %v1342 = vpop.f32.mrb[0].mxu0
    %v1343 = vadd.f32 %v131, %v1342
    %v1344 = vpop.f32.mrb[0].mxu0
    %v1345 = vadd.f32 %v135, %v1344
    %v1346 = vpop.f32.mrb[0].mxu0
    %v1347 = vpop.f32.mrb[0].mxu0
    %1348 = vdwg.mxu0
    %1349 = vmatprep.subr.bf16.mxu0 %v343
    %1350 = vmatpush1.bf16.msra.mxu0 %v342
    %1351 = vmatprep.subr.bf16.mxu0 %v347
    %1352 = vmatpush1.bf16.msra.mxu0 %v346
    %1353 = vmatprep.subr.bf16.mxu0 %v351
    %1354 = vmatpush1.bf16.msra.mxu0 %v350
    %1355 = vmatprep.subr.bf16.mxu0 %v355
    %1356 = vmatpush1.bf16.msra.mxu0 %v354
    %1357 = vmatprep.subr.bf16.mxu0 %v359
    %1358 = vmatpush1.bf16.msra.mxu0 %v358
    %1359 = vmatprep.subr.bf16.mxu0 %v363
    %1360 = vmatpush1.bf16.msra.mxu0 %v362
    %1361 = vmatprep.subr.bf16.mxu0 %v367
    %1362 = vmatpush1.bf16.msra.mxu0 %v366
    %1363 = vmatprep.subr.bf16.mxu0 %v371
    %1364 = vmatpush1.bf16.msra.mxu0 %v370
    %1365 = vmatprep.subr.bf16.mxu0 %v375
    %1366 = vmatpush1.bf16.msra.mxu0 %v374
    %1367 = vmatprep.subr.bf16.mxu0 %v379
    %1368 = vmatpush1.bf16.msra.mxu0 %v378
    %1369 = vmatprep.subr.bf16.mxu0 %v383
    %1370 = vmatpush1.bf16.msra.mxu0 %v382
    %1371 = vmatprep.subr.bf16.mxu0 %v387
    %1372 = vmatpush1.bf16.msra.mxu0 %v386
    %1373 = vmatprep.subr.bf16.mxu0 %v391
    %1374 = vmatpush1.bf16.msra.mxu0 %v390
    %1375 = vmatprep.subr.bf16.mxu0 %v395
    %1376 = vmatpush1.bf16.msra.mxu0 %v394
    %1377 = vmatprep.subr.bf16.mxu0 %v399
    %1378 = vmatpush1.bf16.msra.mxu0 %v398
    %1379 = vmatprep.subr.bf16.mxu0 %v403
    %1380 = vmatpush1.bf16.msra.mxu0 %v402
    %1381 = vmatprep.mubr.bf16.mxu0 %v1198
    %1382 = vmatmul.mubr.bf16.gmra.mrb[0].mxu0 %v1307
    %v1383 = vpop.f32.mrb[0].mxu0
    %v1384 = vadd.f32 %v139, %v1383
    %v1385 = vpop.f32.mrb[0].mxu0
    %v1386 = vadd.f32 %v143, %v1385
    %v1387 = vpop.f32.mrb[0].mxu0
    %v1388 = vpop.f32.mrb[0].mxu0
    %1389 = vdwg.mxu0
    %v1390 = vxor.u32 %v1343, 2147483648
    %v1391 = vmul.f32 %v1390, 1.442695
    %v1392 = vpow.pop %v1391
    %v1393 = vadd.f32 %v1392, 1.0
    %v1394 = vrcp.pop %v1393
    %v1395 = vmul.f32 1.0, %v1394
    %v1396 = vxor.u32 %v1345, 2147483648
    %v1397 = vmul.f32 %v1396, 1.442695
    %v1398 = vpow.pop %v1397
    %v1399 = vadd.f32 %v1398, 1.0
    %v1400 = vrcp.pop %v1399
    %v1401 = vmul.f32 1.0, %v1400
    %v1402 = vtanh.pop %v1384
    %v1403 = vxor.u32 %v1386, 2147483648
    %v1404 = vmul.f32 %v1403, 1.442695
    %v1405 = vpow.pop %v1404
    %v1406 = vadd.f32 %v1405, 1.0
    %v1407 = vrcp.pop %v1406
    %v1408 = vmul.f32 1.0, %v1407
    %v1409 = vmul.f32 %v1401, %v1195
    %v1410 = vmul.f32 %v1395, %v1402
    %v1411 = vadd.f32 %v1409, %v1410
    %v1412 = vtanh.pop %v1411
    %v1413 = vmul.f32 %v1408, %v1412
    %v1414 = vpack.c.bf16 %v1413, %v1413
    %1415 = vmatprep.subr.bf16.mxu0 %v856
    %1416 = vmatpush1.bf16.msra.mxu0 %v855
    %1417 = vmatprep.subr.bf16.mxu0 %v860
    %1418 = vmatpush1.bf16.msra.mxu0 %v859
    %1419 = vmatprep.subr.bf16.mxu0 %v864
    %1420 = vmatpush1.bf16.msra.mxu0 %v863
    %1421 = vmatprep.subr.bf16.mxu0 %v868
    %1422 = vmatpush1.bf16.msra.mxu0 %v867
    %1423 = vmatprep.subr.bf16.mxu0 %v872
    %1424 = vmatpush1.bf16.msra.mxu0 %v871
    %1425 = vmatprep.subr.bf16.mxu0 %v876
    %1426 = vmatpush1.bf16.msra.mxu0 %v875
    %1427 = vmatprep.subr.bf16.mxu0 %v880
    %1428 = vmatpush1.bf16.msra.mxu0 %v879
    %1429 = vmatprep.subr.bf16.mxu0 %v884
    %1430 = vmatpush1.bf16.msra.mxu0 %v883
    %1431 = vmatprep.subr.bf16.mxu0 %v888
    %1432 = vmatpush1.bf16.msra.mxu0 %v887
    %1433 = vmatprep.subr.bf16.mxu0 %v892
    %1434 = vmatpush1.bf16.msra.mxu0 %v891
    %1435 = vmatprep.subr.bf16.mxu0 %v896
    %1436 = vmatpush1.bf16.msra.mxu0 %v895
    %1437 = vmatprep.subr.bf16.mxu0 %v900
    %1438 = vmatpush1.bf16.msra.mxu0 %v899
    %1439 = vmatprep.subr.bf16.mxu0 %v904
    %1440 = vmatpush1.bf16.msra.mxu0 %v903
    %1441 = vmatprep.subr.bf16.mxu0 %v908
    %1442 = vmatpush1.bf16.msra.mxu0 %v907
    %1443 = vmatprep.subr.bf16.mxu0 %v912
    %1444 = vmatpush1.bf16.msra.mxu0 %v911
    %1445 = vmatprep.subr.bf16.mxu0 %v916
    %1446 = vmatpush1.bf16.msra.mxu0 %v915
    %1447 = vmatprep.mubr.bf16.mxu0 %v1305
    %1448 = vmatmul.mubr.bf16.gmra.mrb[0].mxu0 %v1414
    %v1449 = vpop.f32.mrb[0].mxu0
    %v1450 = vadd.f32 %v646, %v1449
    %v1451 = vpop.f32.mrb[0].mxu0
    %v1452 = vadd.f32 %v650, %v1451
    %v1453 = vpop.f32.mrb[0].mxu0
    %v1454 = vpop.f32.mrb[0].mxu0
    %1455 = vdwg.mxu0
    %1456 = vmatprep.subr.bf16.mxu0 %v858
    %1457 = vmatpush1.bf16.msra.mxu0 %v857
    %1458 = vmatprep.subr.bf16.mxu0 %v862
    %1459 = vmatpush1.bf16.msra.mxu0 %v861
    %1460 = vmatprep.subr.bf16.mxu0 %v866
    %1461 = vmatpush1.bf16.msra.mxu0 %v865
    %1462 = vmatprep.subr.bf16.mxu0 %v870
    %1463 = vmatpush1.bf16.msra.mxu0 %v869
    %1464 = vmatprep.subr.bf16.mxu0 %v874
    %1465 = vmatpush1.bf16.msra.mxu0 %v873
    %1466 = vmatprep.subr.bf16.mxu0 %v878
    %1467 = vmatpush1.bf16.msra.mxu0 %v877
    %1468 = vmatprep.subr.bf16.mxu0 %v882
    %1469 = vmatpush1.bf16.msra.mxu0 %v881
    %1470 = vmatprep.subr.bf16.mxu0 %v886
    %1471 = vmatpush1.bf16.msra.mxu0 %v885
    %1472 = vmatprep.subr.bf16.mxu0 %v890
    %1473 = vmatpush1.bf16.msra.mxu0 %v889
    %1474 = vmatprep.subr.bf16.mxu0 %v894
    %1475 = vmatpush1.bf16.msra.mxu0 %v893
    %1476 = vmatprep.subr.bf16.mxu0 %v898
    %1477 = vmatpush1.bf16.msra.mxu0 %v897
    %1478 = vmatprep.subr.bf16.mxu0 %v902
    %1479 = vmatpush1.bf16.msra.mxu0 %v901
    %1480 = vmatprep.subr.bf16.mxu0 %v906
    %1481 = vmatpush1.bf16.msra.mxu0 %v905
    %1482 = vmatprep.subr.bf16.mxu0 %v910
    %1483 = vmatpush1.bf16.msra.mxu0 %v909
    %1484 = vmatprep.subr.bf16.mxu0 %v914
    %1485 = vmatpush1.bf16.msra.mxu0 %v913
    %1486 = vmatprep.subr.bf16.mxu0 %v918
    %1487 = vmatpush1.bf16.msra.mxu0 %v917
    %1488 = vmatprep.mubr.bf16.mxu0 %v1305
    %1489 = vmatmul.mubr.bf16.gmra.mrb[0].mxu0 %v1414
    %v1490 = vpop.f32.mrb[0].mxu0
    %v1491 = vadd.f32 %v654, %v1490
    %v1492 = vpop.f32.mrb[0].mxu0
    %v1493 = vadd.f32 %v658, %v1492
    %v1494 = vpop.f32.mrb[0].mxu0
    %v1495 = vpop.f32.mrb[0].mxu0
    %1496 = vdwg.mxu0
    %v1497 = vxor.u32 %v1450, 2147483648
    %v1498 = vmul.f32 %v1497, 1.442695
    %v1499 = vpow.pop %v1498
    %v1500 = vadd.f32 %v1499, 1.0
    %v1501 = vrcp.pop %v1500
    %v1502 = vmul.f32 1.0, %v1501
    %v1503 = vxor.u32 %v1452, 2147483648
    %v1504 = vmul.f32 %v1503, 1.442695
    %v1505 = vpow.pop %v1504
    %v1506 = vadd.f32 %v1505, 1.0
    %v1507 = vrcp.pop %v1506
    %v1508 = vmul.f32 1.0, %v1507
    %v1509 = vtanh.pop %v1491
    %v1510 = vxor.u32 %v1493, 2147483648
    %v1511 = vmul.f32 %v1510, 1.442695
    %v1512 = vpow.pop %v1511
    %v1513 = vadd.f32 %v1512, 1.0
    %v1514 = vrcp.pop %v1513
    %v1515 = vmul.f32 1.0, %v1514
    %v1516 = vmul.f32 %v1508, %v1302
    %v1517 = vmul.f32 %v1502, %v1509
    %v1518 = vadd.f32 %v1516, %v1517
    %v1519 = vtanh.pop %v1518
    %v1520 = vmul.f32 %v1515, %v1519
    %v1521 = vpack.c.bf16 %v1520, %v1520
    %s1522 = scalar_lea.vmem %s0, 12
    %v1523 = vld [vmem:[%s1522] sm:$0xf]
    %1524 = vmatprep.subr.bf16.mxu0 %v341
    %1525 = vmatpush1.bf16.msra.mxu0 %v340
    %1526 = vmatprep.subr.bf16.mxu0 %v345
    %1527 = vmatpush1.bf16.msra.mxu0 %v344
    %1528 = vmatprep.subr.bf16.mxu0 %v349
    %1529 = vmatpush1.bf16.msra.mxu0 %v348
    %1530 = vmatprep.subr.bf16.mxu0 %v353
    %1531 = vmatpush1.bf16.msra.mxu0 %v352
    %1532 = vmatprep.subr.bf16.mxu0 %v357
    %1533 = vmatpush1.bf16.msra.mxu0 %v356
    %1534 = vmatprep.subr.bf16.mxu0 %v361
    %1535 = vmatpush1.bf16.msra.mxu0 %v360
    %1536 = vmatprep.subr.bf16.mxu0 %v365
    %1537 = vmatpush1.bf16.msra.mxu0 %v364
    %1538 = vmatprep.subr.bf16.mxu0 %v369
    %1539 = vmatpush1.bf16.msra.mxu0 %v368
    %1540 = vmatprep.subr.bf16.mxu0 %v373
    %1541 = vmatpush1.bf16.msra.mxu0 %v372
    %1542 = vmatprep.subr.bf16.mxu0 %v377
    %1543 = vmatpush1.bf16.msra.mxu0 %v376
    %1544 = vmatprep.subr.bf16.mxu0 %v381
    %1545 = vmatpush1.bf16.msra.mxu0 %v380
    %1546 = vmatprep.subr.bf16.mxu0 %v385
    %1547 = vmatpush1.bf16.msra.mxu0 %v384
    %1548 = vmatprep.subr.bf16.mxu0 %v389
    %1549 = vmatpush1.bf16.msra.mxu0 %v388
    %1550 = vmatprep.subr.bf16.mxu0 %v393
    %1551 = vmatpush1.bf16.msra.mxu0 %v392
    %1552 = vmatprep.subr.bf16.mxu0 %v397
    %1553 = vmatpush1.bf16.msra.mxu0 %v396
    %1554 = vmatprep.subr.bf16.mxu0 %v401
    %1555 = vmatpush1.bf16.msra.mxu0 %v400
    %1556 = vmatprep.mubr.bf16.mxu0 %v1414
    %1557 = vmatmul.mubr.bf16.gmra.mrb[0].mxu0 %v1523
    %v1558 = vpop.f32.mrb[0].mxu0
    %v1559 = vadd.f32 %v131, %v1558
    %v1560 = vpop.f32.mrb[0].mxu0
    %v1561 = vadd.f32 %v135, %v1560
    %v1562 = vpop.f32.mrb[0].mxu0
    %v1563 = vpop.f32.mrb[0].mxu0
    %1564 = vdwg.mxu0
    %1565 = vmatprep.subr.bf16.mxu0 %v343
    %1566 = vmatpush1.bf16.msra.mxu0 %v342
    %1567 = vmatprep.subr.bf16.mxu0 %v347
    %1568 = vmatpush1.bf16.msra.mxu0 %v346
    %1569 = vmatprep.subr.bf16.mxu0 %v351
    %1570 = vmatpush1.bf16.msra.mxu0 %v350
    %1571 = vmatprep.subr.bf16.mxu0 %v355
    %1572 = vmatpush1.bf16.msra.mxu0 %v354
    %1573 = vmatprep.subr.bf16.mxu0 %v359
    %1574 = vmatpush1.bf16.msra.mxu0 %v358
    %1575 = vmatprep.subr.bf16.mxu0 %v363
    %1576 = vmatpush1.bf16.msra.mxu0 %v362
    %1577 = vmatprep.subr.bf16.mxu0 %v367
    %1578 = vmatpush1.bf16.msra.mxu0 %v366
    %1579 = vmatprep.subr.bf16.mxu0 %v371
    %1580 = vmatpush1.bf16.msra.mxu0 %v370
    %1581 = vmatprep.subr.bf16.mxu0 %v375
    %1582 = vmatpush1.bf16.msra.mxu0 %v374
    %1583 = vmatprep.subr.bf16.mxu0 %v379
    %1584 = vmatpush1.bf16.msra.mxu0 %v378
    %1585 = vmatprep.subr.bf16.mxu0 %v383
    %1586 = vmatpush1.bf16.msra.mxu0 %v382
    %1587 = vmatprep.subr.bf16.mxu0 %v387
    %1588 = vmatpush1.bf16.msra.mxu0 %v386
    %1589 = vmatprep.subr.bf16.mxu0 %v391
    %1590 = vmatpush1.bf16.msra.mxu0 %v390
    %1591 = vmatprep.subr.bf16.mxu0 %v395
    %1592 = vmatpush1.bf16.msra.mxu0 %v394
    %1593 = vmatprep.subr.bf16.mxu0 %v399
    %1594 = vmatpush1.bf16.msra.mxu0 %v398
    %1595 = vmatprep.subr.bf16.mxu0 %v403
    %1596 = vmatpush1.bf16.msra.mxu0 %v402
    %1597 = vmatprep.mubr.bf16.mxu0 %v1414
    %1598 = vmatmul.mubr.bf16.gmra.mrb[0].mxu0 %v1523
    %v1599 = vpop.f32.mrb[0].mxu0
    %v1600 = vadd.f32 %v139, %v1599
    %v1601 = vpop.f32.mrb[0].mxu0
    %v1602 = vadd.f32 %v143, %v1601
    %v1603 = vpop.f32.mrb[0].mxu0
    %v1604 = vpop.f32.mrb[0].mxu0
    %1605 = vdwg.mxu0
    %v1606 = vxor.u32 %v1559, 2147483648
    %v1607 = vmul.f32 %v1606, 1.442695
    %v1608 = vpow.pop %v1607
    %v1609 = vadd.f32 %v1608, 1.0
    %v1610 = vrcp.pop %v1609
    %v1611 = vmul.f32 1.0, %v1610
    %v1612 = vxor.u32 %v1561, 2147483648
    %v1613 = vmul.f32 %v1612, 1.442695
    %v1614 = vpow.pop %v1613
    %v1615 = vadd.f32 %v1614, 1.0
    %v1616 = vrcp.pop %v1615
    %v1617 = vmul.f32 1.0, %v1616
    %v1618 = vtanh.pop %v1600
    %v1619 = vxor.u32 %v1602, 2147483648
    %v1620 = vmul.f32 %v1619, 1.442695
    %v1621 = vpow.pop %v1620
    %v1622 = vadd.f32 %v1621, 1.0
    %v1623 = vrcp.pop %v1622
    %v1624 = vmul.f32 1.0, %v1623
    %v1625 = vmul.f32 %v1617, %v1411
    %v1626 = vmul.f32 %v1611, %v1618
    %v1627 = vadd.f32 %v1625, %v1626
    %v1628 = vtanh.pop %v1627
    %v1629 = vmul.f32 %v1624, %v1628
    %v1630 = vpack.c.bf16 %v1629, %v1629
    %1631 = vmatprep.subr.bf16.mxu0 %v856
    %1632 = vmatpush1.bf16.msra.mxu0 %v855
    %1633 = vmatprep.subr.bf16.mxu0 %v860
    %1634 = vmatpush1.bf16.msra.mxu0 %v859
    %1635 = vmatprep.subr.bf16.mxu0 %v864
    %1636 = vmatpush1.bf16.msra.mxu0 %v863
    %1637 = vmatprep.subr.bf16.mxu0 %v868
    %1638 = vmatpush1.bf16.msra.mxu0 %v867
    %1639 = vmatprep.subr.bf16.mxu0 %v872
    %1640 = vmatpush1.bf16.msra.mxu0 %v871
    %1641 = vmatprep.subr.bf16.mxu0 %v876
    %1642 = vmatpush1.bf16.msra.mxu0 %v875
    %1643 = vmatprep.subr.bf16.mxu0 %v880
    %1644 = vmatpush1.bf16.msra.mxu0 %v879
    %1645 = vmatprep.subr.bf16.mxu0 %v884
    %1646 = vmatpush1.bf16.msra.mxu0 %v883
    %1647 = vmatprep.subr.bf16.mxu0 %v888
    %1648 = vmatpush1.bf16.msra.mxu0 %v887
    %1649 = vmatprep.subr.bf16.mxu0 %v892
    %1650 = vmatpush1.bf16.msra.mxu0 %v891
    %1651 = vmatprep.subr.bf16.mxu0 %v896
    %1652 = vmatpush1.bf16.msra.mxu0 %v895
    %1653 = vmatprep.subr.bf16.mxu0 %v900
    %1654 = vmatpush1.bf16.msra.mxu0 %v899
    %1655 = vmatprep.subr.bf16.mxu0 %v904
    %1656 = vmatpush1.bf16.msra.mxu0 %v903
    %1657 = vmatprep.subr.bf16.mxu0 %v908
    %1658 = vmatpush1.bf16.msra.mxu0 %v907
    %1659 = vmatprep.subr.bf16.mxu0 %v912
    %1660 = vmatpush1.bf16.msra.mxu0 %v911
    %1661 = vmatprep.subr.bf16.mxu0 %v916
    %1662 = vmatpush1.bf16.msra.mxu0 %v915
    %1663 = vmatprep.mubr.bf16.mxu0 %v1521
    %1664 = vmatmul.mubr.bf16.gmra.mrb[0].mxu0 %v1630
    %v1665 = vpop.f32.mrb[0].mxu0
    %v1666 = vadd.f32 %v646, %v1665
    %v1667 = vpop.f32.mrb[0].mxu0
    %v1668 = vadd.f32 %v650, %v1667
    %v1669 = vpop.f32.mrb[0].mxu0
    %v1670 = vpop.f32.mrb[0].mxu0
    %1671 = vdwg.mxu0
    %1672 = vmatprep.subr.bf16.mxu0 %v858
    %1673 = vmatpush1.bf16.msra.mxu0 %v857
    %1674 = vmatprep.subr.bf16.mxu0 %v862
    %1675 = vmatpush1.bf16.msra.mxu0 %v861
    %1676 = vmatprep.subr.bf16.mxu0 %v866
    %1677 = vmatpush1.bf16.msra.mxu0 %v865
    %1678 = vmatprep.subr.bf16.mxu0 %v870
    %1679 = vmatpush1.bf16.msra.mxu0 %v869
    %1680 = vmatprep.subr.bf16.mxu0 %v874
    %1681 = vmatpush1.bf16.msra.mxu0 %v873
    %1682 = vmatprep.subr.bf16.mxu0 %v878
    %1683 = vmatpush1.bf16.msra.mxu0 %v877
    %1684 = vmatprep.subr.bf16.mxu0 %v882
    %1685 = vmatpush1.bf16.msra.mxu0 %v881
    %1686 = vmatprep.subr.bf16.mxu0 %v886
    %1687 = vmatpush1.bf16.msra.mxu0 %v885
    %1688 = vmatprep.subr.bf16.mxu0 %v890
    %1689 = vmatpush1.bf16.msra.mxu0 %v889
    %1690 = vmatprep.subr.bf16.mxu0 %v894
    %1691 = vmatpush1.bf16.msra.mxu0 %v893
    %1692 = vmatprep.subr.bf16.mxu0 %v898
    %1693 = vmatpush1.bf16.msra.mxu0 %v897
    %1694 = vmatprep.subr.bf16.mxu0 %v902
    %1695 = vmatpush1.bf16.msra.mxu0 %v901
    %1696 = vmatprep.subr.bf16.mxu0 %v906
    %1697 = vmatpush1.bf16.msra.mxu0 %v905
    %1698 = vmatprep.subr.bf16.mxu0 %v910
    %1699 = vmatpush1.bf16.msra.mxu0 %v909
    %1700 = vmatprep.subr.bf16.mxu0 %v914
    %1701 = vmatpush1.bf16.msra.mxu0 %v913
    %1702 = vmatprep.subr.bf16.mxu0 %v918
    %1703 = vmatpush1.bf16.msra.mxu0 %v917
    %1704 = vmatprep.mubr.bf16.mxu0 %v1521
    %1705 = vmatmul.mubr.bf16.gmra.mrb[0].mxu0 %v1630
    %v1706 = vpop.f32.mrb[0].mxu0
    %v1707 = vadd.f32 %v654, %v1706
    %v1708 = vpop.f32.mrb[0].mxu0
    %v1709 = vadd.f32 %v658, %v1708
    %v1710 = vpop.f32.mrb[0].mxu0
    %v1711 = vpop.f32.mrb[0].mxu0
    %1712 = vdwg.mxu0
    %v1713 = vxor.u32 %v1666, 2147483648
    %v1714 = vmul.f32 %v1713, 1.442695
    %v1715 = vpow.pop %v1714
    %v1716 = vadd.f32 %v1715, 1.0
    %v1717 = vrcp.pop %v1716
    %v1718 = vmul.f32 1.0, %v1717
    %v1719 = vxor.u32 %v1668, 2147483648
    %v1720 = vmul.f32 %v1719, 1.442695
    %v1721 = vpow.pop %v1720
    %v1722 = vadd.f32 %v1721, 1.0
    %v1723 = vrcp.pop %v1722
    %v1724 = vmul.f32 1.0, %v1723
    %v1725 = vtanh.pop %v1707
    %v1726 = vxor.u32 %v1709, 2147483648
    %v1727 = vmul.f32 %v1726, 1.442695
    %v1728 = vpow.pop %v1727
    %v1729 = vadd.f32 %v1728, 1.0
    %v1730 = vrcp.pop %v1729
    %v1731 = vmul.f32 1.0, %v1730
    %v1732 = vmul.f32 %v1724, %v1518
    %v1733 = vmul.f32 %v1718, %v1725
    %v1734 = vadd.f32 %v1732, %v1733
    %v1735 = vtanh.pop %v1734
    %v1736 = vmul.f32 %v1731, %v1735
    %v1737 = vpack.c.bf16 %v1736, %v1736
    %s1738 = scalar_lea.vmem %s0, 16
    %v1739 = vld [vmem:[%s1738] sm:$0xf]
    %1740 = vmatprep.subr.bf16.mxu0 %v341
    %1741 = vmatpush1.bf16.msra.mxu0 %v340
    %1742 = vmatprep.subr.bf16.mxu0 %v345
    %1743 = vmatpush1.bf16.msra.mxu0 %v344
    %1744 = vmatprep.subr.bf16.mxu0 %v349
    %1745 = vmatpush1.bf16.msra.mxu0 %v348
    %1746 = vmatprep.subr.bf16.mxu0 %v353
    %1747 = vmatpush1.bf16.msra.mxu0 %v352
    %1748 = vmatprep.subr.bf16.mxu0 %v357
    %1749 = vmatpush1.bf16.msra.mxu0 %v356
    %1750 = vmatprep.subr.bf16.mxu0 %v361
    %1751 = vmatpush1.bf16.msra.mxu0 %v360
    %1752 = vmatprep.subr.bf16.mxu0 %v365
    %1753 = vmatpush1.bf16.msra.mxu0 %v364
    %1754 = vmatprep.subr.bf16.mxu0 %v369
    %1755 = vmatpush1.bf16.msra.mxu0 %v368
    %1756 = vmatprep.subr.bf16.mxu0 %v373
    %1757 = vmatpush1.bf16.msra.mxu0 %v372
    %1758 = vmatprep.subr.bf16.mxu0 %v377
    %1759 = vmatpush1.bf16.msra.mxu0 %v376
    %1760 = vmatprep.subr.bf16.mxu0 %v381
    %1761 = vmatpush1.bf16.msra.mxu0 %v380
    %1762 = vmatprep.subr.bf16.mxu0 %v385
    %1763 = vmatpush1.bf16.msra.mxu0 %v384
    %1764 = vmatprep.subr.bf16.mxu0 %v389
    %1765 = vmatpush1.bf16.msra.mxu0 %v388
    %1766 = vmatprep.subr.bf16.mxu0 %v393
    %1767 = vmatpush1.bf16.msra.mxu0 %v392
    %1768 = vmatprep.subr.bf16.mxu0 %v397
    %1769 = vmatpush1.bf16.msra.mxu0 %v396
    %1770 = vmatprep.subr.bf16.mxu0 %v401
    %1771 = vmatpush1.bf16.msra.mxu0 %v400
    %1772 = vmatprep.mubr.bf16.mxu0 %v1630
    %1773 = vmatmul.mubr.bf16.gmra.mrb[0].mxu0 %v1739
    %v1774 = vpop.f32.mrb[0].mxu0
    %v1775 = vadd.f32 %v131, %v1774
    %v1776 = vpop.f32.mrb[0].mxu0
    %v1777 = vadd.f32 %v135, %v1776
    %v1778 = vpop.f32.mrb[0].mxu0
    %v1779 = vpop.f32.mrb[0].mxu0
    %1780 = vdwg.mxu0
    %1781 = vmatprep.subr.bf16.mxu0 %v343
    %1782 = vmatpush1.bf16.msra.mxu0 %v342
    %1783 = vmatprep.subr.bf16.mxu0 %v347
    %1784 = vmatpush1.bf16.msra.mxu0 %v346
    %1785 = vmatprep.subr.bf16.mxu0 %v351
    %1786 = vmatpush1.bf16.msra.mxu0 %v350
    %1787 = vmatprep.subr.bf16.mxu0 %v355
    %1788 = vmatpush1.bf16.msra.mxu0 %v354
    %1789 = vmatprep.subr.bf16.mxu0 %v359
    %1790 = vmatpush1.bf16.msra.mxu0 %v358
    %1791 = vmatprep.subr.bf16.mxu0 %v363
    %1792 = vmatpush1.bf16.msra.mxu0 %v362
    %1793 = vmatprep.subr.bf16.mxu0 %v367
    %1794 = vmatpush1.bf16.msra.mxu0 %v366
    %1795 = vmatprep.subr.bf16.mxu0 %v371
    %1796 = vmatpush1.bf16.msra.mxu0 %v370
    %1797 = vmatprep.subr.bf16.mxu0 %v375
    %1798 = vmatpush1.bf16.msra.mxu0 %v374
    %1799 = vmatprep.subr.bf16.mxu0 %v379
    %1800 = vmatpush1.bf16.msra.mxu0 %v378
    %1801 = vmatprep.subr.bf16.mxu0 %v383
    %1802 = vmatpush1.bf16.msra.mxu0 %v382
    %1803 = vmatprep.subr.bf16.mxu0 %v387
    %1804 = vmatpush1.bf16.msra.mxu0 %v386
    %1805 = vmatprep.subr.bf16.mxu0 %v391
    %1806 = vmatpush1.bf16.msra.mxu0 %v390
    %1807 = vmatprep.subr.bf16.mxu0 %v395
    %1808 = vmatpush1.bf16.msra.mxu0 %v394
    %1809 = vmatprep.subr.bf16.mxu0 %v399
    %1810 = vmatpush1.bf16.msra.mxu0 %v398
    %1811 = vmatprep.subr.bf16.mxu0 %v403
    %1812 = vmatpush1.bf16.msra.mxu0 %v402
    %1813 = vmatprep.mubr.bf16.mxu0 %v1630
    %1814 = vmatmul.mubr.bf16.gmra.mrb[0].mxu0 %v1739
    %v1815 = vpop.f32.mrb[0].mxu0
    %v1816 = vadd.f32 %v139, %v1815
    %v1817 = vpop.f32.mrb[0].mxu0
    %v1818 = vadd.f32 %v143, %v1817
    %v1819 = vpop.f32.mrb[0].mxu0
    %v1820 = vpop.f32.mrb[0].mxu0
    %1821 = vdwg.mxu0
    %v1822 = vxor.u32 %v1775, 2147483648
    %v1823 = vmul.f32 %v1822, 1.442695
    %v1824 = vpow.pop %v1823
    %v1825 = vadd.f32 %v1824, 1.0
    %v1826 = vrcp.pop %v1825
    %v1827 = vmul.f32 1.0, %v1826
    %v1828 = vxor.u32 %v1777, 2147483648
    %v1829 = vmul.f32 %v1828, 1.442695
    %v1830 = vpow.pop %v1829
    %v1831 = vadd.f32 %v1830, 1.0
    %v1832 = vrcp.pop %v1831
    %v1833 = vmul.f32 1.0, %v1832
    %v1834 = vtanh.pop %v1816
    %v1835 = vxor.u32 %v1818, 2147483648
    %v1836 = vmul.f32 %v1835, 1.442695
    %v1837 = vpow.pop %v1836
    %v1838 = vadd.f32 %v1837, 1.0
    %v1839 = vrcp.pop %v1838
    %v1840 = vmul.f32 1.0, %v1839
    %v1841 = vmul.f32 %v1833, %v1627
    %v1842 = vmul.f32 %v1827, %v1834
    %v1843 = vadd.f32 %v1841, %v1842
    %v1844 = vtanh.pop %v1843
    %v1845 = vmul.f32 %v1840, %v1844
    %v1846 = vpack.c.bf16 %v1845, %v1845
    %1847 = vmatprep.subr.bf16.mxu0 %v856
    %1848 = vmatpush1.bf16.msra.mxu0 %v855
    %1849 = vmatprep.subr.bf16.mxu0 %v860
    %1850 = vmatpush1.bf16.msra.mxu0 %v859
    %1851 = vmatprep.subr.bf16.mxu0 %v864
    %1852 = vmatpush1.bf16.msra.mxu0 %v863
    %1853 = vmatprep.subr.bf16.mxu0 %v868
    %1854 = vmatpush1.bf16.msra.mxu0 %v867
    %1855 = vmatprep.subr.bf16.mxu0 %v872
    %1856 = vmatpush1.bf16.msra.mxu0 %v871
    %1857 = vmatprep.subr.bf16.mxu0 %v876
    %1858 = vmatpush1.bf16.msra.mxu0 %v875
    %1859 = vmatprep.subr.bf16.mxu0 %v880
    %1860 = vmatpush1.bf16.msra.mxu0 %v879
    %1861 = vmatprep.subr.bf16.mxu0 %v884
    %1862 = vmatpush1.bf16.msra.mxu0 %v883
    %1863 = vmatprep.subr.bf16.mxu0 %v888
    %1864 = vmatpush1.bf16.msra.mxu0 %v887
    %1865 = vmatprep.subr.bf16.mxu0 %v892
    %1866 = vmatpush1.bf16.msra.mxu0 %v891
    %1867 = vmatprep.subr.bf16.mxu0 %v896
    %1868 = vmatpush1.bf16.msra.mxu0 %v895
    %1869 = vmatprep.subr.bf16.mxu0 %v900
    %1870 = vmatpush1.bf16.msra.mxu0 %v899
    %1871 = vmatprep.subr.bf16.mxu0 %v904
    %1872 = vmatpush1.bf16.msra.mxu0 %v903
    %1873 = vmatprep.subr.bf16.mxu0 %v908
    %1874 = vmatpush1.bf16.msra.mxu0 %v907
    %1875 = vmatprep.subr.bf16.mxu0 %v912
    %1876 = vmatpush1.bf16.msra.mxu0 %v911
    %1877 = vmatprep.subr.bf16.mxu0 %v916
    %1878 = vmatpush1.bf16.msra.mxu0 %v915
    %1879 = vmatprep.mubr.bf16.mxu0 %v1737
    %1880 = vmatmul.mubr.bf16.gmra.mrb[0].mxu0 %v1846
    %v1881 = vpop.f32.mrb[0].mxu0
    %v1882 = vadd.f32 %v646, %v1881
    %v1883 = vpop.f32.mrb[0].mxu0
    %v1884 = vadd.f32 %v650, %v1883
    %v1885 = vpop.f32.mrb[0].mxu0
    %v1886 = vpop.f32.mrb[0].mxu0
    %1887 = vdwg.mxu0
    %1888 = vmatprep.subr.bf16.mxu0 %v858
    %1889 = vmatpush1.bf16.msra.mxu0 %v857
    %1890 = vmatprep.subr.bf16.mxu0 %v862
    %1891 = vmatpush1.bf16.msra.mxu0 %v861
    %1892 = vmatprep.subr.bf16.mxu0 %v866
    %1893 = vmatpush1.bf16.msra.mxu0 %v865
    %1894 = vmatprep.subr.bf16.mxu0 %v870
    %1895 = vmatpush1.bf16.msra.mxu0 %v869
    %1896 = vmatprep.subr.bf16.mxu0 %v874
    %1897 = vmatpush1.bf16.msra.mxu0 %v873
    %1898 = vmatprep.subr.bf16.mxu0 %v878
    %1899 = vmatpush1.bf16.msra.mxu0 %v877
    %1900 = vmatprep.subr.bf16.mxu0 %v882
    %1901 = vmatpush1.bf16.msra.mxu0 %v881
    %1902 = vmatprep.subr.bf16.mxu0 %v886
    %1903 = vmatpush1.bf16.msra.mxu0 %v885
    %1904 = vmatprep.subr.bf16.mxu0 %v890
    %1905 = vmatpush1.bf16.msra.mxu0 %v889
    %1906 = vmatprep.subr.bf16.mxu0 %v894
    %1907 = vmatpush1.bf16.msra.mxu0 %v893
    %1908 = vmatprep.subr.bf16.mxu0 %v898
    %1909 = vmatpush1.bf16.msra.mxu0 %v897
    %1910 = vmatprep.subr.bf16.mxu0 %v902
    %1911 = vmatpush1.bf16.msra.mxu0 %v901
    %1912 = vmatprep.subr.bf16.mxu0 %v906
    %1913 = vmatpush1.bf16.msra.mxu0 %v905
    %1914 = vmatprep.subr.bf16.mxu0 %v910
    %1915 = vmatpush1.bf16.msra.mxu0 %v909
    %1916 = vmatprep.subr.bf16.mxu0 %v914
    %1917 = vmatpush1.bf16.msra.mxu0 %v913
    %1918 = vmatprep.subr.bf16.mxu0 %v918
    %1919 = vmatpush1.bf16.msra.mxu0 %v917
    %1920 = vmatprep.mubr.bf16.mxu0 %v1737
    %1921 = vmatmul.mubr.bf16.gmra.mrb[0].mxu0 %v1846
    %v1922 = vpop.f32.mrb[0].mxu0
    %v1923 = vadd.f32 %v654, %v1922
    %v1924 = vpop.f32.mrb[0].mxu0
    %v1925 = vadd.f32 %v658, %v1924
    %v1926 = vpop.f32.mrb[0].mxu0
    %v1927 = vpop.f32.mrb[0].mxu0
    %1928 = vdwg.mxu0
    %v1929 = vxor.u32 %v1882, 2147483648
    %v1930 = vmul.f32 %v1929, 1.442695
    %v1931 = vpow.pop %v1930
    %v1932 = vadd.f32 %v1931, 1.0
    %v1933 = vrcp.pop %v1932
    %v1934 = vmul.f32 1.0, %v1933
    %v1935 = vxor.u32 %v1884, 2147483648
    %v1936 = vmul.f32 %v1935, 1.442695
    %v1937 = vpow.pop %v1936
    %v1938 = vadd.f32 %v1937, 1.0
    %v1939 = vrcp.pop %v1938
    %v1940 = vmul.f32 1.0, %v1939
    %v1941 = vtanh.pop %v1923
    %v1942 = vxor.u32 %v1925, 2147483648
    %v1943 = vmul.f32 %v1942, 1.442695
    %v1944 = vpow.pop %v1943
    %v1945 = vadd.f32 %v1944, 1.0
    %v1946 = vrcp.pop %v1945
    %v1947 = vmul.f32 1.0, %v1946
    %v1948 = vmul.f32 %v1940, %v1734
    %v1949 = vmul.f32 %v1934, %v1941
    %v1950 = vadd.f32 %v1948, %v1949
    %v1951 = vtanh.pop %v1950
    %v1952 = vmul.f32 %v1947, %v1951
    %v1953 = vpack.c.bf16 %v1952, %v1952
    %s1954 = scalar_lea.vmem %s0, 20
    %v1955 = vld [vmem:[%s1954] sm:$0xf]
    %1956 = vmatprep.subr.bf16.mxu0 %v341
    %1957 = vmatpush1.bf16.msra.mxu0 %v340
    %1958 = vmatprep.subr.bf16.mxu0 %v345
    %1959 = vmatpush1.bf16.msra.mxu0 %v344
    %1960 = vmatprep.subr.bf16.mxu0 %v349
    %1961 = vmatpush1.bf16.msra.mxu0 %v348
    %1962 = vmatprep.subr.bf16.mxu0 %v353
    %1963 = vmatpush1.bf16.msra.mxu0 %v352
    %1964 = vmatprep.subr.bf16.mxu0 %v357
    %1965 = vmatpush1.bf16.msra.mxu0 %v356
    %1966 = vmatprep.subr.bf16.mxu0 %v361
    %1967 = vmatpush1.bf16.msra.mxu0 %v360
    %1968 = vmatprep.subr.bf16.mxu0 %v365
    %1969 = vmatpush1.bf16.msra.mxu0 %v364
    %1970 = vmatprep.subr.bf16.mxu0 %v369
    %1971 = vmatpush1.bf16.msra.mxu0 %v368
    %1972 = vmatprep.subr.bf16.mxu0 %v373
    %1973 = vmatpush1.bf16.msra.mxu0 %v372
    %1974 = vmatprep.subr.bf16.mxu0 %v377
    %1975 = vmatpush1.bf16.msra.mxu0 %v376
    %1976 = vmatprep.subr.bf16.mxu0 %v381
    %1977 = vmatpush1.bf16.msra.mxu0 %v380
    %1978 = vmatprep.subr.bf16.mxu0 %v385
    %1979 = vmatpush1.bf16.msra.mxu0 %v384
    %1980 = vmatprep.subr.bf16.mxu0 %v389
    %1981 = vmatpush1.bf16.msra.mxu0 %v388
    %1982 = vmatprep.subr.bf16.mxu0 %v393
    %1983 = vmatpush1.bf16.msra.mxu0 %v392
    %1984 = vmatprep.subr.bf16.mxu0 %v397
    %1985 = vmatpush1.bf16.msra.mxu0 %v396
    %1986 = vmatprep.subr.bf16.mxu0 %v401
    %1987 = vmatpush1.bf16.msra.mxu0 %v400
    %1988 = vmatprep.mubr.bf16.mxu0 %v1846
    %1989 = vmatmul.mubr.bf16.gmra.mrb[0].mxu0 %v1955
    %v1990 = vpop.f32.mrb[0].mxu0
    %v1991 = vadd.f32 %v131, %v1990
    %v1992 = vpop.f32.mrb[0].mxu0
    %v1993 = vadd.f32 %v135, %v1992
    %v1994 = vpop.f32.mrb[0].mxu0
    %v1995 = vpop.f32.mrb[0].mxu0
    %1996 = vdwg.mxu0
    %1997 = vmatprep.subr.bf16.mxu0 %v343
    %1998 = vmatpush1.bf16.msra.mxu0 %v342
    %1999 = vmatprep.subr.bf16.mxu0 %v347
    %2000 = vmatpush1.bf16.msra.mxu0 %v346
    %2001 = vmatprep.subr.bf16.mxu0 %v351
    %2002 = vmatpush1.bf16.msra.mxu0 %v350
    %2003 = vmatprep.subr.bf16.mxu0 %v355
    %2004 = vmatpush1.bf16.msra.mxu0 %v354
    %2005 = vmatprep.subr.bf16.mxu0 %v359
    %2006 = vmatpush1.bf16.msra.mxu0 %v358
    %2007 = vmatprep.subr.bf16.mxu0 %v363
    %2008 = vmatpush1.bf16.msra.mxu0 %v362
    %2009 = vmatprep.subr.bf16.mxu0 %v367
    %2010 = vmatpush1.bf16.msra.mxu0 %v366
    %2011 = vmatprep.subr.bf16.mxu0 %v371
    %2012 = vmatpush1.bf16.msra.mxu0 %v370
    %2013 = vmatprep.subr.bf16.mxu0 %v375
    %2014 = vmatpush1.bf16.msra.mxu0 %v374
    %2015 = vmatprep.subr.bf16.mxu0 %v379
    %2016 = vmatpush1.bf16.msra.mxu0 %v378
    %2017 = vmatprep.subr.bf16.mxu0 %v383
    %2018 = vmatpush1.bf16.msra.mxu0 %v382
    %2019 = vmatprep.subr.bf16.mxu0 %v387
    %2020 = vmatpush1.bf16.msra.mxu0 %v386
    %2021 = vmatprep.subr.bf16.mxu0 %v391
    %2022 = vmatpush1.bf16.msra.mxu0 %v390
    %2023 = vmatprep.subr.bf16.mxu0 %v395
    %2024 = vmatpush1.bf16.msra.mxu0 %v394
    %2025 = vmatprep.subr.bf16.mxu0 %v399
    %2026 = vmatpush1.bf16.msra.mxu0 %v398
    %2027 = vmatprep.subr.bf16.mxu0 %v403
    %2028 = vmatpush1.bf16.msra.mxu0 %v402
    %2029 = vmatprep.mubr.bf16.mxu0 %v1846
    %2030 = vmatmul.mubr.bf16.gmra.mrb[0].mxu0 %v1955
    %v2031 = vpop.f32.mrb[0].mxu0
    %v2032 = vadd.f32 %v139, %v2031
    %v2033 = vpop.f32.mrb[0].mxu0
    %v2034 = vadd.f32 %v143, %v2033
    %v2035 = vpop.f32.mrb[0].mxu0
    %v2036 = vpop.f32.mrb[0].mxu0
    %2037 = vdwg.mxu0
    %v2038 = vxor.u32 %v1991, 2147483648
    %v2039 = vmul.f32 %v2038, 1.442695
    %v2040 = vpow.pop %v2039
    %v2041 = vadd.f32 %v2040, 1.0
    %v2042 = vrcp.pop %v2041
    %v2043 = vmul.f32 1.0, %v2042
    %v2044 = vxor.u32 %v1993, 2147483648
    %v2045 = vmul.f32 %v2044, 1.442695
    %v2046 = vpow.pop %v2045
    %v2047 = vadd.f32 %v2046, 1.0
    %v2048 = vrcp.pop %v2047
    %v2049 = vmul.f32 1.0, %v2048
    %v2050 = vtanh.pop %v2032
    %v2051 = vxor.u32 %v2034, 2147483648
    %v2052 = vmul.f32 %v2051, 1.442695
    %v2053 = vpow.pop %v2052
    %v2054 = vadd.f32 %v2053, 1.0
    %v2055 = vrcp.pop %v2054
    %v2056 = vmul.f32 1.0, %v2055
    %v2057 = vmul.f32 %v2049, %v1843
    %v2058 = vmul.f32 %v2043, %v2050
    %v2059 = vadd.f32 %v2057, %v2058
    %v2060 = vtanh.pop %v2059
    %v2061 = vmul.f32 %v2056, %v2060
    %v2062 = vpack.c.bf16 %v2061, %v2061
    %2063 = vmatprep.subr.bf16.mxu0 %v856
    %2064 = vmatpush1.bf16.msra.mxu0 %v855
    %2065 = vmatprep.subr.bf16.mxu0 %v860
    %2066 = vmatpush1.bf16.msra.mxu0 %v859
    %2067 = vmatprep.subr.bf16.mxu0 %v864
    %2068 = vmatpush1.bf16.msra.mxu0 %v863
    %2069 = vmatprep.subr.bf16.mxu0 %v868
    %2070 = vmatpush1.bf16.msra.mxu0 %v867
    %2071 = vmatprep.subr.bf16.mxu0 %v872
    %2072 = vmatpush1.bf16.msra.mxu0 %v871
    %2073 = vmatprep.subr.bf16.mxu0 %v876
    %2074 = vmatpush1.bf16.msra.mxu0 %v875
    %2075 = vmatprep.subr.bf16.mxu0 %v880
    %2076 = vmatpush1.bf16.msra.mxu0 %v879
    %2077 = vmatprep.subr.bf16.mxu0 %v884
    %2078 = vmatpush1.bf16.msra.mxu0 %v883
    %2079 = vmatprep.subr.bf16.mxu0 %v888
    %2080 = vmatpush1.bf16.msra.mxu0 %v887
    %2081 = vmatprep.subr.bf16.mxu0 %v892
    %2082 = vmatpush1.bf16.msra.mxu0 %v891
    %2083 = vmatprep.subr.bf16.mxu0 %v896
    %2084 = vmatpush1.bf16.msra.mxu0 %v895
    %2085 = vmatprep.subr.bf16.mxu0 %v900
    %2086 = vmatpush1.bf16.msra.mxu0 %v899
    %2087 = vmatprep.subr.bf16.mxu0 %v904
    %2088 = vmatpush1.bf16.msra.mxu0 %v903
    %2089 = vmatprep.subr.bf16.mxu0 %v908
    %2090 = vmatpush1.bf16.msra.mxu0 %v907
    %2091 = vmatprep.subr.bf16.mxu0 %v912
    %2092 = vmatpush1.bf16.msra.mxu0 %v911
    %2093 = vmatprep.subr.bf16.mxu0 %v916
    %2094 = vmatpush1.bf16.msra.mxu0 %v915
    %2095 = vmatprep.mubr.bf16.mxu0 %v1953
    %2096 = vmatmul.mubr.bf16.gmra.mrb[0].mxu0 %v2062
    %v2097 = vpop.f32.mrb[0].mxu0
    %v2098 = vadd.f32 %v646, %v2097
    %v2099 = vpop.f32.mrb[0].mxu0
    %v2100 = vadd.f32 %v650, %v2099
    %v2101 = vpop.f32.mrb[0].mxu0
    %v2102 = vpop.f32.mrb[0].mxu0
    %2103 = vdwg.mxu0
    %2104 = vmatprep.subr.bf16.mxu0 %v858
    %2105 = vmatpush1.bf16.msra.mxu0 %v857
    %2106 = vmatprep.subr.bf16.mxu0 %v862
    %2107 = vmatpush1.bf16.msra.mxu0 %v861
    %2108 = vmatprep.subr.bf16.mxu0 %v866
    %2109 = vmatpush1.bf16.msra.mxu0 %v865
    %2110 = vmatprep.subr.bf16.mxu0 %v870
    %2111 = vmatpush1.bf16.msra.mxu0 %v869
    %2112 = vmatprep.subr.bf16.mxu0 %v874
    %2113 = vmatpush1.bf16.msra.mxu0 %v873
    %2114 = vmatprep.subr.bf16.mxu0 %v878
    %2115 = vmatpush1.bf16.msra.mxu0 %v877
    %2116 = vmatprep.subr.bf16.mxu0 %v882
    %2117 = vmatpush1.bf16.msra.mxu0 %v881
    %2118 = vmatprep.subr.bf16.mxu0 %v886
    %2119 = vmatpush1.bf16.msra.mxu0 %v885
    %2120 = vmatprep.subr.bf16.mxu0 %v890
    %2121 = vmatpush1.bf16.msra.mxu0 %v889
    %2122 = vmatprep.subr.bf16.mxu0 %v894
    %2123 = vmatpush1.bf16.msra.mxu0 %v893
    %2124 = vmatprep.subr.bf16.mxu0 %v898
    %2125 = vmatpush1.bf16.msra.mxu0 %v897
    %2126 = vmatprep.subr.bf16.mxu0 %v902
    %2127 = vmatpush1.bf16.msra.mxu0 %v901
    %2128 = vmatprep.subr.bf16.mxu0 %v906
    %2129 = vmatpush1.bf16.msra.mxu0 %v905
    %2130 = vmatprep.subr.bf16.mxu0 %v910
    %2131 = vmatpush1.bf16.msra.mxu0 %v909
    %2132 = vmatprep.subr.bf16.mxu0 %v914
    %2133 = vmatpush1.bf16.msra.mxu0 %v913
    %2134 = vmatprep.subr.bf16.mxu0 %v918
    %2135 = vmatpush1.bf16.msra.mxu0 %v917
    %2136 = vmatprep.mubr.bf16.mxu0 %v1953
    %2137 = vmatmul.mubr.bf16.gmra.mrb[0].mxu0 %v2062
    %v2138 = vpop.f32.mrb[0].mxu0
    %v2139 = vadd.f32 %v654, %v2138
    %v2140 = vpop.f32.mrb[0].mxu0
    %v2141 = vadd.f32 %v658, %v2140
    %v2142 = vpop.f32.mrb[0].mxu0
    %v2143 = vpop.f32.mrb[0].mxu0
    %2144 = vdwg.mxu0
    %v2145 = vxor.u32 %v2098, 2147483648
    %v2146 = vmul.f32 %v2145, 1.442695
    %v2147 = vpow.pop %v2146
    %v2148 = vadd.f32 %v2147, 1.0
    %v2149 = vrcp.pop %v2148
    %v2150 = vmul.f32 1.0, %v2149
    %v2151 = vxor.u32 %v2100, 2147483648
    %v2152 = vmul.f32 %v2151, 1.442695
    %v2153 = vpow.pop %v2152
    %v2154 = vadd.f32 %v2153, 1.0
    %v2155 = vrcp.pop %v2154
    %v2156 = vmul.f32 1.0, %v2155
    %v2157 = vtanh.pop %v2139
    %v2158 = vxor.u32 %v2141, 2147483648
    %v2159 = vmul.f32 %v2158, 1.442695
    %v2160 = vpow.pop %v2159
    %v2161 = vadd.f32 %v2160, 1.0
    %v2162 = vrcp.pop %v2161
    %v2163 = vmul.f32 1.0, %v2162
    %v2164 = vmul.f32 %v2156, %v1950
    %v2165 = vmul.f32 %v2150, %v2157
    %v2166 = vadd.f32 %v2164, %v2165
    %v2167 = vtanh.pop %v2166
    %v2168 = vmul.f32 %v2163, %v2167
    %v2169 = vpack.c.bf16 %v2168, %v2168
    %s2170 = scalar_lea.vmem %s0, 24
    %v2171 = vld [vmem:[%s2170] sm:$0xf]
    %2172 = vmatprep.subr.bf16.mxu0 %v341
    %2173 = vmatpush1.bf16.msra.mxu0 %v340
    %2174 = vmatprep.subr.bf16.mxu0 %v345
    %2175 = vmatpush1.bf16.msra.mxu0 %v344
    %2176 = vmatprep.subr.bf16.mxu0 %v349
    %2177 = vmatpush1.bf16.msra.mxu0 %v348
    %2178 = vmatprep.subr.bf16.mxu0 %v353
    %2179 = vmatpush1.bf16.msra.mxu0 %v352
    %2180 = vmatprep.subr.bf16.mxu0 %v357
    %2181 = vmatpush1.bf16.msra.mxu0 %v356
    %2182 = vmatprep.subr.bf16.mxu0 %v361
    %2183 = vmatpush1.bf16.msra.mxu0 %v360
    %2184 = vmatprep.subr.bf16.mxu0 %v365
    %2185 = vmatpush1.bf16.msra.mxu0 %v364
    %2186 = vmatprep.subr.bf16.mxu0 %v369
    %2187 = vmatpush1.bf16.msra.mxu0 %v368
    %2188 = vmatprep.subr.bf16.mxu0 %v373
    %2189 = vmatpush1.bf16.msra.mxu0 %v372
    %2190 = vmatprep.subr.bf16.mxu0 %v377
    %2191 = vmatpush1.bf16.msra.mxu0 %v376
    %2192 = vmatprep.subr.bf16.mxu0 %v381
    %2193 = vmatpush1.bf16.msra.mxu0 %v380
    %2194 = vmatprep.subr.bf16.mxu0 %v385
    %2195 = vmatpush1.bf16.msra.mxu0 %v384
    %2196 = vmatprep.subr.bf16.mxu0 %v389
    %2197 = vmatpush1.bf16.msra.mxu0 %v388
    %2198 = vmatprep.subr.bf16.mxu0 %v393
    %2199 = vmatpush1.bf16.msra.mxu0 %v392
    %2200 = vmatprep.subr.bf16.mxu0 %v397
    %2201 = vmatpush1.bf16.msra.mxu0 %v396
    %2202 = vmatprep.subr.bf16.mxu0 %v401
    %2203 = vmatpush1.bf16.msra.mxu0 %v400
    %2204 = vmatprep.mubr.bf16.mxu0 %v2062
    %2205 = vmatmul.mubr.bf16.gmra.mrb[0].mxu0 %v2171
    %v2206 = vpop.f32.mrb[0].mxu0
    %v2207 = vadd.f32 %v131, %v2206
    %v2208 = vpop.f32.mrb[0].mxu0
    %v2209 = vadd.f32 %v135, %v2208
    %v2210 = vpop.f32.mrb[0].mxu0
    %v2211 = vpop.f32.mrb[0].mxu0
    %2212 = vdwg.mxu0
    %2213 = vmatprep.subr.bf16.mxu0 %v343
    %2214 = vmatpush1.bf16.msra.mxu0 %v342
    %2215 = vmatprep.subr.bf16.mxu0 %v347
    %2216 = vmatpush1.bf16.msra.mxu0 %v346
    %2217 = vmatprep.subr.bf16.mxu0 %v351
    %2218 = vmatpush1.bf16.msra.mxu0 %v350
    %2219 = vmatprep.subr.bf16.mxu0 %v355
    %2220 = vmatpush1.bf16.msra.mxu0 %v354
    %2221 = vmatprep.subr.bf16.mxu0 %v359
    %2222 = vmatpush1.bf16.msra.mxu0 %v358
    %2223 = vmatprep.subr.bf16.mxu0 %v363
    %2224 = vmatpush1.bf16.msra.mxu0 %v362
    %2225 = vmatprep.subr.bf16.mxu0 %v367
    %2226 = vmatpush1.bf16.msra.mxu0 %v366
    %2227 = vmatprep.subr.bf16.mxu0 %v371
    %2228 = vmatpush1.bf16.msra.mxu0 %v370
    %2229 = vmatprep.subr.bf16.mxu0 %v375
    %2230 = vmatpush1.bf16.msra.mxu0 %v374
    %2231 = vmatprep.subr.bf16.mxu0 %v379
    %2232 = vmatpush1.bf16.msra.mxu0 %v378
    %2233 = vmatprep.subr.bf16.mxu0 %v383
    %2234 = vmatpush1.bf16.msra.mxu0 %v382
    %2235 = vmatprep.subr.bf16.mxu0 %v387
    %2236 = vmatpush1.bf16.msra.mxu0 %v386
    %2237 = vmatprep.subr.bf16.mxu0 %v391
    %2238 = vmatpush1.bf16.msra.mxu0 %v390
    %2239 = vmatprep.subr.bf16.mxu0 %v395
    %2240 = vmatpush1.bf16.msra.mxu0 %v394
    %2241 = vmatprep.subr.bf16.mxu0 %v399
    %2242 = vmatpush1.bf16.msra.mxu0 %v398
    %2243 = vmatprep.subr.bf16.mxu0 %v403
    %2244 = vmatpush1.bf16.msra.mxu0 %v402
    %2245 = vmatprep.mubr.bf16.mxu0 %v2062
    %2246 = vmatmul.mubr.bf16.gmra.mrb[0].mxu0 %v2171
    %v2247 = vpop.f32.mrb[0].mxu0
    %v2248 = vadd.f32 %v139, %v2247
    %v2249 = vpop.f32.mrb[0].mxu0
    %v2250 = vadd.f32 %v143, %v2249
    %v2251 = vpop.f32.mrb[0].mxu0
    %v2252 = vpop.f32.mrb[0].mxu0
    %2253 = vdwg.mxu0
    %v2254 = vxor.u32 %v2207, 2147483648
    %v2255 = vmul.f32 %v2254, 1.442695
    %v2256 = vpow.pop %v2255
    %v2257 = vadd.f32 %v2256, 1.0
    %v2258 = vrcp.pop %v2257
    %v2259 = vmul.f32 1.0, %v2258
    %v2260 = vxor.u32 %v2209, 2147483648
    %v2261 = vmul.f32 %v2260, 1.442695
    %v2262 = vpow.pop %v2261
    %v2263 = vadd.f32 %v2262, 1.0
    %v2264 = vrcp.pop %v2263
    %v2265 = vmul.f32 1.0, %v2264
    %v2266 = vtanh.pop %v2248
    %v2267 = vxor.u32 %v2250, 2147483648
    %v2268 = vmul.f32 %v2267, 1.442695
    %v2269 = vpow.pop %v2268
    %v2270 = vadd.f32 %v2269, 1.0
    %v2271 = vrcp.pop %v2270
    %v2272 = vmul.f32 1.0, %v2271
    %v2273 = vmul.f32 %v2265, %v2059
    %v2274 = vmul.f32 %v2259, %v2266
    %v2275 = vadd.f32 %v2273, %v2274
    %v2276 = vtanh.pop %v2275
    %v2277 = vmul.f32 %v2272, %v2276
    %v2278 = vpack.c.bf16 %v2277, %v2277
    %2279 = vmatprep.subr.bf16.mxu0 %v856
    %2280 = vmatpush1.bf16.msra.mxu0 %v855
    %2281 = vmatprep.subr.bf16.mxu0 %v860
    %2282 = vmatpush1.bf16.msra.mxu0 %v859
    %2283 = vmatprep.subr.bf16.mxu0 %v864
    %2284 = vmatpush1.bf16.msra.mxu0 %v863
    %2285 = vmatprep.subr.bf16.mxu0 %v868
    %2286 = vmatpush1.bf16.msra.mxu0 %v867
    %2287 = vmatprep.subr.bf16.mxu0 %v872
    %2288 = vmatpush1.bf16.msra.mxu0 %v871
    %2289 = vmatprep.subr.bf16.mxu0 %v876
    %2290 = vmatpush1.bf16.msra.mxu0 %v875
    %2291 = vmatprep.subr.bf16.mxu0 %v880
    %2292 = vmatpush1.bf16.msra.mxu0 %v879
    %2293 = vmatprep.subr.bf16.mxu0 %v884
    %2294 = vmatpush1.bf16.msra.mxu0 %v883
    %2295 = vmatprep.subr.bf16.mxu0 %v888
    %2296 = vmatpush1.bf16.msra.mxu0 %v887
    %2297 = vmatprep.subr.bf16.mxu0 %v892
    %2298 = vmatpush1.bf16.msra.mxu0 %v891
    %2299 = vmatprep.subr.bf16.mxu0 %v896
    %2300 = vmatpush1.bf16.msra.mxu0 %v895
    %2301 = vmatprep.subr.bf16.mxu0 %v900
    %2302 = vmatpush1.bf16.msra.mxu0 %v899
    %2303 = vmatprep.subr.bf16.mxu0 %v904
    %2304 = vmatpush1.bf16.msra.mxu0 %v903
    %2305 = vmatprep.subr.bf16.mxu0 %v908
    %2306 = vmatpush1.bf16.msra.mxu0 %v907
    %2307 = vmatprep.subr.bf16.mxu0 %v912
    %2308 = vmatpush1.bf16.msra.mxu0 %v911
    %2309 = vmatprep.subr.bf16.mxu0 %v916
    %2310 = vmatpush1.bf16.msra.mxu0 %v915
    %2311 = vmatprep.mubr.bf16.mxu0 %v2169
    %2312 = vmatmul.mubr.bf16.gmra.mrb[0].mxu0 %v2278
    %v2313 = vpop.f32.mrb[0].mxu0
    %v2314 = vadd.f32 %v646, %v2313
    %v2315 = vpop.f32.mrb[0].mxu0
    %v2316 = vadd.f32 %v650, %v2315
    %v2317 = vpop.f32.mrb[0].mxu0
    %v2318 = vpop.f32.mrb[0].mxu0
    %2319 = vdwg.mxu0
    %2320 = vmatprep.subr.bf16.mxu0 %v858
    %2321 = vmatpush1.bf16.msra.mxu0 %v857
    %2322 = vmatprep.subr.bf16.mxu0 %v862
    %2323 = vmatpush1.bf16.msra.mxu0 %v861
    %2324 = vmatprep.subr.bf16.mxu0 %v866
    %2325 = vmatpush1.bf16.msra.mxu0 %v865
    %2326 = vmatprep.subr.bf16.mxu0 %v870
    %2327 = vmatpush1.bf16.msra.mxu0 %v869
    %2328 = vmatprep.subr.bf16.mxu0 %v874
    %2329 = vmatpush1.bf16.msra.mxu0 %v873
    %2330 = vmatprep.subr.bf16.mxu0 %v878
    %2331 = vmatpush1.bf16.msra.mxu0 %v877
    %2332 = vmatprep.subr.bf16.mxu0 %v882
    %2333 = vmatpush1.bf16.msra.mxu0 %v881
    %2334 = vmatprep.subr.bf16.mxu0 %v886
    %2335 = vmatpush1.bf16.msra.mxu0 %v885
    %2336 = vmatprep.subr.bf16.mxu0 %v890
    %2337 = vmatpush1.bf16.msra.mxu0 %v889
    %2338 = vmatprep.subr.bf16.mxu0 %v894
    %2339 = vmatpush1.bf16.msra.mxu0 %v893
    %2340 = vmatprep.subr.bf16.mxu0 %v898
    %2341 = vmatpush1.bf16.msra.mxu0 %v897
    %2342 = vmatprep.subr.bf16.mxu0 %v902
    %2343 = vmatpush1.bf16.msra.mxu0 %v901
    %2344 = vmatprep.subr.bf16.mxu0 %v906
    %2345 = vmatpush1.bf16.msra.mxu0 %v905
    %2346 = vmatprep.subr.bf16.mxu0 %v910
    %2347 = vmatpush1.bf16.msra.mxu0 %v909
    %2348 = vmatprep.subr.bf16.mxu0 %v914
    %2349 = vmatpush1.bf16.msra.mxu0 %v913
    %2350 = vmatprep.subr.bf16.mxu0 %v918
    %2351 = vmatpush1.bf16.msra.mxu0 %v917
    %2352 = vmatprep.mubr.bf16.mxu0 %v2169
    %2353 = vmatmul.mubr.bf16.gmra.mrb[0].mxu0 %v2278
    %v2354 = vpop.f32.mrb[0].mxu0
    %v2355 = vadd.f32 %v654, %v2354
    %v2356 = vpop.f32.mrb[0].mxu0
    %v2357 = vadd.f32 %v658, %v2356
    %v2358 = vpop.f32.mrb[0].mxu0
    %v2359 = vpop.f32.mrb[0].mxu0
    %2360 = vdwg.mxu0
    %v2361 = vxor.u32 %v2314, 2147483648
    %v2362 = vmul.f32 %v2361, 1.442695
    %v2363 = vpow.pop %v2362
    %v2364 = vadd.f32 %v2363, 1.0
    %v2365 = vrcp.pop %v2364
    %v2366 = vmul.f32 1.0, %v2365
    %v2367 = vxor.u32 %v2316, 2147483648
    %v2368 = vmul.f32 %v2367, 1.442695
    %v2369 = vpow.pop %v2368
    %v2370 = vadd.f32 %v2369, 1.0
    %v2371 = vrcp.pop %v2370
    %v2372 = vmul.f32 1.0, %v2371
    %v2373 = vtanh.pop %v2355
    %v2374 = vxor.u32 %v2357, 2147483648
    %v2375 = vmul.f32 %v2374, 1.442695
    %v2376 = vpow.pop %v2375
    %v2377 = vadd.f32 %v2376, 1.0
    %v2378 = vrcp.pop %v2377
    %v2379 = vmul.f32 1.0, %v2378
    %v2380 = vmul.f32 %v2372, %v2166
    %v2381 = vmul.f32 %v2366, %v2373
    %v2382 = vadd.f32 %v2380, %v2381
    %v2383 = vtanh.pop %v2382
    %v2384 = vmul.f32 %v2379, %v2383
    %v2385 = vpack.c.bf16 %v2384, %v2384
    %s2386 = scalar_lea.vmem %s0, 28
    %v2387 = vld [vmem:[%s2386] sm:$0xf]
    %2388 = vmatprep.subr.bf16.mxu0 %v341
    %2389 = vmatpush1.bf16.msra.mxu0 %v340
    %2390 = vmatprep.subr.bf16.mxu0 %v345
    %2391 = vmatpush1.bf16.msra.mxu0 %v344
    %2392 = vmatprep.subr.bf16.mxu0 %v349
    %2393 = vmatpush1.bf16.msra.mxu0 %v348
    %2394 = vmatprep.subr.bf16.mxu0 %v353
    %2395 = vmatpush1.bf16.msra.mxu0 %v352
    %2396 = vmatprep.subr.bf16.mxu0 %v357
    %2397 = vmatpush1.bf16.msra.mxu0 %v356
    %2398 = vmatprep.subr.bf16.mxu0 %v361
    %2399 = vmatpush1.bf16.msra.mxu0 %v360
    %2400 = vmatprep.subr.bf16.mxu0 %v365
    %2401 = vmatpush1.bf16.msra.mxu0 %v364
    %2402 = vmatprep.subr.bf16.mxu0 %v369
    %2403 = vmatpush1.bf16.msra.mxu0 %v368
    %2404 = vmatprep.subr.bf16.mxu0 %v373
    %2405 = vmatpush1.bf16.msra.mxu0 %v372
    %2406 = vmatprep.subr.bf16.mxu0 %v377
    %2407 = vmatpush1.bf16.msra.mxu0 %v376
    %2408 = vmatprep.subr.bf16.mxu0 %v381
    %2409 = vmatpush1.bf16.msra.mxu0 %v380
    %2410 = vmatprep.subr.bf16.mxu0 %v385
    %2411 = vmatpush1.bf16.msra.mxu0 %v384
    %2412 = vmatprep.subr.bf16.mxu0 %v389
    %2413 = vmatpush1.bf16.msra.mxu0 %v388
    %2414 = vmatprep.subr.bf16.mxu0 %v393
    %2415 = vmatpush1.bf16.msra.mxu0 %v392
    %2416 = vmatprep.subr.bf16.mxu0 %v397
    %2417 = vmatpush1.bf16.msra.mxu0 %v396
    %2418 = vmatprep.subr.bf16.mxu0 %v401
    %2419 = vmatpush1.bf16.msra.mxu0 %v400
    %2420 = vmatprep.mubr.bf16.mxu0 %v2278
    %2421 = vmatmul.mubr.bf16.gmra.mrb[0].mxu0 %v2387
    %v2422 = vpop.f32.mrb[0].mxu0
    %v2423 = vadd.f32 %v131, %v2422
    %v2424 = vpop.f32.mrb[0].mxu0
    %v2425 = vadd.f32 %v135, %v2424
    %v2426 = vpop.f32.mrb[0].mxu0
    %v2427 = vpop.f32.mrb[0].mxu0
    %2428 = vdwg.mxu0
    %2429 = vmatprep.subr.bf16.mxu0 %v343
    %2430 = vmatpush1.bf16.msra.mxu0 %v342
    %2431 = vmatprep.subr.bf16.mxu0 %v347
    %2432 = vmatpush1.bf16.msra.mxu0 %v346
    %2433 = vmatprep.subr.bf16.mxu0 %v351
    %2434 = vmatpush1.bf16.msra.mxu0 %v350
    %2435 = vmatprep.subr.bf16.mxu0 %v355
    %2436 = vmatpush1.bf16.msra.mxu0 %v354
    %2437 = vmatprep.subr.bf16.mxu0 %v359
    %2438 = vmatpush1.bf16.msra.mxu0 %v358
    %2439 = vmatprep.subr.bf16.mxu0 %v363
    %2440 = vmatpush1.bf16.msra.mxu0 %v362
    %2441 = vmatprep.subr.bf16.mxu0 %v367
    %2442 = vmatpush1.bf16.msra.mxu0 %v366
    %2443 = vmatprep.subr.bf16.mxu0 %v371
    %2444 = vmatpush1.bf16.msra.mxu0 %v370
    %2445 = vmatprep.subr.bf16.mxu0 %v375
    %2446 = vmatpush1.bf16.msra.mxu0 %v374
    %2447 = vmatprep.subr.bf16.mxu0 %v379
    %2448 = vmatpush1.bf16.msra.mxu0 %v378
    %2449 = vmatprep.subr.bf16.mxu0 %v383
    %2450 = vmatpush1.bf16.msra.mxu0 %v382
    %2451 = vmatprep.subr.bf16.mxu0 %v387
    %2452 = vmatpush1.bf16.msra.mxu0 %v386
    %2453 = vmatprep.subr.bf16.mxu0 %v391
    %2454 = vmatpush1.bf16.msra.mxu0 %v390
    %2455 = vmatprep.subr.bf16.mxu0 %v395
    %2456 = vmatpush1.bf16.msra.mxu0 %v394
    %2457 = vmatprep.subr.bf16.mxu0 %v399
    %2458 = vmatpush1.bf16.msra.mxu0 %v398
    %2459 = vmatprep.subr.bf16.mxu0 %v403
    %2460 = vmatpush1.bf16.msra.mxu0 %v402
    %2461 = vmatprep.mubr.bf16.mxu0 %v2278
    %2462 = vmatmul.mubr.bf16.gmra.mrb[0].mxu0 %v2387
    %v2463 = vpop.f32.mrb[0].mxu0
    %v2464 = vadd.f32 %v139, %v2463
    %v2465 = vpop.f32.mrb[0].mxu0
    %v2466 = vadd.f32 %v143, %v2465
    %v2467 = vpop.f32.mrb[0].mxu0
    %v2468 = vpop.f32.mrb[0].mxu0
    %2469 = vdwg.mxu0
    %v2470 = vxor.u32 %v2423, 2147483648
    %v2471 = vmul.f32 %v2470, 1.442695
    %v2472 = vpow.pop %v2471
    %v2473 = vadd.f32 %v2472, 1.0
    %v2474 = vrcp.pop %v2473
    %v2475 = vmul.f32 1.0, %v2474
    %v2476 = vxor.u32 %v2425, 2147483648
    %v2477 = vmul.f32 %v2476, 1.442695
    %v2478 = vpow.pop %v2477
    %v2479 = vadd.f32 %v2478, 1.0
    %v2480 = vrcp.pop %v2479
    %v2481 = vmul.f32 1.0, %v2480
    %v2482 = vtanh.pop %v2464
    %v2483 = vxor.u32 %v2466, 2147483648
    %v2484 = vmul.f32 %v2483, 1.442695
    %v2485 = vpow.pop %v2484
    %v2486 = vadd.f32 %v2485, 1.0
    %v2487 = vrcp.pop %v2486
    %v2488 = vmul.f32 1.0, %v2487
    %v2489 = vmul.f32 %v2481, %v2275
    %v2490 = vmul.f32 %v2475, %v2482
    %v2491 = vadd.f32 %v2489, %v2490
    %v2492 = vtanh.pop %v2491
    %v2493 = vmul.f32 %v2488, %v2492
    %v2494 = vpack.c.bf16 %v2493, %v2493
    %2495 = vmatprep.subr.bf16.mxu0 %v856
    %2496 = vmatpush1.bf16.msra.mxu0 %v855
    %2497 = vmatprep.subr.bf16.mxu0 %v860
    %2498 = vmatpush1.bf16.msra.mxu0 %v859
    %2499 = vmatprep.subr.bf16.mxu0 %v864
    %2500 = vmatpush1.bf16.msra.mxu0 %v863
    %2501 = vmatprep.subr.bf16.mxu0 %v868
    %2502 = vmatpush1.bf16.msra.mxu0 %v867
    %2503 = vmatprep.subr.bf16.mxu0 %v872
    %2504 = vmatpush1.bf16.msra.mxu0 %v871
    %2505 = vmatprep.subr.bf16.mxu0 %v876
    %2506 = vmatpush1.bf16.msra.mxu0 %v875
    %2507 = vmatprep.subr.bf16.mxu0 %v880
    %2508 = vmatpush1.bf16.msra.mxu0 %v879
    %2509 = vmatprep.subr.bf16.mxu0 %v884
    %2510 = vmatpush1.bf16.msra.mxu0 %v883
    %2511 = vmatprep.subr.bf16.mxu0 %v888
    %2512 = vmatpush1.bf16.msra.mxu0 %v887
    %2513 = vmatprep.subr.bf16.mxu0 %v892
    %2514 = vmatpush1.bf16.msra.mxu0 %v891
    %2515 = vmatprep.subr.bf16.mxu0 %v896
    %2516 = vmatpush1.bf16.msra.mxu0 %v895
    %2517 = vmatprep.subr.bf16.mxu0 %v900
    %2518 = vmatpush1.bf16.msra.mxu0 %v899
    %2519 = vmatprep.subr.bf16.mxu0 %v904
    %2520 = vmatpush1.bf16.msra.mxu0 %v903
    %2521 = vmatprep.subr.bf16.mxu0 %v908
    %2522 = vmatpush1.bf16.msra.mxu0 %v907
    %2523 = vmatprep.subr.bf16.mxu0 %v912
    %2524 = vmatpush1.bf16.msra.mxu0 %v911
    %2525 = vmatprep.subr.bf16.mxu0 %v916
    %2526 = vmatpush1.bf16.msra.mxu0 %v915
    %2527 = vmatprep.mubr.bf16.mxu0 %v2385
    %2528 = vmatmul.mubr.bf16.gmra.mrb[0].mxu0 %v2494
    %v2529 = vpop.f32.mrb[0].mxu0
    %v2530 = vadd.f32 %v646, %v2529
    %v2531 = vpop.f32.mrb[0].mxu0
    %v2532 = vadd.f32 %v650, %v2531
    %v2533 = vpop.f32.mrb[0].mxu0
    %v2534 = vpop.f32.mrb[0].mxu0
    %2535 = vdwg.mxu0
    %2536 = vmatprep.subr.bf16.mxu0 %v858
    %2537 = vmatpush1.bf16.msra.mxu0 %v857
    %2538 = vmatprep.subr.bf16.mxu0 %v862
    %2539 = vmatpush1.bf16.msra.mxu0 %v861
    %2540 = vmatprep.subr.bf16.mxu0 %v866
    %2541 = vmatpush1.bf16.msra.mxu0 %v865
    %2542 = vmatprep.subr.bf16.mxu0 %v870
    %2543 = vmatpush1.bf16.msra.mxu0 %v869
    %2544 = vmatprep.subr.bf16.mxu0 %v874
    %2545 = vmatpush1.bf16.msra.mxu0 %v873
    %2546 = vmatprep.subr.bf16.mxu0 %v878
    %2547 = vmatpush1.bf16.msra.mxu0 %v877
    %2548 = vmatprep.subr.bf16.mxu0 %v882
    %2549 = vmatpush1.bf16.msra.mxu0 %v881
    %2550 = vmatprep.subr.bf16.mxu0 %v886
    %2551 = vmatpush1.bf16.msra.mxu0 %v885
    %2552 = vmatprep.subr.bf16.mxu0 %v890
    %2553 = vmatpush1.bf16.msra.mxu0 %v889
    %2554 = vmatprep.subr.bf16.mxu0 %v894
    %2555 = vmatpush1.bf16.msra.mxu0 %v893
    %2556 = vmatprep.subr.bf16.mxu0 %v898
    %2557 = vmatpush1.bf16.msra.mxu0 %v897
    %2558 = vmatprep.subr.bf16.mxu0 %v902
    %2559 = vmatpush1.bf16.msra.mxu0 %v901
    %2560 = vmatprep.subr.bf16.mxu0 %v906
    %2561 = vmatpush1.bf16.msra.mxu0 %v905
    %2562 = vmatprep.subr.bf16.mxu0 %v910
    %2563 = vmatpush1.bf16.msra.mxu0 %v909
    %2564 = vmatprep.subr.bf16.mxu0 %v914
    %2565 = vmatpush1.bf16.msra.mxu0 %v913
    %2566 = vmatprep.subr.bf16.mxu0 %v918
    %2567 = vmatpush1.bf16.msra.mxu0 %v917
    %2568 = vmatprep.mubr.bf16.mxu0 %v2385
    %2569 = vmatmul.mubr.bf16.gmra.mrb[0].mxu0 %v2494
    %v2570 = vpop.f32.mrb[0].mxu0
    %v2571 = vadd.f32 %v654, %v2570
    %v2572 = vpop.f32.mrb[0].mxu0
    %v2573 = vadd.f32 %v658, %v2572
    %v2574 = vpop.f32.mrb[0].mxu0
    %v2575 = vpop.f32.mrb[0].mxu0
    %2576 = vdwg.mxu0
    %v2577 = vxor.u32 %v2530, 2147483648
    %v2578 = vmul.f32 %v2577, 1.442695
    %v2579 = vpow.pop %v2578
    %v2580 = vadd.f32 %v2579, 1.0
    %v2581 = vrcp.pop %v2580
    %v2582 = vmul.f32 1.0, %v2581
    %v2583 = vxor.u32 %v2532, 2147483648
    %v2584 = vmul.f32 %v2583, 1.442695
    %v2585 = vpow.pop %v2584
    %v2586 = vadd.f32 %v2585, 1.0
    %v2587 = vrcp.pop %v2586
    %v2588 = vmul.f32 1.0, %v2587
    %v2589 = vtanh.pop %v2571
    %v2590 = vxor.u32 %v2573, 2147483648
    %v2591 = vmul.f32 %v2590, 1.442695
    %v2592 = vpow.pop %v2591
    %v2593 = vadd.f32 %v2592, 1.0
    %v2594 = vrcp.pop %v2593
    %v2595 = vmul.f32 1.0, %v2594
    %v2596 = vmul.f32 %v2588, %v2382
    %v2597 = vmul.f32 %v2582, %v2589
    %v2598 = vadd.f32 %v2596, %v2597
    %v2599 = vtanh.pop %v2598
    %v2600 = vmul.f32 %v2595, %v2599
    %v2601 = vpack.c.bf16 %v2600, %v2600
    %v2602 = vld [vmem:[%s1] sm:$0xf]
    %v2603 = vld [vmem:[#allocation4] sm:$0xff]
    %v2604 = vld [vmem:[#allocation4 + $0x8] sm:$0xff]
    %v2605 = vld [vmem:[#allocation4 + $0x10] sm:$0xff]
    %v2606 = vld [vmem:[#allocation4 + $0x18] sm:$0xff]
    %v2607 = vld [vmem:[#allocation4 + $0x20] sm:$0xff]
    %v2608 = vld [vmem:[#allocation4 + $0x28] sm:$0xff]
    %v2609 = vld [vmem:[#allocation4 + $0x30] sm:$0xff]
    %v2610 = vld [vmem:[#allocation4 + $0x38] sm:$0xff]
    %v2611 = vld [vmem:[#allocation4 + $0x40] sm:$0xff]
    %v2612 = vld [vmem:[#allocation4 + $0x48] sm:$0xff]
    %v2613 = vld [vmem:[#allocation4 + $0x50] sm:$0xff]
    %v2614 = vld [vmem:[#allocation4 + $0x58] sm:$0xff]
    %v2615 = vld [vmem:[#allocation4 + $0x60] sm:$0xff]
    %v2616 = vld [vmem:[#allocation4 + $0x68] sm:$0xff]
    %v2617 = vld [vmem:[#allocation4 + $0x70] sm:$0xff]
    %v2618 = vld [vmem:[#allocation4 + $0x78] sm:$0xff]
    %v2619 = vld [vmem:[#allocation4 + $0x80] sm:$0xff]
    %v2620 = vld [vmem:[#allocation4 + $0x88] sm:$0xff]
    %v2621 = vld [vmem:[#allocation4 + $0x90] sm:$0xff]
    %v2622 = vld [vmem:[#allocation4 + $0x98] sm:$0xff]
    %v2623 = vld [vmem:[#allocation4 + $0xa0] sm:$0xff]
    %v2624 = vld [vmem:[#allocation4 + $0xa8] sm:$0xff]
    %v2625 = vld [vmem:[#allocation4 + $0xb0] sm:$0xff]
    %v2626 = vld [vmem:[#allocation4 + $0xb8] sm:$0xff]
    %v2627 = vld [vmem:[#allocation4 + $0xc0] sm:$0xff]
    %v2628 = vld [vmem:[#allocation4 + $0xc8] sm:$0xff]
    %v2629 = vld [vmem:[#allocation4 + $0xd0] sm:$0xff]
    %v2630 = vld [vmem:[#allocation4 + $0xd8] sm:$0xff]
    %v2631 = vld [vmem:[#allocation4 + $0xe0] sm:$0xff]
    %v2632 = vld [vmem:[#allocation4 + $0xe8] sm:$0xff]
    %v2633 = vld [vmem:[#allocation4 + $0xf0] sm:$0xff]
    %v2634 = vld [vmem:[#allocation4 + $0xf8] sm:$0xff]
    %v2635 = vld [vmem:[#allocation4 + $0x100] sm:$0xff]
    %v2636 = vld [vmem:[#allocation4 + $0x108] sm:$0xff]
    %v2637 = vld [vmem:[#allocation4 + $0x110] sm:$0xff]
    %v2638 = vld [vmem:[#allocation4 + $0x118] sm:$0xff]
    %v2639 = vld [vmem:[#allocation4 + $0x120] sm:$0xff]
    %v2640 = vld [vmem:[#allocation4 + $0x128] sm:$0xff]
    %v2641 = vld [vmem:[#allocation4 + $0x130] sm:$0xff]
    %v2642 = vld [vmem:[#allocation4 + $0x138] sm:$0xff]
    %v2643 = vld [vmem:[#allocation4 + $0x140] sm:$0xff]
    %v2644 = vld [vmem:[#allocation4 + $0x148] sm:$0xff]
    %v2645 = vld [vmem:[#allocation4 + $0x150] sm:$0xff]
    %v2646 = vld [vmem:[#allocation4 + $0x158] sm:$0xff]
    %v2647 = vld [vmem:[#allocation4 + $0x160] sm:$0xff]
    %v2648 = vld [vmem:[#allocation4 + $0x168] sm:$0xff]
    %v2649 = vld [vmem:[#allocation4 + $0x170] sm:$0xff]
    %v2650 = vld [vmem:[#allocation4 + $0x178] sm:$0xff]
    %v2651 = vld [vmem:[#allocation4 + $0x180] sm:$0xff]
    %v2652 = vld [vmem:[#allocation4 + $0x188] sm:$0xff]
    %v2653 = vld [vmem:[#allocation4 + $0x190] sm:$0xff]
    %v2654 = vld [vmem:[#allocation4 + $0x198] sm:$0xff]
    %v2655 = vld [vmem:[#allocation4 + $0x1a0] sm:$0xff]
    %v2656 = vld [vmem:[#allocation4 + $0x1a8] sm:$0xff]
    %v2657 = vld [vmem:[#allocation4 + $0x1b0] sm:$0xff]
    %v2658 = vld [vmem:[#allocation4 + $0x1b8] sm:$0xff]
    %v2659 = vld [vmem:[#allocation4 + $0x1c0] sm:$0xff]
    %v2660 = vld [vmem:[#allocation4 + $0x1c8] sm:$0xff]
    %v2661 = vld [vmem:[#allocation4 + $0x1d0] sm:$0xff]
    %v2662 = vld [vmem:[#allocation4 + $0x1d8] sm:$0xff]
    %v2663 = vld [vmem:[#allocation4 + $0x1e0] sm:$0xff]
    %v2664 = vld [vmem:[#allocation4 + $0x1e8] sm:$0xff]
    %v2665 = vld [vmem:[#allocation4 + $0x1f0] sm:$0xff]
    %v2666 = vld [vmem:[#allocation4 + $0x1f8] sm:$0xff]
    %v2667 = vld [vmem:[%s5] sm:$0xf]
    %v2669 = vlaneseq
    %v2670 = vshrl.u32 %v2669, 7
    %v2671 = vsub.s32 0, %v2670
    %v2672 = vrot.slane %v2667, %v2671
    %v2673 = vlaneseq
    %v2674 = vshrl.u32 %v2673, 7
    %v2675 = vsub.s32 1, %v2674
    %v2676 = vrot.slane %v2667, %v2675
    %v2677 = vlaneseq
    %v2678 = vshrl.u32 %v2677, 7
    %v2679 = vsub.s32 2, %v2678
    %v2680 = vrot.slane %v2667, %v2679
    %v2681 = vlaneseq
    %v2682 = vshrl.u32 %v2681, 7
    %v2683 = vsub.s32 3, %v2682
    %v2684 = vrot.slane %v2667, %v2683
    %v2753 = vunpack.c.l.b16 %v2603
    %v2754 = vunpack.c.h.b16 %v2603
    %v2755 = vunpack.c.l.b16 %v2604
    %v2756 = vunpack.c.h.b16 %v2604
    %v2757 = vunpack.c.l.b16 %v2605
    %v2758 = vunpack.c.h.b16 %v2605
    %v2759 = vunpack.c.l.b16 %v2606
    %v2760 = vunpack.c.h.b16 %v2606
    %v2761 = vunpack.c.l.b16 %v2607
    %v2762 = vunpack.c.h.b16 %v2607
    %v2763 = vunpack.c.l.b16 %v2608
    %v2764 = vunpack.c.h.b16 %v2608
    %v2765 = vunpack.c.l.b16 %v2609
    %v2766 = vunpack.c.h.b16 %v2609
    %v2767 = vunpack.c.l.b16 %v2610
    %v2768 = vunpack.c.h.b16 %v2610
    %v2769 = vunpack.c.l.b16 %v2611
    %v2770 = vunpack.c.h.b16 %v2611
    %v2771 = vunpack.c.l.b16 %v2612
    %v2772 = vunpack.c.h.b16 %v2612
    %v2773 = vunpack.c.l.b16 %v2613
    %v2774 = vunpack.c.h.b16 %v2613
    %v2775 = vunpack.c.l.b16 %v2614
    %v2776 = vunpack.c.h.b16 %v2614
    %v2777 = vunpack.c.l.b16 %v2615
    %v2778 = vunpack.c.h.b16 %v2615
    %v2779 = vunpack.c.l.b16 %v2616
    %v2780 = vunpack.c.h.b16 %v2616
    %v2781 = vunpack.c.l.b16 %v2617
    %v2782 = vunpack.c.h.b16 %v2617
    %v2783 = vunpack.c.l.b16 %v2618
    %v2784 = vunpack.c.h.b16 %v2618
    %v2785 = vunpack.c.l.b16 %v2619
    %v2786 = vunpack.c.h.b16 %v2619
    %v2787 = vunpack.c.l.b16 %v2620
    %v2788 = vunpack.c.h.b16 %v2620
    %v2789 = vunpack.c.l.b16 %v2621
    %v2790 = vunpack.c.h.b16 %v2621
    %v2791 = vunpack.c.l.b16 %v2622
    %v2792 = vunpack.c.h.b16 %v2622
    %v2793 = vunpack.c.l.b16 %v2623
    %v2794 = vunpack.c.h.b16 %v2623
    %v2795 = vunpack.c.l.b16 %v2624
    %v2796 = vunpack.c.h.b16 %v2624
    %v2797 = vunpack.c.l.b16 %v2625
    %v2798 = vunpack.c.h.b16 %v2625
    %v2799 = vunpack.c.l.b16 %v2626
    %v2800 = vunpack.c.h.b16 %v2626
    %v2801 = vunpack.c.l.b16 %v2627
    %v2802 = vunpack.c.h.b16 %v2627
    %v2803 = vunpack.c.l.b16 %v2628
    %v2804 = vunpack.c.h.b16 %v2628
    %v2805 = vunpack.c.l.b16 %v2629
    %v2806 = vunpack.c.h.b16 %v2629
    %v2807 = vunpack.c.l.b16 %v2630
    %v2808 = vunpack.c.h.b16 %v2630
    %v2809 = vunpack.c.l.b16 %v2631
    %v2810 = vunpack.c.h.b16 %v2631
    %v2811 = vunpack.c.l.b16 %v2632
    %v2812 = vunpack.c.h.b16 %v2632
    %v2813 = vunpack.c.l.b16 %v2633
    %v2814 = vunpack.c.h.b16 %v2633
    %v2815 = vunpack.c.l.b16 %v2634
    %v2816 = vunpack.c.h.b16 %v2634
    %v2817 = vunpack.c.l.b16 %v2635
    %v2818 = vunpack.c.h.b16 %v2635
    %v2819 = vunpack.c.l.b16 %v2636
    %v2820 = vunpack.c.h.b16 %v2636
    %v2821 = vunpack.c.l.b16 %v2637
    %v2822 = vunpack.c.h.b16 %v2637
    %v2823 = vunpack.c.l.b16 %v2638
    %v2824 = vunpack.c.h.b16 %v2638
    %v2825 = vunpack.c.l.b16 %v2639
    %v2826 = vunpack.c.h.b16 %v2639
    %v2827 = vunpack.c.l.b16 %v2640
    %v2828 = vunpack.c.h.b16 %v2640
    %v2829 = vunpack.c.l.b16 %v2641
    %v2830 = vunpack.c.h.b16 %v2641
    %v2831 = vunpack.c.l.b16 %v2642
    %v2832 = vunpack.c.h.b16 %v2642
    %v2833 = vunpack.c.l.b16 %v2643
    %v2834 = vunpack.c.h.b16 %v2643
    %v2835 = vunpack.c.l.b16 %v2644
    %v2836 = vunpack.c.h.b16 %v2644
    %v2837 = vunpack.c.l.b16 %v2645
    %v2838 = vunpack.c.h.b16 %v2645
    %v2839 = vunpack.c.l.b16 %v2646
    %v2840 = vunpack.c.h.b16 %v2646
    %v2841 = vunpack.c.l.b16 %v2647
    %v2842 = vunpack.c.h.b16 %v2647
    %v2843 = vunpack.c.l.b16 %v2648
    %v2844 = vunpack.c.h.b16 %v2648
    %v2845 = vunpack.c.l.b16 %v2649
    %v2846 = vunpack.c.h.b16 %v2649
    %v2847 = vunpack.c.l.b16 %v2650
    %v2848 = vunpack.c.h.b16 %v2650
    %v2849 = vunpack.c.l.b16 %v2651
    %v2850 = vunpack.c.h.b16 %v2651
    %v2851 = vunpack.c.l.b16 %v2652
    %v2852 = vunpack.c.h.b16 %v2652
    %v2853 = vunpack.c.l.b16 %v2653
    %v2854 = vunpack.c.h.b16 %v2653
    %v2855 = vunpack.c.l.b16 %v2654
    %v2856 = vunpack.c.h.b16 %v2654
    %v2857 = vunpack.c.l.b16 %v2655
    %v2858 = vunpack.c.h.b16 %v2655
    %v2859 = vunpack.c.l.b16 %v2656
    %v2860 = vunpack.c.h.b16 %v2656
    %v2861 = vunpack.c.l.b16 %v2657
    %v2862 = vunpack.c.h.b16 %v2657
    %v2863 = vunpack.c.l.b16 %v2658
    %v2864 = vunpack.c.h.b16 %v2658
    %v2865 = vunpack.c.l.b16 %v2659
    %v2866 = vunpack.c.h.b16 %v2659
    %v2867 = vunpack.c.l.b16 %v2660
    %v2868 = vunpack.c.h.b16 %v2660
    %v2869 = vunpack.c.l.b16 %v2661
    %v2870 = vunpack.c.h.b16 %v2661
    %v2871 = vunpack.c.l.b16 %v2662
    %v2872 = vunpack.c.h.b16 %v2662
    %v2873 = vunpack.c.l.b16 %v2663
    %v2874 = vunpack.c.h.b16 %v2663
    %v2875 = vunpack.c.l.b16 %v2664
    %v2876 = vunpack.c.h.b16 %v2664
    %v2877 = vunpack.c.l.b16 %v2665
    %v2878 = vunpack.c.h.b16 %v2665
    %v2879 = vunpack.c.l.b16 %v2666
    %v2880 = vunpack.c.h.b16 %v2666
    %v2881 = vpack.c.b16 %v2757, %v2753
    %v2882 = vpack.c.b16 %v2758, %v2754
    %v2883 = vpack.c.b16 %v2759, %v2755
    %v2884 = vpack.c.b16 %v2760, %v2756
    %v2885 = vpack.c.b16 %v2765, %v2761
    %v2886 = vpack.c.b16 %v2766, %v2762
    %v2887 = vpack.c.b16 %v2767, %v2763
    %v2888 = vpack.c.b16 %v2768, %v2764
    %v2889 = vpack.c.b16 %v2773, %v2769
    %v2890 = vpack.c.b16 %v2774, %v2770
    %v2891 = vpack.c.b16 %v2775, %v2771
    %v2892 = vpack.c.b16 %v2776, %v2772
    %v2893 = vpack.c.b16 %v2781, %v2777
    %v2894 = vpack.c.b16 %v2782, %v2778
    %v2895 = vpack.c.b16 %v2783, %v2779
    %v2896 = vpack.c.b16 %v2784, %v2780
    %v2897 = vpack.c.b16 %v2789, %v2785
    %v2898 = vpack.c.b16 %v2790, %v2786
    %v2899 = vpack.c.b16 %v2791, %v2787
    %v2900 = vpack.c.b16 %v2792, %v2788
    %v2901 = vpack.c.b16 %v2797, %v2793
    %v2902 = vpack.c.b16 %v2798, %v2794
    %v2903 = vpack.c.b16 %v2799, %v2795
    %v2904 = vpack.c.b16 %v2800, %v2796
    %v2905 = vpack.c.b16 %v2805, %v2801
    %v2906 = vpack.c.b16 %v2806, %v2802
    %v2907 = vpack.c.b16 %v2807, %v2803
    %v2908 = vpack.c.b16 %v2808, %v2804
    %v2909 = vpack.c.b16 %v2813, %v2809
    %v2910 = vpack.c.b16 %v2814, %v2810
    %v2911 = vpack.c.b16 %v2815, %v2811
    %v2912 = vpack.c.b16 %v2816, %v2812
    %v2913 = vpack.c.b16 %v2821, %v2817
    %v2914 = vpack.c.b16 %v2822, %v2818
    %v2915 = vpack.c.b16 %v2823, %v2819
    %v2916 = vpack.c.b16 %v2824, %v2820
    %v2917 = vpack.c.b16 %v2829, %v2825
    %v2918 = vpack.c.b16 %v2830, %v2826
    %v2919 = vpack.c.b16 %v2831, %v2827
    %v2920 = vpack.c.b16 %v2832, %v2828
    %v2921 = vpack.c.b16 %v2837, %v2833
    %v2922 = vpack.c.b16 %v2838, %v2834
    %v2923 = vpack.c.b16 %v2839, %v2835
    %v2924 = vpack.c.b16 %v2840, %v2836
    %v2925 = vpack.c.b16 %v2845, %v2841
    %v2926 = vpack.c.b16 %v2846, %v2842
    %v2927 = vpack.c.b16 %v2847, %v2843
    %v2928 = vpack.c.b16 %v2848, %v2844
    %v2929 = vpack.c.b16 %v2853, %v2849
    %v2930 = vpack.c.b16 %v2854, %v2850
    %v2931 = vpack.c.b16 %v2855, %v2851
    %v2932 = vpack.c.b16 %v2856, %v2852
    %v2933 = vpack.c.b16 %v2861, %v2857
    %v2934 = vpack.c.b16 %v2862, %v2858
    %v2935 = vpack.c.b16 %v2863, %v2859
    %v2936 = vpack.c.b16 %v2864, %v2860
    %v2937 = vpack.c.b16 %v2869, %v2865
    %v2938 = vpack.c.b16 %v2870, %v2866
    %v2939 = vpack.c.b16 %v2871, %v2867
    %v2940 = vpack.c.b16 %v2872, %v2868
    %v2941 = vpack.c.b16 %v2877, %v2873
    %v2942 = vpack.c.b16 %v2878, %v2874
    %v2943 = vpack.c.b16 %v2879, %v2875
    %v2944 = vpack.c.b16 %v2880, %v2876
    %3009 = vmatprep.subr.bf16.mxu0 %v2882
    %3010 = vmatpush1.bf16.msra.mxu0 %v2881
    %3011 = vmatprep.subr.bf16.mxu0 %v2886
    %3012 = vmatpush1.bf16.msra.mxu0 %v2885
    %3013 = vmatprep.subr.bf16.mxu0 %v2890
    %3014 = vmatpush1.bf16.msra.mxu0 %v2889
    %3015 = vmatprep.subr.bf16.mxu0 %v2894
    %3016 = vmatpush1.bf16.msra.mxu0 %v2893
    %3017 = vmatprep.subr.bf16.mxu0 %v2898
    %3018 = vmatpush1.bf16.msra.mxu0 %v2897
    %3019 = vmatprep.subr.bf16.mxu0 %v2902
    %3020 = vmatpush1.bf16.msra.mxu0 %v2901
    %3021 = vmatprep.subr.bf16.mxu0 %v2906
    %3022 = vmatpush1.bf16.msra.mxu0 %v2905
    %3023 = vmatprep.subr.bf16.mxu0 %v2910
    %3024 = vmatpush1.bf16.msra.mxu0 %v2909
    %3025 = vmatprep.subr.bf16.mxu0 %v2914
    %3026 = vmatpush1.bf16.msra.mxu0 %v2913
    %3027 = vmatprep.subr.bf16.mxu0 %v2918
    %3028 = vmatpush1.bf16.msra.mxu0 %v2917
    %3029 = vmatprep.subr.bf16.mxu0 %v2922
    %3030 = vmatpush1.bf16.msra.mxu0 %v2921
    %3031 = vmatprep.subr.bf16.mxu0 %v2926
    %3032 = vmatpush1.bf16.msra.mxu0 %v2925
    %3033 = vmatprep.subr.bf16.mxu0 %v2930
    %3034 = vmatpush1.bf16.msra.mxu0 %v2929
    %3035 = vmatprep.subr.bf16.mxu0 %v2934
    %3036 = vmatpush1.bf16.msra.mxu0 %v2933
    %3037 = vmatprep.subr.bf16.mxu0 %v2938
    %3038 = vmatpush1.bf16.msra.mxu0 %v2937
    %3039 = vmatprep.subr.bf16.mxu0 %v2942
    %3040 = vmatpush1.bf16.msra.mxu0 %v2941
    %3041 = vmatprep.mubr.bf16.mxu0 %v2494
    %3042 = vmatmul.mubr.bf16.gmra.mrb[0].mxu0 %v2602
    %v3043 = vpop.f32.mrb[0].mxu0
    %v3044 = vadd.f32 %v2672, %v3043
    %v3045 = vpop.f32.mrb[0].mxu0
    %v3046 = vadd.f32 %v2676, %v3045
    %v3047 = vpop.f32.mrb[0].mxu0
    %v3048 = vpop.f32.mrb[0].mxu0
    %3049 = vdwg.mxu0
    %3050 = vmatprep.subr.bf16.mxu0 %v2884
    %3051 = vmatpush1.bf16.msra.mxu0 %v2883
    %3052 = vmatprep.subr.bf16.mxu0 %v2888
    %3053 = vmatpush1.bf16.msra.mxu0 %v2887
    %3054 = vmatprep.subr.bf16.mxu0 %v2892
    %3055 = vmatpush1.bf16.msra.mxu0 %v2891
    %3056 = vmatprep.subr.bf16.mxu0 %v2896
    %3057 = vmatpush1.bf16.msra.mxu0 %v2895
    %3058 = vmatprep.subr.bf16.mxu0 %v2900
    %3059 = vmatpush1.bf16.msra.mxu0 %v2899
    %3060 = vmatprep.subr.bf16.mxu0 %v2904
    %3061 = vmatpush1.bf16.msra.mxu0 %v2903
    %3062 = vmatprep.subr.bf16.mxu0 %v2908
    %3063 = vmatpush1.bf16.msra.mxu0 %v2907
    %3064 = vmatprep.subr.bf16.mxu0 %v2912
    %3065 = vmatpush1.bf16.msra.mxu0 %v2911
    %3066 = vmatprep.subr.bf16.mxu0 %v2916
    %3067 = vmatpush1.bf16.msra.mxu0 %v2915
    %3068 = vmatprep.subr.bf16.mxu0 %v2920
    %3069 = vmatpush1.bf16.msra.mxu0 %v2919
    %3070 = vmatprep.subr.bf16.mxu0 %v2924
    %3071 = vmatpush1.bf16.msra.mxu0 %v2923
    %3072 = vmatprep.subr.bf16.mxu0 %v2928
    %3073 = vmatpush1.bf16.msra.mxu0 %v2927
    %3074 = vmatprep.subr.bf16.mxu0 %v2932
    %3075 = vmatpush1.bf16.msra.mxu0 %v2931
    %3076 = vmatprep.subr.bf16.mxu0 %v2936
    %3077 = vmatpush1.bf16.msra.mxu0 %v2935
    %3078 = vmatprep.subr.bf16.mxu0 %v2940
    %3079 = vmatpush1.bf16.msra.mxu0 %v2939
    %3080 = vmatprep.subr.bf16.mxu0 %v2944
    %3081 = vmatpush1.bf16.msra.mxu0 %v2943
    %3082 = vmatprep.mubr.bf16.mxu0 %v2494
    %3083 = vmatmul.mubr.bf16.gmra.mrb[0].mxu0 %v2602
    %v3084 = vpop.f32.mrb[0].mxu0
    %v3085 = vadd.f32 %v2680, %v3084
    %v3086 = vpop.f32.mrb[0].mxu0
    %v3087 = vadd.f32 %v2684, %v3086
    %v3088 = vpop.f32.mrb[0].mxu0
    %v3089 = vpop.f32.mrb[0].mxu0
    %3090 = vdwg.mxu0
    %v3091 = vxor.u32 %v3044, 2147483648
    %v3092 = vmul.f32 %v3091, 1.442695
    %v3093 = vpow.pop %v3092
    %v3094 = vadd.f32 %v3093, 1.0
    %v3095 = vrcp.pop %v3094
    %v3096 = vmul.f32 1.0, %v3095
    %v3097 = vxor.u32 %v3046, 2147483648
    %v3098 = vmul.f32 %v3097, 1.442695
    %v3099 = vpow.pop %v3098
    %v3100 = vadd.f32 %v3099, 1.0
    %v3101 = vrcp.pop %v3100
    %v3102 = vmul.f32 1.0, %v3101
    %v3103 = vtanh.pop %v3085
    %v3104 = vxor.u32 %v3087, 2147483648
    %v3105 = vmul.f32 %v3104, 1.442695
    %v3106 = vpow.pop %v3105
    %v3107 = vadd.f32 %v3106, 1.0
    %v3108 = vrcp.pop %v3107
    %v3109 = vmul.f32 1.0, %v3108
    %v3110 = vmul.f32 %v3102, %v2491
    %v3111 = vmul.f32 %v3096, %v3103
    %v3112 = vadd.f32 %v3110, %v3111
    %v3113 = vtanh.pop %v3112
    %v3114 = vmul.f32 %v3109, %v3113
    %v3115 = vpack.c.bf16 %v3114, %v3114
    %s3116 = scalar_lea.vmem [#allocation4], 512
    %v3117 = vld [vmem:[%s3116] sm:$0xff]
    %v3118 = vld [vmem:[%s3116 + $0x8] sm:$0xff]
    %v3119 = vld [vmem:[%s3116 + $0x10] sm:$0xff]
    %v3120 = vld [vmem:[%s3116 + $0x18] sm:$0xff]
    %v3121 = vld [vmem:[%s3116 + $0x20] sm:$0xff]
    %v3122 = vld [vmem:[%s3116 + $0x28] sm:$0xff]
    %v3123 = vld [vmem:[%s3116 + $0x30] sm:$0xff]
    %v3124 = vld [vmem:[%s3116 + $0x38] sm:$0xff]
    %v3125 = vld [vmem:[%s3116 + $0x40] sm:$0xff]
    %v3126 = vld [vmem:[%s3116 + $0x48] sm:$0xff]
    %v3127 = vld [vmem:[%s3116 + $0x50] sm:$0xff]
    %v3128 = vld [vmem:[%s3116 + $0x58] sm:$0xff]
    %v3129 = vld [vmem:[%s3116 + $0x60] sm:$0xff]
    %v3130 = vld [vmem:[%s3116 + $0x68] sm:$0xff]
    %v3131 = vld [vmem:[%s3116 + $0x70] sm:$0xff]
    %v3132 = vld [vmem:[%s3116 + $0x78] sm:$0xff]
    %v3133 = vld [vmem:[%s3116 + $0x80] sm:$0xff]
    %v3134 = vld [vmem:[%s3116 + $0x88] sm:$0xff]
    %v3135 = vld [vmem:[%s3116 + $0x90] sm:$0xff]
    %v3136 = vld [vmem:[%s3116 + $0x98] sm:$0xff]
    %v3137 = vld [vmem:[%s3116 + $0xa0] sm:$0xff]
    %v3138 = vld [vmem:[%s3116 + $0xa8] sm:$0xff]
    %v3139 = vld [vmem:[%s3116 + $0xb0] sm:$0xff]
    %v3140 = vld [vmem:[%s3116 + $0xb8] sm:$0xff]
    %v3141 = vld [vmem:[%s3116 + $0xc0] sm:$0xff]
    %v3142 = vld [vmem:[%s3116 + $0xc8] sm:$0xff]
    %v3143 = vld [vmem:[%s3116 + $0xd0] sm:$0xff]
    %v3144 = vld [vmem:[%s3116 + $0xd8] sm:$0xff]
    %v3145 = vld [vmem:[%s3116 + $0xe0] sm:$0xff]
    %v3146 = vld [vmem:[%s3116 + $0xe8] sm:$0xff]
    %v3147 = vld [vmem:[%s3116 + $0xf0] sm:$0xff]
    %v3148 = vld [vmem:[%s3116 + $0xf8] sm:$0xff]
    %v3149 = vld [vmem:[%s3116 + $0x100] sm:$0xff]
    %v3150 = vld [vmem:[%s3116 + $0x108] sm:$0xff]
    %v3151 = vld [vmem:[%s3116 + $0x110] sm:$0xff]
    %v3152 = vld [vmem:[%s3116 + $0x118] sm:$0xff]
    %v3153 = vld [vmem:[%s3116 + $0x120] sm:$0xff]
    %v3154 = vld [vmem:[%s3116 + $0x128] sm:$0xff]
    %v3155 = vld [vmem:[%s3116 + $0x130] sm:$0xff]
    %v3156 = vld [vmem:[%s3116 + $0x138] sm:$0xff]
    %v3157 = vld [vmem:[%s3116 + $0x140] sm:$0xff]
    %v3158 = vld [vmem:[%s3116 + $0x148] sm:$0xff]
    %v3159 = vld [vmem:[%s3116 + $0x150] sm:$0xff]
    %v3160 = vld [vmem:[%s3116 + $0x158] sm:$0xff]
    %v3161 = vld [vmem:[%s3116 + $0x160] sm:$0xff]
    %v3162 = vld [vmem:[%s3116 + $0x168] sm:$0xff]
    %v3163 = vld [vmem:[%s3116 + $0x170] sm:$0xff]
    %v3164 = vld [vmem:[%s3116 + $0x178] sm:$0xff]
    %v3165 = vld [vmem:[%s3116 + $0x180] sm:$0xff]
    %v3166 = vld [vmem:[%s3116 + $0x188] sm:$0xff]
    %v3167 = vld [vmem:[%s3116 + $0x190] sm:$0xff]
    %v3168 = vld [vmem:[%s3116 + $0x198] sm:$0xff]
    %v3169 = vld [vmem:[%s3116 + $0x1a0] sm:$0xff]
    %v3170 = vld [vmem:[%s3116 + $0x1a8] sm:$0xff]
    %v3171 = vld [vmem:[%s3116 + $0x1b0] sm:$0xff]
    %v3172 = vld [vmem:[%s3116 + $0x1b8] sm:$0xff]
    %v3173 = vld [vmem:[%s3116 + $0x1c0] sm:$0xff]
    %v3174 = vld [vmem:[%s3116 + $0x1c8] sm:$0xff]
    %v3175 = vld [vmem:[%s3116 + $0x1d0] sm:$0xff]
    %v3176 = vld [vmem:[%s3116 + $0x1d8] sm:$0xff]
    %v3177 = vld [vmem:[%s3116 + $0x1e0] sm:$0xff]
    %v3178 = vld [vmem:[%s3116 + $0x1e8] sm:$0xff]
    %v3179 = vld [vmem:[%s3116 + $0x1f0] sm:$0xff]
    %v3180 = vld [vmem:[%s3116 + $0x1f8] sm:$0xff]
    %s3181 = scalar_lea.vmem %s5, 4
    %v3182 = vld [vmem:[%s3181] sm:$0xf]
    %v3184 = vlaneseq
    %v3185 = vshrl.u32 %v3184, 7
    %v3186 = vsub.s32 0, %v3185
    %v3187 = vrot.slane %v3182, %v3186
    %v3188 = vlaneseq
    %v3189 = vshrl.u32 %v3188, 7
    %v3190 = vsub.s32 1, %v3189
    %v3191 = vrot.slane %v3182, %v3190
    %v3192 = vlaneseq
    %v3193 = vshrl.u32 %v3192, 7
    %v3194 = vsub.s32 2, %v3193
    %v3195 = vrot.slane %v3182, %v3194
    %v3196 = vlaneseq
    %v3197 = vshrl.u32 %v3196, 7
    %v3198 = vsub.s32 3, %v3197
    %v3199 = vrot.slane %v3182, %v3198
    %v3268 = vunpack.c.l.b16 %v3117
    %v3269 = vunpack.c.h.b16 %v3117
    %v3270 = vunpack.c.l.b16 %v3118
    %v3271 = vunpack.c.h.b16 %v3118
    %v3272 = vunpack.c.l.b16 %v3119
    %v3273 = vunpack.c.h.b16 %v3119
    %v3274 = vunpack.c.l.b16 %v3120
    %v3275 = vunpack.c.h.b16 %v3120
    %v3276 = vunpack.c.l.b16 %v3121
    %v3277 = vunpack.c.h.b16 %v3121
    %v3278 = vunpack.c.l.b16 %v3122
    %v3279 = vunpack.c.h.b16 %v3122
    %v3280 = vunpack.c.l.b16 %v3123
    %v3281 = vunpack.c.h.b16 %v3123
    %v3282 = vunpack.c.l.b16 %v3124
    %v3283 = vunpack.c.h.b16 %v3124
    %v3284 = vunpack.c.l.b16 %v3125
    %v3285 = vunpack.c.h.b16 %v3125
    %v3286 = vunpack.c.l.b16 %v3126
    %v3287 = vunpack.c.h.b16 %v3126
    %v3288 = vunpack.c.l.b16 %v3127
    %v3289 = vunpack.c.h.b16 %v3127
    %v3290 = vunpack.c.l.b16 %v3128
    %v3291 = vunpack.c.h.b16 %v3128
    %v3292 = vunpack.c.l.b16 %v3129
    %v3293 = vunpack.c.h.b16 %v3129
    %v3294 = vunpack.c.l.b16 %v3130
    %v3295 = vunpack.c.h.b16 %v3130
    %v3296 = vunpack.c.l.b16 %v3131
    %v3297 = vunpack.c.h.b16 %v3131
    %v3298 = vunpack.c.l.b16 %v3132
    %v3299 = vunpack.c.h.b16 %v3132
    %v3300 = vunpack.c.l.b16 %v3133
    %v3301 = vunpack.c.h.b16 %v3133
    %v3302 = vunpack.c.l.b16 %v3134
    %v3303 = vunpack.c.h.b16 %v3134
    %v3304 = vunpack.c.l.b16 %v3135
    %v3305 = vunpack.c.h.b16 %v3135
    %v3306 = vunpack.c.l.b16 %v3136
    %v3307 = vunpack.c.h.b16 %v3136
    %v3308 = vunpack.c.l.b16 %v3137
    %v3309 = vunpack.c.h.b16 %v3137
    %v3310 = vunpack.c.l.b16 %v3138
    %v3311 = vunpack.c.h.b16 %v3138
    %v3312 = vunpack.c.l.b16 %v3139
    %v3313 = vunpack.c.h.b16 %v3139
    %v3314 = vunpack.c.l.b16 %v3140
    %v3315 = vunpack.c.h.b16 %v3140
    %v3316 = vunpack.c.l.b16 %v3141
    %v3317 = vunpack.c.h.b16 %v3141
    %v3318 = vunpack.c.l.b16 %v3142
    %v3319 = vunpack.c.h.b16 %v3142
    %v3320 = vunpack.c.l.b16 %v3143
    %v3321 = vunpack.c.h.b16 %v3143
    %v3322 = vunpack.c.l.b16 %v3144
    %v3323 = vunpack.c.h.b16 %v3144
    %v3324 = vunpack.c.l.b16 %v3145
    %v3325 = vunpack.c.h.b16 %v3145
    %v3326 = vunpack.c.l.b16 %v3146
    %v3327 = vunpack.c.h.b16 %v3146
    %v3328 = vunpack.c.l.b16 %v3147
    %v3329 = vunpack.c.h.b16 %v3147
    %v3330 = vunpack.c.l.b16 %v3148
    %v3331 = vunpack.c.h.b16 %v3148
    %v3332 = vunpack.c.l.b16 %v3149
    %v3333 = vunpack.c.h.b16 %v3149
    %v3334 = vunpack.c.l.b16 %v3150
    %v3335 = vunpack.c.h.b16 %v3150
    %v3336 = vunpack.c.l.b16 %v3151
    %v3337 = vunpack.c.h.b16 %v3151
    %v3338 = vunpack.c.l.b16 %v3152
    %v3339 = vunpack.c.h.b16 %v3152
    %v3340 = vunpack.c.l.b16 %v3153
    %v3341 = vunpack.c.h.b16 %v3153
    %v3342 = vunpack.c.l.b16 %v3154
    %v3343 = vunpack.c.h.b16 %v3154
    %v3344 = vunpack.c.l.b16 %v3155
    %v3345 = vunpack.c.h.b16 %v3155
    %v3346 = vunpack.c.l.b16 %v3156
    %v3347 = vunpack.c.h.b16 %v3156
    %v3348 = vunpack.c.l.b16 %v3157
    %v3349 = vunpack.c.h.b16 %v3157
    %v3350 = vunpack.c.l.b16 %v3158
    %v3351 = vunpack.c.h.b16 %v3158
    %v3352 = vunpack.c.l.b16 %v3159
    %v3353 = vunpack.c.h.b16 %v3159
    %v3354 = vunpack.c.l.b16 %v3160
    %v3355 = vunpack.c.h.b16 %v3160
    %v3356 = vunpack.c.l.b16 %v3161
    %v3357 = vunpack.c.h.b16 %v3161
    %v3358 = vunpack.c.l.b16 %v3162
    %v3359 = vunpack.c.h.b16 %v3162
    %v3360 = vunpack.c.l.b16 %v3163
    %v3361 = vunpack.c.h.b16 %v3163
    %v3362 = vunpack.c.l.b16 %v3164
    %v3363 = vunpack.c.h.b16 %v3164
    %v3364 = vunpack.c.l.b16 %v3165
    %v3365 = vunpack.c.h.b16 %v3165
    %v3366 = vunpack.c.l.b16 %v3166
    %v3367 = vunpack.c.h.b16 %v3166
    %v3368 = vunpack.c.l.b16 %v3167
    %v3369 = vunpack.c.h.b16 %v3167
    %v3370 = vunpack.c.l.b16 %v3168
    %v3371 = vunpack.c.h.b16 %v3168
    %v3372 = vunpack.c.l.b16 %v3169
    %v3373 = vunpack.c.h.b16 %v3169
    %v3374 = vunpack.c.l.b16 %v3170
    %v3375 = vunpack.c.h.b16 %v3170
    %v3376 = vunpack.c.l.b16 %v3171
    %v3377 = vunpack.c.h.b16 %v3171
    %v3378 = vunpack.c.l.b16 %v3172
    %v3379 = vunpack.c.h.b16 %v3172
    %v3380 = vunpack.c.l.b16 %v3173
    %v3381 = vunpack.c.h.b16 %v3173
    %v3382 = vunpack.c.l.b16 %v3174
    %v3383 = vunpack.c.h.b16 %v3174
    %v3384 = vunpack.c.l.b16 %v3175
    %v3385 = vunpack.c.h.b16 %v3175
    %v3386 = vunpack.c.l.b16 %v3176
    %v3387 = vunpack.c.h.b16 %v3176
    %v3388 = vunpack.c.l.b16 %v3177
    %v3389 = vunpack.c.h.b16 %v3177
    %v3390 = vunpack.c.l.b16 %v3178
    %v3391 = vunpack.c.h.b16 %v3178
    %v3392 = vunpack.c.l.b16 %v3179
    %v3393 = vunpack.c.h.b16 %v3179
    %v3394 = vunpack.c.l.b16 %v3180
    %v3395 = vunpack.c.h.b16 %v3180
    %v3396 = vpack.c.b16 %v3272, %v3268
    %v3397 = vpack.c.b16 %v3273, %v3269
    %v3398 = vpack.c.b16 %v3274, %v3270
    %v3399 = vpack.c.b16 %v3275, %v3271
    %v3400 = vpack.c.b16 %v3280, %v3276
    %v3401 = vpack.c.b16 %v3281, %v3277
    %v3402 = vpack.c.b16 %v3282, %v3278
    %v3403 = vpack.c.b16 %v3283, %v3279
    %v3404 = vpack.c.b16 %v3288, %v3284
    %v3405 = vpack.c.b16 %v3289, %v3285
    %v3406 = vpack.c.b16 %v3290, %v3286
    %v3407 = vpack.c.b16 %v3291, %v3287
    %v3408 = vpack.c.b16 %v3296, %v3292
    %v3409 = vpack.c.b16 %v3297, %v3293
    %v3410 = vpack.c.b16 %v3298, %v3294
    %v3411 = vpack.c.b16 %v3299, %v3295
    %v3412 = vpack.c.b16 %v3304, %v3300
    %v3413 = vpack.c.b16 %v3305, %v3301
    %v3414 = vpack.c.b16 %v3306, %v3302
    %v3415 = vpack.c.b16 %v3307, %v3303
    %v3416 = vpack.c.b16 %v3312, %v3308
    %v3417 = vpack.c.b16 %v3313, %v3309
    %v3418 = vpack.c.b16 %v3314, %v3310
    %v3419 = vpack.c.b16 %v3315, %v3311
    %v3420 = vpack.c.b16 %v3320, %v3316
    %v3421 = vpack.c.b16 %v3321, %v3317
    %v3422 = vpack.c.b16 %v3322, %v3318
    %v3423 = vpack.c.b16 %v3323, %v3319
    %v3424 = vpack.c.b16 %v3328, %v3324
    %v3425 = vpack.c.b16 %v3329, %v3325
    %v3426 = vpack.c.b16 %v3330, %v3326
    %v3427 = vpack.c.b16 %v3331, %v3327
    %v3428 = vpack.c.b16 %v3336, %v3332
    %v3429 = vpack.c.b16 %v3337, %v3333
    %v3430 = vpack.c.b16 %v3338, %v3334
    %v3431 = vpack.c.b16 %v3339, %v3335
    %v3432 = vpack.c.b16 %v3344, %v3340
    %v3433 = vpack.c.b16 %v3345, %v3341
    %v3434 = vpack.c.b16 %v3346, %v3342
    %v3435 = vpack.c.b16 %v3347, %v3343
    %v3436 = vpack.c.b16 %v3352, %v3348
    %v3437 = vpack.c.b16 %v3353, %v3349
    %v3438 = vpack.c.b16 %v3354, %v3350
    %v3439 = vpack.c.b16 %v3355, %v3351
    %v3440 = vpack.c.b16 %v3360, %v3356
    %v3441 = vpack.c.b16 %v3361, %v3357
    %v3442 = vpack.c.b16 %v3362, %v3358
    %v3443 = vpack.c.b16 %v3363, %v3359
    %v3444 = vpack.c.b16 %v3368, %v3364
    %v3445 = vpack.c.b16 %v3369, %v3365
    %v3446 = vpack.c.b16 %v3370, %v3366
    %v3447 = vpack.c.b16 %v3371, %v3367
    %v3448 = vpack.c.b16 %v3376, %v3372
    %v3449 = vpack.c.b16 %v3377, %v3373
    %v3450 = vpack.c.b16 %v3378, %v3374
    %v3451 = vpack.c.b16 %v3379, %v3375
    %v3452 = vpack.c.b16 %v3384, %v3380
    %v3453 = vpack.c.b16 %v3385, %v3381
    %v3454 = vpack.c.b16 %v3386, %v3382
    %v3455 = vpack.c.b16 %v3387, %v3383
    %v3456 = vpack.c.b16 %v3392, %v3388
    %v3457 = vpack.c.b16 %v3393, %v3389
    %v3458 = vpack.c.b16 %v3394, %v3390
    %v3459 = vpack.c.b16 %v3395, %v3391
    %3524 = vmatprep.subr.bf16.mxu0 %v3397
    %3525 = vmatpush1.bf16.msra.mxu0 %v3396
    %3526 = vmatprep.subr.bf16.mxu0 %v3401
    %3527 = vmatpush1.bf16.msra.mxu0 %v3400
    %3528 = vmatprep.subr.bf16.mxu0 %v3405
    %3529 = vmatpush1.bf16.msra.mxu0 %v3404
    %3530 = vmatprep.subr.bf16.mxu0 %v3409
    %3531 = vmatpush1.bf16.msra.mxu0 %v3408
    %3532 = vmatprep.subr.bf16.mxu0 %v3413
    %3533 = vmatpush1.bf16.msra.mxu0 %v3412
    %3534 = vmatprep.subr.bf16.mxu0 %v3417
    %3535 = vmatpush1.bf16.msra.mxu0 %v3416
    %3536 = vmatprep.subr.bf16.mxu0 %v3421
    %3537 = vmatpush1.bf16.msra.mxu0 %v3420
    %3538 = vmatprep.subr.bf16.mxu0 %v3425
    %3539 = vmatpush1.bf16.msra.mxu0 %v3424
    %3540 = vmatprep.subr.bf16.mxu0 %v3429
    %3541 = vmatpush1.bf16.msra.mxu0 %v3428
    %3542 = vmatprep.subr.bf16.mxu0 %v3433
    %3543 = vmatpush1.bf16.msra.mxu0 %v3432
    %3544 = vmatprep.subr.bf16.mxu0 %v3437
    %3545 = vmatpush1.bf16.msra.mxu0 %v3436
    %3546 = vmatprep.subr.bf16.mxu0 %v3441
    %3547 = vmatpush1.bf16.msra.mxu0 %v3440
    %3548 = vmatprep.subr.bf16.mxu0 %v3445
    %3549 = vmatpush1.bf16.msra.mxu0 %v3444
    %3550 = vmatprep.subr.bf16.mxu0 %v3449
    %3551 = vmatpush1.bf16.msra.mxu0 %v3448
    %3552 = vmatprep.subr.bf16.mxu0 %v3453
    %3553 = vmatpush1.bf16.msra.mxu0 %v3452
    %3554 = vmatprep.subr.bf16.mxu0 %v3457
    %3555 = vmatpush1.bf16.msra.mxu0 %v3456
    %3556 = vmatprep.mubr.bf16.mxu0 %v2601
    %3557 = vmatmul.mubr.bf16.gmra.mrb[0].mxu0 %v3115
    %v3558 = vpop.f32.mrb[0].mxu0
    %v3559 = vadd.f32 %v3187, %v3558
    %v3560 = vpop.f32.mrb[0].mxu0
    %v3561 = vadd.f32 %v3191, %v3560
    %v3562 = vpop.f32.mrb[0].mxu0
    %v3563 = vpop.f32.mrb[0].mxu0
    %3564 = vdwg.mxu0
    %3565 = vmatprep.subr.bf16.mxu0 %v3399
    %3566 = vmatpush1.bf16.msra.mxu0 %v3398
    %3567 = vmatprep.subr.bf16.mxu0 %v3403
    %3568 = vmatpush1.bf16.msra.mxu0 %v3402
    %3569 = vmatprep.subr.bf16.mxu0 %v3407
    %3570 = vmatpush1.bf16.msra.mxu0 %v3406
    %3571 = vmatprep.subr.bf16.mxu0 %v3411
    %3572 = vmatpush1.bf16.msra.mxu0 %v3410
    %3573 = vmatprep.subr.bf16.mxu0 %v3415
    %3574 = vmatpush1.bf16.msra.mxu0 %v3414
    %3575 = vmatprep.subr.bf16.mxu0 %v3419
    %3576 = vmatpush1.bf16.msra.mxu0 %v3418
    %3577 = vmatprep.subr.bf16.mxu0 %v3423
    %3578 = vmatpush1.bf16.msra.mxu0 %v3422
    %3579 = vmatprep.subr.bf16.mxu0 %v3427
    %3580 = vmatpush1.bf16.msra.mxu0 %v3426
    %3581 = vmatprep.subr.bf16.mxu0 %v3431
    %3582 = vmatpush1.bf16.msra.mxu0 %v3430
    %3583 = vmatprep.subr.bf16.mxu0 %v3435
    %3584 = vmatpush1.bf16.msra.mxu0 %v3434
    %3585 = vmatprep.subr.bf16.mxu0 %v3439
    %3586 = vmatpush1.bf16.msra.mxu0 %v3438
    %3587 = vmatprep.subr.bf16.mxu0 %v3443
    %3588 = vmatpush1.bf16.msra.mxu0 %v3442
    %3589 = vmatprep.subr.bf16.mxu0 %v3447
    %3590 = vmatpush1.bf16.msra.mxu0 %v3446
    %3591 = vmatprep.subr.bf16.mxu0 %v3451
    %3592 = vmatpush1.bf16.msra.mxu0 %v3450
    %3593 = vmatprep.subr.bf16.mxu0 %v3455
    %3594 = vmatpush1.bf16.msra.mxu0 %v3454
    %3595 = vmatprep.subr.bf16.mxu0 %v3459
    %3596 = vmatpush1.bf16.msra.mxu0 %v3458
    %3597 = vmatprep.mubr.bf16.mxu0 %v2601
    %3598 = vmatmul.mubr.bf16.gmra.mrb[0].mxu0 %v3115
    %v3599 = vpop.f32.mrb[0].mxu0
    %v3600 = vadd.f32 %v3195, %v3599
    %v3601 = vpop.f32.mrb[0].mxu0
    %v3602 = vadd.f32 %v3199, %v3601
    %v3603 = vpop.f32.mrb[0].mxu0
    %v3604 = vpop.f32.mrb[0].mxu0
    %3605 = vdwg.mxu0
    %v3606 = vxor.u32 %v3559, 2147483648
    %v3607 = vmul.f32 %v3606, 1.442695
    %v3608 = vpow.pop %v3607
    %v3609 = vadd.f32 %v3608, 1.0
    %v3610 = vrcp.pop %v3609
    %v3611 = vmul.f32 1.0, %v3610
    %v3612 = vxor.u32 %v3561, 2147483648
    %v3613 = vmul.f32 %v3612, 1.442695
    %v3614 = vpow.pop %v3613
    %v3615 = vadd.f32 %v3614, 1.0
    %v3616 = vrcp.pop %v3615
    %v3617 = vmul.f32 1.0, %v3616
    %v3618 = vtanh.pop %v3600
    %v3619 = vxor.u32 %v3602, 2147483648
    %v3620 = vmul.f32 %v3619, 1.442695
    %v3621 = vpow.pop %v3620
    %v3622 = vadd.f32 %v3621, 1.0
    %v3623 = vrcp.pop %v3622
    %v3624 = vmul.f32 1.0, %v3623
    %v3625 = vmul.f32 %v3617, %v2598
    %v3626 = vmul.f32 %v3611, %v3618
    %v3627 = vadd.f32 %v3625, %v3626
    %v3628 = vtanh.pop %v3627
    %v3629 = vmul.f32 %v3624, %v3628
    %v3630 = vpack.c.bf16 %v3629, %v3629
    %v3631 = vld [vmem:[%s6] sm:$0xf]
    %v3632 = vld [vmem:[%s6 + $0x4] sm:$0xf]
    %v3633 = vld [vmem:[%s6 + $0x8] sm:$0xf]
    %v3634 = vld [vmem:[%s6 + $0xc] sm:$0xf]
    %v3635 = vld [vmem:[%s6 + $0x10] sm:$0xf]
    %v3636 = vld [vmem:[%s6 + $0x14] sm:$0xf]
    %v3637 = vld [vmem:[%s6 + $0x18] sm:$0xf]
    %v3638 = vld [vmem:[%s6 + $0x1c] sm:$0xf]
    %v3639 = vld [vmem:[%s6 + $0x20] sm:$0xf]
    %v3640 = vld [vmem:[%s6 + $0x24] sm:$0xf]
    %v3641 = vld [vmem:[%s6 + $0x28] sm:$0xf]
    %v3642 = vld [vmem:[%s6 + $0x2c] sm:$0xf]
    %v3643 = vld [vmem:[%s6 + $0x30] sm:$0xf]
    %v3644 = vld [vmem:[%s6 + $0x34] sm:$0xf]
    %v3645 = vld [vmem:[%s6 + $0x38] sm:$0xf]
    %v3646 = vld [vmem:[%s6 + $0x3c] sm:$0xf]
    %v3647 = vld [vmem:[%s7] sm:$0x1]
    %v3649 = vlaneseq
    %v3650 = vshrl.u32 %v3649, 7
    %v3651 = vsub.s32 0, %v3650
    %v3652 = vrot.slane %v3647, %v3651
    %v3670 = vunpack.c.l.b16 %v3631
    %v3671 = vunpack.c.l.b16 %v3632
    %v3672 = vunpack.c.l.b16 %v3633
    %v3673 = vunpack.c.l.b16 %v3634
    %v3674 = vunpack.c.l.b16 %v3635
    %v3675 = vunpack.c.l.b16 %v3636
    %v3676 = vunpack.c.l.b16 %v3637
    %v3677 = vunpack.c.l.b16 %v3638
    %v3678 = vunpack.c.l.b16 %v3639
    %v3679 = vunpack.c.l.b16 %v3640
    %v3680 = vunpack.c.l.b16 %v3641
    %v3681 = vunpack.c.l.b16 %v3642
    %v3682 = vunpack.c.l.b16 %v3643
    %v3683 = vunpack.c.l.b16 %v3644
    %v3684 = vunpack.c.l.b16 %v3645
    %v3685 = vunpack.c.l.b16 %v3646
    %v3686 = vpack.c.b16 %v3671, %v3670
    %v3687 = vpack.c.b16 %v3673, %v3672
    %v3688 = vpack.c.b16 %v3675, %v3674
    %v3689 = vpack.c.b16 %v3677, %v3676
    %v3690 = vpack.c.b16 %v3679, %v3678
    %v3691 = vpack.c.b16 %v3681, %v3680
    %v3692 = vpack.c.b16 %v3683, %v3682
    %v3693 = vpack.c.b16 %v3685, %v3684
    %3702 = vmatprep.subr.bf16.mxu0 0
    %3703 = vmatpush1.bf16.msra.mxu0 %v3686
    %3704 = vmatprep.subr.bf16.mxu0 0
    %3705 = vmatpush1.bf16.msra.mxu0 %v3687
    %3706 = vmatprep.subr.bf16.mxu0 0
    %3707 = vmatpush1.bf16.msra.mxu0 %v3688
    %3708 = vmatprep.subr.bf16.mxu0 0
    %3709 = vmatpush1.bf16.msra.mxu0 %v3689
    %3710 = vmatprep.subr.bf16.mxu0 0
    %3711 = vmatpush1.bf16.msra.mxu0 %v3690
    %3712 = vmatprep.subr.bf16.mxu0 0
    %3713 = vmatpush1.bf16.msra.mxu0 %v3691
    %3714 = vmatprep.subr.bf16.mxu0 0
    %3715 = vmatpush1.bf16.msra.mxu0 %v3692
    %3716 = vmatprep.subr.bf16.mxu0 0
    %3717 = vmatpush1.bf16.msra.mxu0 %v3693
    %3718 = vmatprep.subr.bf16.mxu0 0
    %3719 = vmatpush1.bf16.msra.mxu0 0
    %3720 = vmatprep.subr.bf16.mxu0 0
    %3721 = vmatpush1.bf16.msra.mxu0 0
    %3722 = vmatprep.subr.bf16.mxu0 0
    %3723 = vmatpush1.bf16.msra.mxu0 0
    %3724 = vmatprep.subr.bf16.mxu0 0
    %3725 = vmatpush1.bf16.msra.mxu0 0
    %3726 = vmatprep.subr.bf16.mxu0 0
    %3727 = vmatpush1.bf16.msra.mxu0 0
    %3728 = vmatprep.subr.bf16.mxu0 0
    %3729 = vmatpush1.bf16.msra.mxu0 0
    %3730 = vmatprep.subr.bf16.mxu0 0
    %3731 = vmatpush1.bf16.msra.mxu0 0
    %3732 = vmatprep.subr.bf16.mxu0 0
    %3733 = vmatpush1.bf16.msra.mxu0 0
    %3734 = vmatprep.mubr.bf16.mxu0 0
    %3735 = vmatmul.mubr.bf16.gmra.mrb[0].mxu0 %v3630
    %v3736 = vpop.f32.mrb[0].mxu0
    %v3737 = vadd.f32 %v3652, %v3736
    %v3738 = vpop.f32.mrb[0].mxu0
    %v3739 = vpop.f32.mrb[0].mxu0
    %v3740 = vpop.f32.mrb[0].mxu0
    %3741 = vdwg.mxu0
    %3742 = vst [vmem:[%s9] sm:$0xff] %v3737
    %v3743 = vlaneseq
    %v3744 = vand.u32 %v3743, 127
    %v3745 = vcvt.s32.f32 %v3744
    %3746 = vmax.xlane.f32.xlu0 %v3737
    %v3747 = vpop.xlane.xlu0 %3746
    %vm3748 = vcmp.eq.f32.partialorder %v3737, %v3747
    %v3749 = vsel %vm3748, %v3745, 128.0
    %3750 = vmin.xlane.f32.xlu0 %v3749
    %v3751 = vpop.xlane.xlu0 %3750
    %vm3752 = vcmp.eq.f32.partialorder %v3745, %v3751
    %v3753 = vsel %vm3752, 1, 0
    %v3754 = vcvt.s32.f32 %v3753
    %v3755 = vpack.c.bf16 %v3754, %v3754
    %v3756 = vld [vmem:[%s8] sm:$0xf]
    %v3757 = vld [vmem:[%s8 + $0x4] sm:$0xf]
    %v3758 = vld [vmem:[%s8 + $0x8] sm:$0xf]
    %v3759 = vld [vmem:[%s8 + $0xc] sm:$0xf]
    %v3760 = vld [vmem:[%s8 + $0x10] sm:$0xf]
    %v3761 = vld [vmem:[%s8 + $0x14] sm:$0xf]
    %v3762 = vld [vmem:[%s8 + $0x18] sm:$0xf]
    %v3763 = vld [vmem:[%s8 + $0x1c] sm:$0xf]
    %v3764 = vld [vmem:[%s8 + $0x20] sm:$0xf]
    %v3765 = vld [vmem:[%s8 + $0x24] sm:$0xf]
    %v3766 = vld [vmem:[%s8 + $0x28] sm:$0xf]
    %v3767 = vld [vmem:[%s8 + $0x2c] sm:$0xf]
    %v3768 = vld [vmem:[%s8 + $0x30] sm:$0xf]
    %v3769 = vld [vmem:[%s8 + $0x34] sm:$0xf]
    %v3770 = vld [vmem:[%s8 + $0x38] sm:$0xf]
    %v3771 = vld [vmem:[%s8 + $0x3c] sm:$0xf]
    %v3788 = vunpack.c.l.b16 %v3756
    %v3789 = vunpack.c.l.b16 %v3757
    %v3790 = vunpack.c.l.b16 %v3758
    %v3791 = vunpack.c.l.b16 %v3759
    %v3792 = vunpack.c.l.b16 %v3760
    %v3793 = vunpack.c.l.b16 %v3761
    %v3794 = vunpack.c.l.b16 %v3762
    %v3795 = vunpack.c.l.b16 %v3763
    %v3796 = vunpack.c.l.b16 %v3764
    %v3797 = vunpack.c.l.b16 %v3765
    %v3798 = vunpack.c.l.b16 %v3766
    %v3799 = vunpack.c.l.b16 %v3767
    %v3800 = vunpack.c.l.b16 %v3768
    %v3801 = vunpack.c.l.b16 %v3769
    %v3802 = vunpack.c.l.b16 %v3770
    %v3803 = vunpack.c.l.b16 %v3771
    %v3804 = vpack.c.b16 %v3789, %v3788
    %v3805 = vpack.c.b16 %v3791, %v3790
    %v3806 = vpack.c.b16 %v3793, %v3792
    %v3807 = vpack.c.b16 %v3795, %v3794
    %v3808 = vpack.c.b16 %v3797, %v3796
    %v3809 = vpack.c.b16 %v3799, %v3798
    %v3810 = vpack.c.b16 %v3801, %v3800
    %v3811 = vpack.c.b16 %v3803, %v3802
    %3820 = vmatprep.subr.bf16.mxu0 0
    %3821 = vmatpush1.bf16.msra.mxu0 %v3804
    %3822 = vmatprep.subr.bf16.mxu0 0
    %3823 = vmatpush1.bf16.msra.mxu0 %v3805
    %3824 = vmatprep.subr.bf16.mxu0 0
    %3825 = vmatpush1.bf16.msra.mxu0 %v3806
    %3826 = vmatprep.subr.bf16.mxu0 0
    %3827 = vmatpush1.bf16.msra.mxu0 %v3807
    %3828 = vmatprep.subr.bf16.mxu0 0
    %3829 = vmatpush1.bf16.msra.mxu0 %v3808
    %3830 = vmatprep.subr.bf16.mxu0 0
    %3831 = vmatpush1.bf16.msra.mxu0 %v3809
    %3832 = vmatprep.subr.bf16.mxu0 0
    %3833 = vmatpush1.bf16.msra.mxu0 %v3810
    %3834 = vmatprep.subr.bf16.mxu0 0
    %3835 = vmatpush1.bf16.msra.mxu0 %v3811
    %3836 = vmatprep.subr.bf16.mxu0 0
    %3837 = vmatpush1.bf16.msra.mxu0 0
    %3838 = vmatprep.subr.bf16.mxu0 0
    %3839 = vmatpush1.bf16.msra.mxu0 0
    %3840 = vmatprep.subr.bf16.mxu0 0
    %3841 = vmatpush1.bf16.msra.mxu0 0
    %3842 = vmatprep.subr.bf16.mxu0 0
    %3843 = vmatpush1.bf16.msra.mxu0 0
    %3844 = vmatprep.subr.bf16.mxu0 0
    %3845 = vmatpush1.bf16.msra.mxu0 0
    %3846 = vmatprep.subr.bf16.mxu0 0
    %3847 = vmatpush1.bf16.msra.mxu0 0
    %3848 = vmatprep.subr.bf16.mxu0 0
    %3849 = vmatpush1.bf16.msra.mxu0 0
    %3850 = vmatprep.subr.bf16.mxu0 0
    %3851 = vmatpush1.bf16.msra.mxu0 0
    %3852 = vmatprep.mubr.bf16.mxu0 0
    %3853 = vmatmul.mubr.bf16.gmra.mrb[0].mxu0 %v3755
    %v3854 = vpop.f32.mrb[0].mxu0
    %v3855 = vadd.f32 0.0, %v3854
    %v3856 = vpop.f32.mrb[0].mxu0
    %v3857 = vpop.f32.mrb[0].mxu0
    %v3858 = vpop.f32.mrb[0].mxu0
    %3859 = vdwg.mxu0
    %v3860 = vpack.c.bf16 %v3855, %v3855
    %v3861 = vld [vmem:[#allocation4] sm:$0xff]
    %v3862 = vld [vmem:[#allocation4 + $0x8] sm:$0xff]
    %v3863 = vld [vmem:[#allocation4 + $0x10] sm:$0xff]
    %v3864 = vld [vmem:[#allocation4 + $0x18] sm:$0xff]
    %v3865 = vld [vmem:[#allocation4 + $0x20] sm:$0xff]
    %v3866 = vld [vmem:[#allocation4 + $0x28] sm:$0xff]
    %v3867 = vld [vmem:[#allocation4 + $0x30] sm:$0xff]
    %v3868 = vld [vmem:[#allocation4 + $0x38] sm:$0xff]
    %v3869 = vld [vmem:[#allocation4 + $0x40] sm:$0xff]
    %v3870 = vld [vmem:[#allocation4 + $0x48] sm:$0xff]
    %v3871 = vld [vmem:[#allocation4 + $0x50] sm:$0xff]
    %v3872 = vld [vmem:[#allocation4 + $0x58] sm:$0xff]
    %v3873 = vld [vmem:[#allocation4 + $0x60] sm:$0xff]
    %v3874 = vld [vmem:[#allocation4 + $0x68] sm:$0xff]
    %v3875 = vld [vmem:[#allocation4 + $0x70] sm:$0xff]
    %v3876 = vld [vmem:[#allocation4 + $0x78] sm:$0xff]
    %v3877 = vld [vmem:[#allocation4 + $0x80] sm:$0xff]
    %v3878 = vld [vmem:[#allocation4 + $0x88] sm:$0xff]
    %v3879 = vld [vmem:[#allocation4 + $0x90] sm:$0xff]
    %v3880 = vld [vmem:[#allocation4 + $0x98] sm:$0xff]
    %v3881 = vld [vmem:[#allocation4 + $0xa0] sm:$0xff]
    %v3882 = vld [vmem:[#allocation4 + $0xa8] sm:$0xff]
    %v3883 = vld [vmem:[#allocation4 + $0xb0] sm:$0xff]
    %v3884 = vld [vmem:[#allocation4 + $0xb8] sm:$0xff]
    %v3885 = vld [vmem:[#allocation4 + $0xc0] sm:$0xff]
    %v3886 = vld [vmem:[#allocation4 + $0xc8] sm:$0xff]
    %v3887 = vld [vmem:[#allocation4 + $0xd0] sm:$0xff]
    %v3888 = vld [vmem:[#allocation4 + $0xd8] sm:$0xff]
    %v3889 = vld [vmem:[#allocation4 + $0xe0] sm:$0xff]
    %v3890 = vld [vmem:[#allocation4 + $0xe8] sm:$0xff]
    %v3891 = vld [vmem:[#allocation4 + $0xf0] sm:$0xff]
    %v3892 = vld [vmem:[#allocation4 + $0xf8] sm:$0xff]
    %v3893 = vld [vmem:[#allocation4 + $0x100] sm:$0xff]
    %v3894 = vld [vmem:[#allocation4 + $0x108] sm:$0xff]
    %v3895 = vld [vmem:[#allocation4 + $0x110] sm:$0xff]
    %v3896 = vld [vmem:[#allocation4 + $0x118] sm:$0xff]
    %v3897 = vld [vmem:[#allocation4 + $0x120] sm:$0xff]
    %v3898 = vld [vmem:[#allocation4 + $0x128] sm:$0xff]
    %v3899 = vld [vmem:[#allocation4 + $0x130] sm:$0xff]
    %v3900 = vld [vmem:[#allocation4 + $0x138] sm:$0xff]
    %v3901 = vld [vmem:[#allocation4 + $0x140] sm:$0xff]
    %v3902 = vld [vmem:[#allocation4 + $0x148] sm:$0xff]
    %v3903 = vld [vmem:[#allocation4 + $0x150] sm:$0xff]
    %v3904 = vld [vmem:[#allocation4 + $0x158] sm:$0xff]
    %v3905 = vld [vmem:[#allocation4 + $0x160] sm:$0xff]
    %v3906 = vld [vmem:[#allocation4 + $0x168] sm:$0xff]
    %v3907 = vld [vmem:[#allocation4 + $0x170] sm:$0xff]
    %v3908 = vld [vmem:[#allocation4 + $0x178] sm:$0xff]
    %v3909 = vld [vmem:[#allocation4 + $0x180] sm:$0xff]
    %v3910 = vld [vmem:[#allocation4 + $0x188] sm:$0xff]
    %v3911 = vld [vmem:[#allocation4 + $0x190] sm:$0xff]
    %v3912 = vld [vmem:[#allocation4 + $0x198] sm:$0xff]
    %v3913 = vld [vmem:[#allocation4 + $0x1a0] sm:$0xff]
    %v3914 = vld [vmem:[#allocation4 + $0x1a8] sm:$0xff]
    %v3915 = vld [vmem:[#allocation4 + $0x1b0] sm:$0xff]
    %v3916 = vld [vmem:[#allocation4 + $0x1b8] sm:$0xff]
    %v3917 = vld [vmem:[#allocation4 + $0x1c0] sm:$0xff]
    %v3918 = vld [vmem:[#allocation4 + $0x1c8] sm:$0xff]
    %v3919 = vld [vmem:[#allocation4 + $0x1d0] sm:$0xff]
    %v3920 = vld [vmem:[#allocation4 + $0x1d8] sm:$0xff]
    %v3921 = vld [vmem:[#allocation4 + $0x1e0] sm:$0xff]
    %v3922 = vld [vmem:[#allocation4 + $0x1e8] sm:$0xff]
    %v3923 = vld [vmem:[#allocation4 + $0x1f0] sm:$0xff]
    %v3924 = vld [vmem:[#allocation4 + $0x1f8] sm:$0xff]
    %v3925 = vld [vmem:[%s5] sm:$0xf]
    %v3927 = vlaneseq
    %v3928 = vshrl.u32 %v3927, 7
    %v3929 = vsub.s32 0, %v3928
    %v3930 = vrot.slane %v3925, %v3929
    %v3931 = vlaneseq
    %v3932 = vshrl.u32 %v3931, 7
    %v3933 = vsub.s32 1, %v3932
    %v3934 = vrot.slane %v3925, %v3933
    %v3935 = vlaneseq
    %v3936 = vshrl.u32 %v3935, 7
    %v3937 = vsub.s32 2, %v3936
    %v3938 = vrot.slane %v3925, %v3937
    %v3939 = vlaneseq
    %v3940 = vshrl.u32 %v3939, 7
    %v3941 = vsub.s32 3, %v3940
    %v3942 = vrot.slane %v3925, %v3941
    %v4011 = vunpack.c.l.b16 %v3861
    %v4012 = vunpack.c.h.b16 %v3861
    %v4013 = vunpack.c.l.b16 %v3862
    %v4014 = vunpack.c.h.b16 %v3862
    %v4015 = vunpack.c.l.b16 %v3863
    %v4016 = vunpack.c.h.b16 %v3863
    %v4017 = vunpack.c.l.b16 %v3864
    %v4018 = vunpack.c.h.b16 %v3864
    %v4019 = vunpack.c.l.b16 %v3865
    %v4020 = vunpack.c.h.b16 %v3865
    %v4021 = vunpack.c.l.b16 %v3866
    %v4022 = vunpack.c.h.b16 %v3866
    %v4023 = vunpack.c.l.b16 %v3867
    %v4024 = vunpack.c.h.b16 %v3867
    %v4025 = vunpack.c.l.b16 %v3868
    %v4026 = vunpack.c.h.b16 %v3868
    %v4027 = vunpack.c.l.b16 %v3869
    %v4028 = vunpack.c.h.b16 %v3869
    %v4029 = vunpack.c.l.b16 %v3870
    %v4030 = vunpack.c.h.b16 %v3870
    %v4031 = vunpack.c.l.b16 %v3871
    %v4032 = vunpack.c.h.b16 %v3871
    %v4033 = vunpack.c.l.b16 %v3872
    %v4034 = vunpack.c.h.b16 %v3872
    %v4035 = vunpack.c.l.b16 %v3873
    %v4036 = vunpack.c.h.b16 %v3873
    %v4037 = vunpack.c.l.b16 %v3874
    %v4038 = vunpack.c.h.b16 %v3874
    %v4039 = vunpack.c.l.b16 %v3875
    %v4040 = vunpack.c.h.b16 %v3875
    %v4041 = vunpack.c.l.b16 %v3876
    %v4042 = vunpack.c.h.b16 %v3876
    %v4043 = vunpack.c.l.b16 %v3877
    %v4044 = vunpack.c.h.b16 %v3877
    %v4045 = vunpack.c.l.b16 %v3878
    %v4046 = vunpack.c.h.b16 %v3878
    %v4047 = vunpack.c.l.b16 %v3879
    %v4048 = vunpack.c.h.b16 %v3879
    %v4049 = vunpack.c.l.b16 %v3880
    %v4050 = vunpack.c.h.b16 %v3880
    %v4051 = vunpack.c.l.b16 %v3881
    %v4052 = vunpack.c.h.b16 %v3881
    %v4053 = vunpack.c.l.b16 %v3882
    %v4054 = vunpack.c.h.b16 %v3882
    %v4055 = vunpack.c.l.b16 %v3883
    %v4056 = vunpack.c.h.b16 %v3883
    %v4057 = vunpack.c.l.b16 %v3884
    %v4058 = vunpack.c.h.b16 %v3884
    %v4059 = vunpack.c.l.b16 %v3885
    %v4060 = vunpack.c.h.b16 %v3885
    %v4061 = vunpack.c.l.b16 %v3886
    %v4062 = vunpack.c.h.b16 %v3886
    %v4063 = vunpack.c.l.b16 %v3887
    %v4064 = vunpack.c.h.b16 %v3887
    %v4065 = vunpack.c.l.b16 %v3888
    %v4066 = vunpack.c.h.b16 %v3888
    %v4067 = vunpack.c.l.b16 %v3889
    %v4068 = vunpack.c.h.b16 %v3889
    %v4069 = vunpack.c.l.b16 %v3890
    %v4070 = vunpack.c.h.b16 %v3890
    %v4071 = vunpack.c.l.b16 %v3891
    %v4072 = vunpack.c.h.b16 %v3891
    %v4073 = vunpack.c.l.b16 %v3892
    %v4074 = vunpack.c.h.b16 %v3892
    %v4075 = vunpack.c.l.b16 %v3893
    %v4076 = vunpack.c.h.b16 %v3893
    %v4077 = vunpack.c.l.b16 %v3894
    %v4078 = vunpack.c.h.b16 %v3894
    %v4079 = vunpack.c.l.b16 %v3895
    %v4080 = vunpack.c.h.b16 %v3895
    %v4081 = vunpack.c.l.b16 %v3896
    %v4082 = vunpack.c.h.b16 %v3896
    %v4083 = vunpack.c.l.b16 %v3897
    %v4084 = vunpack.c.h.b16 %v3897
    %v4085 = vunpack.c.l.b16 %v3898
    %v4086 = vunpack.c.h.b16 %v3898
    %v4087 = vunpack.c.l.b16 %v3899
    %v4088 = vunpack.c.h.b16 %v3899
    %v4089 = vunpack.c.l.b16 %v3900
    %v4090 = vunpack.c.h.b16 %v3900
    %v4091 = vunpack.c.l.b16 %v3901
    %v4092 = vunpack.c.h.b16 %v3901
    %v4093 = vunpack.c.l.b16 %v3902
    %v4094 = vunpack.c.h.b16 %v3902
    %v4095 = vunpack.c.l.b16 %v3903
    %v4096 = vunpack.c.h.b16 %v3903
    %v4097 = vunpack.c.l.b16 %v3904
    %v4098 = vunpack.c.h.b16 %v3904
    %v4099 = vunpack.c.l.b16 %v3905
    %v4100 = vunpack.c.h.b16 %v3905
    %v4101 = vunpack.c.l.b16 %v3906
    %v4102 = vunpack.c.h.b16 %v3906
    %v4103 = vunpack.c.l.b16 %v3907
    %v4104 = vunpack.c.h.b16 %v3907
    %v4105 = vunpack.c.l.b16 %v3908
    %v4106 = vunpack.c.h.b16 %v3908
    %v4107 = vunpack.c.l.b16 %v3909
    %v4108 = vunpack.c.h.b16 %v3909
    %v4109 = vunpack.c.l.b16 %v3910
    %v4110 = vunpack.c.h.b16 %v3910
    %v4111 = vunpack.c.l.b16 %v3911
    %v4112 = vunpack.c.h.b16 %v3911
    %v4113 = vunpack.c.l.b16 %v3912
    %v4114 = vunpack.c.h.b16 %v3912
    %v4115 = vunpack.c.l.b16 %v3913
    %v4116 = vunpack.c.h.b16 %v3913
    %v4117 = vunpack.c.l.b16 %v3914
    %v4118 = vunpack.c.h.b16 %v3914
    %v4119 = vunpack.c.l.b16 %v3915
    %v4120 = vunpack.c.h.b16 %v3915
    %v4121 = vunpack.c.l.b16 %v3916
    %v4122 = vunpack.c.h.b16 %v3916
    %v4123 = vunpack.c.l.b16 %v3917
    %v4124 = vunpack.c.h.b16 %v3917
    %v4125 = vunpack.c.l.b16 %v3918
    %v4126 = vunpack.c.h.b16 %v3918
    %v4127 = vunpack.c.l.b16 %v3919
    %v4128 = vunpack.c.h.b16 %v3919
    %v4129 = vunpack.c.l.b16 %v3920
    %v4130 = vunpack.c.h.b16 %v3920
    %v4131 = vunpack.c.l.b16 %v3921
    %v4132 = vunpack.c.h.b16 %v3921
    %v4133 = vunpack.c.l.b16 %v3922
    %v4134 = vunpack.c.h.b16 %v3922
    %v4135 = vunpack.c.l.b16 %v3923
    %v4136 = vunpack.c.h.b16 %v3923
    %v4137 = vunpack.c.l.b16 %v3924
    %v4138 = vunpack.c.h.b16 %v3924
    %v4139 = vpack.c.b16 %v4015, %v4011
    %v4140 = vpack.c.b16 %v4016, %v4012
    %v4141 = vpack.c.b16 %v4017, %v4013
    %v4142 = vpack.c.b16 %v4018, %v4014
    %v4143 = vpack.c.b16 %v4023, %v4019
    %v4144 = vpack.c.b16 %v4024, %v4020
    %v4145 = vpack.c.b16 %v4025, %v4021
    %v4146 = vpack.c.b16 %v4026, %v4022
    %v4147 = vpack.c.b16 %v4031, %v4027
    %v4148 = vpack.c.b16 %v4032, %v4028
    %v4149 = vpack.c.b16 %v4033, %v4029
    %v4150 = vpack.c.b16 %v4034, %v4030
    %v4151 = vpack.c.b16 %v4039, %v4035
    %v4152 = vpack.c.b16 %v4040, %v4036
    %v4153 = vpack.c.b16 %v4041, %v4037
    %v4154 = vpack.c.b16 %v4042, %v4038
    %v4155 = vpack.c.b16 %v4047, %v4043
    %v4156 = vpack.c.b16 %v4048, %v4044
    %v4157 = vpack.c.b16 %v4049, %v4045
    %v4158 = vpack.c.b16 %v4050, %v4046
    %v4159 = vpack.c.b16 %v4055, %v4051
    %v4160 = vpack.c.b16 %v4056, %v4052
    %v4161 = vpack.c.b16 %v4057, %v4053
    %v4162 = vpack.c.b16 %v4058, %v4054
    %v4163 = vpack.c.b16 %v4063, %v4059
    %v4164 = vpack.c.b16 %v4064, %v4060
    %v4165 = vpack.c.b16 %v4065, %v4061
    %v4166 = vpack.c.b16 %v4066, %v4062
    %v4167 = vpack.c.b16 %v4071, %v4067
    %v4168 = vpack.c.b16 %v4072, %v4068
    %v4169 = vpack.c.b16 %v4073, %v4069
    %v4170 = vpack.c.b16 %v4074, %v4070
    %v4171 = vpack.c.b16 %v4079, %v4075
    %v4172 = vpack.c.b16 %v4080, %v4076
    %v4173 = vpack.c.b16 %v4081, %v4077
    %v4174 = vpack.c.b16 %v4082, %v4078
    %v4175 = vpack.c.b16 %v4087, %v4083
    %v4176 = vpack.c.b16 %v4088, %v4084
    %v4177 = vpack.c.b16 %v4089, %v4085
    %v4178 = vpack.c.b16 %v4090, %v4086
    %v4179 = vpack.c.b16 %v4095, %v4091
    %v4180 = vpack.c.b16 %v4096, %v4092
    %v4181 = vpack.c.b16 %v4097, %v4093
    %v4182 = vpack.c.b16 %v4098, %v4094
    %v4183 = vpack.c.b16 %v4103, %v4099
    %v4184 = vpack.c.b16 %v4104, %v4100
    %v4185 = vpack.c.b16 %v4105, %v4101
    %v4186 = vpack.c.b16 %v4106, %v4102
    %v4187 = vpack.c.b16 %v4111, %v4107
    %v4188 = vpack.c.b16 %v4112, %v4108
    %v4189 = vpack.c.b16 %v4113, %v4109
    %v4190 = vpack.c.b16 %v4114, %v4110
    %v4191 = vpack.c.b16 %v4119, %v4115
    %v4192 = vpack.c.b16 %v4120, %v4116
    %v4193 = vpack.c.b16 %v4121, %v4117
    %v4194 = vpack.c.b16 %v4122, %v4118
    %v4195 = vpack.c.b16 %v4127, %v4123
    %v4196 = vpack.c.b16 %v4128, %v4124
    %v4197 = vpack.c.b16 %v4129, %v4125
    %v4198 = vpack.c.b16 %v4130, %v4126
    %v4199 = vpack.c.b16 %v4135, %v4131
    %v4200 = vpack.c.b16 %v4136, %v4132
    %v4201 = vpack.c.b16 %v4137, %v4133
    %v4202 = vpack.c.b16 %v4138, %v4134
    %4267 = vmatprep.subr.bf16.mxu0 %v4140
    %4268 = vmatpush1.bf16.msra.mxu0 %v4139
    %4269 = vmatprep.subr.bf16.mxu0 %v4144
    %4270 = vmatpush1.bf16.msra.mxu0 %v4143
    %4271 = vmatprep.subr.bf16.mxu0 %v4148
    %4272 = vmatpush1.bf16.msra.mxu0 %v4147
    %4273 = vmatprep.subr.bf16.mxu0 %v4152
    %4274 = vmatpush1.bf16.msra.mxu0 %v4151
    %4275 = vmatprep.subr.bf16.mxu0 %v4156
    %4276 = vmatpush1.bf16.msra.mxu0 %v4155
    %4277 = vmatprep.subr.bf16.mxu0 %v4160
    %4278 = vmatpush1.bf16.msra.mxu0 %v4159
    %4279 = vmatprep.subr.bf16.mxu0 %v4164
    %4280 = vmatpush1.bf16.msra.mxu0 %v4163
    %4281 = vmatprep.subr.bf16.mxu0 %v4168
    %4282 = vmatpush1.bf16.msra.mxu0 %v4167
    %4283 = vmatprep.subr.bf16.mxu0 %v4172
    %4284 = vmatpush1.bf16.msra.mxu0 %v4171
    %4285 = vmatprep.subr.bf16.mxu0 %v4176
    %4286 = vmatpush1.bf16.msra.mxu0 %v4175
    %4287 = vmatprep.subr.bf16.mxu0 %v4180
    %4288 = vmatpush1.bf16.msra.mxu0 %v4179
    %4289 = vmatprep.subr.bf16.mxu0 %v4184
    %4290 = vmatpush1.bf16.msra.mxu0 %v4183
    %4291 = vmatprep.subr.bf16.mxu0 %v4188
    %4292 = vmatpush1.bf16.msra.mxu0 %v4187
    %4293 = vmatprep.subr.bf16.mxu0 %v4192
    %4294 = vmatpush1.bf16.msra.mxu0 %v4191
    %4295 = vmatprep.subr.bf16.mxu0 %v4196
    %4296 = vmatpush1.bf16.msra.mxu0 %v4195
    %4297 = vmatprep.subr.bf16.mxu0 %v4200
    %4298 = vmatpush1.bf16.msra.mxu0 %v4199
    %4299 = vmatprep.mubr.bf16.mxu0 %v3115
    %4300 = vmatmul.mubr.bf16.gmra.mrb[0].mxu0 %v3860
    %v4301 = vpop.f32.mrb[0].mxu0
    %v4302 = vadd.f32 %v3930, %v4301
    %v4303 = vpop.f32.mrb[0].mxu0
    %v4304 = vadd.f32 %v3934, %v4303
    %v4305 = vpop.f32.mrb[0].mxu0
    %v4306 = vpop.f32.mrb[0].mxu0
    %4307 = vdwg.mxu0
    %4308 = vmatprep.subr.bf16.mxu0 %v4142
    %4309 = vmatpush1.bf16.msra.mxu0 %v4141
    %4310 = vmatprep.subr.bf16.mxu0 %v4146
    %4311 = vmatpush1.bf16.msra.mxu0 %v4145
    %4312 = vmatprep.subr.bf16.mxu0 %v4150
    %4313 = vmatpush1.bf16.msra.mxu0 %v4149
    %4314 = vmatprep.subr.bf16.mxu0 %v4154
    %4315 = vmatpush1.bf16.msra.mxu0 %v4153
    %4316 = vmatprep.subr.bf16.mxu0 %v4158
    %4317 = vmatpush1.bf16.msra.mxu0 %v4157
    %4318 = vmatprep.subr.bf16.mxu0 %v4162
    %4319 = vmatpush1.bf16.msra.mxu0 %v4161
    %4320 = vmatprep.subr.bf16.mxu0 %v4166
    %4321 = vmatpush1.bf16.msra.mxu0 %v4165
    %4322 = vmatprep.subr.bf16.mxu0 %v4170
    %4323 = vmatpush1.bf16.msra.mxu0 %v4169
    %4324 = vmatprep.subr.bf16.mxu0 %v4174
    %4325 = vmatpush1.bf16.msra.mxu0 %v4173
    %4326 = vmatprep.subr.bf16.mxu0 %v4178
    %4327 = vmatpush1.bf16.msra.mxu0 %v4177
    %4328 = vmatprep.subr.bf16.mxu0 %v4182
    %4329 = vmatpush1.bf16.msra.mxu0 %v4181
    %4330 = vmatprep.subr.bf16.mxu0 %v4186
    %4331 = vmatpush1.bf16.msra.mxu0 %v4185
    %4332 = vmatprep.subr.bf16.mxu0 %v4190
    %4333 = vmatpush1.bf16.msra.mxu0 %v4189
    %4334 = vmatprep.subr.bf16.mxu0 %v4194
    %4335 = vmatpush1.bf16.msra.mxu0 %v4193
    %4336 = vmatprep.subr.bf16.mxu0 %v4198
    %4337 = vmatpush1.bf16.msra.mxu0 %v4197
    %4338 = vmatprep.subr.bf16.mxu0 %v4202
    %4339 = vmatpush1.bf16.msra.mxu0 %v4201
    %4340 = vmatprep.mubr.bf16.mxu0 %v3115
    %4341 = vmatmul.mubr.bf16.gmra.mrb[0].mxu0 %v3860
    %v4342 = vpop.f32.mrb[0].mxu0
    %v4343 = vadd.f32 %v3938, %v4342
    %v4344 = vpop.f32.mrb[0].mxu0
    %v4345 = vadd.f32 %v3942, %v4344
    %v4346 = vpop.f32.mrb[0].mxu0
    %v4347 = vpop.f32.mrb[0].mxu0
    %4348 = vdwg.mxu0
    %v4349 = vxor.u32 %v4302, 2147483648
    %v4350 = vmul.f32 %v4349, 1.442695
    %v4351 = vpow.pop %v4350
    %v4352 = vadd.f32 %v4351, 1.0
    %v4353 = vrcp.pop %v4352
    %v4354 = vmul.f32 1.0, %v4353
    %v4355 = vxor.u32 %v4304, 2147483648
    %v4356 = vmul.f32 %v4355, 1.442695
    %v4357 = vpow.pop %v4356
    %v4358 = vadd.f32 %v4357, 1.0
    %v4359 = vrcp.pop %v4358
    %v4360 = vmul.f32 1.0, %v4359
    %v4361 = vtanh.pop %v4343
    %v4362 = vxor.u32 %v4345, 2147483648
    %v4363 = vmul.f32 %v4362, 1.442695
    %v4364 = vpow.pop %v4363
    %v4365 = vadd.f32 %v4364, 1.0
    %v4366 = vrcp.pop %v4365
    %v4367 = vmul.f32 1.0, %v4366
    %v4368 = vmul.f32 %v4360, %v3112
    %v4369 = vmul.f32 %v4354, %v4361
    %v4370 = vadd.f32 %v4368, %v4369
    %v4371 = vtanh.pop %v4370
    %v4372 = vmul.f32 %v4367, %v4371
    %v4373 = vpack.c.bf16 %v4372, %v4372
    %v4374 = vld [vmem:[%s3116] sm:$0xff]
    %v4375 = vld [vmem:[%s3116 + $0x8] sm:$0xff]
    %v4376 = vld [vmem:[%s3116 + $0x10] sm:$0xff]
    %v4377 = vld [vmem:[%s3116 + $0x18] sm:$0xff]
    %v4378 = vld [vmem:[%s3116 + $0x20] sm:$0xff]
    %v4379 = vld [vmem:[%s3116 + $0x28] sm:$0xff]
    %v4380 = vld [vmem:[%s3116 + $0x30] sm:$0xff]
    %v4381 = vld [vmem:[%s3116 + $0x38] sm:$0xff]
    %v4382 = vld [vmem:[%s3116 + $0x40] sm:$0xff]
    %v4383 = vld [vmem:[%s3116 + $0x48] sm:$0xff]
    %v4384 = vld [vmem:[%s3116 + $0x50] sm:$0xff]
    %v4385 = vld [vmem:[%s3116 + $0x58] sm:$0xff]
    %v4386 = vld [vmem:[%s3116 + $0x60] sm:$0xff]
    %v4387 = vld [vmem:[%s3116 + $0x68] sm:$0xff]
    %v4388 = vld [vmem:[%s3116 + $0x70] sm:$0xff]
    %v4389 = vld [vmem:[%s3116 + $0x78] sm:$0xff]
    %v4390 = vld [vmem:[%s3116 + $0x80] sm:$0xff]
    %v4391 = vld [vmem:[%s3116 + $0x88] sm:$0xff]
    %v4392 = vld [vmem:[%s3116 + $0x90] sm:$0xff]
    %v4393 = vld [vmem:[%s3116 + $0x98] sm:$0xff]
    %v4394 = vld [vmem:[%s3116 + $0xa0] sm:$0xff]
    %v4395 = vld [vmem:[%s3116 + $0xa8] sm:$0xff]
    %v4396 = vld [vmem:[%s3116 + $0xb0] sm:$0xff]
    %v4397 = vld [vmem:[%s3116 + $0xb8] sm:$0xff]
    %v4398 = vld [vmem:[%s3116 + $0xc0] sm:$0xff]
    %v4399 = vld [vmem:[%s3116 + $0xc8] sm:$0xff]
    %v4400 = vld [vmem:[%s3116 + $0xd0] sm:$0xff]
    %v4401 = vld [vmem:[%s3116 + $0xd8] sm:$0xff]
    %v4402 = vld [vmem:[%s3116 + $0xe0] sm:$0xff]
    %v4403 = vld [vmem:[%s3116 + $0xe8] sm:$0xff]
    %v4404 = vld [vmem:[%s3116 + $0xf0] sm:$0xff]
    %v4405 = vld [vmem:[%s3116 + $0xf8] sm:$0xff]
    %v4406 = vld [vmem:[%s3116 + $0x100] sm:$0xff]
    %v4407 = vld [vmem:[%s3116 + $0x108] sm:$0xff]
    %v4408 = vld [vmem:[%s3116 + $0x110] sm:$0xff]
    %v4409 = vld [vmem:[%s3116 + $0x118] sm:$0xff]
    %v4410 = vld [vmem:[%s3116 + $0x120] sm:$0xff]
    %v4411 = vld [vmem:[%s3116 + $0x128] sm:$0xff]
    %v4412 = vld [vmem:[%s3116 + $0x130] sm:$0xff]
    %v4413 = vld [vmem:[%s3116 + $0x138] sm:$0xff]
    %v4414 = vld [vmem:[%s3116 + $0x140] sm:$0xff]
    %v4415 = vld [vmem:[%s3116 + $0x148] sm:$0xff]
    %v4416 = vld [vmem:[%s3116 + $0x150] sm:$0xff]
    %v4417 = vld [vmem:[%s3116 + $0x158] sm:$0xff]
    %v4418 = vld [vmem:[%s3116 + $0x160] sm:$0xff]
    %v4419 = vld [vmem:[%s3116 + $0x168] sm:$0xff]
    %v4420 = vld [vmem:[%s3116 + $0x170] sm:$0xff]
    %v4421 = vld [vmem:[%s3116 + $0x178] sm:$0xff]
    %v4422 = vld [vmem:[%s3116 + $0x180] sm:$0xff]
    %v4423 = vld [vmem:[%s3116 + $0x188] sm:$0xff]
    %v4424 = vld [vmem:[%s3116 + $0x190] sm:$0xff]
    %v4425 = vld [vmem:[%s3116 + $0x198] sm:$0xff]
    %v4426 = vld [vmem:[%s3116 + $0x1a0] sm:$0xff]
    %v4427 = vld [vmem:[%s3116 + $0x1a8] sm:$0xff]
    %v4428 = vld [vmem:[%s3116 + $0x1b0] sm:$0xff]
    %v4429 = vld [vmem:[%s3116 + $0x1b8] sm:$0xff]
    %v4430 = vld [vmem:[%s3116 + $0x1c0] sm:$0xff]
    %v4431 = vld [vmem:[%s3116 + $0x1c8] sm:$0xff]
    %v4432 = vld [vmem:[%s3116 + $0x1d0] sm:$0xff]
    %v4433 = vld [vmem:[%s3116 + $0x1d8] sm:$0xff]
    %v4434 = vld [vmem:[%s3116 + $0x1e0] sm:$0xff]
    %v4435 = vld [vmem:[%s3116 + $0x1e8] sm:$0xff]
    %v4436 = vld [vmem:[%s3116 + $0x1f0] sm:$0xff]
    %v4437 = vld [vmem:[%s3116 + $0x1f8] sm:$0xff]
    %v4438 = vld [vmem:[%s3181] sm:$0xf]
    %v4440 = vlaneseq
    %v4441 = vshrl.u32 %v4440, 7
    %v4442 = vsub.s32 0, %v4441
    %v4443 = vrot.slane %v4438, %v4442
    %v4444 = vlaneseq
    %v4445 = vshrl.u32 %v4444, 7
    %v4446 = vsub.s32 1, %v4445
    %v4447 = vrot.slane %v4438, %v4446
    %v4448 = vlaneseq
    %v4449 = vshrl.u32 %v4448, 7
    %v4450 = vsub.s32 2, %v4449
    %v4451 = vrot.slane %v4438, %v4450
    %v4452 = vlaneseq
    %v4453 = vshrl.u32 %v4452, 7
    %v4454 = vsub.s32 3, %v4453
    %v4455 = vrot.slane %v4438, %v4454
    %v4524 = vunpack.c.l.b16 %v4374
    %v4525 = vunpack.c.h.b16 %v4374
    %v4526 = vunpack.c.l.b16 %v4375
    %v4527 = vunpack.c.h.b16 %v4375
    %v4528 = vunpack.c.l.b16 %v4376
    %v4529 = vunpack.c.h.b16 %v4376
    %v4530 = vunpack.c.l.b16 %v4377
    %v4531 = vunpack.c.h.b16 %v4377
    %v4532 = vunpack.c.l.b16 %v4378
    %v4533 = vunpack.c.h.b16 %v4378
    %v4534 = vunpack.c.l.b16 %v4379
    %v4535 = vunpack.c.h.b16 %v4379
    %v4536 = vunpack.c.l.b16 %v4380
    %v4537 = vunpack.c.h.b16 %v4380
    %v4538 = vunpack.c.l.b16 %v4381
    %v4539 = vunpack.c.h.b16 %v4381
    %v4540 = vunpack.c.l.b16 %v4382
    %v4541 = vunpack.c.h.b16 %v4382
    %v4542 = vunpack.c.l.b16 %v4383
    %v4543 = vunpack.c.h.b16 %v4383
    %v4544 = vunpack.c.l.b16 %v4384
    %v4545 = vunpack.c.h.b16 %v4384
    %v4546 = vunpack.c.l.b16 %v4385
    %v4547 = vunpack.c.h.b16 %v4385
    %v4548 = vunpack.c.l.b16 %v4386
    %v4549 = vunpack.c.h.b16 %v4386
    %v4550 = vunpack.c.l.b16 %v4387
    %v4551 = vunpack.c.h.b16 %v4387
    %v4552 = vunpack.c.l.b16 %v4388
    %v4553 = vunpack.c.h.b16 %v4388
    %v4554 = vunpack.c.l.b16 %v4389
    %v4555 = vunpack.c.h.b16 %v4389
    %v4556 = vunpack.c.l.b16 %v4390
    %v4557 = vunpack.c.h.b16 %v4390
    %v4558 = vunpack.c.l.b16 %v4391
    %v4559 = vunpack.c.h.b16 %v4391
    %v4560 = vunpack.c.l.b16 %v4392
    %v4561 = vunpack.c.h.b16 %v4392
    %v4562 = vunpack.c.l.b16 %v4393
    %v4563 = vunpack.c.h.b16 %v4393
    %v4564 = vunpack.c.l.b16 %v4394
    %v4565 = vunpack.c.h.b16 %v4394
    %v4566 = vunpack.c.l.b16 %v4395
    %v4567 = vunpack.c.h.b16 %v4395
    %v4568 = vunpack.c.l.b16 %v4396
    %v4569 = vunpack.c.h.b16 %v4396
    %v4570 = vunpack.c.l.b16 %v4397
    %v4571 = vunpack.c.h.b16 %v4397
    %v4572 = vunpack.c.l.b16 %v4398
    %v4573 = vunpack.c.h.b16 %v4398
    %v4574 = vunpack.c.l.b16 %v4399
    %v4575 = vunpack.c.h.b16 %v4399
    %v4576 = vunpack.c.l.b16 %v4400
    %v4577 = vunpack.c.h.b16 %v4400
    %v4578 = vunpack.c.l.b16 %v4401
    %v4579 = vunpack.c.h.b16 %v4401
    %v4580 = vunpack.c.l.b16 %v4402
    %v4581 = vunpack.c.h.b16 %v4402
    %v4582 = vunpack.c.l.b16 %v4403
    %v4583 = vunpack.c.h.b16 %v4403
    %v4584 = vunpack.c.l.b16 %v4404
    %v4585 = vunpack.c.h.b16 %v4404
    %v4586 = vunpack.c.l.b16 %v4405
    %v4587 = vunpack.c.h.b16 %v4405
    %v4588 = vunpack.c.l.b16 %v4406
    %v4589 = vunpack.c.h.b16 %v4406
    %v4590 = vunpack.c.l.b16 %v4407
    %v4591 = vunpack.c.h.b16 %v4407
    %v4592 = vunpack.c.l.b16 %v4408
    %v4593 = vunpack.c.h.b16 %v4408
    %v4594 = vunpack.c.l.b16 %v4409
    %v4595 = vunpack.c.h.b16 %v4409
    %v4596 = vunpack.c.l.b16 %v4410
    %v4597 = vunpack.c.h.b16 %v4410
    %v4598 = vunpack.c.l.b16 %v4411
    %v4599 = vunpack.c.h.b16 %v4411
    %v4600 = vunpack.c.l.b16 %v4412
    %v4601 = vunpack.c.h.b16 %v4412
    %v4602 = vunpack.c.l.b16 %v4413
    %v4603 = vunpack.c.h.b16 %v4413
    %v4604 = vunpack.c.l.b16 %v4414
    %v4605 = vunpack.c.h.b16 %v4414
    %v4606 = vunpack.c.l.b16 %v4415
    %v4607 = vunpack.c.h.b16 %v4415
    %v4608 = vunpack.c.l.b16 %v4416
    %v4609 = vunpack.c.h.b16 %v4416
    %v4610 = vunpack.c.l.b16 %v4417
    %v4611 = vunpack.c.h.b16 %v4417
    %v4612 = vunpack.c.l.b16 %v4418
    %v4613 = vunpack.c.h.b16 %v4418
    %v4614 = vunpack.c.l.b16 %v4419
    %v4615 = vunpack.c.h.b16 %v4419
    %v4616 = vunpack.c.l.b16 %v4420
    %v4617 = vunpack.c.h.b16 %v4420
    %v4618 = vunpack.c.l.b16 %v4421
    %v4619 = vunpack.c.h.b16 %v4421
    %v4620 = vunpack.c.l.b16 %v4422
    %v4621 = vunpack.c.h.b16 %v4422
    %v4622 = vunpack.c.l.b16 %v4423
    %v4623 = vunpack.c.h.b16 %v4423
    %v4624 = vunpack.c.l.b16 %v4424
    %v4625 = vunpack.c.h.b16 %v4424
    %v4626 = vunpack.c.l.b16 %v4425
    %v4627 = vunpack.c.h.b16 %v4425
    %v4628 = vunpack.c.l.b16 %v4426
    %v4629 = vunpack.c.h.b16 %v4426
    %v4630 = vunpack.c.l.b16 %v4427
    %v4631 = vunpack.c.h.b16 %v4427
    %v4632 = vunpack.c.l.b16 %v4428
    %v4633 = vunpack.c.h.b16 %v4428
    %v4634 = vunpack.c.l.b16 %v4429
    %v4635 = vunpack.c.h.b16 %v4429
    %v4636 = vunpack.c.l.b16 %v4430
    %v4637 = vunpack.c.h.b16 %v4430
    %v4638 = vunpack.c.l.b16 %v4431
    %v4639 = vunpack.c.h.b16 %v4431
    %v4640 = vunpack.c.l.b16 %v4432
    %v4641 = vunpack.c.h.b16 %v4432
    %v4642 = vunpack.c.l.b16 %v4433
    %v4643 = vunpack.c.h.b16 %v4433
    %v4644 = vunpack.c.l.b16 %v4434
    %v4645 = vunpack.c.h.b16 %v4434
    %v4646 = vunpack.c.l.b16 %v4435
    %v4647 = vunpack.c.h.b16 %v4435
    %v4648 = vunpack.c.l.b16 %v4436
    %v4649 = vunpack.c.h.b16 %v4436
    %v4650 = vunpack.c.l.b16 %v4437
    %v4651 = vunpack.c.h.b16 %v4437
    %v4652 = vpack.c.b16 %v4528, %v4524
    %v4653 = vpack.c.b16 %v4529, %v4525
    %v4654 = vpack.c.b16 %v4530, %v4526
    %v4655 = vpack.c.b16 %v4531, %v4527
    %v4656 = vpack.c.b16 %v4536, %v4532
    %v4657 = vpack.c.b16 %v4537, %v4533
    %v4658 = vpack.c.b16 %v4538, %v4534
    %v4659 = vpack.c.b16 %v4539, %v4535
    %v4660 = vpack.c.b16 %v4544, %v4540
    %v4661 = vpack.c.b16 %v4545, %v4541
    %v4662 = vpack.c.b16 %v4546, %v4542
    %v4663 = vpack.c.b16 %v4547, %v4543
    %v4664 = vpack.c.b16 %v4552, %v4548
    %v4665 = vpack.c.b16 %v4553, %v4549
    %v4666 = vpack.c.b16 %v4554, %v4550
    %v4667 = vpack.c.b16 %v4555, %v4551
    %v4668 = vpack.c.b16 %v4560, %v4556
    %v4669 = vpack.c.b16 %v4561, %v4557
    %v4670 = vpack.c.b16 %v4562, %v4558
    %v4671 = vpack.c.b16 %v4563, %v4559
    %v4672 = vpack.c.b16 %v4568, %v4564
    %v4673 = vpack.c.b16 %v4569, %v4565
    %v4674 = vpack.c.b16 %v4570, %v4566
    %v4675 = vpack.c.b16 %v4571, %v4567
    %v4676 = vpack.c.b16 %v4576, %v4572
    %v4677 = vpack.c.b16 %v4577, %v4573
    %v4678 = vpack.c.b16 %v4578, %v4574
    %v4679 = vpack.c.b16 %v4579, %v4575
    %v4680 = vpack.c.b16 %v4584, %v4580
    %v4681 = vpack.c.b16 %v4585, %v4581
    %v4682 = vpack.c.b16 %v4586, %v4582
    %v4683 = vpack.c.b16 %v4587, %v4583
    %v4684 = vpack.c.b16 %v4592, %v4588
    %v4685 = vpack.c.b16 %v4593, %v4589
    %v4686 = vpack.c.b16 %v4594, %v4590
    %v4687 = vpack.c.b16 %v4595, %v4591
    %v4688 = vpack.c.b16 %v4600, %v4596
    %v4689 = vpack.c.b16 %v4601, %v4597
    %v4690 = vpack.c.b16 %v4602, %v4598
    %v4691 = vpack.c.b16 %v4603, %v4599
    %v4692 = vpack.c.b16 %v4608, %v4604
    %v4693 = vpack.c.b16 %v4609, %v4605
    %v4694 = vpack.c.b16 %v4610, %v4606
    %v4695 = vpack.c.b16 %v4611, %v4607
    %v4696 = vpack.c.b16 %v4616, %v4612
    %v4697 = vpack.c.b16 %v4617, %v4613
    %v4698 = vpack.c.b16 %v4618, %v4614
    %v4699 = vpack.c.b16 %v4619, %v4615
    %v4700 = vpack.c.b16 %v4624, %v4620
    %v4701 = vpack.c.b16 %v4625, %v4621
    %v4702 = vpack.c.b16 %v4626, %v4622
    %v4703 = vpack.c.b16 %v4627, %v4623
    %v4704 = vpack.c.b16 %v4632, %v4628
    %v4705 = vpack.c.b16 %v4633, %v4629
    %v4706 = vpack.c.b16 %v4634, %v4630
    %v4707 = vpack.c.b16 %v4635, %v4631
    %v4708 = vpack.c.b16 %v4640, %v4636
    %v4709 = vpack.c.b16 %v4641, %v4637
    %v4710 = vpack.c.b16 %v4642, %v4638
    %v4711 = vpack.c.b16 %v4643, %v4639
    %v4712 = vpack.c.b16 %v4648, %v4644
    %v4713 = vpack.c.b16 %v4649, %v4645
    %v4714 = vpack.c.b16 %v4650, %v4646
    %v4715 = vpack.c.b16 %v4651, %v4647
    %4780 = vmatprep.subr.bf16.mxu0 %v4653
    %4781 = vmatpush1.bf16.msra.mxu0 %v4652
    %4782 = vmatprep.subr.bf16.mxu0 %v4657
    %4783 = vmatpush1.bf16.msra.mxu0 %v4656
    %4784 = vmatprep.subr.bf16.mxu0 %v4661
    %4785 = vmatpush1.bf16.msra.mxu0 %v4660
    %4786 = vmatprep.subr.bf16.mxu0 %v4665
    %4787 = vmatpush1.bf16.msra.mxu0 %v4664
    %4788 = vmatprep.subr.bf16.mxu0 %v4669
    %4789 = vmatpush1.bf16.msra.mxu0 %v4668
    %4790 = vmatprep.subr.bf16.mxu0 %v4673
    %4791 = vmatpush1.bf16.msra.mxu0 %v4672
    %4792 = vmatprep.subr.bf16.mxu0 %v4677
    %4793 = vmatpush1.bf16.msra.mxu0 %v4676
    %4794 = vmatprep.subr.bf16.mxu0 %v4681
    %4795 = vmatpush1.bf16.msra.mxu0 %v4680
    %4796 = vmatprep.subr.bf16.mxu0 %v4685
    %4797 = vmatpush1.bf16.msra.mxu0 %v4684
    %4798 = vmatprep.subr.bf16.mxu0 %v4689
    %4799 = vmatpush1.bf16.msra.mxu0 %v4688
    %4800 = vmatprep.subr.bf16.mxu0 %v4693
    %4801 = vmatpush1.bf16.msra.mxu0 %v4692
    %4802 = vmatprep.subr.bf16.mxu0 %v4697
    %4803 = vmatpush1.bf16.msra.mxu0 %v4696
    %4804 = vmatprep.subr.bf16.mxu0 %v4701
    %4805 = vmatpush1.bf16.msra.mxu0 %v4700
    %4806 = vmatprep.subr.bf16.mxu0 %v4705
    %4807 = vmatpush1.bf16.msra.mxu0 %v4704
    %4808 = vmatprep.subr.bf16.mxu0 %v4709
    %4809 = vmatpush1.bf16.msra.mxu0 %v4708
    %4810 = vmatprep.subr.bf16.mxu0 %v4713
    %4811 = vmatpush1.bf16.msra.mxu0 %v4712
    %4812 = vmatprep.mubr.bf16.mxu0 %v3630
    %4813 = vmatmul.mubr.bf16.gmra.mrb[0].mxu0 %v4373
    %v4814 = vpop.f32.mrb[0].mxu0
    %v4815 = vadd.f32 %v4443, %v4814
    %v4816 = vpop.f32.mrb[0].mxu0
    %v4817 = vadd.f32 %v4447, %v4816
    %v4818 = vpop.f32.mrb[0].mxu0
    %v4819 = vpop.f32.mrb[0].mxu0
    %4820 = vdwg.mxu0
    %4821 = vmatprep.subr.bf16.mxu0 %v4655
    %4822 = vmatpush1.bf16.msra.mxu0 %v4654
    %4823 = vmatprep.subr.bf16.mxu0 %v4659
    %4824 = vmatpush1.bf16.msra.mxu0 %v4658
    %4825 = vmatprep.subr.bf16.mxu0 %v4663
    %4826 = vmatpush1.bf16.msra.mxu0 %v4662
    %4827 = vmatprep.subr.bf16.mxu0 %v4667
    %4828 = vmatpush1.bf16.msra.mxu0 %v4666
    %4829 = vmatprep.subr.bf16.mxu0 %v4671
    %4830 = vmatpush1.bf16.msra.mxu0 %v4670
    %4831 = vmatprep.subr.bf16.mxu0 %v4675
    %4832 = vmatpush1.bf16.msra.mxu0 %v4674
    %4833 = vmatprep.subr.bf16.mxu0 %v4679
    %4834 = vmatpush1.bf16.msra.mxu0 %v4678
    %4835 = vmatprep.subr.bf16.mxu0 %v4683
    %4836 = vmatpush1.bf16.msra.mxu0 %v4682
    %4837 = vmatprep.subr.bf16.mxu0 %v4687
    %4838 = vmatpush1.bf16.msra.mxu0 %v4686
    %4839 = vmatprep.subr.bf16.mxu0 %v4691
    %4840 = vmatpush1.bf16.msra.mxu0 %v4690
    %4841 = vmatprep.subr.bf16.mxu0 %v4695
    %4842 = vmatpush1.bf16.msra.mxu0 %v4694
    %4843 = vmatprep.subr.bf16.mxu0 %v4699
    %4844 = vmatpush1.bf16.msra.mxu0 %v4698
    %4845 = vmatprep.subr.bf16.mxu0 %v4703
    %4846 = vmatpush1.bf16.msra.mxu0 %v4702
    %4847 = vmatprep.subr.bf16.mxu0 %v4707
    %4848 = vmatpush1.bf16.msra.mxu0 %v4706
    %4849 = vmatprep.subr.bf16.mxu0 %v4711
    %4850 = vmatpush1.bf16.msra.mxu0 %v4710
    %4851 = vmatprep.subr.bf16.mxu0 %v4715
    %4852 = vmatpush1.bf16.msra.mxu0 %v4714
    %4853 = vmatprep.mubr.bf16.mxu0 %v3630
    %4854 = vmatmul.mubr.bf16.gmra.mrb[0].mxu0 %v4373
    %v4855 = vpop.f32.mrb[0].mxu0
    %v4856 = vadd.f32 %v4451, %v4855
    %v4857 = vpop.f32.mrb[0].mxu0
    %v4858 = vadd.f32 %v4455, %v4857
    %v4859 = vpop.f32.mrb[0].mxu0
    %v4860 = vpop.f32.mrb[0].mxu0
    %4861 = vdwg.mxu0
    %v4862 = vxor.u32 %v4815, 2147483648
    %v4863 = vmul.f32 %v4862, 1.442695
    %v4864 = vpow.pop %v4863
    %v4865 = vadd.f32 %v4864, 1.0
    %v4866 = vrcp.pop %v4865
    %v4867 = vmul.f32 1.0, %v4866
    %v4868 = vxor.u32 %v4817, 2147483648
    %v4869 = vmul.f32 %v4868, 1.442695
    %v4870 = vpow.pop %v4869
    %v4871 = vadd.f32 %v4870, 1.0
    %v4872 = vrcp.pop %v4871
    %v4873 = vmul.f32 1.0, %v4872
    %v4874 = vtanh.pop %v4856
    %v4875 = vxor.u32 %v4858, 2147483648
    %v4876 = vmul.f32 %v4875, 1.442695
    %v4877 = vpow.pop %v4876
    %v4878 = vadd.f32 %v4877, 1.0
    %v4879 = vrcp.pop %v4878
    %v4880 = vmul.f32 1.0, %v4879
    %v4881 = vmul.f32 %v4873, %v3627
    %v4882 = vmul.f32 %v4867, %v4874
    %v4883 = vadd.f32 %v4881, %v4882
    %v4884 = vtanh.pop %v4883
    %v4885 = vmul.f32 %v4880, %v4884
    %v4886 = vpack.c.bf16 %v4885, %v4885
    %v4887 = vld [vmem:[%s6] sm:$0xf]
    %v4888 = vld [vmem:[%s6 + $0x4] sm:$0xf]
    %v4889 = vld [vmem:[%s6 + $0x8] sm:$0xf]
    %v4890 = vld [vmem:[%s6 + $0xc] sm:$0xf]
    %v4891 = vld [vmem:[%s6 + $0x10] sm:$0xf]
    %v4892 = vld [vmem:[%s6 + $0x14] sm:$0xf]
    %v4893 = vld [vmem:[%s6 + $0x18] sm:$0xf]
    %v4894 = vld [vmem:[%s6 + $0x1c] sm:$0xf]
    %v4895 = vld [vmem:[%s6 + $0x20] sm:$0xf]
    %v4896 = vld [vmem:[%s6 + $0x24] sm:$0xf]
    %v4897 = vld [vmem:[%s6 + $0x28] sm:$0xf]
    %v4898 = vld [vmem:[%s6 + $0x2c] sm:$0xf]
    %v4899 = vld [vmem:[%s6 + $0x30] sm:$0xf]
    %v4900 = vld [vmem:[%s6 + $0x34] sm:$0xf]
    %v4901 = vld [vmem:[%s6 + $0x38] sm:$0xf]
    %v4902 = vld [vmem:[%s6 + $0x3c] sm:$0xf]
    %v4903 = vld [vmem:[%s7] sm:$0x1]
    %v4905 = vlaneseq
    %v4906 = vshrl.u32 %v4905, 7
    %v4907 = vsub.s32 0, %v4906
    %v4908 = vrot.slane %v4903, %v4907
    %v4926 = vunpack.c.l.b16 %v4887
    %v4927 = vunpack.c.l.b16 %v4888
    %v4928 = vunpack.c.l.b16 %v4889
    %v4929 = vunpack.c.l.b16 %v4890
    %v4930 = vunpack.c.l.b16 %v4891
    %v4931 = vunpack.c.l.b16 %v4892
    %v4932 = vunpack.c.l.b16 %v4893
    %v4933 = vunpack.c.l.b16 %v4894
    %v4934 = vunpack.c.l.b16 %v4895
    %v4935 = vunpack.c.l.b16 %v4896
    %v4936 = vunpack.c.l.b16 %v4897
    %v4937 = vunpack.c.l.b16 %v4898
    %v4938 = vunpack.c.l.b16 %v4899
    %v4939 = vunpack.c.l.b16 %v4900
    %v4940 = vunpack.c.l.b16 %v4901
    %v4941 = vunpack.c.l.b16 %v4902
    %v4942 = vpack.c.b16 %v4927, %v4926
    %v4943 = vpack.c.b16 %v4929, %v4928
    %v4944 = vpack.c.b16 %v4931, %v4930
    %v4945 = vpack.c.b16 %v4933, %v4932
    %v4946 = vpack.c.b16 %v4935, %v4934
    %v4947 = vpack.c.b16 %v4937, %v4936
    %v4948 = vpack.c.b16 %v4939, %v4938
    %v4949 = vpack.c.b16 %v4941, %v4940
    %4958 = vmatprep.subr.bf16.mxu0 0
    %4959 = vmatpush1.bf16.msra.mxu0 %v4942
    %4960 = vmatprep.subr.bf16.mxu0 0
    %4961 = vmatpush1.bf16.msra.mxu0 %v4943
    %4962 = vmatprep.subr.bf16.mxu0 0
    %4963 = vmatpush1.bf16.msra.mxu0 %v4944
    %4964 = vmatprep.subr.bf16.mxu0 0
    %4965 = vmatpush1.bf16.msra.mxu0 %v4945
    %4966 = vmatprep.subr.bf16.mxu0 0
    %4967 = vmatpush1.bf16.msra.mxu0 %v4946
    %4968 = vmatprep.subr.bf16.mxu0 0
    %4969 = vmatpush1.bf16.msra.mxu0 %v4947
    %4970 = vmatprep.subr.bf16.mxu0 0
    %4971 = vmatpush1.bf16.msra.mxu0 %v4948
    %4972 = vmatprep.subr.bf16.mxu0 0
    %4973 = vmatpush1.bf16.msra.mxu0 %v4949
    %4974 = vmatprep.subr.bf16.mxu0 0
    %4975 = vmatpush1.bf16.msra.mxu0 0
    %4976 = vmatprep.subr.bf16.mxu0 0
    %4977 = vmatpush1.bf16.msra.mxu0 0
    %4978 = vmatprep.subr.bf16.mxu0 0
    %4979 = vmatpush1.bf16.msra.mxu0 0
    %4980 = vmatprep.subr.bf16.mxu0 0
    %4981 = vmatpush1.bf16.msra.mxu0 0
    %4982 = vmatprep.subr.bf16.mxu0 0
    %4983 = vmatpush1.bf16.msra.mxu0 0
    %4984 = vmatprep.subr.bf16.mxu0 0
    %4985 = vmatpush1.bf16.msra.mxu0 0
    %4986 = vmatprep.subr.bf16.mxu0 0
    %4987 = vmatpush1.bf16.msra.mxu0 0
    %4988 = vmatprep.subr.bf16.mxu0 0
    %4989 = vmatpush1.bf16.msra.mxu0 0
    %4990 = vmatprep.mubr.bf16.mxu0 0
    %4991 = vmatmul.mubr.bf16.gmra.mrb[0].mxu0 %v4886
    %v4992 = vpop.f32.mrb[0].mxu0
    %v4993 = vadd.f32 %v4908, %v4992
    %v4994 = vpop.f32.mrb[0].mxu0
    %v4995 = vpop.f32.mrb[0].mxu0
    %v4996 = vpop.f32.mrb[0].mxu0
    %4997 = vdwg.mxu0
    %s4998 = scalar_lea.vmem %s9, 8
    %4999 = vst [vmem:[%s4998] sm:$0xff] %v4993
    %5000 = vmax.xlane.f32.xlu0 %v4993
    %v5001 = vpop.xlane.xlu0 %5000
    %vm5002 = vcmp.eq.f32.partialorder %v4993, %v5001
    %v5003 = vsel %vm5002, %v3745, 128.0
    %5004 = vmin.xlane.f32.xlu0 %v5003
    %v5005 = vpop.xlane.xlu0 %5004
    %vm5006 = vcmp.eq.f32.partialorder %v3745, %v5005
    %v5007 = vsel %vm5006, 1, 0
    %v5008 = vcvt.s32.f32 %v5007
    %v5009 = vpack.c.bf16 %v5008, %v5008
    %v5010 = vld [vmem:[%s8] sm:$0xf]
    %v5011 = vld [vmem:[%s8 + $0x4] sm:$0xf]
    %v5012 = vld [vmem:[%s8 + $0x8] sm:$0xf]
    %v5013 = vld [vmem:[%s8 + $0xc] sm:$0xf]
    %v5014 = vld [vmem:[%s8 + $0x10] sm:$0xf]
    %v5015 = vld [vmem:[%s8 + $0x14] sm:$0xf]
    %v5016 = vld [vmem:[%s8 + $0x18] sm:$0xf]
    %v5017 = vld [vmem:[%s8 + $0x1c] sm:$0xf]
    %v5018 = vld [vmem:[%s8 + $0x20] sm:$0xf]
    %v5019 = vld [vmem:[%s8 + $0x24] sm:$0xf]
    %v5020 = vld [vmem:[%s8 + $0x28] sm:$0xf]
    %v5021 = vld [vmem:[%s8 + $0x2c] sm:$0xf]
    %v5022 = vld [vmem:[%s8 + $0x30] sm:$0xf]
    %v5023 = vld [vmem:[%s8 + $0x34] sm:$0xf]
    %v5024 = vld [vmem:[%s8 + $0x38] sm:$0xf]
    %v5025 = vld [vmem:[%s8 + $0x3c] sm:$0xf]
    %v5042 = vunpack.c.l.b16 %v5010
    %v5043 = vunpack.c.l.b16 %v5011
    %v5044 = vunpack.c.l.b16 %v5012
    %v5045 = vunpack.c.l.b16 %v5013
    %v5046 = vunpack.c.l.b16 %v5014
    %v5047 = vunpack.c.l.b16 %v5015
    %v5048 = vunpack.c.l.b16 %v5016
    %v5049 = vunpack.c.l.b16 %v5017
    %v5050 = vunpack.c.l.b16 %v5018
    %v5051 = vunpack.c.l.b16 %v5019
    %v5052 = vunpack.c.l.b16 %v5020
    %v5053 = vunpack.c.l.b16 %v5021
    %v5054 = vunpack.c.l.b16 %v5022
    %v5055 = vunpack.c.l.b16 %v5023
    %v5056 = vunpack.c.l.b16 %v5024
    %v5057 = vunpack.c.l.b16 %v5025
    %v5058 = vpack.c.b16 %v5043, %v5042
    %v5059 = vpack.c.b16 %v5045, %v5044
    %v5060 = vpack.c.b16 %v5047, %v5046
    %v5061 = vpack.c.b16 %v5049, %v5048
    %v5062 = vpack.c.b16 %v5051, %v5050
    %v5063 = vpack.c.b16 %v5053, %v5052
    %v5064 = vpack.c.b16 %v5055, %v5054
    %v5065 = vpack.c.b16 %v5057, %v5056
    %5074 = vmatprep.subr.bf16.mxu0 0
    %5075 = vmatpush1.bf16.msra.mxu0 %v5058
    %5076 = vmatprep.subr.bf16.mxu0 0
    %5077 = vmatpush1.bf16.msra.mxu0 %v5059
    %5078 = vmatprep.subr.bf16.mxu0 0
    %5079 = vmatpush1.bf16.msra.mxu0 %v5060
    %5080 = vmatprep.subr.bf16.mxu0 0
    %5081 = vmatpush1.bf16.msra.mxu0 %v5061
    %5082 = vmatprep.subr.bf16.mxu0 0
    %5083 = vmatpush1.bf16.msra.mxu0 %v5062
    %5084 = vmatprep.subr.bf16.mxu0 0
    %5085 = vmatpush1.bf16.msra.mxu0 %v5063
    %5086 = vmatprep.subr.bf16.mxu0 0
    %5087 = vmatpush1.bf16.msra.mxu0 %v5064
    %5088 = vmatprep.subr.bf16.mxu0 0
    %5089 = vmatpush1.bf16.msra.mxu0 %v5065
    %5090 = vmatprep.subr.bf16.mxu0 0
    %5091 = vmatpush1.bf16.msra.mxu0 0
    %5092 = vmatprep.subr.bf16.mxu0 0
    %5093 = vmatpush1.bf16.msra.mxu0 0
    %5094 = vmatprep.subr.bf16.mxu0 0
    %5095 = vmatpush1.bf16.msra.mxu0 0
    %5096 = vmatprep.subr.bf16.mxu0 0
    %5097 = vmatpush1.bf16.msra.mxu0 0
    %5098 = vmatprep.subr.bf16.mxu0 0
    %5099 = vmatpush1.bf16.msra.mxu0 0
    %5100 = vmatprep.subr.bf16.mxu0 0
    %5101 = vmatpush1.bf16.msra.mxu0 0
    %5102 = vmatprep.subr.bf16.mxu0 0
    %5103 = vmatpush1.bf16.msra.mxu0 0
    %5104 = vmatprep.subr.bf16.mxu0 0
    %5105 = vmatpush1.bf16.msra.mxu0 0
    %5106 = vmatprep.mubr.bf16.mxu0 0
    %5107 = vmatmul.mubr.bf16.gmra.mrb[0].mxu0 %v5009
    %v5108 = vpop.f32.mrb[0].mxu0
    %v5109 = vadd.f32 0.0, %v5108
    %v5110 = vpop.f32.mrb[0].mxu0
    %v5111 = vpop.f32.mrb[0].mxu0
    %v5112 = vpop.f32.mrb[0].mxu0
    %5113 = vdwg.mxu0
    %v5114 = vpack.c.bf16 %v5109, %v5109
    %v5115 = vld [vmem:[#allocation4] sm:$0xff]
    %v5116 = vld [vmem:[#allocation4 + $0x8] sm:$0xff]
    %v5117 = vld [vmem:[#allocation4 + $0x10] sm:$0xff]
    %v5118 = vld [vmem:[#allocation4 + $0x18] sm:$0xff]
    %v5119 = vld [vmem:[#allocation4 + $0x20] sm:$0xff]
    %v5120 = vld [vmem:[#allocation4 + $0x28] sm:$0xff]
    %v5121 = vld [vmem:[#allocation4 + $0x30] sm:$0xff]
    %v5122 = vld [vmem:[#allocation4 + $0x38] sm:$0xff]
    %v5123 = vld [vmem:[#allocation4 + $0x40] sm:$0xff]
    %v5124 = vld [vmem:[#allocation4 + $0x48] sm:$0xff]
    %v5125 = vld [vmem:[#allocation4 + $0x50] sm:$0xff]
    %v5126 = vld [vmem:[#allocation4 + $0x58] sm:$0xff]
    %v5127 = vld [vmem:[#allocation4 + $0x60] sm:$0xff]
    %v5128 = vld [vmem:[#allocation4 + $0x68] sm:$0xff]
    %v5129 = vld [vmem:[#allocation4 + $0x70] sm:$0xff]
    %v5130 = vld [vmem:[#allocation4 + $0x78] sm:$0xff]
    %v5131 = vld [vmem:[#allocation4 + $0x80] sm:$0xff]
    %v5132 = vld [vmem:[#allocation4 + $0x88] sm:$0xff]
    %v5133 = vld [vmem:[#allocation4 + $0x90] sm:$0xff]
    %v5134 = vld [vmem:[#allocation4 + $0x98] sm:$0xff]
    %v5135 = vld [vmem:[#allocation4 + $0xa0] sm:$0xff]
    %v5136 = vld [vmem:[#allocation4 + $0xa8] sm:$0xff]
    %v5137 = vld [vmem:[#allocation4 + $0xb0] sm:$0xff]
    %v5138 = vld [vmem:[#allocation4 + $0xb8] sm:$0xff]
    %v5139 = vld [vmem:[#allocation4 + $0xc0] sm:$0xff]
    %v5140 = vld [vmem:[#allocation4 + $0xc8] sm:$0xff]
    %v5141 = vld [vmem:[#allocation4 + $0xd0] sm:$0xff]
    %v5142 = vld [vmem:[#allocation4 + $0xd8] sm:$0xff]
    %v5143 = vld [vmem:[#allocation4 + $0xe0] sm:$0xff]
    %v5144 = vld [vmem:[#allocation4 + $0xe8] sm:$0xff]
    %v5145 = vld [vmem:[#allocation4 + $0xf0] sm:$0xff]
    %v5146 = vld [vmem:[#allocation4 + $0xf8] sm:$0xff]
    %v5147 = vld [vmem:[#allocation4 + $0x100] sm:$0xff]
    %v5148 = vld [vmem:[#allocation4 + $0x108] sm:$0xff]
    %v5149 = vld [vmem:[#allocation4 + $0x110] sm:$0xff]
    %v5150 = vld [vmem:[#allocation4 + $0x118] sm:$0xff]
    %v5151 = vld [vmem:[#allocation4 + $0x120] sm:$0xff]
    %v5152 = vld [vmem:[#allocation4 + $0x128] sm:$0xff]
    %v5153 = vld [vmem:[#allocation4 + $0x130] sm:$0xff]
    %v5154 = vld [vmem:[#allocation4 + $0x138] sm:$0xff]
    %v5155 = vld [vmem:[#allocation4 + $0x140] sm:$0xff]
    %v5156 = vld [vmem:[#allocation4 + $0x148] sm:$0xff]
    %v5157 = vld [vmem:[#allocation4 + $0x150] sm:$0xff]
    %v5158 = vld [vmem:[#allocation4 + $0x158] sm:$0xff]
    %v5159 = vld [vmem:[#allocation4 + $0x160] sm:$0xff]
    %v5160 = vld [vmem:[#allocation4 + $0x168] sm:$0xff]
    %v5161 = vld [vmem:[#allocation4 + $0x170] sm:$0xff]
    %v5162 = vld [vmem:[#allocation4 + $0x178] sm:$0xff]
    %v5163 = vld [vmem:[#allocation4 + $0x180] sm:$0xff]
    %v5164 = vld [vmem:[#allocation4 + $0x188] sm:$0xff]
    %v5165 = vld [vmem:[#allocation4 + $0x190] sm:$0xff]
    %v5166 = vld [vmem:[#allocation4 + $0x198] sm:$0xff]
    %v5167 = vld [vmem:[#allocation4 + $0x1a0] sm:$0xff]
    %v5168 = vld [vmem:[#allocation4 + $0x1a8] sm:$0xff]
    %v5169 = vld [vmem:[#allocation4 + $0x1b0] sm:$0xff]
    %v5170 = vld [vmem:[#allocation4 + $0x1b8] sm:$0xff]
    %v5171 = vld [vmem:[#allocation4 + $0x1c0] sm:$0xff]
    %v5172 = vld [vmem:[#allocation4 + $0x1c8] sm:$0xff]
    %v5173 = vld [vmem:[#allocation4 + $0x1d0] sm:$0xff]
    %v5174 = vld [vmem:[#allocation4 + $0x1d8] sm:$0xff]
    %v5175 = vld [vmem:[#allocation4 + $0x1e0] sm:$0xff]
    %v5176 = vld [vmem:[#allocation4 + $0x1e8] sm:$0xff]
    %v5177 = vld [vmem:[#allocation4 + $0x1f0] sm:$0xff]
    %v5178 = vld [vmem:[#allocation4 + $0x1f8] sm:$0xff]
    %v5179 = vld [vmem:[%s5] sm:$0xf]
    %v5181 = vlaneseq
    %v5182 = vshrl.u32 %v5181, 7
    %v5183 = vsub.s32 0, %v5182
    %v5184 = vrot.slane %v5179, %v5183
    %v5185 = vlaneseq
    %v5186 = vshrl.u32 %v5185, 7
    %v5187 = vsub.s32 1, %v5186
    %v5188 = vrot.slane %v5179, %v5187
    %v5189 = vlaneseq
    %v5190 = vshrl.u32 %v5189, 7
    %v5191 = vsub.s32 2, %v5190
    %v5192 = vrot.slane %v5179, %v5191
    %v5193 = vlaneseq
    %v5194 = vshrl.u32 %v5193, 7
    %v5195 = vsub.s32 3, %v5194
    %v5196 = vrot.slane %v5179, %v5195
    %v5265 = vunpack.c.l.b16 %v5115
    %v5266 = vunpack.c.h.b16 %v5115
    %v5267 = vunpack.c.l.b16 %v5116
    %v5268 = vunpack.c.h.b16 %v5116
    %v5269 = vunpack.c.l.b16 %v5117
    %v5270 = vunpack.c.h.b16 %v5117
    %v5271 = vunpack.c.l.b16 %v5118
    %v5272 = vunpack.c.h.b16 %v5118
    %v5273 = vunpack.c.l.b16 %v5119
    %v5274 = vunpack.c.h.b16 %v5119
    %v5275 = vunpack.c.l.b16 %v5120
    %v5276 = vunpack.c.h.b16 %v5120
    %v5277 = vunpack.c.l.b16 %v5121
    %v5278 = vunpack.c.h.b16 %v5121
    %v5279 = vunpack.c.l.b16 %v5122
    %v5280 = vunpack.c.h.b16 %v5122
    %v5281 = vunpack.c.l.b16 %v5123
    %v5282 = vunpack.c.h.b16 %v5123
    %v5283 = vunpack.c.l.b16 %v5124
    %v5284 = vunpack.c.h.b16 %v5124
    %v5285 = vunpack.c.l.b16 %v5125
    %v5286 = vunpack.c.h.b16 %v5125
    %v5287 = vunpack.c.l.b16 %v5126
    %v5288 = vunpack.c.h.b16 %v5126
    %v5289 = vunpack.c.l.b16 %v5127
    %v5290 = vunpack.c.h.b16 %v5127
    %v5291 = vunpack.c.l.b16 %v5128
    %v5292 = vunpack.c.h.b16 %v5128
    %v5293 = vunpack.c.l.b16 %v5129
    %v5294 = vunpack.c.h.b16 %v5129
    %v5295 = vunpack.c.l.b16 %v5130
    %v5296 = vunpack.c.h.b16 %v5130
    %v5297 = vunpack.c.l.b16 %v5131
    %v5298 = vunpack.c.h.b16 %v5131
    %v5299 = vunpack.c.l.b16 %v5132
    %v5300 = vunpack.c.h.b16 %v5132
    %v5301 = vunpack.c.l.b16 %v5133
    %v5302 = vunpack.c.h.b16 %v5133
    %v5303 = vunpack.c.l.b16 %v5134
    %v5304 = vunpack.c.h.b16 %v5134
    %v5305 = vunpack.c.l.b16 %v5135
    %v5306 = vunpack.c.h.b16 %v5135
    %v5307 = vunpack.c.l.b16 %v5136
    %v5308 = vunpack.c.h.b16 %v5136
    %v5309 = vunpack.c.l.b16 %v5137
    %v5310 = vunpack.c.h.b16 %v5137
    %v5311 = vunpack.c.l.b16 %v5138
    %v5312 = vunpack.c.h.b16 %v5138
    %v5313 = vunpack.c.l.b16 %v5139
    %v5314 = vunpack.c.h.b16 %v5139
    %v5315 = vunpack.c.l.b16 %v5140
    %v5316 = vunpack.c.h.b16 %v5140
    %v5317 = vunpack.c.l.b16 %v5141
    %v5318 = vunpack.c.h.b16 %v5141
    %v5319 = vunpack.c.l.b16 %v5142
    %v5320 = vunpack.c.h.b16 %v5142
    %v5321 = vunpack.c.l.b16 %v5143
    %v5322 = vunpack.c.h.b16 %v5143
    %v5323 = vunpack.c.l.b16 %v5144
    %v5324 = vunpack.c.h.b16 %v5144
    %v5325 = vunpack.c.l.b16 %v5145
    %v5326 = vunpack.c.h.b16 %v5145
    %v5327 = vunpack.c.l.b16 %v5146
    %v5328 = vunpack.c.h.b16 %v5146
    %v5329 = vunpack.c.l.b16 %v5147
    %v5330 = vunpack.c.h.b16 %v5147
    %v5331 = vunpack.c.l.b16 %v5148
    %v5332 = vunpack.c.h.b16 %v5148
    %v5333 = vunpack.c.l.b16 %v5149
    %v5334 = vunpack.c.h.b16 %v5149
    %v5335 = vunpack.c.l.b16 %v5150
    %v5336 = vunpack.c.h.b16 %v5150
    %v5337 = vunpack.c.l.b16 %v5151
    %v5338 = vunpack.c.h.b16 %v5151
    %v5339 = vunpack.c.l.b16 %v5152
    %v5340 = vunpack.c.h.b16 %v5152
    %v5341 = vunpack.c.l.b16 %v5153
    %v5342 = vunpack.c.h.b16 %v5153
    %v5343 = vunpack.c.l.b16 %v5154
    %v5344 = vunpack.c.h.b16 %v5154
    %v5345 = vunpack.c.l.b16 %v5155
    %v5346 = vunpack.c.h.b16 %v5155
    %v5347 = vunpack.c.l.b16 %v5156
    %v5348 = vunpack.c.h.b16 %v5156
    %v5349 = vunpack.c.l.b16 %v5157
    %v5350 = vunpack.c.h.b16 %v5157
    %v5351 = vunpack.c.l.b16 %v5158
    %v5352 = vunpack.c.h.b16 %v5158
    %v5353 = vunpack.c.l.b16 %v5159
    %v5354 = vunpack.c.h.b16 %v5159
    %v5355 = vunpack.c.l.b16 %v5160
    %v5356 = vunpack.c.h.b16 %v5160
    %v5357 = vunpack.c.l.b16 %v5161
    %v5358 = vunpack.c.h.b16 %v5161
    %v5359 = vunpack.c.l.b16 %v5162
    %v5360 = vunpack.c.h.b16 %v5162
    %v5361 = vunpack.c.l.b16 %v5163
    %v5362 = vunpack.c.h.b16 %v5163
    %v5363 = vunpack.c.l.b16 %v5164
    %v5364 = vunpack.c.h.b16 %v5164
    %v5365 = vunpack.c.l.b16 %v5165
    %v5366 = vunpack.c.h.b16 %v5165
    %v5367 = vunpack.c.l.b16 %v5166
    %v5368 = vunpack.c.h.b16 %v5166
    %v5369 = vunpack.c.l.b16 %v5167
    %v5370 = vunpack.c.h.b16 %v5167
    %v5371 = vunpack.c.l.b16 %v5168
    %v5372 = vunpack.c.h.b16 %v5168
    %v5373 = vunpack.c.l.b16 %v5169
    %v5374 = vunpack.c.h.b16 %v5169
    %v5375 = vunpack.c.l.b16 %v5170
    %v5376 = vunpack.c.h.b16 %v5170
    %v5377 = vunpack.c.l.b16 %v5171
    %v5378 = vunpack.c.h.b16 %v5171
    %v5379 = vunpack.c.l.b16 %v5172
    %v5380 = vunpack.c.h.b16 %v5172
    %v5381 = vunpack.c.l.b16 %v5173
    %v5382 = vunpack.c.h.b16 %v5173
    %v5383 = vunpack.c.l.b16 %v5174
    %v5384 = vunpack.c.h.b16 %v5174
    %v5385 = vunpack.c.l.b16 %v5175
    %v5386 = vunpack.c.h.b16 %v5175
    %v5387 = vunpack.c.l.b16 %v5176
    %v5388 = vunpack.c.h.b16 %v5176
    %v5389 = vunpack.c.l.b16 %v5177
    %v5390 = vunpack.c.h.b16 %v5177
    %v5391 = vunpack.c.l.b16 %v5178
    %v5392 = vunpack.c.h.b16 %v5178
    %v5393 = vpack.c.b16 %v5269, %v5265
    %v5394 = vpack.c.b16 %v5270, %v5266
    %v5395 = vpack.c.b16 %v5271, %v5267
    %v5396 = vpack.c.b16 %v5272, %v5268
    %v5397 = vpack.c.b16 %v5277, %v5273
    %v5398 = vpack.c.b16 %v5278, %v5274
    %v5399 = vpack.c.b16 %v5279, %v5275
    %v5400 = vpack.c.b16 %v5280, %v5276
    %v5401 = vpack.c.b16 %v5285, %v5281
    %v5402 = vpack.c.b16 %v5286, %v5282
    %v5403 = vpack.c.b16 %v5287, %v5283
    %v5404 = vpack.c.b16 %v5288, %v5284
    %v5405 = vpack.c.b16 %v5293, %v5289
    %v5406 = vpack.c.b16 %v5294, %v5290
    %v5407 = vpack.c.b16 %v5295, %v5291
    %v5408 = vpack.c.b16 %v5296, %v5292
    %v5409 = vpack.c.b16 %v5301, %v5297
    %v5410 = vpack.c.b16 %v5302, %v5298
    %v5411 = vpack.c.b16 %v5303, %v5299
    %v5412 = vpack.c.b16 %v5304, %v5300
    %v5413 = vpack.c.b16 %v5309, %v5305
    %v5414 = vpack.c.b16 %v5310, %v5306
    %v5415 = vpack.c.b16 %v5311, %v5307
    %v5416 = vpack.c.b16 %v5312, %v5308
    %v5417 = vpack.c.b16 %v5317, %v5313
    %v5418 = vpack.c.b16 %v5318, %v5314
    %v5419 = vpack.c.b16 %v5319, %v5315
    %v5420 = vpack.c.b16 %v5320, %v5316
    %v5421 = vpack.c.b16 %v5325, %v5321
    %v5422 = vpack.c.b16 %v5326, %v5322
    %v5423 = vpack.c.b16 %v5327, %v5323
    %v5424 = vpack.c.b16 %v5328, %v5324
    %v5425 = vpack.c.b16 %v5333, %v5329
    %v5426 = vpack.c.b16 %v5334, %v5330
    %v5427 = vpack.c.b16 %v5335, %v5331
    %v5428 = vpack.c.b16 %v5336, %v5332
    %v5429 = vpack.c.b16 %v5341, %v5337
    %v5430 = vpack.c.b16 %v5342, %v5338
    %v5431 = vpack.c.b16 %v5343, %v5339
    %v5432 = vpack.c.b16 %v5344, %v5340
    %v5433 = vpack.c.b16 %v5349, %v5345
    %v5434 = vpack.c.b16 %v5350, %v5346
    %v5435 = vpack.c.b16 %v5351, %v5347
    %v5436 = vpack.c.b16 %v5352, %v5348
    %v5437 = vpack.c.b16 %v5357, %v5353
    %v5438 = vpack.c.b16 %v5358, %v5354
    %v5439 = vpack.c.b16 %v5359, %v5355
    %v5440 = vpack.c.b16 %v5360, %v5356
    %v5441 = vpack.c.b16 %v5365, %v5361
    %v5442 = vpack.c.b16 %v5366, %v5362
    %v5443 = vpack.c.b16 %v5367, %v5363
    %v5444 = vpack.c.b16 %v5368, %v5364
    %v5445 = vpack.c.b16 %v5373, %v5369
    %v5446 = vpack.c.b16 %v5374, %v5370
    %v5447 = vpack.c.b16 %v5375, %v5371
    %v5448 = vpack.c.b16 %v5376, %v5372
    %v5449 = vpack.c.b16 %v5381, %v5377
    %v5450 = vpack.c.b16 %v5382, %v5378
    %v5451 = vpack.c.b16 %v5383, %v5379
    %v5452 = vpack.c.b16 %v5384, %v5380
    %v5453 = vpack.c.b16 %v5389, %v5385
    %v5454 = vpack.c.b16 %v5390, %v5386
    %v5455 = vpack.c.b16 %v5391, %v5387
    %v5456 = vpack.c.b16 %v5392, %v5388
    %5521 = vmatprep.subr.bf16.mxu0 %v5394
    %5522 = vmatpush1.bf16.msra.mxu0 %v5393
    %5523 = vmatprep.subr.bf16.mxu0 %v5398
    %5524 = vmatpush1.bf16.msra.mxu0 %v5397
    %5525 = vmatprep.subr.bf16.mxu0 %v5402
    %5526 = vmatpush1.bf16.msra.mxu0 %v5401
    %5527 = vmatprep.subr.bf16.mxu0 %v5406
    %5528 = vmatpush1.bf16.msra.mxu0 %v5405
    %5529 = vmatprep.subr.bf16.mxu0 %v5410
    %5530 = vmatpush1.bf16.msra.mxu0 %v5409
    %5531 = vmatprep.subr.bf16.mxu0 %v5414
    %5532 = vmatpush1.bf16.msra.mxu0 %v5413
    %5533 = vmatprep.subr.bf16.mxu0 %v5418
    %5534 = vmatpush1.bf16.msra.mxu0 %v5417
    %5535 = vmatprep.subr.bf16.mxu0 %v5422
    %5536 = vmatpush1.bf16.msra.mxu0 %v5421
    %5537 = vmatprep.subr.bf16.mxu0 %v5426
    %5538 = vmatpush1.bf16.msra.mxu0 %v5425
    %5539 = vmatprep.subr.bf16.mxu0 %v5430
    %5540 = vmatpush1.bf16.msra.mxu0 %v5429
    %5541 = vmatprep.subr.bf16.mxu0 %v5434
    %5542 = vmatpush1.bf16.msra.mxu0 %v5433
    %5543 = vmatprep.subr.bf16.mxu0 %v5438
    %5544 = vmatpush1.bf16.msra.mxu0 %v5437
    %5545 = vmatprep.subr.bf16.mxu0 %v5442
    %5546 = vmatpush1.bf16.msra.mxu0 %v5441
    %5547 = vmatprep.subr.bf16.mxu0 %v5446
    %5548 = vmatpush1.bf16.msra.mxu0 %v5445
    %5549 = vmatprep.subr.bf16.mxu0 %v5450
    %5550 = vmatpush1.bf16.msra.mxu0 %v5449
    %5551 = vmatprep.subr.bf16.mxu0 %v5454
    %5552 = vmatpush1.bf16.msra.mxu0 %v5453
    %5553 = vmatprep.mubr.bf16.mxu0 %v4373
    %5554 = vmatmul.mubr.bf16.gmra.mrb[0].mxu0 %v5114
    %v5555 = vpop.f32.mrb[0].mxu0
    %v5556 = vadd.f32 %v5184, %v5555
    %v5557 = vpop.f32.mrb[0].mxu0
    %v5558 = vadd.f32 %v5188, %v5557
    %v5559 = vpop.f32.mrb[0].mxu0
    %v5560 = vpop.f32.mrb[0].mxu0
    %5561 = vdwg.mxu0
    %5562 = vmatprep.subr.bf16.mxu0 %v5396
    %5563 = vmatpush1.bf16.msra.mxu0 %v5395
    %5564 = vmatprep.subr.bf16.mxu0 %v5400
    %5565 = vmatpush1.bf16.msra.mxu0 %v5399
    %5566 = vmatprep.subr.bf16.mxu0 %v5404
    %5567 = vmatpush1.bf16.msra.mxu0 %v5403
    %5568 = vmatprep.subr.bf16.mxu0 %v5408
    %5569 = vmatpush1.bf16.msra.mxu0 %v5407
    %5570 = vmatprep.subr.bf16.mxu0 %v5412
    %5571 = vmatpush1.bf16.msra.mxu0 %v5411
    %5572 = vmatprep.subr.bf16.mxu0 %v5416
    %5573 = vmatpush1.bf16.msra.mxu0 %v5415
    %5574 = vmatprep.subr.bf16.mxu0 %v5420
    %5575 = vmatpush1.bf16.msra.mxu0 %v5419
    %5576 = vmatprep.subr.bf16.mxu0 %v5424
    %5577 = vmatpush1.bf16.msra.mxu0 %v5423
    %5578 = vmatprep.subr.bf16.mxu0 %v5428
    %5579 = vmatpush1.bf16.msra.mxu0 %v5427
    %5580 = vmatprep.subr.bf16.mxu0 %v5432
    %5581 = vmatpush1.bf16.msra.mxu0 %v5431
    %5582 = vmatprep.subr.bf16.mxu0 %v5436
    %5583 = vmatpush1.bf16.msra.mxu0 %v5435
    %5584 = vmatprep.subr.bf16.mxu0 %v5440
    %5585 = vmatpush1.bf16.msra.mxu0 %v5439
    %5586 = vmatprep.subr.bf16.mxu0 %v5444
    %5587 = vmatpush1.bf16.msra.mxu0 %v5443
    %5588 = vmatprep.subr.bf16.mxu0 %v5448
    %5589 = vmatpush1.bf16.msra.mxu0 %v5447
    %5590 = vmatprep.subr.bf16.mxu0 %v5452
    %5591 = vmatpush1.bf16.msra.mxu0 %v5451
    %5592 = vmatprep.subr.bf16.mxu0 %v5456
    %5593 = vmatpush1.bf16.msra.mxu0 %v5455
    %5594 = vmatprep.mubr.bf16.mxu0 %v4373
    %5595 = vmatmul.mubr.bf16.gmra.mrb[0].mxu0 %v5114
    %v5596 = vpop.f32.mrb[0].mxu0
    %v5597 = vadd.f32 %v5192, %v5596
    %v5598 = vpop.f32.mrb[0].mxu0
    %v5599 = vadd.f32 %v5196, %v5598
    %v5600 = vpop.f32.mrb[0].mxu0
    %v5601 = vpop.f32.mrb[0].mxu0
    %5602 = vdwg.mxu0
    %v5603 = vxor.u32 %v5556, 2147483648
    %v5604 = vmul.f32 %v5603, 1.442695
    %v5605 = vpow.pop %v5604
    %v5606 = vadd.f32 %v5605, 1.0
    %v5607 = vrcp.pop %v5606
    %v5608 = vmul.f32 1.0, %v5607
    %v5609 = vxor.u32 %v5558, 2147483648
    %v5610 = vmul.f32 %v5609, 1.442695
    %v5611 = vpow.pop %v5610
    %v5612 = vadd.f32 %v5611, 1.0
    %v5613 = vrcp.pop %v5612
    %v5614 = vmul.f32 1.0, %v5613
    %v5615 = vtanh.pop %v5597
    %v5616 = vxor.u32 %v5599, 2147483648
    %v5617 = vmul.f32 %v5616, 1.442695
    %v5618 = vpow.pop %v5617
    %v5619 = vadd.f32 %v5618, 1.0
    %v5620 = vrcp.pop %v5619
    %v5621 = vmul.f32 1.0, %v5620
    %v5622 = vmul.f32 %v5614, %v4370
    %v5623 = vmul.f32 %v5608, %v5615
    %v5624 = vadd.f32 %v5622, %v5623
    %v5625 = vtanh.pop %v5624
    %v5626 = vmul.f32 %v5621, %v5625
    %v5627 = vpack.c.bf16 %v5626, %v5626
    %v5628 = vld [vmem:[%s3116] sm:$0xff]
    %v5629 = vld [vmem:[%s3116 + $0x8] sm:$0xff]
    %v5630 = vld [vmem:[%s3116 + $0x10] sm:$0xff]
    %v5631 = vld [vmem:[%s3116 + $0x18] sm:$0xff]
    %v5632 = vld [vmem:[%s3116 + $0x20] sm:$0xff]
    %v5633 = vld [vmem:[%s3116 + $0x28] sm:$0xff]
    %v5634 = vld [vmem:[%s3116 + $0x30] sm:$0xff]
    %v5635 = vld [vmem:[%s3116 + $0x38] sm:$0xff]
    %v5636 = vld [vmem:[%s3116 + $0x40] sm:$0xff]
    %v5637 = vld [vmem:[%s3116 + $0x48] sm:$0xff]
    %v5638 = vld [vmem:[%s3116 + $0x50] sm:$0xff]
    %v5639 = vld [vmem:[%s3116 + $0x58] sm:$0xff]
    %v5640 = vld [vmem:[%s3116 + $0x60] sm:$0xff]
    %v5641 = vld [vmem:[%s3116 + $0x68] sm:$0xff]
    %v5642 = vld [vmem:[%s3116 + $0x70] sm:$0xff]
    %v5643 = vld [vmem:[%s3116 + $0x78] sm:$0xff]
    %v5644 = vld [vmem:[%s3116 + $0x80] sm:$0xff]
    %v5645 = vld [vmem:[%s3116 + $0x88] sm:$0xff]
    %v5646 = vld [vmem:[%s3116 + $0x90] sm:$0xff]
    %v5647 = vld [vmem:[%s3116 + $0x98] sm:$0xff]
    %v5648 = vld [vmem:[%s3116 + $0xa0] sm:$0xff]
    %v5649 = vld [vmem:[%s3116 + $0xa8] sm:$0xff]
    %v5650 = vld [vmem:[%s3116 + $0xb0] sm:$0xff]
    %v5651 = vld [vmem:[%s3116 + $0xb8] sm:$0xff]
    %v5652 = vld [vmem:[%s3116 + $0xc0] sm:$0xff]
    %v5653 = vld [vmem:[%s3116 + $0xc8] sm:$0xff]
    %v5654 = vld [vmem:[%s3116 + $0xd0] sm:$0xff]
    %v5655 = vld [vmem:[%s3116 + $0xd8] sm:$0xff]
    %v5656 = vld [vmem:[%s3116 + $0xe0] sm:$0xff]
    %v5657 = vld [vmem:[%s3116 + $0xe8] sm:$0xff]
    %v5658 = vld [vmem:[%s3116 + $0xf0] sm:$0xff]
    %v5659 = vld [vmem:[%s3116 + $0xf8] sm:$0xff]
    %v5660 = vld [vmem:[%s3116 + $0x100] sm:$0xff]
    %v5661 = vld [vmem:[%s3116 + $0x108] sm:$0xff]
    %v5662 = vld [vmem:[%s3116 + $0x110] sm:$0xff]
    %v5663 = vld [vmem:[%s3116 + $0x118] sm:$0xff]
    %v5664 = vld [vmem:[%s3116 + $0x120] sm:$0xff]
    %v5665 = vld [vmem:[%s3116 + $0x128] sm:$0xff]
    %v5666 = vld [vmem:[%s3116 + $0x130] sm:$0xff]
    %v5667 = vld [vmem:[%s3116 + $0x138] sm:$0xff]
    %v5668 = vld [vmem:[%s3116 + $0x140] sm:$0xff]
    %v5669 = vld [vmem:[%s3116 + $0x148] sm:$0xff]
    %v5670 = vld [vmem:[%s3116 + $0x150] sm:$0xff]
    %v5671 = vld [vmem:[%s3116 + $0x158] sm:$0xff]
    %v5672 = vld [vmem:[%s3116 + $0x160] sm:$0xff]
    %v5673 = vld [vmem:[%s3116 + $0x168] sm:$0xff]
    %v5674 = vld [vmem:[%s3116 + $0x170] sm:$0xff]
    %v5675 = vld [vmem:[%s3116 + $0x178] sm:$0xff]
    %v5676 = vld [vmem:[%s3116 + $0x180] sm:$0xff]
    %v5677 = vld [vmem:[%s3116 + $0x188] sm:$0xff]
    %v5678 = vld [vmem:[%s3116 + $0x190] sm:$0xff]
    %v5679 = vld [vmem:[%s3116 + $0x198] sm:$0xff]
    %v5680 = vld [vmem:[%s3116 + $0x1a0] sm:$0xff]
    %v5681 = vld [vmem:[%s3116 + $0x1a8] sm:$0xff]
    %v5682 = vld [vmem:[%s3116 + $0x1b0] sm:$0xff]
    %v5683 = vld [vmem:[%s3116 + $0x1b8] sm:$0xff]
    %v5684 = vld [vmem:[%s3116 + $0x1c0] sm:$0xff]
    %v5685 = vld [vmem:[%s3116 + $0x1c8] sm:$0xff]
    %v5686 = vld [vmem:[%s3116 + $0x1d0] sm:$0xff]
    %v5687 = vld [vmem:[%s3116 + $0x1d8] sm:$0xff]
    %v5688 = vld [vmem:[%s3116 + $0x1e0] sm:$0xff]
    %v5689 = vld [vmem:[%s3116 + $0x1e8] sm:$0xff]
    %v5690 = vld [vmem:[%s3116 + $0x1f0] sm:$0xff]
    %v5691 = vld [vmem:[%s3116 + $0x1f8] sm:$0xff]
    %v5692 = vld [vmem:[%s3181] sm:$0xf]
    %v5694 = vlaneseq
    %v5695 = vshrl.u32 %v5694, 7
    %v5696 = vsub.s32 0, %v5695
    %v5697 = vrot.slane %v5692, %v5696
    %v5698 = vlaneseq
    %v5699 = vshrl.u32 %v5698, 7
    %v5700 = vsub.s32 1, %v5699
    %v5701 = vrot.slane %v5692, %v5700
    %v5702 = vlaneseq
    %v5703 = vshrl.u32 %v5702, 7
    %v5704 = vsub.s32 2, %v5703
    %v5705 = vrot.slane %v5692, %v5704
    %v5706 = vlaneseq
    %v5707 = vshrl.u32 %v5706, 7
    %v5708 = vsub.s32 3, %v5707
    %v5709 = vrot.slane %v5692, %v5708
    %v5778 = vunpack.c.l.b16 %v5628
    %v5779 = vunpack.c.h.b16 %v5628
    %v5780 = vunpack.c.l.b16 %v5629
    %v5781 = vunpack.c.h.b16 %v5629
    %v5782 = vunpack.c.l.b16 %v5630
    %v5783 = vunpack.c.h.b16 %v5630
    %v5784 = vunpack.c.l.b16 %v5631
    %v5785 = vunpack.c.h.b16 %v5631
    %v5786 = vunpack.c.l.b16 %v5632
    %v5787 = vunpack.c.h.b16 %v5632
    %v5788 = vunpack.c.l.b16 %v5633
    %v5789 = vunpack.c.h.b16 %v5633
    %v5790 = vunpack.c.l.b16 %v5634
    %v5791 = vunpack.c.h.b16 %v5634
    %v5792 = vunpack.c.l.b16 %v5635
    %v5793 = vunpack.c.h.b16 %v5635
    %v5794 = vunpack.c.l.b16 %v5636
    %v5795 = vunpack.c.h.b16 %v5636
    %v5796 = vunpack.c.l.b16 %v5637
    %v5797 = vunpack.c.h.b16 %v5637
    %v5798 = vunpack.c.l.b16 %v5638
    %v5799 = vunpack.c.h.b16 %v5638
    %v5800 = vunpack.c.l.b16 %v5639
    %v5801 = vunpack.c.h.b16 %v5639
    %v5802 = vunpack.c.l.b16 %v5640
    %v5803 = vunpack.c.h.b16 %v5640
    %v5804 = vunpack.c.l.b16 %v5641
    %v5805 = vunpack.c.h.b16 %v5641
    %v5806 = vunpack.c.l.b16 %v5642
    %v5807 = vunpack.c.h.b16 %v5642
    %v5808 = vunpack.c.l.b16 %v5643
    %v5809 = vunpack.c.h.b16 %v5643
    %v5810 = vunpack.c.l.b16 %v5644
    %v5811 = vunpack.c.h.b16 %v5644
    %v5812 = vunpack.c.l.b16 %v5645
    %v5813 = vunpack.c.h.b16 %v5645
    %v5814 = vunpack.c.l.b16 %v5646
    %v5815 = vunpack.c.h.b16 %v5646
    %v5816 = vunpack.c.l.b16 %v5647
    %v5817 = vunpack.c.h.b16 %v5647
    %v5818 = vunpack.c.l.b16 %v5648
    %v5819 = vunpack.c.h.b16 %v5648
    %v5820 = vunpack.c.l.b16 %v5649
    %v5821 = vunpack.c.h.b16 %v5649
    %v5822 = vunpack.c.l.b16 %v5650
    %v5823 = vunpack.c.h.b16 %v5650
    %v5824 = vunpack.c.l.b16 %v5651
    %v5825 = vunpack.c.h.b16 %v5651
    %v5826 = vunpack.c.l.b16 %v5652
    %v5827 = vunpack.c.h.b16 %v5652
    %v5828 = vunpack.c.l.b16 %v5653
    %v5829 = vunpack.c.h.b16 %v5653
    %v5830 = vunpack.c.l.b16 %v5654
    %v5831 = vunpack.c.h.b16 %v5654
    %v5832 = vunpack.c.l.b16 %v5655
    %v5833 = vunpack.c.h.b16 %v5655
    %v5834 = vunpack.c.l.b16 %v5656
    %v5835 = vunpack.c.h.b16 %v5656
    %v5836 = vunpack.c.l.b16 %v5657
    %v5837 = vunpack.c.h.b16 %v5657
    %v5838 = vunpack.c.l.b16 %v5658
    %v5839 = vunpack.c.h.b16 %v5658
    %v5840 = vunpack.c.l.b16 %v5659
    %v5841 = vunpack.c.h.b16 %v5659
    %v5842 = vunpack.c.l.b16 %v5660
    %v5843 = vunpack.c.h.b16 %v5660
    %v5844 = vunpack.c.l.b16 %v5661
    %v5845 = vunpack.c.h.b16 %v5661
    %v5846 = vunpack.c.l.b16 %v5662
    %v5847 = vunpack.c.h.b16 %v5662
    %v5848 = vunpack.c.l.b16 %v5663
    %v5849 = vunpack.c.h.b16 %v5663
    %v5850 = vunpack.c.l.b16 %v5664
    %v5851 = vunpack.c.h.b16 %v5664
    %v5852 = vunpack.c.l.b16 %v5665
    %v5853 = vunpack.c.h.b16 %v5665
    %v5854 = vunpack.c.l.b16 %v5666
    %v5855 = vunpack.c.h.b16 %v5666
    %v5856 = vunpack.c.l.b16 %v5667
    %v5857 = vunpack.c.h.b16 %v5667
    %v5858 = vunpack.c.l.b16 %v5668
    %v5859 = vunpack.c.h.b16 %v5668
    %v5860 = vunpack.c.l.b16 %v5669
    %v5861 = vunpack.c.h.b16 %v5669
    %v5862 = vunpack.c.l.b16 %v5670
    %v5863 = vunpack.c.h.b16 %v5670
    %v5864 = vunpack.c.l.b16 %v5671
    %v5865 = vunpack.c.h.b16 %v5671
    %v5866 = vunpack.c.l.b16 %v5672
    %v5867 = vunpack.c.h.b16 %v5672
    %v5868 = vunpack.c.l.b16 %v5673
    %v5869 = vunpack.c.h.b16 %v5673
    %v5870 = vunpack.c.l.b16 %v5674
    %v5871 = vunpack.c.h.b16 %v5674
    %v5872 = vunpack.c.l.b16 %v5675
    %v5873 = vunpack.c.h.b16 %v5675
    %v5874 = vunpack.c.l.b16 %v5676
    %v5875 = vunpack.c.h.b16 %v5676
    %v5876 = vunpack.c.l.b16 %v5677
    %v5877 = vunpack.c.h.b16 %v5677
    %v5878 = vunpack.c.l.b16 %v5678
    %v5879 = vunpack.c.h.b16 %v5678
    %v5880 = vunpack.c.l.b16 %v5679
    %v5881 = vunpack.c.h.b16 %v5679
    %v5882 = vunpack.c.l.b16 %v5680
    %v5883 = vunpack.c.h.b16 %v5680
    %v5884 = vunpack.c.l.b16 %v5681
    %v5885 = vunpack.c.h.b16 %v5681
    %v5886 = vunpack.c.l.b16 %v5682
    %v5887 = vunpack.c.h.b16 %v5682
    %v5888 = vunpack.c.l.b16 %v5683
    %v5889 = vunpack.c.h.b16 %v5683
    %v5890 = vunpack.c.l.b16 %v5684
    %v5891 = vunpack.c.h.b16 %v5684
    %v5892 = vunpack.c.l.b16 %v5685
    %v5893 = vunpack.c.h.b16 %v5685
    %v5894 = vunpack.c.l.b16 %v5686
    %v5895 = vunpack.c.h.b16 %v5686
    %v5896 = vunpack.c.l.b16 %v5687
    %v5897 = vunpack.c.h.b16 %v5687
    %v5898 = vunpack.c.l.b16 %v5688
    %v5899 = vunpack.c.h.b16 %v5688
    %v5900 = vunpack.c.l.b16 %v5689
    %v5901 = vunpack.c.h.b16 %v5689
    %v5902 = vunpack.c.l.b16 %v5690
    %v5903 = vunpack.c.h.b16 %v5690
    %v5904 = vunpack.c.l.b16 %v5691
    %v5905 = vunpack.c.h.b16 %v5691
    %v5906 = vpack.c.b16 %v5782, %v5778
    %v5907 = vpack.c.b16 %v5783, %v5779
    %v5908 = vpack.c.b16 %v5784, %v5780
    %v5909 = vpack.c.b16 %v5785, %v5781
    %v5910 = vpack.c.b16 %v5790, %v5786
    %v5911 = vpack.c.b16 %v5791, %v5787
    %v5912 = vpack.c.b16 %v5792, %v5788
    %v5913 = vpack.c.b16 %v5793, %v5789
    %v5914 = vpack.c.b16 %v5798, %v5794
    %v5915 = vpack.c.b16 %v5799, %v5795
    %v5916 = vpack.c.b16 %v5800, %v5796
    %v5917 = vpack.c.b16 %v5801, %v5797
    %v5918 = vpack.c.b16 %v5806, %v5802
    %v5919 = vpack.c.b16 %v5807, %v5803
    %v5920 = vpack.c.b16 %v5808, %v5804
    %v5921 = vpack.c.b16 %v5809, %v5805
    %v5922 = vpack.c.b16 %v5814, %v5810
    %v5923 = vpack.c.b16 %v5815, %v5811
    %v5924 = vpack.c.b16 %v5816, %v5812
    %v5925 = vpack.c.b16 %v5817, %v5813
    %v5926 = vpack.c.b16 %v5822, %v5818
    %v5927 = vpack.c.b16 %v5823, %v5819
    %v5928 = vpack.c.b16 %v5824, %v5820
    %v5929 = vpack.c.b16 %v5825, %v5821
    %v5930 = vpack.c.b16 %v5830, %v5826
    %v5931 = vpack.c.b16 %v5831, %v5827
    %v5932 = vpack.c.b16 %v5832, %v5828
    %v5933 = vpack.c.b16 %v5833, %v5829
    %v5934 = vpack.c.b16 %v5838, %v5834
    %v5935 = vpack.c.b16 %v5839, %v5835
    %v5936 = vpack.c.b16 %v5840, %v5836
    %v5937 = vpack.c.b16 %v5841, %v5837
    %v5938 = vpack.c.b16 %v5846, %v5842
    %v5939 = vpack.c.b16 %v5847, %v5843
    %v5940 = vpack.c.b16 %v5848, %v5844
    %v5941 = vpack.c.b16 %v5849, %v5845
    %v5942 = vpack.c.b16 %v5854, %v5850
    %v5943 = vpack.c.b16 %v5855, %v5851
    %v5944 = vpack.c.b16 %v5856, %v5852
    %v5945 = vpack.c.b16 %v5857, %v5853
    %v5946 = vpack.c.b16 %v5862, %v5858
    %v5947 = vpack.c.b16 %v5863, %v5859
    %v5948 = vpack.c.b16 %v5864, %v5860
    %v5949 = vpack.c.b16 %v5865, %v5861
    %v5950 = vpack.c.b16 %v5870, %v5866
    %v5951 = vpack.c.b16 %v5871, %v5867
    %v5952 = vpack.c.b16 %v5872, %v5868
    %v5953 = vpack.c.b16 %v5873, %v5869
    %v5954 = vpack.c.b16 %v5878, %v5874
    %v5955 = vpack.c.b16 %v5879, %v5875
    %v5956 = vpack.c.b16 %v5880, %v5876
    %v5957 = vpack.c.b16 %v5881, %v5877
    %v5958 = vpack.c.b16 %v5886, %v5882
    %v5959 = vpack.c.b16 %v5887, %v5883
    %v5960 = vpack.c.b16 %v5888, %v5884
    %v5961 = vpack.c.b16 %v5889, %v5885
    %v5962 = vpack.c.b16 %v5894, %v5890
    %v5963 = vpack.c.b16 %v5895, %v5891
    %v5964 = vpack.c.b16 %v5896, %v5892
    %v5965 = vpack.c.b16 %v5897, %v5893
    %v5966 = vpack.c.b16 %v5902, %v5898
    %v5967 = vpack.c.b16 %v5903, %v5899
    %v5968 = vpack.c.b16 %v5904, %v5900
    %v5969 = vpack.c.b16 %v5905, %v5901
    %6034 = vmatprep.subr.bf16.mxu0 %v5907
    %6035 = vmatpush1.bf16.msra.mxu0 %v5906
    %6036 = vmatprep.subr.bf16.mxu0 %v5911
    %6037 = vmatpush1.bf16.msra.mxu0 %v5910
    %6038 = vmatprep.subr.bf16.mxu0 %v5915
    %6039 = vmatpush1.bf16.msra.mxu0 %v5914
    %6040 = vmatprep.subr.bf16.mxu0 %v5919
    %6041 = vmatpush1.bf16.msra.mxu0 %v5918
    %6042 = vmatprep.subr.bf16.mxu0 %v5923
    %6043 = vmatpush1.bf16.msra.mxu0 %v5922
    %6044 = vmatprep.subr.bf16.mxu0 %v5927
    %6045 = vmatpush1.bf16.msra.mxu0 %v5926
    %6046 = vmatprep.subr.bf16.mxu0 %v5931
    %6047 = vmatpush1.bf16.msra.mxu0 %v5930
    %6048 = vmatprep.subr.bf16.mxu0 %v5935
    %6049 = vmatpush1.bf16.msra.mxu0 %v5934
    %6050 = vmatprep.subr.bf16.mxu0 %v5939
    %6051 = vmatpush1.bf16.msra.mxu0 %v5938
    %6052 = vmatprep.subr.bf16.mxu0 %v5943
    %6053 = vmatpush1.bf16.msra.mxu0 %v5942
    %6054 = vmatprep.subr.bf16.mxu0 %v5947
    %6055 = vmatpush1.bf16.msra.mxu0 %v5946
    %6056 = vmatprep.subr.bf16.mxu0 %v5951
    %6057 = vmatpush1.bf16.msra.mxu0 %v5950
    %6058 = vmatprep.subr.bf16.mxu0 %v5955
    %6059 = vmatpush1.bf16.msra.mxu0 %v5954
    %6060 = vmatprep.subr.bf16.mxu0 %v5959
    %6061 = vmatpush1.bf16.msra.mxu0 %v5958
    %6062 = vmatprep.subr.bf16.mxu0 %v5963
    %6063 = vmatpush1.bf16.msra.mxu0 %v5962
    %6064 = vmatprep.subr.bf16.mxu0 %v5967
    %6065 = vmatpush1.bf16.msra.mxu0 %v5966
    %6066 = vmatprep.mubr.bf16.mxu0 %v4886
    %6067 = vmatmul.mubr.bf16.gmra.mrb[0].mxu0 %v5627
    %v6068 = vpop.f32.mrb[0].mxu0
    %v6069 = vadd.f32 %v5697, %v6068
    %v6070 = vpop.f32.mrb[0].mxu0
    %v6071 = vadd.f32 %v5701, %v6070
    %v6072 = vpop.f32.mrb[0].mxu0
    %v6073 = vpop.f32.mrb[0].mxu0
    %6074 = vdwg.mxu0
    %6075 = vmatprep.subr.bf16.mxu0 %v5909
    %6076 = vmatpush1.bf16.msra.mxu0 %v5908
    %6077 = vmatprep.subr.bf16.mxu0 %v5913
    %6078 = vmatpush1.bf16.msra.mxu0 %v5912
    %6079 = vmatprep.subr.bf16.mxu0 %v5917
    %6080 = vmatpush1.bf16.msra.mxu0 %v5916
    %6081 = vmatprep.subr.bf16.mxu0 %v5921
    %6082 = vmatpush1.bf16.msra.mxu0 %v5920
    %6083 = vmatprep.subr.bf16.mxu0 %v5925
    %6084 = vmatpush1.bf16.msra.mxu0 %v5924
    %6085 = vmatprep.subr.bf16.mxu0 %v5929
    %6086 = vmatpush1.bf16.msra.mxu0 %v5928
    %6087 = vmatprep.subr.bf16.mxu0 %v5933
    %6088 = vmatpush1.bf16.msra.mxu0 %v5932
    %6089 = vmatprep.subr.bf16.mxu0 %v5937
    %6090 = vmatpush1.bf16.msra.mxu0 %v5936
    %6091 = vmatprep.subr.bf16.mxu0 %v5941
    %6092 = vmatpush1.bf16.msra.mxu0 %v5940
    %6093 = vmatprep.subr.bf16.mxu0 %v5945
    %6094 = vmatpush1.bf16.msra.mxu0 %v5944
    %6095 = vmatprep.subr.bf16.mxu0 %v5949
    %6096 = vmatpush1.bf16.msra.mxu0 %v5948
    %6097 = vmatprep.subr.bf16.mxu0 %v5953
    %6098 = vmatpush1.bf16.msra.mxu0 %v5952
    %6099 = vmatprep.subr.bf16.mxu0 %v5957
    %6100 = vmatpush1.bf16.msra.mxu0 %v5956
    %6101 = vmatprep.subr.bf16.mxu0 %v5961
    %6102 = vmatpush1.bf16.msra.mxu0 %v5960
    %6103 = vmatprep.subr.bf16.mxu0 %v5965
    %6104 = vmatpush1.bf16.msra.mxu0 %v5964
    %6105 = vmatprep.subr.bf16.mxu0 %v5969
    %6106 = vmatpush1.bf16.msra.mxu0 %v5968
    %6107 = vmatprep.mubr.bf16.mxu0 %v4886
    %6108 = vmatmul.mubr.bf16.gmra.mrb[0].mxu0 %v5627
    %v6109 = vpop.f32.mrb[0].mxu0
    %v6110 = vadd.f32 %v5705, %v6109
    %v6111 = vpop.f32.mrb[0].mxu0
    %v6112 = vadd.f32 %v5709, %v6111
    %v6113 = vpop.f32.mrb[0].mxu0
    %v6114 = vpop.f32.mrb[0].mxu0
    %6115 = vdwg.mxu0
    %v6116 = vxor.u32 %v6069, 2147483648
    %v6117 = vmul.f32 %v6116, 1.442695
    %v6118 = vpow.pop %v6117
    %v6119 = vadd.f32 %v6118, 1.0
    %v6120 = vrcp.pop %v6119
    %v6121 = vmul.f32 1.0, %v6120
    %v6122 = vxor.u32 %v6071, 2147483648
    %v6123 = vmul.f32 %v6122, 1.442695
    %v6124 = vpow.pop %v6123
    %v6125 = vadd.f32 %v6124, 1.0
    %v6126 = vrcp.pop %v6125
    %v6127 = vmul.f32 1.0, %v6126
    %v6128 = vtanh.pop %v6110
    %v6129 = vxor.u32 %v6112, 2147483648
    %v6130 = vmul.f32 %v6129, 1.442695
    %v6131 = vpow.pop %v6130
    %v6132 = vadd.f32 %v6131, 1.0
    %v6133 = vrcp.pop %v6132
    %v6134 = vmul.f32 1.0, %v6133
    %v6135 = vmul.f32 %v6127, %v4883
    %v6136 = vmul.f32 %v6121, %v6128
    %v6137 = vadd.f32 %v6135, %v6136
    %v6138 = vtanh.pop %v6137
    %v6139 = vmul.f32 %v6134, %v6138
    %v6140 = vpack.c.bf16 %v6139, %v6139
    %v6141 = vld [vmem:[%s6] sm:$0xf]
    %v6142 = vld [vmem:[%s6 + $0x4] sm:$0xf]
    %v6143 = vld [vmem:[%s6 + $0x8] sm:$0xf]
    %v6144 = vld [vmem:[%s6 + $0xc] sm:$0xf]
    %v6145 = vld [vmem:[%s6 + $0x10] sm:$0xf]
    %v6146 = vld [vmem:[%s6 + $0x14] sm:$0xf]
    %v6147 = vld [vmem:[%s6 + $0x18] sm:$0xf]
    %v6148 = vld [vmem:[%s6 + $0x1c] sm:$0xf]
    %v6149 = vld [vmem:[%s6 + $0x20] sm:$0xf]
    %v6150 = vld [vmem:[%s6 + $0x24] sm:$0xf]
    %v6151 = vld [vmem:[%s6 + $0x28] sm:$0xf]
    %v6152 = vld [vmem:[%s6 + $0x2c] sm:$0xf]
    %v6153 = vld [vmem:[%s6 + $0x30] sm:$0xf]
    %v6154 = vld [vmem:[%s6 + $0x34] sm:$0xf]
    %v6155 = vld [vmem:[%s6 + $0x38] sm:$0xf]
    %v6156 = vld [vmem:[%s6 + $0x3c] sm:$0xf]
    %v6157 = vld [vmem:[%s7] sm:$0x1]
    %v6159 = vlaneseq
    %v6160 = vshrl.u32 %v6159, 7
    %v6161 = vsub.s32 0, %v6160
    %v6162 = vrot.slane %v6157, %v6161
    %v6180 = vunpack.c.l.b16 %v6141
    %v6181 = vunpack.c.l.b16 %v6142
    %v6182 = vunpack.c.l.b16 %v6143
    %v6183 = vunpack.c.l.b16 %v6144
    %v6184 = vunpack.c.l.b16 %v6145
    %v6185 = vunpack.c.l.b16 %v6146
    %v6186 = vunpack.c.l.b16 %v6147
    %v6187 = vunpack.c.l.b16 %v6148
    %v6188 = vunpack.c.l.b16 %v6149
    %v6189 = vunpack.c.l.b16 %v6150
    %v6190 = vunpack.c.l.b16 %v6151
    %v6191 = vunpack.c.l.b16 %v6152
    %v6192 = vunpack.c.l.b16 %v6153
    %v6193 = vunpack.c.l.b16 %v6154
    %v6194 = vunpack.c.l.b16 %v6155
    %v6195 = vunpack.c.l.b16 %v6156
    %v6196 = vpack.c.b16 %v6181, %v6180
    %v6197 = vpack.c.b16 %v6183, %v6182
    %v6198 = vpack.c.b16 %v6185, %v6184
    %v6199 = vpack.c.b16 %v6187, %v6186
    %v6200 = vpack.c.b16 %v6189, %v6188
    %v6201 = vpack.c.b16 %v6191, %v6190
    %v6202 = vpack.c.b16 %v6193, %v6192
    %v6203 = vpack.c.b16 %v6195, %v6194
    %6212 = vmatprep.subr.bf16.mxu0 0
    %6213 = vmatpush1.bf16.msra.mxu0 %v6196
    %6214 = vmatprep.subr.bf16.mxu0 0
    %6215 = vmatpush1.bf16.msra.mxu0 %v6197
    %6216 = vmatprep.subr.bf16.mxu0 0
    %6217 = vmatpush1.bf16.msra.mxu0 %v6198
    %6218 = vmatprep.subr.bf16.mxu0 0
    %6219 = vmatpush1.bf16.msra.mxu0 %v6199
    %6220 = vmatprep.subr.bf16.mxu0 0
    %6221 = vmatpush1.bf16.msra.mxu0 %v6200
    %6222 = vmatprep.subr.bf16.mxu0 0
    %6223 = vmatpush1.bf16.msra.mxu0 %v6201
    %6224 = vmatprep.subr.bf16.mxu0 0
    %6225 = vmatpush1.bf16.msra.mxu0 %v6202
    %6226 = vmatprep.subr.bf16.mxu0 0
    %6227 = vmatpush1.bf16.msra.mxu0 %v6203
    %6228 = vmatprep.subr.bf16.mxu0 0
    %6229 = vmatpush1.bf16.msra.mxu0 0
    %6230 = vmatprep.subr.bf16.mxu0 0
    %6231 = vmatpush1.bf16.msra.mxu0 0
    %6232 = vmatprep.subr.bf16.mxu0 0
    %6233 = vmatpush1.bf16.msra.mxu0 0
    %6234 = vmatprep.subr.bf16.mxu0 0
    %6235 = vmatpush1.bf16.msra.mxu0 0
    %6236 = vmatprep.subr.bf16.mxu0 0
    %6237 = vmatpush1.bf16.msra.mxu0 0
    %6238 = vmatprep.subr.bf16.mxu0 0
    %6239 = vmatpush1.bf16.msra.mxu0 0
    %6240 = vmatprep.subr.bf16.mxu0 0
    %6241 = vmatpush1.bf16.msra.mxu0 0
    %6242 = vmatprep.subr.bf16.mxu0 0
    %6243 = vmatpush1.bf16.msra.mxu0 0
    %6244 = vmatprep.mubr.bf16.mxu0 0
    %6245 = vmatmul.mubr.bf16.gmra.mrb[0].mxu0 %v6140
    %v6246 = vpop.f32.mrb[0].mxu0
    %v6247 = vadd.f32 %v6162, %v6246
    %v6248 = vpop.f32.mrb[0].mxu0
    %v6249 = vpop.f32.mrb[0].mxu0
    %v6250 = vpop.f32.mrb[0].mxu0
    %6251 = vdwg.mxu0
    %s6252 = scalar_lea.vmem %s9, 16
    %6253 = vst [vmem:[%s6252] sm:$0xff] %v6247
    %6254 = vmax.xlane.f32.xlu0 %v6247
    %v6255 = vpop.xlane.xlu0 %6254
    %vm6256 = vcmp.eq.f32.partialorder %v6247, %v6255
    %v6257 = vsel %vm6256, %v3745, 128.0
    %6258 = vmin.xlane.f32.xlu0 %v6257
    %v6259 = vpop.xlane.xlu0 %6258
    %vm6260 = vcmp.eq.f32.partialorder %v3745, %v6259
    %v6261 = vsel %vm6260, 1, 0
    %v6262 = vcvt.s32.f32 %v6261
    %v6263 = vpack.c.bf16 %v6262, %v6262
    %v6264 = vld [vmem:[%s8] sm:$0xf]
    %v6265 = vld [vmem:[%s8 + $0x4] sm:$0xf]
    %v6266 = vld [vmem:[%s8 + $0x8] sm:$0xf]
    %v6267 = vld [vmem:[%s8 + $0xc] sm:$0xf]
    %v6268 = vld [vmem:[%s8 + $0x10] sm:$0xf]
    %v6269 = vld [vmem:[%s8 + $0x14] sm:$0xf]
    %v6270 = vld [vmem:[%s8 + $0x18] sm:$0xf]
    %v6271 = vld [vmem:[%s8 + $0x1c] sm:$0xf]
    %v6272 = vld [vmem:[%s8 + $0x20] sm:$0xf]
    %v6273 = vld [vmem:[%s8 + $0x24] sm:$0xf]
    %v6274 = vld [vmem:[%s8 + $0x28] sm:$0xf]
    %v6275 = vld [vmem:[%s8 + $0x2c] sm:$0xf]
    %v6276 = vld [vmem:[%s8 + $0x30] sm:$0xf]
    %v6277 = vld [vmem:[%s8 + $0x34] sm:$0xf]
    %v6278 = vld [vmem:[%s8 + $0x38] sm:$0xf]
    %v6279 = vld [vmem:[%s8 + $0x3c] sm:$0xf]
    %v6296 = vunpack.c.l.b16 %v6264
    %v6297 = vunpack.c.l.b16 %v6265
    %v6298 = vunpack.c.l.b16 %v6266
    %v6299 = vunpack.c.l.b16 %v6267
    %v6300 = vunpack.c.l.b16 %v6268
    %v6301 = vunpack.c.l.b16 %v6269
    %v6302 = vunpack.c.l.b16 %v6270
    %v6303 = vunpack.c.l.b16 %v6271
    %v6304 = vunpack.c.l.b16 %v6272
    %v6305 = vunpack.c.l.b16 %v6273
    %v6306 = vunpack.c.l.b16 %v6274
    %v6307 = vunpack.c.l.b16 %v6275
    %v6308 = vunpack.c.l.b16 %v6276
    %v6309 = vunpack.c.l.b16 %v6277
    %v6310 = vunpack.c.l.b16 %v6278
    %v6311 = vunpack.c.l.b16 %v6279
    %v6312 = vpack.c.b16 %v6297, %v6296
    %v6313 = vpack.c.b16 %v6299, %v6298
    %v6314 = vpack.c.b16 %v6301, %v6300
    %v6315 = vpack.c.b16 %v6303, %v6302
    %v6316 = vpack.c.b16 %v6305, %v6304
    %v6317 = vpack.c.b16 %v6307, %v6306
    %v6318 = vpack.c.b16 %v6309, %v6308
    %v6319 = vpack.c.b16 %v6311, %v6310
    %6328 = vmatprep.subr.bf16.mxu0 0
    %6329 = vmatpush1.bf16.msra.mxu0 %v6312
    %6330 = vmatprep.subr.bf16.mxu0 0
    %6331 = vmatpush1.bf16.msra.mxu0 %v6313
    %6332 = vmatprep.subr.bf16.mxu0 0
    %6333 = vmatpush1.bf16.msra.mxu0 %v6314
    %6334 = vmatprep.subr.bf16.mxu0 0
    %6335 = vmatpush1.bf16.msra.mxu0 %v6315
    %6336 = vmatprep.subr.bf16.mxu0 0
    %6337 = vmatpush1.bf16.msra.mxu0 %v6316
    %6338 = vmatprep.subr.bf16.mxu0 0
    %6339 = vmatpush1.bf16.msra.mxu0 %v6317
    %6340 = vmatprep.subr.bf16.mxu0 0
    %6341 = vmatpush1.bf16.msra.mxu0 %v6318
    %6342 = vmatprep.subr.bf16.mxu0 0
    %6343 = vmatpush1.bf16.msra.mxu0 %v6319
    %6344 = vmatprep.subr.bf16.mxu0 0
    %6345 = vmatpush1.bf16.msra.mxu0 0
    %6346 = vmatprep.subr.bf16.mxu0 0
    %6347 = vmatpush1.bf16.msra.mxu0 0
    %6348 = vmatprep.subr.bf16.mxu0 0
    %6349 = vmatpush1.bf16.msra.mxu0 0
    %6350 = vmatprep.subr.bf16.mxu0 0
    %6351 = vmatpush1.bf16.msra.mxu0 0
    %6352 = vmatprep.subr.bf16.mxu0 0
    %6353 = vmatpush1.bf16.msra.mxu0 0
    %6354 = vmatprep.subr.bf16.mxu0 0
    %6355 = vmatpush1.bf16.msra.mxu0 0
    %6356 = vmatprep.subr.bf16.mxu0 0
    %6357 = vmatpush1.bf16.msra.mxu0 0
    %6358 = vmatprep.subr.bf16.mxu0 0
    %6359 = vmatpush1.bf16.msra.mxu0 0
    %6360 = vmatprep.mubr.bf16.mxu0 0
    %6361 = vmatmul.mubr.bf16.gmra.mrb[0].mxu0 %v6263
    %v6362 = vpop.f32.mrb[0].mxu0
    %v6363 = vadd.f32 0.0, %v6362
    %v6364 = vpop.f32.mrb[0].mxu0
    %v6365 = vpop.f32.mrb[0].mxu0
    %v6366 = vpop.f32.mrb[0].mxu0
    %6367 = vdwg.mxu0
    %v6368 = vpack.c.bf16 %v6363, %v6363
    %v6369 = vld [vmem:[#allocation4] sm:$0xff]
    %v6370 = vld [vmem:[#allocation4 + $0x8] sm:$0xff]
    %v6371 = vld [vmem:[#allocation4 + $0x10] sm:$0xff]
    %v6372 = vld [vmem:[#allocation4 + $0x18] sm:$0xff]
    %v6373 = vld [vmem:[#allocation4 + $0x20] sm:$0xff]
    %v6374 = vld [vmem:[#allocation4 + $0x28] sm:$0xff]
    %v6375 = vld [vmem:[#allocation4 + $0x30] sm:$0xff]
    %v6376 = vld [vmem:[#allocation4 + $0x38] sm:$0xff]
    %v6377 = vld [vmem:[#allocation4 + $0x40] sm:$0xff]
    %v6378 = vld [vmem:[#allocation4 + $0x48] sm:$0xff]
    %v6379 = vld [vmem:[#allocation4 + $0x50] sm:$0xff]
    %v6380 = vld [vmem:[#allocation4 + $0x58] sm:$0xff]
    %v6381 = vld [vmem:[#allocation4 + $0x60] sm:$0xff]
    %v6382 = vld [vmem:[#allocation4 + $0x68] sm:$0xff]
    %v6383 = vld [vmem:[#allocation4 + $0x70] sm:$0xff]
    %v6384 = vld [vmem:[#allocation4 + $0x78] sm:$0xff]
    %v6385 = vld [vmem:[#allocation4 + $0x80] sm:$0xff]
    %v6386 = vld [vmem:[#allocation4 + $0x88] sm:$0xff]
    %v6387 = vld [vmem:[#allocation4 + $0x90] sm:$0xff]
    %v6388 = vld [vmem:[#allocation4 + $0x98] sm:$0xff]
    %v6389 = vld [vmem:[#allocation4 + $0xa0] sm:$0xff]
    %v6390 = vld [vmem:[#allocation4 + $0xa8] sm:$0xff]
    %v6391 = vld [vmem:[#allocation4 + $0xb0] sm:$0xff]
    %v6392 = vld [vmem:[#allocation4 + $0xb8] sm:$0xff]
    %v6393 = vld [vmem:[#allocation4 + $0xc0] sm:$0xff]
    %v6394 = vld [vmem:[#allocation4 + $0xc8] sm:$0xff]
    %v6395 = vld [vmem:[#allocation4 + $0xd0] sm:$0xff]
    %v6396 = vld [vmem:[#allocation4 + $0xd8] sm:$0xff]
    %v6397 = vld [vmem:[#allocation4 + $0xe0] sm:$0xff]
    %v6398 = vld [vmem:[#allocation4 + $0xe8] sm:$0xff]
    %v6399 = vld [vmem:[#allocation4 + $0xf0] sm:$0xff]
    %v6400 = vld [vmem:[#allocation4 + $0xf8] sm:$0xff]
    %v6401 = vld [vmem:[#allocation4 + $0x100] sm:$0xff]
    %v6402 = vld [vmem:[#allocation4 + $0x108] sm:$0xff]
    %v6403 = vld [vmem:[#allocation4 + $0x110] sm:$0xff]
    %v6404 = vld [vmem:[#allocation4 + $0x118] sm:$0xff]
    %v6405 = vld [vmem:[#allocation4 + $0x120] sm:$0xff]
    %v6406 = vld [vmem:[#allocation4 + $0x128] sm:$0xff]
    %v6407 = vld [vmem:[#allocation4 + $0x130] sm:$0xff]
    %v6408 = vld [vmem:[#allocation4 + $0x138] sm:$0xff]
    %v6409 = vld [vmem:[#allocation4 + $0x140] sm:$0xff]
    %v6410 = vld [vmem:[#allocation4 + $0x148] sm:$0xff]
    %v6411 = vld [vmem:[#allocation4 + $0x150] sm:$0xff]
    %v6412 = vld [vmem:[#allocation4 + $0x158] sm:$0xff]
    %v6413 = vld [vmem:[#allocation4 + $0x160] sm:$0xff]
    %v6414 = vld [vmem:[#allocation4 + $0x168] sm:$0xff]
    %v6415 = vld [vmem:[#allocation4 + $0x170] sm:$0xff]
    %v6416 = vld [vmem:[#allocation4 + $0x178] sm:$0xff]
    %v6417 = vld [vmem:[#allocation4 + $0x180] sm:$0xff]
    %v6418 = vld [vmem:[#allocation4 + $0x188] sm:$0xff]
    %v6419 = vld [vmem:[#allocation4 + $0x190] sm:$0xff]
    %v6420 = vld [vmem:[#allocation4 + $0x198] sm:$0xff]
    %v6421 = vld [vmem:[#allocation4 + $0x1a0] sm:$0xff]
    %v6422 = vld [vmem:[#allocation4 + $0x1a8] sm:$0xff]
    %v6423 = vld [vmem:[#allocation4 + $0x1b0] sm:$0xff]
    %v6424 = vld [vmem:[#allocation4 + $0x1b8] sm:$0xff]
    %v6425 = vld [vmem:[#allocation4 + $0x1c0] sm:$0xff]
    %v6426 = vld [vmem:[#allocation4 + $0x1c8] sm:$0xff]
    %v6427 = vld [vmem:[#allocation4 + $0x1d0] sm:$0xff]
    %v6428 = vld [vmem:[#allocation4 + $0x1d8] sm:$0xff]
    %v6429 = vld [vmem:[#allocation4 + $0x1e0] sm:$0xff]
    %v6430 = vld [vmem:[#allocation4 + $0x1e8] sm:$0xff]
    %v6431 = vld [vmem:[#allocation4 + $0x1f0] sm:$0xff]
    %v6432 = vld [vmem:[#allocation4 + $0x1f8] sm:$0xff]
    %v6433 = vld [vmem:[%s5] sm:$0xf]
    %v6435 = vlaneseq
    %v6436 = vshrl.u32 %v6435, 7
    %v6437 = vsub.s32 0, %v6436
    %v6438 = vrot.slane %v6433, %v6437
    %v6439 = vlaneseq
    %v6440 = vshrl.u32 %v6439, 7
    %v6441 = vsub.s32 1, %v6440
    %v6442 = vrot.slane %v6433, %v6441
    %v6443 = vlaneseq
    %v6444 = vshrl.u32 %v6443, 7
    %v6445 = vsub.s32 2, %v6444
    %v6446 = vrot.slane %v6433, %v6445
    %v6447 = vlaneseq
    %v6448 = vshrl.u32 %v6447, 7
    %v6449 = vsub.s32 3, %v6448
    %v6450 = vrot.slane %v6433, %v6449
    %v6519 = vunpack.c.l.b16 %v6369
    %v6520 = vunpack.c.h.b16 %v6369
    %v6521 = vunpack.c.l.b16 %v6370
    %v6522 = vunpack.c.h.b16 %v6370
    %v6523 = vunpack.c.l.b16 %v6371
    %v6524 = vunpack.c.h.b16 %v6371
    %v6525 = vunpack.c.l.b16 %v6372
    %v6526 = vunpack.c.h.b16 %v6372
    %v6527 = vunpack.c.l.b16 %v6373
    %v6528 = vunpack.c.h.b16 %v6373
    %v6529 = vunpack.c.l.b16 %v6374
    %v6530 = vunpack.c.h.b16 %v6374
    %v6531 = vunpack.c.l.b16 %v6375
    %v6532 = vunpack.c.h.b16 %v6375
    %v6533 = vunpack.c.l.b16 %v6376
    %v6534 = vunpack.c.h.b16 %v6376
    %v6535 = vunpack.c.l.b16 %v6377
    %v6536 = vunpack.c.h.b16 %v6377
    %v6537 = vunpack.c.l.b16 %v6378
    %v6538 = vunpack.c.h.b16 %v6378
    %v6539 = vunpack.c.l.b16 %v6379
    %v6540 = vunpack.c.h.b16 %v6379
    %v6541 = vunpack.c.l.b16 %v6380
    %v6542 = vunpack.c.h.b16 %v6380
    %v6543 = vunpack.c.l.b16 %v6381
    %v6544 = vunpack.c.h.b16 %v6381
    %v6545 = vunpack.c.l.b16 %v6382
    %v6546 = vunpack.c.h.b16 %v6382
    %v6547 = vunpack.c.l.b16 %v6383
    %v6548 = vunpack.c.h.b16 %v6383
    %v6549 = vunpack.c.l.b16 %v6384
    %v6550 = vunpack.c.h.b16 %v6384
    %v6551 = vunpack.c.l.b16 %v6385
    %v6552 = vunpack.c.h.b16 %v6385
    %v6553 = vunpack.c.l.b16 %v6386
    %v6554 = vunpack.c.h.b16 %v6386
    %v6555 = vunpack.c.l.b16 %v6387
    %v6556 = vunpack.c.h.b16 %v6387
    %v6557 = vunpack.c.l.b16 %v6388
    %v6558 = vunpack.c.h.b16 %v6388
    %v6559 = vunpack.c.l.b16 %v6389
    %v6560 = vunpack.c.h.b16 %v6389
    %v6561 = vunpack.c.l.b16 %v6390
    %v6562 = vunpack.c.h.b16 %v6390
    %v6563 = vunpack.c.l.b16 %v6391
    %v6564 = vunpack.c.h.b16 %v6391
    %v6565 = vunpack.c.l.b16 %v6392
    %v6566 = vunpack.c.h.b16 %v6392
    %v6567 = vunpack.c.l.b16 %v6393
    %v6568 = vunpack.c.h.b16 %v6393
    %v6569 = vunpack.c.l.b16 %v6394
    %v6570 = vunpack.c.h.b16 %v6394
    %v6571 = vunpack.c.l.b16 %v6395
    %v6572 = vunpack.c.h.b16 %v6395
    %v6573 = vunpack.c.l.b16 %v6396
    %v6574 = vunpack.c.h.b16 %v6396
    %v6575 = vunpack.c.l.b16 %v6397
    %v6576 = vunpack.c.h.b16 %v6397
    %v6577 = vunpack.c.l.b16 %v6398
    %v6578 = vunpack.c.h.b16 %v6398
    %v6579 = vunpack.c.l.b16 %v6399
    %v6580 = vunpack.c.h.b16 %v6399
    %v6581 = vunpack.c.l.b16 %v6400
    %v6582 = vunpack.c.h.b16 %v6400
    %v6583 = vunpack.c.l.b16 %v6401
    %v6584 = vunpack.c.h.b16 %v6401
    %v6585 = vunpack.c.l.b16 %v6402
    %v6586 = vunpack.c.h.b16 %v6402
    %v6587 = vunpack.c.l.b16 %v6403
    %v6588 = vunpack.c.h.b16 %v6403
    %v6589 = vunpack.c.l.b16 %v6404
    %v6590 = vunpack.c.h.b16 %v6404
    %v6591 = vunpack.c.l.b16 %v6405
    %v6592 = vunpack.c.h.b16 %v6405
    %v6593 = vunpack.c.l.b16 %v6406
    %v6594 = vunpack.c.h.b16 %v6406
    %v6595 = vunpack.c.l.b16 %v6407
    %v6596 = vunpack.c.h.b16 %v6407
    %v6597 = vunpack.c.l.b16 %v6408
    %v6598 = vunpack.c.h.b16 %v6408
    %v6599 = vunpack.c.l.b16 %v6409
    %v6600 = vunpack.c.h.b16 %v6409
    %v6601 = vunpack.c.l.b16 %v6410
    %v6602 = vunpack.c.h.b16 %v6410
    %v6603 = vunpack.c.l.b16 %v6411
    %v6604 = vunpack.c.h.b16 %v6411
    %v6605 = vunpack.c.l.b16 %v6412
    %v6606 = vunpack.c.h.b16 %v6412
    %v6607 = vunpack.c.l.b16 %v6413
    %v6608 = vunpack.c.h.b16 %v6413
    %v6609 = vunpack.c.l.b16 %v6414
    %v6610 = vunpack.c.h.b16 %v6414
    %v6611 = vunpack.c.l.b16 %v6415
    %v6612 = vunpack.c.h.b16 %v6415
    %v6613 = vunpack.c.l.b16 %v6416
    %v6614 = vunpack.c.h.b16 %v6416
    %v6615 = vunpack.c.l.b16 %v6417
    %v6616 = vunpack.c.h.b16 %v6417
    %v6617 = vunpack.c.l.b16 %v6418
    %v6618 = vunpack.c.h.b16 %v6418
    %v6619 = vunpack.c.l.b16 %v6419
    %v6620 = vunpack.c.h.b16 %v6419
    %v6621 = vunpack.c.l.b16 %v6420
    %v6622 = vunpack.c.h.b16 %v6420
    %v6623 = vunpack.c.l.b16 %v6421
    %v6624 = vunpack.c.h.b16 %v6421
    %v6625 = vunpack.c.l.b16 %v6422
    %v6626 = vunpack.c.h.b16 %v6422
    %v6627 = vunpack.c.l.b16 %v6423
    %v6628 = vunpack.c.h.b16 %v6423
    %v6629 = vunpack.c.l.b16 %v6424
    %v6630 = vunpack.c.h.b16 %v6424
    %v6631 = vunpack.c.l.b16 %v6425
    %v6632 = vunpack.c.h.b16 %v6425
    %v6633 = vunpack.c.l.b16 %v6426
    %v6634 = vunpack.c.h.b16 %v6426
    %v6635 = vunpack.c.l.b16 %v6427
    %v6636 = vunpack.c.h.b16 %v6427
    %v6637 = vunpack.c.l.b16 %v6428
    %v6638 = vunpack.c.h.b16 %v6428
    %v6639 = vunpack.c.l.b16 %v6429
    %v6640 = vunpack.c.h.b16 %v6429
    %v6641 = vunpack.c.l.b16 %v6430
    %v6642 = vunpack.c.h.b16 %v6430
    %v6643 = vunpack.c.l.b16 %v6431
    %v6644 = vunpack.c.h.b16 %v6431
    %v6645 = vunpack.c.l.b16 %v6432
    %v6646 = vunpack.c.h.b16 %v6432
    %v6647 = vpack.c.b16 %v6523, %v6519
    %v6648 = vpack.c.b16 %v6524, %v6520
    %v6649 = vpack.c.b16 %v6525, %v6521
    %v6650 = vpack.c.b16 %v6526, %v6522
    %v6651 = vpack.c.b16 %v6531, %v6527
    %v6652 = vpack.c.b16 %v6532, %v6528
    %v6653 = vpack.c.b16 %v6533, %v6529
    %v6654 = vpack.c.b16 %v6534, %v6530
    %v6655 = vpack.c.b16 %v6539, %v6535
    %v6656 = vpack.c.b16 %v6540, %v6536
    %v6657 = vpack.c.b16 %v6541, %v6537
    %v6658 = vpack.c.b16 %v6542, %v6538
    %v6659 = vpack.c.b16 %v6547, %v6543
    %v6660 = vpack.c.b16 %v6548, %v6544
    %v6661 = vpack.c.b16 %v6549, %v6545
    %v6662 = vpack.c.b16 %v6550, %v6546
    %v6663 = vpack.c.b16 %v6555, %v6551
    %v6664 = vpack.c.b16 %v6556, %v6552
    %v6665 = vpack.c.b16 %v6557, %v6553
    %v6666 = vpack.c.b16 %v6558, %v6554
    %v6667 = vpack.c.b16 %v6563, %v6559
    %v6668 = vpack.c.b16 %v6564, %v6560
    %v6669 = vpack.c.b16 %v6565, %v6561
    %v6670 = vpack.c.b16 %v6566, %v6562
    %v6671 = vpack.c.b16 %v6571, %v6567
    %v6672 = vpack.c.b16 %v6572, %v6568
    %v6673 = vpack.c.b16 %v6573, %v6569
    %v6674 = vpack.c.b16 %v6574, %v6570
    %v6675 = vpack.c.b16 %v6579, %v6575
    %v6676 = vpack.c.b16 %v6580, %v6576
    %v6677 = vpack.c.b16 %v6581, %v6577
    %v6678 = vpack.c.b16 %v6582, %v6578
    %v6679 = vpack.c.b16 %v6587, %v6583
    %v6680 = vpack.c.b16 %v6588, %v6584
    %v6681 = vpack.c.b16 %v6589, %v6585
    %v6682 = vpack.c.b16 %v6590, %v6586
    %v6683 = vpack.c.b16 %v6595, %v6591
    %v6684 = vpack.c.b16 %v6596, %v6592
    %v6685 = vpack.c.b16 %v6597, %v6593
    %v6686 = vpack.c.b16 %v6598, %v6594
    %v6687 = vpack.c.b16 %v6603, %v6599
    %v6688 = vpack.c.b16 %v6604, %v6600
    %v6689 = vpack.c.b16 %v6605, %v6601
    %v6690 = vpack.c.b16 %v6606, %v6602
    %v6691 = vpack.c.b16 %v6611, %v6607
    %v6692 = vpack.c.b16 %v6612, %v6608
    %v6693 = vpack.c.b16 %v6613, %v6609
    %v6694 = vpack.c.b16 %v6614, %v6610
    %v6695 = vpack.c.b16 %v6619, %v6615
    %v6696 = vpack.c.b16 %v6620, %v6616
    %v6697 = vpack.c.b16 %v6621, %v6617
    %v6698 = vpack.c.b16 %v6622, %v6618
    %v6699 = vpack.c.b16 %v6627, %v6623
    %v6700 = vpack.c.b16 %v6628, %v6624
    %v6701 = vpack.c.b16 %v6629, %v6625
    %v6702 = vpack.c.b16 %v6630, %v6626
    %v6703 = vpack.c.b16 %v6635, %v6631
    %v6704 = vpack.c.b16 %v6636, %v6632
    %v6705 = vpack.c.b16 %v6637, %v6633
    %v6706 = vpack.c.b16 %v6638, %v6634
    %v6707 = vpack.c.b16 %v6643, %v6639
    %v6708 = vpack.c.b16 %v6644, %v6640
    %v6709 = vpack.c.b16 %v6645, %v6641
    %v6710 = vpack.c.b16 %v6646, %v6642
    %6775 = vmatprep.subr.bf16.mxu0 %v6648
    %6776 = vmatpush1.bf16.msra.mxu0 %v6647
    %6777 = vmatprep.subr.bf16.mxu0 %v6652
    %6778 = vmatpush1.bf16.msra.mxu0 %v6651
    %6779 = vmatprep.subr.bf16.mxu0 %v6656
    %6780 = vmatpush1.bf16.msra.mxu0 %v6655
    %6781 = vmatprep.subr.bf16.mxu0 %v6660
    %6782 = vmatpush1.bf16.msra.mxu0 %v6659
    %6783 = vmatprep.subr.bf16.mxu0 %v6664
    %6784 = vmatpush1.bf16.msra.mxu0 %v6663
    %6785 = vmatprep.subr.bf16.mxu0 %v6668
    %6786 = vmatpush1.bf16.msra.mxu0 %v6667
    %6787 = vmatprep.subr.bf16.mxu0 %v6672
    %6788 = vmatpush1.bf16.msra.mxu0 %v6671
    %6789 = vmatprep.subr.bf16.mxu0 %v6676
    %6790 = vmatpush1.bf16.msra.mxu0 %v6675
    %6791 = vmatprep.subr.bf16.mxu0 %v6680
    %6792 = vmatpush1.bf16.msra.mxu0 %v6679
    %6793 = vmatprep.subr.bf16.mxu0 %v6684
    %6794 = vmatpush1.bf16.msra.mxu0 %v6683
    %6795 = vmatprep.subr.bf16.mxu0 %v6688
    %6796 = vmatpush1.bf16.msra.mxu0 %v6687
    %6797 = vmatprep.subr.bf16.mxu0 %v6692
    %6798 = vmatpush1.bf16.msra.mxu0 %v6691
    %6799 = vmatprep.subr.bf16.mxu0 %v6696
    %6800 = vmatpush1.bf16.msra.mxu0 %v6695
    %6801 = vmatprep.subr.bf16.mxu0 %v6700
    %6802 = vmatpush1.bf16.msra.mxu0 %v6699
    %6803 = vmatprep.subr.bf16.mxu0 %v6704
    %6804 = vmatpush1.bf16.msra.mxu0 %v6703
    %6805 = vmatprep.subr.bf16.mxu0 %v6708
    %6806 = vmatpush1.bf16.msra.mxu0 %v6707
    %6807 = vmatprep.mubr.bf16.mxu0 %v5627
    %6808 = vmatmul.mubr.bf16.gmra.mrb[0].mxu0 %v6368
    %v6809 = vpop.f32.mrb[0].mxu0
    %v6810 = vadd.f32 %v6438, %v6809
    %v6811 = vpop.f32.mrb[0].mxu0
    %v6812 = vadd.f32 %v6442, %v6811
    %v6813 = vpop.f32.mrb[0].mxu0
    %v6814 = vpop.f32.mrb[0].mxu0
    %6815 = vdwg.mxu0
    %6816 = vmatprep.subr.bf16.mxu0 %v6650
    %6817 = vmatpush1.bf16.msra.mxu0 %v6649
    %6818 = vmatprep.subr.bf16.mxu0 %v6654
    %6819 = vmatpush1.bf16.msra.mxu0 %v6653
    %6820 = vmatprep.subr.bf16.mxu0 %v6658
    %6821 = vmatpush1.bf16.msra.mxu0 %v6657
    %6822 = vmatprep.subr.bf16.mxu0 %v6662
    %6823 = vmatpush1.bf16.msra.mxu0 %v6661
    %6824 = vmatprep.subr.bf16.mxu0 %v6666
    %6825 = vmatpush1.bf16.msra.mxu0 %v6665
    %6826 = vmatprep.subr.bf16.mxu0 %v6670
    %6827 = vmatpush1.bf16.msra.mxu0 %v6669
    %6828 = vmatprep.subr.bf16.mxu0 %v6674
    %6829 = vmatpush1.bf16.msra.mxu0 %v6673
    %6830 = vmatprep.subr.bf16.mxu0 %v6678
    %6831 = vmatpush1.bf16.msra.mxu0 %v6677
    %6832 = vmatprep.subr.bf16.mxu0 %v6682
    %6833 = vmatpush1.bf16.msra.mxu0 %v6681
    %6834 = vmatprep.subr.bf16.mxu0 %v6686
    %6835 = vmatpush1.bf16.msra.mxu0 %v6685
    %6836 = vmatprep.subr.bf16.mxu0 %v6690
    %6837 = vmatpush1.bf16.msra.mxu0 %v6689
    %6838 = vmatprep.subr.bf16.mxu0 %v6694
    %6839 = vmatpush1.bf16.msra.mxu0 %v6693
    %6840 = vmatprep.subr.bf16.mxu0 %v6698
    %6841 = vmatpush1.bf16.msra.mxu0 %v6697
    %6842 = vmatprep.subr.bf16.mxu0 %v6702
    %6843 = vmatpush1.bf16.msra.mxu0 %v6701
    %6844 = vmatprep.subr.bf16.mxu0 %v6706
    %6845 = vmatpush1.bf16.msra.mxu0 %v6705
    %6846 = vmatprep.subr.bf16.mxu0 %v6710
    %6847 = vmatpush1.bf16.msra.mxu0 %v6709
    %6848 = vmatprep.mubr.bf16.mxu0 %v5627
    %6849 = vmatmul.mubr.bf16.gmra.mrb[0].mxu0 %v6368
    %v6850 = vpop.f32.mrb[0].mxu0
    %v6851 = vadd.f32 %v6446, %v6850
    %v6852 = vpop.f32.mrb[0].mxu0
    %v6853 = vadd.f32 %v6450, %v6852
    %v6854 = vpop.f32.mrb[0].mxu0
    %v6855 = vpop.f32.mrb[0].mxu0
    %6856 = vdwg.mxu0
    %v6857 = vxor.u32 %v6810, 2147483648
    %v6858 = vmul.f32 %v6857, 1.442695
    %v6859 = vpow.pop %v6858
    %v6860 = vadd.f32 %v6859, 1.0
    %v6861 = vrcp.pop %v6860
    %v6862 = vmul.f32 1.0, %v6861
    %v6863 = vxor.u32 %v6812, 2147483648
    %v6864 = vmul.f32 %v6863, 1.442695
    %v6865 = vpow.pop %v6864
    %v6866 = vadd.f32 %v6865, 1.0
    %v6867 = vrcp.pop %v6866
    %v6868 = vmul.f32 1.0, %v6867
    %v6869 = vtanh.pop %v6851
    %v6870 = vxor.u32 %v6853, 2147483648
    %v6871 = vmul.f32 %v6870, 1.442695
    %v6872 = vpow.pop %v6871
    %v6873 = vadd.f32 %v6872, 1.0
    %v6874 = vrcp.pop %v6873
    %v6875 = vmul.f32 1.0, %v6874
    %v6876 = vmul.f32 %v6868, %v5624
    %v6877 = vmul.f32 %v6862, %v6869
    %v6878 = vadd.f32 %v6876, %v6877
    %v6879 = vtanh.pop %v6878
    %v6880 = vmul.f32 %v6875, %v6879
    %v6881 = vpack.c.bf16 %v6880, %v6880
    %v6882 = vld [vmem:[%s3116] sm:$0xff]
    %v6883 = vld [vmem:[%s3116 + $0x8] sm:$0xff]
    %v6884 = vld [vmem:[%s3116 + $0x10] sm:$0xff]
    %v6885 = vld [vmem:[%s3116 + $0x18] sm:$0xff]
    %v6886 = vld [vmem:[%s3116 + $0x20] sm:$0xff]
    %v6887 = vld [vmem:[%s3116 + $0x28] sm:$0xff]
    %v6888 = vld [vmem:[%s3116 + $0x30] sm:$0xff]
    %v6889 = vld [vmem:[%s3116 + $0x38] sm:$0xff]
    %v6890 = vld [vmem:[%s3116 + $0x40] sm:$0xff]
    %v6891 = vld [vmem:[%s3116 + $0x48] sm:$0xff]
    %v6892 = vld [vmem:[%s3116 + $0x50] sm:$0xff]
    %v6893 = vld [vmem:[%s3116 + $0x58] sm:$0xff]
    %v6894 = vld [vmem:[%s3116 + $0x60] sm:$0xff]
    %v6895 = vld [vmem:[%s3116 + $0x68] sm:$0xff]
    %v6896 = vld [vmem:[%s3116 + $0x70] sm:$0xff]
    %v6897 = vld [vmem:[%s3116 + $0x78] sm:$0xff]
    %v6898 = vld [vmem:[%s3116 + $0x80] sm:$0xff]
    %v6899 = vld [vmem:[%s3116 + $0x88] sm:$0xff]
    %v6900 = vld [vmem:[%s3116 + $0x90] sm:$0xff]
    %v6901 = vld [vmem:[%s3116 + $0x98] sm:$0xff]
    %v6902 = vld [vmem:[%s3116 + $0xa0] sm:$0xff]
    %v6903 = vld [vmem:[%s3116 + $0xa8] sm:$0xff]
    %v6904 = vld [vmem:[%s3116 + $0xb0] sm:$0xff]
    %v6905 = vld [vmem:[%s3116 + $0xb8] sm:$0xff]
    %v6906 = vld [vmem:[%s3116 + $0xc0] sm:$0xff]
    %v6907 = vld [vmem:[%s3116 + $0xc8] sm:$0xff]
    %v6908 = vld [vmem:[%s3116 + $0xd0] sm:$0xff]
    %v6909 = vld [vmem:[%s3116 + $0xd8] sm:$0xff]
    %v6910 = vld [vmem:[%s3116 + $0xe0] sm:$0xff]
    %v6911 = vld [vmem:[%s3116 + $0xe8] sm:$0xff]
    %v6912 = vld [vmem:[%s3116 + $0xf0] sm:$0xff]
    %v6913 = vld [vmem:[%s3116 + $0xf8] sm:$0xff]
    %v6914 = vld [vmem:[%s3116 + $0x100] sm:$0xff]
    %v6915 = vld [vmem:[%s3116 + $0x108] sm:$0xff]
    %v6916 = vld [vmem:[%s3116 + $0x110] sm:$0xff]
    %v6917 = vld [vmem:[%s3116 + $0x118] sm:$0xff]
    %v6918 = vld [vmem:[%s3116 + $0x120] sm:$0xff]
    %v6919 = vld [vmem:[%s3116 + $0x128] sm:$0xff]
    %v6920 = vld [vmem:[%s3116 + $0x130] sm:$0xff]
    %v6921 = vld [vmem:[%s3116 + $0x138] sm:$0xff]
    %v6922 = vld [vmem:[%s3116 + $0x140] sm:$0xff]
    %v6923 = vld [vmem:[%s3116 + $0x148] sm:$0xff]
    %v6924 = vld [vmem:[%s3116 + $0x150] sm:$0xff]
    %v6925 = vld [vmem:[%s3116 + $0x158] sm:$0xff]
    %v6926 = vld [vmem:[%s3116 + $0x160] sm:$0xff]
    %v6927 = vld [vmem:[%s3116 + $0x168] sm:$0xff]
    %v6928 = vld [vmem:[%s3116 + $0x170] sm:$0xff]
    %v6929 = vld [vmem:[%s3116 + $0x178] sm:$0xff]
    %v6930 = vld [vmem:[%s3116 + $0x180] sm:$0xff]
    %v6931 = vld [vmem:[%s3116 + $0x188] sm:$0xff]
    %v6932 = vld [vmem:[%s3116 + $0x190] sm:$0xff]
    %v6933 = vld [vmem:[%s3116 + $0x198] sm:$0xff]
    %v6934 = vld [vmem:[%s3116 + $0x1a0] sm:$0xff]
    %v6935 = vld [vmem:[%s3116 + $0x1a8] sm:$0xff]
    %v6936 = vld [vmem:[%s3116 + $0x1b0] sm:$0xff]
    %v6937 = vld [vmem:[%s3116 + $0x1b8] sm:$0xff]
    %v6938 = vld [vmem:[%s3116 + $0x1c0] sm:$0xff]
    %v6939 = vld [vmem:[%s3116 + $0x1c8] sm:$0xff]
    %v6940 = vld [vmem:[%s3116 + $0x1d0] sm:$0xff]
    %v6941 = vld [vmem:[%s3116 + $0x1d8] sm:$0xff]
    %v6942 = vld [vmem:[%s3116 + $0x1e0] sm:$0xff]
    %v6943 = vld [vmem:[%s3116 + $0x1e8] sm:$0xff]
    %v6944 = vld [vmem:[%s3116 + $0x1f0] sm:$0xff]
    %v6945 = vld [vmem:[%s3116 + $0x1f8] sm:$0xff]
    %v6946 = vld [vmem:[%s3181] sm:$0xf]
    %v6948 = vlaneseq
    %v6949 = vshrl.u32 %v6948, 7
    %v6950 = vsub.s32 0, %v6949
    %v6951 = vrot.slane %v6946, %v6950
    %v6952 = vlaneseq
    %v6953 = vshrl.u32 %v6952, 7
    %v6954 = vsub.s32 1, %v6953
    %v6955 = vrot.slane %v6946, %v6954
    %v6956 = vlaneseq
    %v6957 = vshrl.u32 %v6956, 7
    %v6958 = vsub.s32 2, %v6957
    %v6959 = vrot.slane %v6946, %v6958
    %v6960 = vlaneseq
    %v6961 = vshrl.u32 %v6960, 7
    %v6962 = vsub.s32 3, %v6961
    %v6963 = vrot.slane %v6946, %v6962
    %v7032 = vunpack.c.l.b16 %v6882
    %v7033 = vunpack.c.h.b16 %v6882
    %v7034 = vunpack.c.l.b16 %v6883
    %v7035 = vunpack.c.h.b16 %v6883
    %v7036 = vunpack.c.l.b16 %v6884
    %v7037 = vunpack.c.h.b16 %v6884
    %v7038 = vunpack.c.l.b16 %v6885
    %v7039 = vunpack.c.h.b16 %v6885
    %v7040 = vunpack.c.l.b16 %v6886
    %v7041 = vunpack.c.h.b16 %v6886
    %v7042 = vunpack.c.l.b16 %v6887
    %v7043 = vunpack.c.h.b16 %v6887
    %v7044 = vunpack.c.l.b16 %v6888
    %v7045 = vunpack.c.h.b16 %v6888
    %v7046 = vunpack.c.l.b16 %v6889
    %v7047 = vunpack.c.h.b16 %v6889
    %v7048 = vunpack.c.l.b16 %v6890
    %v7049 = vunpack.c.h.b16 %v6890
    %v7050 = vunpack.c.l.b16 %v6891
    %v7051 = vunpack.c.h.b16 %v6891
    %v7052 = vunpack.c.l.b16 %v6892
    %v7053 = vunpack.c.h.b16 %v6892
    %v7054 = vunpack.c.l.b16 %v6893
    %v7055 = vunpack.c.h.b16 %v6893
    %v7056 = vunpack.c.l.b16 %v6894
    %v7057 = vunpack.c.h.b16 %v6894
    %v7058 = vunpack.c.l.b16 %v6895
    %v7059 = vunpack.c.h.b16 %v6895
    %v7060 = vunpack.c.l.b16 %v6896
    %v7061 = vunpack.c.h.b16 %v6896
    %v7062 = vunpack.c.l.b16 %v6897
    %v7063 = vunpack.c.h.b16 %v6897
    %v7064 = vunpack.c.l.b16 %v6898
    %v7065 = vunpack.c.h.b16 %v6898
    %v7066 = vunpack.c.l.b16 %v6899
    %v7067 = vunpack.c.h.b16 %v6899
    %v7068 = vunpack.c.l.b16 %v6900
    %v7069 = vunpack.c.h.b16 %v6900
    %v7070 = vunpack.c.l.b16 %v6901
    %v7071 = vunpack.c.h.b16 %v6901
    %v7072 = vunpack.c.l.b16 %v6902
    %v7073 = vunpack.c.h.b16 %v6902
    %v7074 = vunpack.c.l.b16 %v6903
    %v7075 = vunpack.c.h.b16 %v6903
    %v7076 = vunpack.c.l.b16 %v6904
    %v7077 = vunpack.c.h.b16 %v6904
    %v7078 = vunpack.c.l.b16 %v6905
    %v7079 = vunpack.c.h.b16 %v6905
    %v7080 = vunpack.c.l.b16 %v6906
    %v7081 = vunpack.c.h.b16 %v6906
    %v7082 = vunpack.c.l.b16 %v6907
    %v7083 = vunpack.c.h.b16 %v6907
    %v7084 = vunpack.c.l.b16 %v6908
    %v7085 = vunpack.c.h.b16 %v6908
    %v7086 = vunpack.c.l.b16 %v6909
    %v7087 = vunpack.c.h.b16 %v6909
    %v7088 = vunpack.c.l.b16 %v6910
    %v7089 = vunpack.c.h.b16 %v6910
    %v7090 = vunpack.c.l.b16 %v6911
    %v7091 = vunpack.c.h.b16 %v6911
    %v7092 = vunpack.c.l.b16 %v6912
    %v7093 = vunpack.c.h.b16 %v6912
    %v7094 = vunpack.c.l.b16 %v6913
    %v7095 = vunpack.c.h.b16 %v6913
    %v7096 = vunpack.c.l.b16 %v6914
    %v7097 = vunpack.c.h.b16 %v6914
    %v7098 = vunpack.c.l.b16 %v6915
    %v7099 = vunpack.c.h.b16 %v6915
    %v7100 = vunpack.c.l.b16 %v6916
    %v7101 = vunpack.c.h.b16 %v6916
    %v7102 = vunpack.c.l.b16 %v6917
    %v7103 = vunpack.c.h.b16 %v6917
    %v7104 = vunpack.c.l.b16 %v6918
    %v7105 = vunpack.c.h.b16 %v6918
    %v7106 = vunpack.c.l.b16 %v6919
    %v7107 = vunpack.c.h.b16 %v6919
    %v7108 = vunpack.c.l.b16 %v6920
    %v7109 = vunpack.c.h.b16 %v6920
    %v7110 = vunpack.c.l.b16 %v6921
    %v7111 = vunpack.c.h.b16 %v6921
    %v7112 = vunpack.c.l.b16 %v6922
    %v7113 = vunpack.c.h.b16 %v6922
    %v7114 = vunpack.c.l.b16 %v6923
    %v7115 = vunpack.c.h.b16 %v6923
    %v7116 = vunpack.c.l.b16 %v6924
    %v7117 = vunpack.c.h.b16 %v6924
    %v7118 = vunpack.c.l.b16 %v6925
    %v7119 = vunpack.c.h.b16 %v6925
    %v7120 = vunpack.c.l.b16 %v6926
    %v7121 = vunpack.c.h.b16 %v6926
    %v7122 = vunpack.c.l.b16 %v6927
    %v7123 = vunpack.c.h.b16 %v6927
    %v7124 = vunpack.c.l.b16 %v6928
    %v7125 = vunpack.c.h.b16 %v6928
    %v7126 = vunpack.c.l.b16 %v6929
    %v7127 = vunpack.c.h.b16 %v6929
    %v7128 = vunpack.c.l.b16 %v6930
    %v7129 = vunpack.c.h.b16 %v6930
    %v7130 = vunpack.c.l.b16 %v6931
    %v7131 = vunpack.c.h.b16 %v6931
    %v7132 = vunpack.c.l.b16 %v6932
    %v7133 = vunpack.c.h.b16 %v6932
    %v7134 = vunpack.c.l.b16 %v6933
    %v7135 = vunpack.c.h.b16 %v6933
    %v7136 = vunpack.c.l.b16 %v6934
    %v7137 = vunpack.c.h.b16 %v6934
    %v7138 = vunpack.c.l.b16 %v6935
    %v7139 = vunpack.c.h.b16 %v6935
    %v7140 = vunpack.c.l.b16 %v6936
    %v7141 = vunpack.c.h.b16 %v6936
    %v7142 = vunpack.c.l.b16 %v6937
    %v7143 = vunpack.c.h.b16 %v6937
    %v7144 = vunpack.c.l.b16 %v6938
    %v7145 = vunpack.c.h.b16 %v6938
    %v7146 = vunpack.c.l.b16 %v6939
    %v7147 = vunpack.c.h.b16 %v6939
    %v7148 = vunpack.c.l.b16 %v6940
    %v7149 = vunpack.c.h.b16 %v6940
    %v7150 = vunpack.c.l.b16 %v6941
    %v7151 = vunpack.c.h.b16 %v6941
    %v7152 = vunpack.c.l.b16 %v6942
    %v7153 = vunpack.c.h.b16 %v6942
    %v7154 = vunpack.c.l.b16 %v6943
    %v7155 = vunpack.c.h.b16 %v6943
    %v7156 = vunpack.c.l.b16 %v6944
    %v7157 = vunpack.c.h.b16 %v6944
    %v7158 = vunpack.c.l.b16 %v6945
    %v7159 = vunpack.c.h.b16 %v6945
    %v7160 = vpack.c.b16 %v7036, %v7032
    %v7161 = vpack.c.b16 %v7037, %v7033
    %v7162 = vpack.c.b16 %v7038, %v7034
    %v7163 = vpack.c.b16 %v7039, %v7035
    %v7164 = vpack.c.b16 %v7044, %v7040
    %v7165 = vpack.c.b16 %v7045, %v7041
    %v7166 = vpack.c.b16 %v7046, %v7042
    %v7167 = vpack.c.b16 %v7047, %v7043
    %v7168 = vpack.c.b16 %v7052, %v7048
    %v7169 = vpack.c.b16 %v7053, %v7049
    %v7170 = vpack.c.b16 %v7054, %v7050
    %v7171 = vpack.c.b16 %v7055, %v7051
    %v7172 = vpack.c.b16 %v7060, %v7056
    %v7173 = vpack.c.b16 %v7061, %v7057
    %v7174 = vpack.c.b16 %v7062, %v7058
    %v7175 = vpack.c.b16 %v7063, %v7059
    %v7176 = vpack.c.b16 %v7068, %v7064
    %v7177 = vpack.c.b16 %v7069, %v7065
    %v7178 = vpack.c.b16 %v7070, %v7066
    %v7179 = vpack.c.b16 %v7071, %v7067
    %v7180 = vpack.c.b16 %v7076, %v7072
    %v7181 = vpack.c.b16 %v7077, %v7073
    %v7182 = vpack.c.b16 %v7078, %v7074
    %v7183 = vpack.c.b16 %v7079, %v7075
    %v7184 = vpack.c.b16 %v7084, %v7080
    %v7185 = vpack.c.b16 %v7085, %v7081
    %v7186 = vpack.c.b16 %v7086, %v7082
    %v7187 = vpack.c.b16 %v7087, %v7083
    %v7188 = vpack.c.b16 %v7092, %v7088
    %v7189 = vpack.c.b16 %v7093, %v7089
    %v7190 = vpack.c.b16 %v7094, %v7090
    %v7191 = vpack.c.b16 %v7095, %v7091
    %v7192 = vpack.c.b16 %v7100, %v7096
    %v7193 = vpack.c.b16 %v7101, %v7097
    %v7194 = vpack.c.b16 %v7102, %v7098
    %v7195 = vpack.c.b16 %v7103, %v7099
    %v7196 = vpack.c.b16 %v7108, %v7104
    %v7197 = vpack.c.b16 %v7109, %v7105
    %v7198 = vpack.c.b16 %v7110, %v7106
    %v7199 = vpack.c.b16 %v7111, %v7107
    %v7200 = vpack.c.b16 %v7116, %v7112
    %v7201 = vpack.c.b16 %v7117, %v7113
    %v7202 = vpack.c.b16 %v7118, %v7114
    %v7203 = vpack.c.b16 %v7119, %v7115
    %v7204 = vpack.c.b16 %v7124, %v7120
    %v7205 = vpack.c.b16 %v7125, %v7121
    %v7206 = vpack.c.b16 %v7126, %v7122
    %v7207 = vpack.c.b16 %v7127, %v7123
    %v7208 = vpack.c.b16 %v7132, %v7128
    %v7209 = vpack.c.b16 %v7133, %v7129
    %v7210 = vpack.c.b16 %v7134, %v7130
    %v7211 = vpack.c.b16 %v7135, %v7131
    %v7212 = vpack.c.b16 %v7140, %v7136
    %v7213 = vpack.c.b16 %v7141, %v7137
    %v7214 = vpack.c.b16 %v7142, %v7138
    %v7215 = vpack.c.b16 %v7143, %v7139
    %v7216 = vpack.c.b16 %v7148, %v7144
    %v7217 = vpack.c.b16 %v7149, %v7145
    %v7218 = vpack.c.b16 %v7150, %v7146
    %v7219 = vpack.c.b16 %v7151, %v7147
    %v7220 = vpack.c.b16 %v7156, %v7152
    %v7221 = vpack.c.b16 %v7157, %v7153
    %v7222 = vpack.c.b16 %v7158, %v7154
    %v7223 = vpack.c.b16 %v7159, %v7155
    %7288 = vmatprep.subr.bf16.mxu0 %v7161
    %7289 = vmatpush1.bf16.msra.mxu0 %v7160
    %7290 = vmatprep.subr.bf16.mxu0 %v7165
    %7291 = vmatpush1.bf16.msra.mxu0 %v7164
    %7292 = vmatprep.subr.bf16.mxu0 %v7169
    %7293 = vmatpush1.bf16.msra.mxu0 %v7168
    %7294 = vmatprep.subr.bf16.mxu0 %v7173
    %7295 = vmatpush1.bf16.msra.mxu0 %v7172
    %7296 = vmatprep.subr.bf16.mxu0 %v7177
    %7297 = vmatpush1.bf16.msra.mxu0 %v7176
    %7298 = vmatprep.subr.bf16.mxu0 %v7181
    %7299 = vmatpush1.bf16.msra.mxu0 %v7180
    %7300 = vmatprep.subr.bf16.mxu0 %v7185
    %7301 = vmatpush1.bf16.msra.mxu0 %v7184
    %7302 = vmatprep.subr.bf16.mxu0 %v7189
    %7303 = vmatpush1.bf16.msra.mxu0 %v7188
    %7304 = vmatprep.subr.bf16.mxu0 %v7193
    %7305 = vmatpush1.bf16.msra.mxu0 %v7192
    %7306 = vmatprep.subr.bf16.mxu0 %v7197
    %7307 = vmatpush1.bf16.msra.mxu0 %v7196
    %7308 = vmatprep.subr.bf16.mxu0 %v7201
    %7309 = vmatpush1.bf16.msra.mxu0 %v7200
    %7310 = vmatprep.subr.bf16.mxu0 %v7205
    %7311 = vmatpush1.bf16.msra.mxu0 %v7204
    %7312 = vmatprep.subr.bf16.mxu0 %v7209
    %7313 = vmatpush1.bf16.msra.mxu0 %v7208
    %7314 = vmatprep.subr.bf16.mxu0 %v7213
    %7315 = vmatpush1.bf16.msra.mxu0 %v7212
    %7316 = vmatprep.subr.bf16.mxu0 %v7217
    %7317 = vmatpush1.bf16.msra.mxu0 %v7216
    %7318 = vmatprep.subr.bf16.mxu0 %v7221
    %7319 = vmatpush1.bf16.msra.mxu0 %v7220
    %7320 = vmatprep.mubr.bf16.mxu0 %v6140
    %7321 = vmatmul.mubr.bf16.gmra.mrb[0].mxu0 %v6881
    %v7322 = vpop.f32.mrb[0].mxu0
    %v7323 = vadd.f32 %v6951, %v7322
    %v7324 = vpop.f32.mrb[0].mxu0
    %v7325 = vadd.f32 %v6955, %v7324
    %v7326 = vpop.f32.mrb[0].mxu0
    %v7327 = vpop.f32.mrb[0].mxu0
    %7328 = vdwg.mxu0
    %7329 = vmatprep.subr.bf16.mxu0 %v7163
    %7330 = vmatpush1.bf16.msra.mxu0 %v7162
    %7331 = vmatprep.subr.bf16.mxu0 %v7167
    %7332 = vmatpush1.bf16.msra.mxu0 %v7166
    %7333 = vmatprep.subr.bf16.mxu0 %v7171
    %7334 = vmatpush1.bf16.msra.mxu0 %v7170
    %7335 = vmatprep.subr.bf16.mxu0 %v7175
    %7336 = vmatpush1.bf16.msra.mxu0 %v7174
    %7337 = vmatprep.subr.bf16.mxu0 %v7179
    %7338 = vmatpush1.bf16.msra.mxu0 %v7178
    %7339 = vmatprep.subr.bf16.mxu0 %v7183
    %7340 = vmatpush1.bf16.msra.mxu0 %v7182
    %7341 = vmatprep.subr.bf16.mxu0 %v7187
    %7342 = vmatpush1.bf16.msra.mxu0 %v7186
    %7343 = vmatprep.subr.bf16.mxu0 %v7191
    %7344 = vmatpush1.bf16.msra.mxu0 %v7190
    %7345 = vmatprep.subr.bf16.mxu0 %v7195
    %7346 = vmatpush1.bf16.msra.mxu0 %v7194
    %7347 = vmatprep.subr.bf16.mxu0 %v7199
    %7348 = vmatpush1.bf16.msra.mxu0 %v7198
    %7349 = vmatprep.subr.bf16.mxu0 %v7203
    %7350 = vmatpush1.bf16.msra.mxu0 %v7202
    %7351 = vmatprep.subr.bf16.mxu0 %v7207
    %7352 = vmatpush1.bf16.msra.mxu0 %v7206
    %7353 = vmatprep.subr.bf16.mxu0 %v7211
    %7354 = vmatpush1.bf16.msra.mxu0 %v7210
    %7355 = vmatprep.subr.bf16.mxu0 %v7215
    %7356 = vmatpush1.bf16.msra.mxu0 %v7214
    %7357 = vmatprep.subr.bf16.mxu0 %v7219
    %7358 = vmatpush1.bf16.msra.mxu0 %v7218
    %7359 = vmatprep.subr.bf16.mxu0 %v7223
    %7360 = vmatpush1.bf16.msra.mxu0 %v7222
    %7361 = vmatprep.mubr.bf16.mxu0 %v6140
    %7362 = vmatmul.mubr.bf16.gmra.mrb[0].mxu0 %v6881
    %v7363 = vpop.f32.mrb[0].mxu0
    %v7364 = vadd.f32 %v6959, %v7363
    %v7365 = vpop.f32.mrb[0].mxu0
    %v7366 = vadd.f32 %v6963, %v7365
    %v7367 = vpop.f32.mrb[0].mxu0
    %v7368 = vpop.f32.mrb[0].mxu0
    %7369 = vdwg.mxu0
    %v7370 = vxor.u32 %v7323, 2147483648
    %v7371 = vmul.f32 %v7370, 1.442695
    %v7372 = vpow.pop %v7371
    %v7373 = vadd.f32 %v7372, 1.0
    %v7374 = vrcp.pop %v7373
    %v7375 = vmul.f32 1.0, %v7374
    %v7376 = vxor.u32 %v7325, 2147483648
    %v7377 = vmul.f32 %v7376, 1.442695
    %v7378 = vpow.pop %v7377
    %v7379 = vadd.f32 %v7378, 1.0
    %v7380 = vrcp.pop %v7379
    %v7381 = vmul.f32 1.0, %v7380
    %v7382 = vtanh.pop %v7364
    %v7383 = vxor.u32 %v7366, 2147483648
    %v7384 = vmul.f32 %v7383, 1.442695
    %v7385 = vpow.pop %v7384
    %v7386 = vadd.f32 %v7385, 1.0
    %v7387 = vrcp.pop %v7386
    %v7388 = vmul.f32 1.0, %v7387
    %v7389 = vmul.f32 %v7381, %v6137
    %v7390 = vmul.f32 %v7375, %v7382
    %v7391 = vadd.f32 %v7389, %v7390
    %v7392 = vtanh.pop %v7391
    %v7393 = vmul.f32 %v7388, %v7392
    %v7394 = vpack.c.bf16 %v7393, %v7393
    %v7395 = vld [vmem:[%s6] sm:$0xf]
    %v7396 = vld [vmem:[%s6 + $0x4] sm:$0xf]
    %v7397 = vld [vmem:[%s6 + $0x8] sm:$0xf]
    %v7398 = vld [vmem:[%s6 + $0xc] sm:$0xf]
    %v7399 = vld [vmem:[%s6 + $0x10] sm:$0xf]
    %v7400 = vld [vmem:[%s6 + $0x14] sm:$0xf]
    %v7401 = vld [vmem:[%s6 + $0x18] sm:$0xf]
    %v7402 = vld [vmem:[%s6 + $0x1c] sm:$0xf]
    %v7403 = vld [vmem:[%s6 + $0x20] sm:$0xf]
    %v7404 = vld [vmem:[%s6 + $0x24] sm:$0xf]
    %v7405 = vld [vmem:[%s6 + $0x28] sm:$0xf]
    %v7406 = vld [vmem:[%s6 + $0x2c] sm:$0xf]
    %v7407 = vld [vmem:[%s6 + $0x30] sm:$0xf]
    %v7408 = vld [vmem:[%s6 + $0x34] sm:$0xf]
    %v7409 = vld [vmem:[%s6 + $0x38] sm:$0xf]
    %v7410 = vld [vmem:[%s6 + $0x3c] sm:$0xf]
    %v7411 = vld [vmem:[%s7] sm:$0x1]
    %v7413 = vlaneseq
    %v7414 = vshrl.u32 %v7413, 7
    %v7415 = vsub.s32 0, %v7414
    %v7416 = vrot.slane %v7411, %v7415
    %v7434 = vunpack.c.l.b16 %v7395
    %v7435 = vunpack.c.l.b16 %v7396
    %v7436 = vunpack.c.l.b16 %v7397
    %v7437 = vunpack.c.l.b16 %v7398
    %v7438 = vunpack.c.l.b16 %v7399
    %v7439 = vunpack.c.l.b16 %v7400
    %v7440 = vunpack.c.l.b16 %v7401
    %v7441 = vunpack.c.l.b16 %v7402
    %v7442 = vunpack.c.l.b16 %v7403
    %v7443 = vunpack.c.l.b16 %v7404
    %v7444 = vunpack.c.l.b16 %v7405
    %v7445 = vunpack.c.l.b16 %v7406
    %v7446 = vunpack.c.l.b16 %v7407
    %v7447 = vunpack.c.l.b16 %v7408
    %v7448 = vunpack.c.l.b16 %v7409
    %v7449 = vunpack.c.l.b16 %v7410
    %v7450 = vpack.c.b16 %v7435, %v7434
    %v7451 = vpack.c.b16 %v7437, %v7436
    %v7452 = vpack.c.b16 %v7439, %v7438
    %v7453 = vpack.c.b16 %v7441, %v7440
    %v7454 = vpack.c.b16 %v7443, %v7442
    %v7455 = vpack.c.b16 %v7445, %v7444
    %v7456 = vpack.c.b16 %v7447, %v7446
    %v7457 = vpack.c.b16 %v7449, %v7448
    %7466 = vmatprep.subr.bf16.mxu0 0
    %7467 = vmatpush1.bf16.msra.mxu0 %v7450
    %7468 = vmatprep.subr.bf16.mxu0 0
    %7469 = vmatpush1.bf16.msra.mxu0 %v7451
    %7470 = vmatprep.subr.bf16.mxu0 0
    %7471 = vmatpush1.bf16.msra.mxu0 %v7452
    %7472 = vmatprep.subr.bf16.mxu0 0
    %7473 = vmatpush1.bf16.msra.mxu0 %v7453
    %7474 = vmatprep.subr.bf16.mxu0 0
    %7475 = vmatpush1.bf16.msra.mxu0 %v7454
    %7476 = vmatprep.subr.bf16.mxu0 0
    %7477 = vmatpush1.bf16.msra.mxu0 %v7455
    %7478 = vmatprep.subr.bf16.mxu0 0
    %7479 = vmatpush1.bf16.msra.mxu0 %v7456
    %7480 = vmatprep.subr.bf16.mxu0 0
    %7481 = vmatpush1.bf16.msra.mxu0 %v7457
    %7482 = vmatprep.subr.bf16.mxu0 0
    %7483 = vmatpush1.bf16.msra.mxu0 0
    %7484 = vmatprep.subr.bf16.mxu0 0
    %7485 = vmatpush1.bf16.msra.mxu0 0
    %7486 = vmatprep.subr.bf16.mxu0 0
    %7487 = vmatpush1.bf16.msra.mxu0 0
    %7488 = vmatprep.subr.bf16.mxu0 0
    %7489 = vmatpush1.bf16.msra.mxu0 0
    %7490 = vmatprep.subr.bf16.mxu0 0
    %7491 = vmatpush1.bf16.msra.mxu0 0
    %7492 = vmatprep.subr.bf16.mxu0 0
    %7493 = vmatpush1.bf16.msra.mxu0 0
    %7494 = vmatprep.subr.bf16.mxu0 0
    %7495 = vmatpush1.bf16.msra.mxu0 0
    %7496 = vmatprep.subr.bf16.mxu0 0
    %7497 = vmatpush1.bf16.msra.mxu0 0
    %7498 = vmatprep.mubr.bf16.mxu0 0
    %7499 = vmatmul.mubr.bf16.gmra.mrb[0].mxu0 %v7394
    %v7500 = vpop.f32.mrb[0].mxu0
    %v7501 = vadd.f32 %v7416, %v7500
    %v7502 = vpop.f32.mrb[0].mxu0
    %v7503 = vpop.f32.mrb[0].mxu0
    %v7504 = vpop.f32.mrb[0].mxu0
    %7505 = vdwg.mxu0
    %s7506 = scalar_lea.vmem %s9, 24
    %7507 = vst [vmem:[%s7506] sm:$0xff] %v7501
    %7508 = vmax.xlane.f32.xlu0 %v7501
    %v7509 = vpop.xlane.xlu0 %7508
    %vm7510 = vcmp.eq.f32.partialorder %v7501, %v7509
    %v7511 = vsel %vm7510, %v3745, 128.0
    %7512 = vmin.xlane.f32.xlu0 %v7511
    %v7513 = vpop.xlane.xlu0 %7512
    %vm7514 = vcmp.eq.f32.partialorder %v3745, %v7513
    %v7515 = vsel %vm7514, 1, 0
    %v7516 = vcvt.s32.f32 %v7515
    %v7517 = vpack.c.bf16 %v7516, %v7516
    %v7518 = vld [vmem:[%s8] sm:$0xf]
    %v7519 = vld [vmem:[%s8 + $0x4] sm:$0xf]
    %v7520 = vld [vmem:[%s8 + $0x8] sm:$0xf]
    %v7521 = vld [vmem:[%s8 + $0xc] sm:$0xf]
    %v7522 = vld [vmem:[%s8 + $0x10] sm:$0xf]
    %v7523 = vld [vmem:[%s8 + $0x14] sm:$0xf]
    %v7524 = vld [vmem:[%s8 + $0x18] sm:$0xf]
    %v7525 = vld [vmem:[%s8 + $0x1c] sm:$0xf]
    %v7526 = vld [vmem:[%s8 + $0x20] sm:$0xf]
    %v7527 = vld [vmem:[%s8 + $0x24] sm:$0xf]
    %v7528 = vld [vmem:[%s8 + $0x28] sm:$0xf]
    %v7529 = vld [vmem:[%s8 + $0x2c] sm:$0xf]
    %v7530 = vld [vmem:[%s8 + $0x30] sm:$0xf]
    %v7531 = vld [vmem:[%s8 + $0x34] sm:$0xf]
    %v7532 = vld [vmem:[%s8 + $0x38] sm:$0xf]
    %v7533 = vld [vmem:[%s8 + $0x3c] sm:$0xf]
    %v7550 = vunpack.c.l.b16 %v7518
    %v7551 = vunpack.c.l.b16 %v7519
    %v7552 = vunpack.c.l.b16 %v7520
    %v7553 = vunpack.c.l.b16 %v7521
    %v7554 = vunpack.c.l.b16 %v7522
    %v7555 = vunpack.c.l.b16 %v7523
    %v7556 = vunpack.c.l.b16 %v7524
    %v7557 = vunpack.c.l.b16 %v7525
    %v7558 = vunpack.c.l.b16 %v7526
    %v7559 = vunpack.c.l.b16 %v7527
    %v7560 = vunpack.c.l.b16 %v7528
    %v7561 = vunpack.c.l.b16 %v7529
    %v7562 = vunpack.c.l.b16 %v7530
    %v7563 = vunpack.c.l.b16 %v7531
    %v7564 = vunpack.c.l.b16 %v7532
    %v7565 = vunpack.c.l.b16 %v7533
    %v7566 = vpack.c.b16 %v7551, %v7550
    %v7567 = vpack.c.b16 %v7553, %v7552
    %v7568 = vpack.c.b16 %v7555, %v7554
    %v7569 = vpack.c.b16 %v7557, %v7556
    %v7570 = vpack.c.b16 %v7559, %v7558
    %v7571 = vpack.c.b16 %v7561, %v7560
    %v7572 = vpack.c.b16 %v7563, %v7562
    %v7573 = vpack.c.b16 %v7565, %v7564
    %7582 = vmatprep.subr.bf16.mxu0 0
    %7583 = vmatpush1.bf16.msra.mxu0 %v7566
    %7584 = vmatprep.subr.bf16.mxu0 0
    %7585 = vmatpush1.bf16.msra.mxu0 %v7567
    %7586 = vmatprep.subr.bf16.mxu0 0
    %7587 = vmatpush1.bf16.msra.mxu0 %v7568
    %7588 = vmatprep.subr.bf16.mxu0 0
    %7589 = vmatpush1.bf16.msra.mxu0 %v7569
    %7590 = vmatprep.subr.bf16.mxu0 0
    %7591 = vmatpush1.bf16.msra.mxu0 %v7570
    %7592 = vmatprep.subr.bf16.mxu0 0
    %7593 = vmatpush1.bf16.msra.mxu0 %v7571
    %7594 = vmatprep.subr.bf16.mxu0 0
    %7595 = vmatpush1.bf16.msra.mxu0 %v7572
    %7596 = vmatprep.subr.bf16.mxu0 0
    %7597 = vmatpush1.bf16.msra.mxu0 %v7573
    %7598 = vmatprep.subr.bf16.mxu0 0
    %7599 = vmatpush1.bf16.msra.mxu0 0
    %7600 = vmatprep.subr.bf16.mxu0 0
    %7601 = vmatpush1.bf16.msra.mxu0 0
    %7602 = vmatprep.subr.bf16.mxu0 0
    %7603 = vmatpush1.bf16.msra.mxu0 0
    %7604 = vmatprep.subr.bf16.mxu0 0
    %7605 = vmatpush1.bf16.msra.mxu0 0
    %7606 = vmatprep.subr.bf16.mxu0 0
    %7607 = vmatpush1.bf16.msra.mxu0 0
    %7608 = vmatprep.subr.bf16.mxu0 0
    %7609 = vmatpush1.bf16.msra.mxu0 0
    %7610 = vmatprep.subr.bf16.mxu0 0
    %7611 = vmatpush1.bf16.msra.mxu0 0
    %7612 = vmatprep.subr.bf16.mxu0 0
    %7613 = vmatpush1.bf16.msra.mxu0 0
    %7614 = vmatprep.mubr.bf16.mxu0 0
    %7615 = vmatmul.mubr.bf16.gmra.mrb[0].mxu0 %v7517
    %v7616 = vpop.f32.mrb[0].mxu0
    %v7617 = vadd.f32 0.0, %v7616
    %v7618 = vpop.f32.mrb[0].mxu0
    %v7619 = vpop.f32.mrb[0].mxu0
    %v7620 = vpop.f32.mrb[0].mxu0
    %7621 = vdwg.mxu0
    %v7622 = vpack.c.bf16 %v7617, %v7617
    %v7623 = vld [vmem:[#allocation4] sm:$0xff]
    %v7624 = vld [vmem:[#allocation4 + $0x8] sm:$0xff]
    %v7625 = vld [vmem:[#allocation4 + $0x10] sm:$0xff]
    %v7626 = vld [vmem:[#allocation4 + $0x18] sm:$0xff]
    %v7627 = vld [vmem:[#allocation4 + $0x20] sm:$0xff]
    %v7628 = vld [vmem:[#allocation4 + $0x28] sm:$0xff]
    %v7629 = vld [vmem:[#allocation4 + $0x30] sm:$0xff]
    %v7630 = vld [vmem:[#allocation4 + $0x38] sm:$0xff]
    %v7631 = vld [vmem:[#allocation4 + $0x40] sm:$0xff]
    %v7632 = vld [vmem:[#allocation4 + $0x48] sm:$0xff]
    %v7633 = vld [vmem:[#allocation4 + $0x50] sm:$0xff]
    %v7634 = vld [vmem:[#allocation4 + $0x58] sm:$0xff]
    %v7635 = vld [vmem:[#allocation4 + $0x60] sm:$0xff]
    %v7636 = vld [vmem:[#allocation4 + $0x68] sm:$0xff]
    %v7637 = vld [vmem:[#allocation4 + $0x70] sm:$0xff]
    %v7638 = vld [vmem:[#allocation4 + $0x78] sm:$0xff]
    %v7639 = vld [vmem:[#allocation4 + $0x80] sm:$0xff]
    %v7640 = vld [vmem:[#allocation4 + $0x88] sm:$0xff]
    %v7641 = vld [vmem:[#allocation4 + $0x90] sm:$0xff]
    %v7642 = vld [vmem:[#allocation4 + $0x98] sm:$0xff]
    %v7643 = vld [vmem:[#allocation4 + $0xa0] sm:$0xff]
    %v7644 = vld [vmem:[#allocation4 + $0xa8] sm:$0xff]
    %v7645 = vld [vmem:[#allocation4 + $0xb0] sm:$0xff]
    %v7646 = vld [vmem:[#allocation4 + $0xb8] sm:$0xff]
    %v7647 = vld [vmem:[#allocation4 + $0xc0] sm:$0xff]
    %v7648 = vld [vmem:[#allocation4 + $0xc8] sm:$0xff]
    %v7649 = vld [vmem:[#allocation4 + $0xd0] sm:$0xff]
    %v7650 = vld [vmem:[#allocation4 + $0xd8] sm:$0xff]
    %v7651 = vld [vmem:[#allocation4 + $0xe0] sm:$0xff]
    %v7652 = vld [vmem:[#allocation4 + $0xe8] sm:$0xff]
    %v7653 = vld [vmem:[#allocation4 + $0xf0] sm:$0xff]
    %v7654 = vld [vmem:[#allocation4 + $0xf8] sm:$0xff]
    %v7655 = vld [vmem:[#allocation4 + $0x100] sm:$0xff]
    %v7656 = vld [vmem:[#allocation4 + $0x108] sm:$0xff]
    %v7657 = vld [vmem:[#allocation4 + $0x110] sm:$0xff]
    %v7658 = vld [vmem:[#allocation4 + $0x118] sm:$0xff]
    %v7659 = vld [vmem:[#allocation4 + $0x120] sm:$0xff]
    %v7660 = vld [vmem:[#allocation4 + $0x128] sm:$0xff]
    %v7661 = vld [vmem:[#allocation4 + $0x130] sm:$0xff]
    %v7662 = vld [vmem:[#allocation4 + $0x138] sm:$0xff]
    %v7663 = vld [vmem:[#allocation4 + $0x140] sm:$0xff]
    %v7664 = vld [vmem:[#allocation4 + $0x148] sm:$0xff]
    %v7665 = vld [vmem:[#allocation4 + $0x150] sm:$0xff]
    %v7666 = vld [vmem:[#allocation4 + $0x158] sm:$0xff]
    %v7667 = vld [vmem:[#allocation4 + $0x160] sm:$0xff]
    %v7668 = vld [vmem:[#allocation4 + $0x168] sm:$0xff]
    %v7669 = vld [vmem:[#allocation4 + $0x170] sm:$0xff]
    %v7670 = vld [vmem:[#allocation4 + $0x178] sm:$0xff]
    %v7671 = vld [vmem:[#allocation4 + $0x180] sm:$0xff]
    %v7672 = vld [vmem:[#allocation4 + $0x188] sm:$0xff]
    %v7673 = vld [vmem:[#allocation4 + $0x190] sm:$0xff]
    %v7674 = vld [vmem:[#allocation4 + $0x198] sm:$0xff]
    %v7675 = vld [vmem:[#allocation4 + $0x1a0] sm:$0xff]
    %v7676 = vld [vmem:[#allocation4 + $0x1a8] sm:$0xff]
    %v7677 = vld [vmem:[#allocation4 + $0x1b0] sm:$0xff]
    %v7678 = vld [vmem:[#allocation4 + $0x1b8] sm:$0xff]
    %v7679 = vld [vmem:[#allocation4 + $0x1c0] sm:$0xff]
    %v7680 = vld [vmem:[#allocation4 + $0x1c8] sm:$0xff]
    %v7681 = vld [vmem:[#allocation4 + $0x1d0] sm:$0xff]
    %v7682 = vld [vmem:[#allocation4 + $0x1d8] sm:$0xff]
    %v7683 = vld [vmem:[#allocation4 + $0x1e0] sm:$0xff]
    %v7684 = vld [vmem:[#allocation4 + $0x1e8] sm:$0xff]
    %v7685 = vld [vmem:[#allocation4 + $0x1f0] sm:$0xff]
    %v7686 = vld [vmem:[#allocation4 + $0x1f8] sm:$0xff]
    %v7687 = vld [vmem:[%s5] sm:$0xf]
    %v7689 = vlaneseq
    %v7690 = vshrl.u32 %v7689, 7
    %v7691 = vsub.s32 0, %v7690
    %v7692 = vrot.slane %v7687, %v7691
    %v7693 = vlaneseq
    %v7694 = vshrl.u32 %v7693, 7
    %v7695 = vsub.s32 1, %v7694
    %v7696 = vrot.slane %v7687, %v7695
    %v7697 = vlaneseq
    %v7698 = vshrl.u32 %v7697, 7
    %v7699 = vsub.s32 2, %v7698
    %v7700 = vrot.slane %v7687, %v7699
    %v7701 = vlaneseq
    %v7702 = vshrl.u32 %v7701, 7
    %v7703 = vsub.s32 3, %v7702
    %v7704 = vrot.slane %v7687, %v7703
    %v7773 = vunpack.c.l.b16 %v7623
    %v7774 = vunpack.c.h.b16 %v7623
    %v7775 = vunpack.c.l.b16 %v7624
    %v7776 = vunpack.c.h.b16 %v7624
    %v7777 = vunpack.c.l.b16 %v7625
    %v7778 = vunpack.c.h.b16 %v7625
    %v7779 = vunpack.c.l.b16 %v7626
    %v7780 = vunpack.c.h.b16 %v7626
    %v7781 = vunpack.c.l.b16 %v7627
    %v7782 = vunpack.c.h.b16 %v7627
    %v7783 = vunpack.c.l.b16 %v7628
    %v7784 = vunpack.c.h.b16 %v7628
    %v7785 = vunpack.c.l.b16 %v7629
    %v7786 = vunpack.c.h.b16 %v7629
    %v7787 = vunpack.c.l.b16 %v7630
    %v7788 = vunpack.c.h.b16 %v7630
    %v7789 = vunpack.c.l.b16 %v7631
    %v7790 = vunpack.c.h.b16 %v7631
    %v7791 = vunpack.c.l.b16 %v7632
    %v7792 = vunpack.c.h.b16 %v7632
    %v7793 = vunpack.c.l.b16 %v7633
    %v7794 = vunpack.c.h.b16 %v7633
    %v7795 = vunpack.c.l.b16 %v7634
    %v7796 = vunpack.c.h.b16 %v7634
    %v7797 = vunpack.c.l.b16 %v7635
    %v7798 = vunpack.c.h.b16 %v7635
    %v7799 = vunpack.c.l.b16 %v7636
    %v7800 = vunpack.c.h.b16 %v7636
    %v7801 = vunpack.c.l.b16 %v7637
    %v7802 = vunpack.c.h.b16 %v7637
    %v7803 = vunpack.c.l.b16 %v7638
    %v7804 = vunpack.c.h.b16 %v7638
    %v7805 = vunpack.c.l.b16 %v7639
    %v7806 = vunpack.c.h.b16 %v7639
    %v7807 = vunpack.c.l.b16 %v7640
    %v7808 = vunpack.c.h.b16 %v7640
    %v7809 = vunpack.c.l.b16 %v7641
    %v7810 = vunpack.c.h.b16 %v7641
    %v7811 = vunpack.c.l.b16 %v7642
    %v7812 = vunpack.c.h.b16 %v7642
    %v7813 = vunpack.c.l.b16 %v7643
    %v7814 = vunpack.c.h.b16 %v7643
    %v7815 = vunpack.c.l.b16 %v7644
    %v7816 = vunpack.c.h.b16 %v7644
    %v7817 = vunpack.c.l.b16 %v7645
    %v7818 = vunpack.c.h.b16 %v7645
    %v7819 = vunpack.c.l.b16 %v7646
    %v7820 = vunpack.c.h.b16 %v7646
    %v7821 = vunpack.c.l.b16 %v7647
    %v7822 = vunpack.c.h.b16 %v7647
    %v7823 = vunpack.c.l.b16 %v7648
    %v7824 = vunpack.c.h.b16 %v7648
    %v7825 = vunpack.c.l.b16 %v7649
    %v7826 = vunpack.c.h.b16 %v7649
    %v7827 = vunpack.c.l.b16 %v7650
    %v7828 = vunpack.c.h.b16 %v7650
    %v7829 = vunpack.c.l.b16 %v7651
    %v7830 = vunpack.c.h.b16 %v7651
    %v7831 = vunpack.c.l.b16 %v7652
    %v7832 = vunpack.c.h.b16 %v7652
    %v7833 = vunpack.c.l.b16 %v7653
    %v7834 = vunpack.c.h.b16 %v7653
    %v7835 = vunpack.c.l.b16 %v7654
    %v7836 = vunpack.c.h.b16 %v7654
    %v7837 = vunpack.c.l.b16 %v7655
    %v7838 = vunpack.c.h.b16 %v7655
    %v7839 = vunpack.c.l.b16 %v7656
    %v7840 = vunpack.c.h.b16 %v7656
    %v7841 = vunpack.c.l.b16 %v7657
    %v7842 = vunpack.c.h.b16 %v7657
    %v7843 = vunpack.c.l.b16 %v7658
    %v7844 = vunpack.c.h.b16 %v7658
    %v7845 = vunpack.c.l.b16 %v7659
    %v7846 = vunpack.c.h.b16 %v7659
    %v7847 = vunpack.c.l.b16 %v7660
    %v7848 = vunpack.c.h.b16 %v7660
    %v7849 = vunpack.c.l.b16 %v7661
    %v7850 = vunpack.c.h.b16 %v7661
    %v7851 = vunpack.c.l.b16 %v7662
    %v7852 = vunpack.c.h.b16 %v7662
    %v7853 = vunpack.c.l.b16 %v7663
    %v7854 = vunpack.c.h.b16 %v7663
    %v7855 = vunpack.c.l.b16 %v7664
    %v7856 = vunpack.c.h.b16 %v7664
    %v7857 = vunpack.c.l.b16 %v7665
    %v7858 = vunpack.c.h.b16 %v7665
    %v7859 = vunpack.c.l.b16 %v7666
    %v7860 = vunpack.c.h.b16 %v7666
    %v7861 = vunpack.c.l.b16 %v7667
    %v7862 = vunpack.c.h.b16 %v7667
    %v7863 = vunpack.c.l.b16 %v7668
    %v7864 = vunpack.c.h.b16 %v7668
    %v7865 = vunpack.c.l.b16 %v7669
    %v7866 = vunpack.c.h.b16 %v7669
    %v7867 = vunpack.c.l.b16 %v7670
    %v7868 = vunpack.c.h.b16 %v7670
    %v7869 = vunpack.c.l.b16 %v7671
    %v7870 = vunpack.c.h.b16 %v7671
    %v7871 = vunpack.c.l.b16 %v7672
    %v7872 = vunpack.c.h.b16 %v7672
    %v7873 = vunpack.c.l.b16 %v7673
    %v7874 = vunpack.c.h.b16 %v7673
    %v7875 = vunpack.c.l.b16 %v7674
    %v7876 = vunpack.c.h.b16 %v7674
    %v7877 = vunpack.c.l.b16 %v7675
    %v7878 = vunpack.c.h.b16 %v7675
    %v7879 = vunpack.c.l.b16 %v7676
    %v7880 = vunpack.c.h.b16 %v7676
    %v7881 = vunpack.c.l.b16 %v7677
    %v7882 = vunpack.c.h.b16 %v7677
    %v7883 = vunpack.c.l.b16 %v7678
    %v7884 = vunpack.c.h.b16 %v7678
    %v7885 = vunpack.c.l.b16 %v7679
    %v7886 = vunpack.c.h.b16 %v7679
    %v7887 = vunpack.c.l.b16 %v7680
    %v7888 = vunpack.c.h.b16 %v7680
    %v7889 = vunpack.c.l.b16 %v7681
    %v7890 = vunpack.c.h.b16 %v7681
    %v7891 = vunpack.c.l.b16 %v7682
    %v7892 = vunpack.c.h.b16 %v7682
    %v7893 = vunpack.c.l.b16 %v7683
    %v7894 = vunpack.c.h.b16 %v7683
    %v7895 = vunpack.c.l.b16 %v7684
    %v7896 = vunpack.c.h.b16 %v7684
    %v7897 = vunpack.c.l.b16 %v7685
    %v7898 = vunpack.c.h.b16 %v7685
    %v7899 = vunpack.c.l.b16 %v7686
    %v7900 = vunpack.c.h.b16 %v7686
    %v7901 = vpack.c.b16 %v7777, %v7773
    %v7902 = vpack.c.b16 %v7778, %v7774
    %v7903 = vpack.c.b16 %v7779, %v7775
    %v7904 = vpack.c.b16 %v7780, %v7776
    %v7905 = vpack.c.b16 %v7785, %v7781
    %v7906 = vpack.c.b16 %v7786, %v7782
    %v7907 = vpack.c.b16 %v7787, %v7783
    %v7908 = vpack.c.b16 %v7788, %v7784
    %v7909 = vpack.c.b16 %v7793, %v7789
    %v7910 = vpack.c.b16 %v7794, %v7790
    %v7911 = vpack.c.b16 %v7795, %v7791
    %v7912 = vpack.c.b16 %v7796, %v7792
    %v7913 = vpack.c.b16 %v7801, %v7797
    %v7914 = vpack.c.b16 %v7802, %v7798
    %v7915 = vpack.c.b16 %v7803, %v7799
    %v7916 = vpack.c.b16 %v7804, %v7800
    %v7917 = vpack.c.b16 %v7809, %v7805
    %v7918 = vpack.c.b16 %v7810, %v7806
    %v7919 = vpack.c.b16 %v7811, %v7807
    %v7920 = vpack.c.b16 %v7812, %v7808
    %v7921 = vpack.c.b16 %v7817, %v7813
    %v7922 = vpack.c.b16 %v7818, %v7814
    %v7923 = vpack.c.b16 %v7819, %v7815
    %v7924 = vpack.c.b16 %v7820, %v7816
    %v7925 = vpack.c.b16 %v7825, %v7821
    %v7926 = vpack.c.b16 %v7826, %v7822
    %v7927 = vpack.c.b16 %v7827, %v7823
    %v7928 = vpack.c.b16 %v7828, %v7824
    %v7929 = vpack.c.b16 %v7833, %v7829
    %v7930 = vpack.c.b16 %v7834, %v7830
    %v7931 = vpack.c.b16 %v7835, %v7831
    %v7932 = vpack.c.b16 %v7836, %v7832
    %v7933 = vpack.c.b16 %v7841, %v7837
    %v7934 = vpack.c.b16 %v7842, %v7838
    %v7935 = vpack.c.b16 %v7843, %v7839
    %v7936 = vpack.c.b16 %v7844, %v7840
    %v7937 = vpack.c.b16 %v7849, %v7845
    %v7938 = vpack.c.b16 %v7850, %v7846
    %v7939 = vpack.c.b16 %v7851, %v7847
    %v7940 = vpack.c.b16 %v7852, %v7848
    %v7941 = vpack.c.b16 %v7857, %v7853
    %v7942 = vpack.c.b16 %v7858, %v7854
    %v7943 = vpack.c.b16 %v7859, %v7855
    %v7944 = vpack.c.b16 %v7860, %v7856
    %v7945 = vpack.c.b16 %v7865, %v7861
    %v7946 = vpack.c.b16 %v7866, %v7862
    %v7947 = vpack.c.b16 %v7867, %v7863
    %v7948 = vpack.c.b16 %v7868, %v7864
    %v7949 = vpack.c.b16 %v7873, %v7869
    %v7950 = vpack.c.b16 %v7874, %v7870
    %v7951 = vpack.c.b16 %v7875, %v7871
    %v7952 = vpack.c.b16 %v7876, %v7872
    %v7953 = vpack.c.b16 %v7881, %v7877
    %v7954 = vpack.c.b16 %v7882, %v7878
    %v7955 = vpack.c.b16 %v7883, %v7879
    %v7956 = vpack.c.b16 %v7884, %v7880
    %v7957 = vpack.c.b16 %v7889, %v7885
    %v7958 = vpack.c.b16 %v7890, %v7886
    %v7959 = vpack.c.b16 %v7891, %v7887
    %v7960 = vpack.c.b16 %v7892, %v7888
    %v7961 = vpack.c.b16 %v7897, %v7893
    %v7962 = vpack.c.b16 %v7898, %v7894
    %v7963 = vpack.c.b16 %v7899, %v7895
    %v7964 = vpack.c.b16 %v7900, %v7896
    %8029 = vmatprep.subr.bf16.mxu0 %v7902
    %8030 = vmatpush1.bf16.msra.mxu0 %v7901
    %8031 = vmatprep.subr.bf16.mxu0 %v7906
    %8032 = vmatpush1.bf16.msra.mxu0 %v7905
    %8033 = vmatprep.subr.bf16.mxu0 %v7910
    %8034 = vmatpush1.bf16.msra.mxu0 %v7909
    %8035 = vmatprep.subr.bf16.mxu0 %v7914
    %8036 = vmatpush1.bf16.msra.mxu0 %v7913
    %8037 = vmatprep.subr.bf16.mxu0 %v7918
    %8038 = vmatpush1.bf16.msra.mxu0 %v7917
    %8039 = vmatprep.subr.bf16.mxu0 %v7922
    %8040 = vmatpush1.bf16.msra.mxu0 %v7921
    %8041 = vmatprep.subr.bf16.mxu0 %v7926
    %8042 = vmatpush1.bf16.msra.mxu0 %v7925
    %8043 = vmatprep.subr.bf16.mxu0 %v7930
    %8044 = vmatpush1.bf16.msra.mxu0 %v7929
    %8045 = vmatprep.subr.bf16.mxu0 %v7934
    %8046 = vmatpush1.bf16.msra.mxu0 %v7933
    %8047 = vmatprep.subr.bf16.mxu0 %v7938
    %8048 = vmatpush1.bf16.msra.mxu0 %v7937
    %8049 = vmatprep.subr.bf16.mxu0 %v7942
    %8050 = vmatpush1.bf16.msra.mxu0 %v7941
    %8051 = vmatprep.subr.bf16.mxu0 %v7946
    %8052 = vmatpush1.bf16.msra.mxu0 %v7945
    %8053 = vmatprep.subr.bf16.mxu0 %v7950
    %8054 = vmatpush1.bf16.msra.mxu0 %v7949
    %8055 = vmatprep.subr.bf16.mxu0 %v7954
    %8056 = vmatpush1.bf16.msra.mxu0 %v7953
    %8057 = vmatprep.subr.bf16.mxu0 %v7958
    %8058 = vmatpush1.bf16.msra.mxu0 %v7957
    %8059 = vmatprep.subr.bf16.mxu0 %v7962
    %8060 = vmatpush1.bf16.msra.mxu0 %v7961
    %8061 = vmatprep.mubr.bf16.mxu0 %v6881
    %8062 = vmatmul.mubr.bf16.gmra.mrb[0].mxu0 %v7622
    %v8063 = vpop.f32.mrb[0].mxu0
    %v8064 = vadd.f32 %v7692, %v8063
    %v8065 = vpop.f32.mrb[0].mxu0
    %v8066 = vadd.f32 %v7696, %v8065
    %v8067 = vpop.f32.mrb[0].mxu0
    %v8068 = vpop.f32.mrb[0].mxu0
    %8069 = vdwg.mxu0
    %8070 = vmatprep.subr.bf16.mxu0 %v7904
    %8071 = vmatpush1.bf16.msra.mxu0 %v7903
    %8072 = vmatprep.subr.bf16.mxu0 %v7908
    %8073 = vmatpush1.bf16.msra.mxu0 %v7907
    %8074 = vmatprep.subr.bf16.mxu0 %v7912
    %8075 = vmatpush1.bf16.msra.mxu0 %v7911
    %8076 = vmatprep.subr.bf16.mxu0 %v7916
    %8077 = vmatpush1.bf16.msra.mxu0 %v7915
    %8078 = vmatprep.subr.bf16.mxu0 %v7920
    %8079 = vmatpush1.bf16.msra.mxu0 %v7919
    %8080 = vmatprep.subr.bf16.mxu0 %v7924
    %8081 = vmatpush1.bf16.msra.mxu0 %v7923
    %8082 = vmatprep.subr.bf16.mxu0 %v7928
    %8083 = vmatpush1.bf16.msra.mxu0 %v7927
    %8084 = vmatprep.subr.bf16.mxu0 %v7932
    %8085 = vmatpush1.bf16.msra.mxu0 %v7931
    %8086 = vmatprep.subr.bf16.mxu0 %v7936
    %8087 = vmatpush1.bf16.msra.mxu0 %v7935
    %8088 = vmatprep.subr.bf16.mxu0 %v7940
    %8089 = vmatpush1.bf16.msra.mxu0 %v7939
    %8090 = vmatprep.subr.bf16.mxu0 %v7944
    %8091 = vmatpush1.bf16.msra.mxu0 %v7943
    %8092 = vmatprep.subr.bf16.mxu0 %v7948
    %8093 = vmatpush1.bf16.msra.mxu0 %v7947
    %8094 = vmatprep.subr.bf16.mxu0 %v7952
    %8095 = vmatpush1.bf16.msra.mxu0 %v7951
    %8096 = vmatprep.subr.bf16.mxu0 %v7956
    %8097 = vmatpush1.bf16.msra.mxu0 %v7955
    %8098 = vmatprep.subr.bf16.mxu0 %v7960
    %8099 = vmatpush1.bf16.msra.mxu0 %v7959
    %8100 = vmatprep.subr.bf16.mxu0 %v7964
    %8101 = vmatpush1.bf16.msra.mxu0 %v7963
    %8102 = vmatprep.mubr.bf16.mxu0 %v6881
    %8103 = vmatmul.mubr.bf16.gmra.mrb[0].mxu0 %v7622
    %v8104 = vpop.f32.mrb[0].mxu0
    %v8105 = vadd.f32 %v7700, %v8104
    %v8106 = vpop.f32.mrb[0].mxu0
    %v8107 = vadd.f32 %v7704, %v8106
    %v8108 = vpop.f32.mrb[0].mxu0
    %v8109 = vpop.f32.mrb[0].mxu0
    %8110 = vdwg.mxu0
    %v8111 = vxor.u32 %v8064, 2147483648
    %v8112 = vmul.f32 %v8111, 1.442695
    %v8113 = vpow.pop %v8112
    %v8114 = vadd.f32 %v8113, 1.0
    %v8115 = vrcp.pop %v8114
    %v8116 = vmul.f32 1.0, %v8115
    %v8117 = vxor.u32 %v8066, 2147483648
    %v8118 = vmul.f32 %v8117, 1.442695
    %v8119 = vpow.pop %v8118
    %v8120 = vadd.f32 %v8119, 1.0
    %v8121 = vrcp.pop %v8120
    %v8122 = vmul.f32 1.0, %v8121
    %v8123 = vtanh.pop %v8105
    %v8124 = vxor.u32 %v8107, 2147483648
    %v8125 = vmul.f32 %v8124, 1.442695
    %v8126 = vpow.pop %v8125
    %v8127 = vadd.f32 %v8126, 1.0
    %v8128 = vrcp.pop %v8127
    %v8129 = vmul.f32 1.0, %v8128
    %v8130 = vmul.f32 %v8122, %v6878
    %v8131 = vmul.f32 %v8116, %v8123
    %v8132 = vadd.f32 %v8130, %v8131
    %v8133 = vtanh.pop %v8132
    %v8134 = vmul.f32 %v8129, %v8133
    %v8135 = vpack.c.bf16 %v8134, %v8134
    %v8136 = vld [vmem:[%s3116] sm:$0xff]
    %v8137 = vld [vmem:[%s3116 + $0x8] sm:$0xff]
    %v8138 = vld [vmem:[%s3116 + $0x10] sm:$0xff]
    %v8139 = vld [vmem:[%s3116 + $0x18] sm:$0xff]
    %v8140 = vld [vmem:[%s3116 + $0x20] sm:$0xff]
    %v8141 = vld [vmem:[%s3116 + $0x28] sm:$0xff]
    %v8142 = vld [vmem:[%s3116 + $0x30] sm:$0xff]
    %v8143 = vld [vmem:[%s3116 + $0x38] sm:$0xff]
    %v8144 = vld [vmem:[%s3116 + $0x40] sm:$0xff]
    %v8145 = vld [vmem:[%s3116 + $0x48] sm:$0xff]
    %v8146 = vld [vmem:[%s3116 + $0x50] sm:$0xff]
    %v8147 = vld [vmem:[%s3116 + $0x58] sm:$0xff]
    %v8148 = vld [vmem:[%s3116 + $0x60] sm:$0xff]
    %v8149 = vld [vmem:[%s3116 + $0x68] sm:$0xff]
    %v8150 = vld [vmem:[%s3116 + $0x70] sm:$0xff]
    %v8151 = vld [vmem:[%s3116 + $0x78] sm:$0xff]
    %v8152 = vld [vmem:[%s3116 + $0x80] sm:$0xff]
    %v8153 = vld [vmem:[%s3116 + $0x88] sm:$0xff]
    %v8154 = vld [vmem:[%s3116 + $0x90] sm:$0xff]
    %v8155 = vld [vmem:[%s3116 + $0x98] sm:$0xff]
    %v8156 = vld [vmem:[%s3116 + $0xa0] sm:$0xff]
    %v8157 = vld [vmem:[%s3116 + $0xa8] sm:$0xff]
    %v8158 = vld [vmem:[%s3116 + $0xb0] sm:$0xff]
    %v8159 = vld [vmem:[%s3116 + $0xb8] sm:$0xff]
    %v8160 = vld [vmem:[%s3116 + $0xc0] sm:$0xff]
    %v8161 = vld [vmem:[%s3116 + $0xc8] sm:$0xff]
    %v8162 = vld [vmem:[%s3116 + $0xd0] sm:$0xff]
    %v8163 = vld [vmem:[%s3116 + $0xd8] sm:$0xff]
    %v8164 = vld [vmem:[%s3116 + $0xe0] sm:$0xff]
    %v8165 = vld [vmem:[%s3116 + $0xe8] sm:$0xff]
    %v8166 = vld [vmem:[%s3116 + $0xf0] sm:$0xff]
    %v8167 = vld [vmem:[%s3116 + $0xf8] sm:$0xff]
    %v8168 = vld [vmem:[%s3116 + $0x100] sm:$0xff]
    %v8169 = vld [vmem:[%s3116 + $0x108] sm:$0xff]
    %v8170 = vld [vmem:[%s3116 + $0x110] sm:$0xff]
    %v8171 = vld [vmem:[%s3116 + $0x118] sm:$0xff]
    %v8172 = vld [vmem:[%s3116 + $0x120] sm:$0xff]
    %v8173 = vld [vmem:[%s3116 + $0x128] sm:$0xff]
    %v8174 = vld [vmem:[%s3116 + $0x130] sm:$0xff]
    %v8175 = vld [vmem:[%s3116 + $0x138] sm:$0xff]
    %v8176 = vld [vmem:[%s3116 + $0x140] sm:$0xff]
    %v8177 = vld [vmem:[%s3116 + $0x148] sm:$0xff]
    %v8178 = vld [vmem:[%s3116 + $0x150] sm:$0xff]
    %v8179 = vld [vmem:[%s3116 + $0x158] sm:$0xff]
    %v8180 = vld [vmem:[%s3116 + $0x160] sm:$0xff]
    %v8181 = vld [vmem:[%s3116 + $0x168] sm:$0xff]
    %v8182 = vld [vmem:[%s3116 + $0x170] sm:$0xff]
    %v8183 = vld [vmem:[%s3116 + $0x178] sm:$0xff]
    %v8184 = vld [vmem:[%s3116 + $0x180] sm:$0xff]
    %v8185 = vld [vmem:[%s3116 + $0x188] sm:$0xff]
    %v8186 = vld [vmem:[%s3116 + $0x190] sm:$0xff]
    %v8187 = vld [vmem:[%s3116 + $0x198] sm:$0xff]
    %v8188 = vld [vmem:[%s3116 + $0x1a0] sm:$0xff]
    %v8189 = vld [vmem:[%s3116 + $0x1a8] sm:$0xff]
    %v8190 = vld [vmem:[%s3116 + $0x1b0] sm:$0xff]
    %v8191 = vld [vmem:[%s3116 + $0x1b8] sm:$0xff]
    %v8192 = vld [vmem:[%s3116 + $0x1c0] sm:$0xff]
    %v8193 = vld [vmem:[%s3116 + $0x1c8] sm:$0xff]
    %v8194 = vld [vmem:[%s3116 + $0x1d0] sm:$0xff]
    %v8195 = vld [vmem:[%s3116 + $0x1d8] sm:$0xff]
    %v8196 = vld [vmem:[%s3116 + $0x1e0] sm:$0xff]
    %v8197 = vld [vmem:[%s3116 + $0x1e8] sm:$0xff]
    %v8198 = vld [vmem:[%s3116 + $0x1f0] sm:$0xff]
    %v8199 = vld [vmem:[%s3116 + $0x1f8] sm:$0xff]
    %v8200 = vld [vmem:[%s3181] sm:$0xf]
    %v8202 = vlaneseq
    %v8203 = vshrl.u32 %v8202, 7
    %v8204 = vsub.s32 0, %v8203
    %v8205 = vrot.slane %v8200, %v8204
    %v8206 = vlaneseq
    %v8207 = vshrl.u32 %v8206, 7
    %v8208 = vsub.s32 1, %v8207
    %v8209 = vrot.slane %v8200, %v8208
    %v8210 = vlaneseq
    %v8211 = vshrl.u32 %v8210, 7
    %v8212 = vsub.s32 2, %v8211
    %v8213 = vrot.slane %v8200, %v8212
    %v8214 = vlaneseq
    %v8215 = vshrl.u32 %v8214, 7
    %v8216 = vsub.s32 3, %v8215
    %v8217 = vrot.slane %v8200, %v8216
    %v8286 = vunpack.c.l.b16 %v8136
    %v8287 = vunpack.c.h.b16 %v8136
    %v8288 = vunpack.c.l.b16 %v8137
    %v8289 = vunpack.c.h.b16 %v8137
    %v8290 = vunpack.c.l.b16 %v8138
    %v8291 = vunpack.c.h.b16 %v8138
    %v8292 = vunpack.c.l.b16 %v8139
    %v8293 = vunpack.c.h.b16 %v8139
    %v8294 = vunpack.c.l.b16 %v8140
    %v8295 = vunpack.c.h.b16 %v8140
    %v8296 = vunpack.c.l.b16 %v8141
    %v8297 = vunpack.c.h.b16 %v8141
    %v8298 = vunpack.c.l.b16 %v8142
    %v8299 = vunpack.c.h.b16 %v8142
    %v8300 = vunpack.c.l.b16 %v8143
    %v8301 = vunpack.c.h.b16 %v8143
    %v8302 = vunpack.c.l.b16 %v8144
    %v8303 = vunpack.c.h.b16 %v8144
    %v8304 = vunpack.c.l.b16 %v8145
    %v8305 = vunpack.c.h.b16 %v8145
    %v8306 = vunpack.c.l.b16 %v8146
    %v8307 = vunpack.c.h.b16 %v8146
    %v8308 = vunpack.c.l.b16 %v8147
    %v8309 = vunpack.c.h.b16 %v8147
    %v8310 = vunpack.c.l.b16 %v8148
    %v8311 = vunpack.c.h.b16 %v8148
    %v8312 = vunpack.c.l.b16 %v8149
    %v8313 = vunpack.c.h.b16 %v8149
    %v8314 = vunpack.c.l.b16 %v8150
    %v8315 = vunpack.c.h.b16 %v8150
    %v8316 = vunpack.c.l.b16 %v8151
    %v8317 = vunpack.c.h.b16 %v8151
    %v8318 = vunpack.c.l.b16 %v8152
    %v8319 = vunpack.c.h.b16 %v8152
    %v8320 = vunpack.c.l.b16 %v8153
    %v8321 = vunpack.c.h.b16 %v8153
    %v8322 = vunpack.c.l.b16 %v8154
    %v8323 = vunpack.c.h.b16 %v8154
    %v8324 = vunpack.c.l.b16 %v8155
    %v8325 = vunpack.c.h.b16 %v8155
    %v8326 = vunpack.c.l.b16 %v8156
    %v8327 = vunpack.c.h.b16 %v8156
    %v8328 = vunpack.c.l.b16 %v8157
    %v8329 = vunpack.c.h.b16 %v8157
    %v8330 = vunpack.c.l.b16 %v8158
    %v8331 = vunpack.c.h.b16 %v8158
    %v8332 = vunpack.c.l.b16 %v8159
    %v8333 = vunpack.c.h.b16 %v8159
    %v8334 = vunpack.c.l.b16 %v8160
    %v8335 = vunpack.c.h.b16 %v8160
    %v8336 = vunpack.c.l.b16 %v8161
    %v8337 = vunpack.c.h.b16 %v8161
    %v8338 = vunpack.c.l.b16 %v8162
    %v8339 = vunpack.c.h.b16 %v8162
    %v8340 = vunpack.c.l.b16 %v8163
    %v8341 = vunpack.c.h.b16 %v8163
    %v8342 = vunpack.c.l.b16 %v8164
    %v8343 = vunpack.c.h.b16 %v8164
    %v8344 = vunpack.c.l.b16 %v8165
    %v8345 = vunpack.c.h.b16 %v8165
    %v8346 = vunpack.c.l.b16 %v8166
    %v8347 = vunpack.c.h.b16 %v8166
    %v8348 = vunpack.c.l.b16 %v8167
    %v8349 = vunpack.c.h.b16 %v8167
    %v8350 = vunpack.c.l.b16 %v8168
    %v8351 = vunpack.c.h.b16 %v8168
    %v8352 = vunpack.c.l.b16 %v8169
    %v8353 = vunpack.c.h.b16 %v8169
    %v8354 = vunpack.c.l.b16 %v8170
    %v8355 = vunpack.c.h.b16 %v8170
    %v8356 = vunpack.c.l.b16 %v8171
    %v8357 = vunpack.c.h.b16 %v8171
    %v8358 = vunpack.c.l.b16 %v8172
    %v8359 = vunpack.c.h.b16 %v8172
    %v8360 = vunpack.c.l.b16 %v8173
    %v8361 = vunpack.c.h.b16 %v8173
    %v8362 = vunpack.c.l.b16 %v8174
    %v8363 = vunpack.c.h.b16 %v8174
    %v8364 = vunpack.c.l.b16 %v8175
    %v8365 = vunpack.c.h.b16 %v8175
    %v8366 = vunpack.c.l.b16 %v8176
    %v8367 = vunpack.c.h.b16 %v8176
    %v8368 = vunpack.c.l.b16 %v8177
    %v8369 = vunpack.c.h.b16 %v8177
    %v8370 = vunpack.c.l.b16 %v8178
    %v8371 = vunpack.c.h.b16 %v8178
    %v8372 = vunpack.c.l.b16 %v8179
    %v8373 = vunpack.c.h.b16 %v8179
    %v8374 = vunpack.c.l.b16 %v8180
    %v8375 = vunpack.c.h.b16 %v8180
    %v8376 = vunpack.c.l.b16 %v8181
    %v8377 = vunpack.c.h.b16 %v8181
    %v8378 = vunpack.c.l.b16 %v8182
    %v8379 = vunpack.c.h.b16 %v8182
    %v8380 = vunpack.c.l.b16 %v8183
    %v8381 = vunpack.c.h.b16 %v8183
    %v8382 = vunpack.c.l.b16 %v8184
    %v8383 = vunpack.c.h.b16 %v8184
    %v8384 = vunpack.c.l.b16 %v8185
    %v8385 = vunpack.c.h.b16 %v8185
    %v8386 = vunpack.c.l.b16 %v8186
    %v8387 = vunpack.c.h.b16 %v8186
    %v8388 = vunpack.c.l.b16 %v8187
    %v8389 = vunpack.c.h.b16 %v8187
    %v8390 = vunpack.c.l.b16 %v8188
    %v8391 = vunpack.c.h.b16 %v8188
    %v8392 = vunpack.c.l.b16 %v8189
    %v8393 = vunpack.c.h.b16 %v8189
    %v8394 = vunpack.c.l.b16 %v8190
    %v8395 = vunpack.c.h.b16 %v8190
    %v8396 = vunpack.c.l.b16 %v8191
    %v8397 = vunpack.c.h.b16 %v8191
    %v8398 = vunpack.c.l.b16 %v8192
    %v8399 = vunpack.c.h.b16 %v8192
    %v8400 = vunpack.c.l.b16 %v8193
    %v8401 = vunpack.c.h.b16 %v8193
    %v8402 = vunpack.c.l.b16 %v8194
    %v8403 = vunpack.c.h.b16 %v8194
    %v8404 = vunpack.c.l.b16 %v8195
    %v8405 = vunpack.c.h.b16 %v8195
    %v8406 = vunpack.c.l.b16 %v8196
    %v8407 = vunpack.c.h.b16 %v8196
    %v8408 = vunpack.c.l.b16 %v8197
    %v8409 = vunpack.c.h.b16 %v8197
    %v8410 = vunpack.c.l.b16 %v8198
    %v8411 = vunpack.c.h.b16 %v8198
    %v8412 = vunpack.c.l.b16 %v8199
    %v8413 = vunpack.c.h.b16 %v8199
    %v8414 = vpack.c.b16 %v8290, %v8286
    %v8415 = vpack.c.b16 %v8291, %v8287
    %v8416 = vpack.c.b16 %v8292, %v8288
    %v8417 = vpack.c.b16 %v8293, %v8289
    %v8418 = vpack.c.b16 %v8298, %v8294
    %v8419 = vpack.c.b16 %v8299, %v8295
    %v8420 = vpack.c.b16 %v8300, %v8296
    %v8421 = vpack.c.b16 %v8301, %v8297
    %v8422 = vpack.c.b16 %v8306, %v8302
    %v8423 = vpack.c.b16 %v8307, %v8303
    %v8424 = vpack.c.b16 %v8308, %v8304
    %v8425 = vpack.c.b16 %v8309, %v8305
    %v8426 = vpack.c.b16 %v8314, %v8310
    %v8427 = vpack.c.b16 %v8315, %v8311
    %v8428 = vpack.c.b16 %v8316, %v8312
    %v8429 = vpack.c.b16 %v8317, %v8313
    %v8430 = vpack.c.b16 %v8322, %v8318
    %v8431 = vpack.c.b16 %v8323, %v8319
    %v8432 = vpack.c.b16 %v8324, %v8320
    %v8433 = vpack.c.b16 %v8325, %v8321
    %v8434 = vpack.c.b16 %v8330, %v8326
    %v8435 = vpack.c.b16 %v8331, %v8327
    %v8436 = vpack.c.b16 %v8332, %v8328
    %v8437 = vpack.c.b16 %v8333, %v8329
    %v8438 = vpack.c.b16 %v8338, %v8334
    %v8439 = vpack.c.b16 %v8339, %v8335
    %v8440 = vpack.c.b16 %v8340, %v8336
    %v8441 = vpack.c.b16 %v8341, %v8337
    %v8442 = vpack.c.b16 %v8346, %v8342
    %v8443 = vpack.c.b16 %v8347, %v8343
    %v8444 = vpack.c.b16 %v8348, %v8344
    %v8445 = vpack.c.b16 %v8349, %v8345
    %v8446 = vpack.c.b16 %v8354, %v8350
    %v8447 = vpack.c.b16 %v8355, %v8351
    %v8448 = vpack.c.b16 %v8356, %v8352
    %v8449 = vpack.c.b16 %v8357, %v8353
    %v8450 = vpack.c.b16 %v8362, %v8358
    %v8451 = vpack.c.b16 %v8363, %v8359
    %v8452 = vpack.c.b16 %v8364, %v8360
    %v8453 = vpack.c.b16 %v8365, %v8361
    %v8454 = vpack.c.b16 %v8370, %v8366
    %v8455 = vpack.c.b16 %v8371, %v8367
    %v8456 = vpack.c.b16 %v8372, %v8368
    %v8457 = vpack.c.b16 %v8373, %v8369
    %v8458 = vpack.c.b16 %v8378, %v8374
    %v8459 = vpack.c.b16 %v8379, %v8375
    %v8460 = vpack.c.b16 %v8380, %v8376
    %v8461 = vpack.c.b16 %v8381, %v8377
    %v8462 = vpack.c.b16 %v8386, %v8382
    %v8463 = vpack.c.b16 %v8387, %v8383
    %v8464 = vpack.c.b16 %v8388, %v8384
    %v8465 = vpack.c.b16 %v8389, %v8385
    %v8466 = vpack.c.b16 %v8394, %v8390
    %v8467 = vpack.c.b16 %v8395, %v8391
    %v8468 = vpack.c.b16 %v8396, %v8392
    %v8469 = vpack.c.b16 %v8397, %v8393
    %v8470 = vpack.c.b16 %v8402, %v8398
    %v8471 = vpack.c.b16 %v8403, %v8399
    %v8472 = vpack.c.b16 %v8404, %v8400
    %v8473 = vpack.c.b16 %v8405, %v8401
    %v8474 = vpack.c.b16 %v8410, %v8406
    %v8475 = vpack.c.b16 %v8411, %v8407
    %v8476 = vpack.c.b16 %v8412, %v8408
    %v8477 = vpack.c.b16 %v8413, %v8409
    %8542 = vmatprep.subr.bf16.mxu0 %v8415
    %8543 = vmatpush1.bf16.msra.mxu0 %v8414
    %8544 = vmatprep.subr.bf16.mxu0 %v8419
    %8545 = vmatpush1.bf16.msra.mxu0 %v8418
    %8546 = vmatprep.subr.bf16.mxu0 %v8423
    %8547 = vmatpush1.bf16.msra.mxu0 %v8422
    %8548 = vmatprep.subr.bf16.mxu0 %v8427
    %8549 = vmatpush1.bf16.msra.mxu0 %v8426
    %8550 = vmatprep.subr.bf16.mxu0 %v8431
    %8551 = vmatpush1.bf16.msra.mxu0 %v8430
    %8552 = vmatprep.subr.bf16.mxu0 %v8435
    %8553 = vmatpush1.bf16.msra.mxu0 %v8434
    %8554 = vmatprep.subr.bf16.mxu0 %v8439
    %8555 = vmatpush1.bf16.msra.mxu0 %v8438
    %8556 = vmatprep.subr.bf16.mxu0 %v8443
    %8557 = vmatpush1.bf16.msra.mxu0 %v8442
    %8558 = vmatprep.subr.bf16.mxu0 %v8447
    %8559 = vmatpush1.bf16.msra.mxu0 %v8446
    %8560 = vmatprep.subr.bf16.mxu0 %v8451
    %8561 = vmatpush1.bf16.msra.mxu0 %v8450
    %8562 = vmatprep.subr.bf16.mxu0 %v8455
    %8563 = vmatpush1.bf16.msra.mxu0 %v8454
    %8564 = vmatprep.subr.bf16.mxu0 %v8459
    %8565 = vmatpush1.bf16.msra.mxu0 %v8458
    %8566 = vmatprep.subr.bf16.mxu0 %v8463
    %8567 = vmatpush1.bf16.msra.mxu0 %v8462
    %8568 = vmatprep.subr.bf16.mxu0 %v8467
    %8569 = vmatpush1.bf16.msra.mxu0 %v8466
    %8570 = vmatprep.subr.bf16.mxu0 %v8471
    %8571 = vmatpush1.bf16.msra.mxu0 %v8470
    %8572 = vmatprep.subr.bf16.mxu0 %v8475
    %8573 = vmatpush1.bf16.msra.mxu0 %v8474
    %8574 = vmatprep.mubr.bf16.mxu0 %v7394
    %8575 = vmatmul.mubr.bf16.gmra.mrb[0].mxu0 %v8135
    %v8576 = vpop.f32.mrb[0].mxu0
    %v8577 = vadd.f32 %v8205, %v8576
    %v8578 = vpop.f32.mrb[0].mxu0
    %v8579 = vadd.f32 %v8209, %v8578
    %v8580 = vpop.f32.mrb[0].mxu0
    %v8581 = vpop.f32.mrb[0].mxu0
    %8582 = vdwg.mxu0
    %8583 = vmatprep.subr.bf16.mxu0 %v8417
    %8584 = vmatpush1.bf16.msra.mxu0 %v8416
    %8585 = vmatprep.subr.bf16.mxu0 %v8421
    %8586 = vmatpush1.bf16.msra.mxu0 %v8420
    %8587 = vmatprep.subr.bf16.mxu0 %v8425
    %8588 = vmatpush1.bf16.msra.mxu0 %v8424
    %8589 = vmatprep.subr.bf16.mxu0 %v8429
    %8590 = vmatpush1.bf16.msra.mxu0 %v8428
    %8591 = vmatprep.subr.bf16.mxu0 %v8433
    %8592 = vmatpush1.bf16.msra.mxu0 %v8432
    %8593 = vmatprep.subr.bf16.mxu0 %v8437
    %8594 = vmatpush1.bf16.msra.mxu0 %v8436
    %8595 = vmatprep.subr.bf16.mxu0 %v8441
    %8596 = vmatpush1.bf16.msra.mxu0 %v8440
    %8597 = vmatprep.subr.bf16.mxu0 %v8445
    %8598 = vmatpush1.bf16.msra.mxu0 %v8444
    %8599 = vmatprep.subr.bf16.mxu0 %v8449
    %8600 = vmatpush1.bf16.msra.mxu0 %v8448
    %8601 = vmatprep.subr.bf16.mxu0 %v8453
    %8602 = vmatpush1.bf16.msra.mxu0 %v8452
    %8603 = vmatprep.subr.bf16.mxu0 %v8457
    %8604 = vmatpush1.bf16.msra.mxu0 %v8456
    %8605 = vmatprep.subr.bf16.mxu0 %v8461
    %8606 = vmatpush1.bf16.msra.mxu0 %v8460
    %8607 = vmatprep.subr.bf16.mxu0 %v8465
    %8608 = vmatpush1.bf16.msra.mxu0 %v8464
    %8609 = vmatprep.subr.bf16.mxu0 %v8469
    %8610 = vmatpush1.bf16.msra.mxu0 %v8468
    %8611 = vmatprep.subr.bf16.mxu0 %v8473
    %8612 = vmatpush1.bf16.msra.mxu0 %v8472
    %8613 = vmatprep.subr.bf16.mxu0 %v8477
    %8614 = vmatpush1.bf16.msra.mxu0 %v8476
    %8615 = vmatprep.mubr.bf16.mxu0 %v7394
    %8616 = vmatmul.mubr.bf16.gmra.mrb[0].mxu0 %v8135
    %v8617 = vpop.f32.mrb[0].mxu0
    %v8618 = vadd.f32 %v8213, %v8617
    %v8619 = vpop.f32.mrb[0].mxu0
    %v8620 = vadd.f32 %v8217, %v8619
    %v8621 = vpop.f32.mrb[0].mxu0
    %v8622 = vpop.f32.mrb[0].mxu0
    %8623 = vdwg.mxu0
    %v8624 = vxor.u32 %v8577, 2147483648
    %v8625 = vmul.f32 %v8624, 1.442695
    %v8626 = vpow.pop %v8625
    %v8627 = vadd.f32 %v8626, 1.0
    %v8628 = vrcp.pop %v8627
    %v8629 = vmul.f32 1.0, %v8628
    %v8630 = vxor.u32 %v8579, 2147483648
    %v8631 = vmul.f32 %v8630, 1.442695
    %v8632 = vpow.pop %v8631
    %v8633 = vadd.f32 %v8632, 1.0
    %v8634 = vrcp.pop %v8633
    %v8635 = vmul.f32 1.0, %v8634
    %v8636 = vtanh.pop %v8618
    %v8637 = vxor.u32 %v8620, 2147483648
    %v8638 = vmul.f32 %v8637, 1.442695
    %v8639 = vpow.pop %v8638
    %v8640 = vadd.f32 %v8639, 1.0
    %v8641 = vrcp.pop %v8640
    %v8642 = vmul.f32 1.0, %v8641
    %v8643 = vmul.f32 %v8635, %v7391
    %v8644 = vmul.f32 %v8629, %v8636
    %v8645 = vadd.f32 %v8643, %v8644
    %v8646 = vtanh.pop %v8645
    %v8647 = vmul.f32 %v8642, %v8646
    %v8648 = vpack.c.bf16 %v8647, %v8647
    %v8649 = vld [vmem:[%s6] sm:$0xf]
    %v8650 = vld [vmem:[%s6 + $0x4] sm:$0xf]
    %v8651 = vld [vmem:[%s6 + $0x8] sm:$0xf]
    %v8652 = vld [vmem:[%s6 + $0xc] sm:$0xf]
    %v8653 = vld [vmem:[%s6 + $0x10] sm:$0xf]
    %v8654 = vld [vmem:[%s6 + $0x14] sm:$0xf]
    %v8655 = vld [vmem:[%s6 + $0x18] sm:$0xf]
    %v8656 = vld [vmem:[%s6 + $0x1c] sm:$0xf]
    %v8657 = vld [vmem:[%s6 + $0x20] sm:$0xf]
    %v8658 = vld [vmem:[%s6 + $0x24] sm:$0xf]
    %v8659 = vld [vmem:[%s6 + $0x28] sm:$0xf]
    %v8660 = vld [vmem:[%s6 + $0x2c] sm:$0xf]
    %v8661 = vld [vmem:[%s6 + $0x30] sm:$0xf]
    %v8662 = vld [vmem:[%s6 + $0x34] sm:$0xf]
    %v8663 = vld [vmem:[%s6 + $0x38] sm:$0xf]
    %v8664 = vld [vmem:[%s6 + $0x3c] sm:$0xf]
    %v8665 = vld [vmem:[%s7] sm:$0x1]
    %v8667 = vlaneseq
    %v8668 = vshrl.u32 %v8667, 7
    %v8669 = vsub.s32 0, %v8668
    %v8670 = vrot.slane %v8665, %v8669
    %v8688 = vunpack.c.l.b16 %v8649
    %v8689 = vunpack.c.l.b16 %v8650
    %v8690 = vunpack.c.l.b16 %v8651
    %v8691 = vunpack.c.l.b16 %v8652
    %v8692 = vunpack.c.l.b16 %v8653
    %v8693 = vunpack.c.l.b16 %v8654
    %v8694 = vunpack.c.l.b16 %v8655
    %v8695 = vunpack.c.l.b16 %v8656
    %v8696 = vunpack.c.l.b16 %v8657
    %v8697 = vunpack.c.l.b16 %v8658
    %v8698 = vunpack.c.l.b16 %v8659
    %v8699 = vunpack.c.l.b16 %v8660
    %v8700 = vunpack.c.l.b16 %v8661
    %v8701 = vunpack.c.l.b16 %v8662
    %v8702 = vunpack.c.l.b16 %v8663
    %v8703 = vunpack.c.l.b16 %v8664
    %v8704 = vpack.c.b16 %v8689, %v8688
    %v8705 = vpack.c.b16 %v8691, %v8690
    %v8706 = vpack.c.b16 %v8693, %v8692
    %v8707 = vpack.c.b16 %v8695, %v8694
    %v8708 = vpack.c.b16 %v8697, %v8696
    %v8709 = vpack.c.b16 %v8699, %v8698
    %v8710 = vpack.c.b16 %v8701, %v8700
    %v8711 = vpack.c.b16 %v8703, %v8702
    %8720 = vmatprep.subr.bf16.mxu0 0
    %8721 = vmatpush1.bf16.msra.mxu0 %v8704
    %8722 = vmatprep.subr.bf16.mxu0 0
    %8723 = vmatpush1.bf16.msra.mxu0 %v8705
    %8724 = vmatprep.subr.bf16.mxu0 0
    %8725 = vmatpush1.bf16.msra.mxu0 %v8706
    %8726 = vmatprep.subr.bf16.mxu0 0
    %8727 = vmatpush1.bf16.msra.mxu0 %v8707
    %8728 = vmatprep.subr.bf16.mxu0 0
    %8729 = vmatpush1.bf16.msra.mxu0 %v8708
    %8730 = vmatprep.subr.bf16.mxu0 0
    %8731 = vmatpush1.bf16.msra.mxu0 %v8709
    %8732 = vmatprep.subr.bf16.mxu0 0
    %8733 = vmatpush1.bf16.msra.mxu0 %v8710
    %8734 = vmatprep.subr.bf16.mxu0 0
    %8735 = vmatpush1.bf16.msra.mxu0 %v8711
    %8736 = vmatprep.subr.bf16.mxu0 0
    %8737 = vmatpush1.bf16.msra.mxu0 0
    %8738 = vmatprep.subr.bf16.mxu0 0
    %8739 = vmatpush1.bf16.msra.mxu0 0
    %8740 = vmatprep.subr.bf16.mxu0 0
    %8741 = vmatpush1.bf16.msra.mxu0 0
    %8742 = vmatprep.subr.bf16.mxu0 0
    %8743 = vmatpush1.bf16.msra.mxu0 0
    %8744 = vmatprep.subr.bf16.mxu0 0
    %8745 = vmatpush1.bf16.msra.mxu0 0
    %8746 = vmatprep.subr.bf16.mxu0 0
    %8747 = vmatpush1.bf16.msra.mxu0 0
    %8748 = vmatprep.subr.bf16.mxu0 0
    %8749 = vmatpush1.bf16.msra.mxu0 0
    %8750 = vmatprep.subr.bf16.mxu0 0
    %8751 = vmatpush1.bf16.msra.mxu0 0
    %8752 = vmatprep.mubr.bf16.mxu0 0
    %8753 = vmatmul.mubr.bf16.gmra.mrb[0].mxu0 %v8648
    %v8754 = vpop.f32.mrb[0].mxu0
    %v8755 = vadd.f32 %v8670, %v8754
    %v8756 = vpop.f32.mrb[0].mxu0
    %v8757 = vpop.f32.mrb[0].mxu0
    %v8758 = vpop.f32.mrb[0].mxu0
    %8759 = vdwg.mxu0
    %s8760 = scalar_lea.vmem %s9, 32
    %8761 = vst [vmem:[%s8760] sm:$0xff] %v8755
    %8762 = vmax.xlane.f32.xlu0 %v8755
    %v8763 = vpop.xlane.xlu0 %8762
    %vm8764 = vcmp.eq.f32.partialorder %v8755, %v8763
    %v8765 = vsel %vm8764, %v3745, 128.0
    %8766 = vmin.xlane.f32.xlu0 %v8765
    %v8767 = vpop.xlane.xlu0 %8766
    %vm8768 = vcmp.eq.f32.partialorder %v3745, %v8767
    %v8769 = vsel %vm8768, 1, 0
    %v8770 = vcvt.s32.f32 %v8769
    %v8771 = vpack.c.bf16 %v8770, %v8770
    %v8772 = vld [vmem:[%s8] sm:$0xf]
    %v8773 = vld [vmem:[%s8 + $0x4] sm:$0xf]
    %v8774 = vld [vmem:[%s8 + $0x8] sm:$0xf]
    %v8775 = vld [vmem:[%s8 + $0xc] sm:$0xf]
    %v8776 = vld [vmem:[%s8 + $0x10] sm:$0xf]
    %v8777 = vld [vmem:[%s8 + $0x14] sm:$0xf]
    %v8778 = vld [vmem:[%s8 + $0x18] sm:$0xf]
    %v8779 = vld [vmem:[%s8 + $0x1c] sm:$0xf]
    %v8780 = vld [vmem:[%s8 + $0x20] sm:$0xf]
    %v8781 = vld [vmem:[%s8 + $0x24] sm:$0xf]
    %v8782 = vld [vmem:[%s8 + $0x28] sm:$0xf]
    %v8783 = vld [vmem:[%s8 + $0x2c] sm:$0xf]
    %v8784 = vld [vmem:[%s8 + $0x30] sm:$0xf]
    %v8785 = vld [vmem:[%s8 + $0x34] sm:$0xf]
    %v8786 = vld [vmem:[%s8 + $0x38] sm:$0xf]
    %v8787 = vld [vmem:[%s8 + $0x3c] sm:$0xf]
    %v8804 = vunpack.c.l.b16 %v8772
    %v8805 = vunpack.c.l.b16 %v8773
    %v8806 = vunpack.c.l.b16 %v8774
    %v8807 = vunpack.c.l.b16 %v8775
    %v8808 = vunpack.c.l.b16 %v8776
    %v8809 = vunpack.c.l.b16 %v8777
    %v8810 = vunpack.c.l.b16 %v8778
    %v8811 = vunpack.c.l.b16 %v8779
    %v8812 = vunpack.c.l.b16 %v8780
    %v8813 = vunpack.c.l.b16 %v8781
    %v8814 = vunpack.c.l.b16 %v8782
    %v8815 = vunpack.c.l.b16 %v8783
    %v8816 = vunpack.c.l.b16 %v8784
    %v8817 = vunpack.c.l.b16 %v8785
    %v8818 = vunpack.c.l.b16 %v8786
    %v8819 = vunpack.c.l.b16 %v8787
    %v8820 = vpack.c.b16 %v8805, %v8804
    %v8821 = vpack.c.b16 %v8807, %v8806
    %v8822 = vpack.c.b16 %v8809, %v8808
    %v8823 = vpack.c.b16 %v8811, %v8810
    %v8824 = vpack.c.b16 %v8813, %v8812
    %v8825 = vpack.c.b16 %v8815, %v8814
    %v8826 = vpack.c.b16 %v8817, %v8816
    %v8827 = vpack.c.b16 %v8819, %v8818
    %8836 = vmatprep.subr.bf16.mxu0 0
    %8837 = vmatpush1.bf16.msra.mxu0 %v8820
    %8838 = vmatprep.subr.bf16.mxu0 0
    %8839 = vmatpush1.bf16.msra.mxu0 %v8821
    %8840 = vmatprep.subr.bf16.mxu0 0
    %8841 = vmatpush1.bf16.msra.mxu0 %v8822
    %8842 = vmatprep.subr.bf16.mxu0 0
    %8843 = vmatpush1.bf16.msra.mxu0 %v8823
    %8844 = vmatprep.subr.bf16.mxu0 0
    %8845 = vmatpush1.bf16.msra.mxu0 %v8824
    %8846 = vmatprep.subr.bf16.mxu0 0
    %8847 = vmatpush1.bf16.msra.mxu0 %v8825
    %8848 = vmatprep.subr.bf16.mxu0 0
    %8849 = vmatpush1.bf16.msra.mxu0 %v8826
    %8850 = vmatprep.subr.bf16.mxu0 0
    %8851 = vmatpush1.bf16.msra.mxu0 %v8827
    %8852 = vmatprep.subr.bf16.mxu0 0
    %8853 = vmatpush1.bf16.msra.mxu0 0
    %8854 = vmatprep.subr.bf16.mxu0 0
    %8855 = vmatpush1.bf16.msra.mxu0 0
    %8856 = vmatprep.subr.bf16.mxu0 0
    %8857 = vmatpush1.bf16.msra.mxu0 0
    %8858 = vmatprep.subr.bf16.mxu0 0
    %8859 = vmatpush1.bf16.msra.mxu0 0
    %8860 = vmatprep.subr.bf16.mxu0 0
    %8861 = vmatpush1.bf16.msra.mxu0 0
    %8862 = vmatprep.subr.bf16.mxu0 0
    %8863 = vmatpush1.bf16.msra.mxu0 0
    %8864 = vmatprep.subr.bf16.mxu0 0
    %8865 = vmatpush1.bf16.msra.mxu0 0
    %8866 = vmatprep.subr.bf16.mxu0 0
    %8867 = vmatpush1.bf16.msra.mxu0 0
    %8868 = vmatprep.mubr.bf16.mxu0 0
    %8869 = vmatmul.mubr.bf16.gmra.mrb[0].mxu0 %v8771
    %v8870 = vpop.f32.mrb[0].mxu0
    %v8871 = vadd.f32 0.0, %v8870
    %v8872 = vpop.f32.mrb[0].mxu0
    %v8873 = vpop.f32.mrb[0].mxu0
    %v8874 = vpop.f32.mrb[0].mxu0
    %8875 = vdwg.mxu0
    %v8876 = vpack.c.bf16 %v8871, %v8871
    %v8877 = vld [vmem:[#allocation4] sm:$0xff]
    %v8878 = vld [vmem:[#allocation4 + $0x8] sm:$0xff]
    %v8879 = vld [vmem:[#allocation4 + $0x10] sm:$0xff]
    %v8880 = vld [vmem:[#allocation4 + $0x18] sm:$0xff]
    %v8881 = vld [vmem:[#allocation4 + $0x20] sm:$0xff]
    %v8882 = vld [vmem:[#allocation4 + $0x28] sm:$0xff]
    %v8883 = vld [vmem:[#allocation4 + $0x30] sm:$0xff]
    %v8884 = vld [vmem:[#allocation4 + $0x38] sm:$0xff]
    %v8885 = vld [vmem:[#allocation4 + $0x40] sm:$0xff]
    %v8886 = vld [vmem:[#allocation4 + $0x48] sm:$0xff]
    %v8887 = vld [vmem:[#allocation4 + $0x50] sm:$0xff]
    %v8888 = vld [vmem:[#allocation4 + $0x58] sm:$0xff]
    %v8889 = vld [vmem:[#allocation4 + $0x60] sm:$0xff]
    %v8890 = vld [vmem:[#allocation4 + $0x68] sm:$0xff]
    %v8891 = vld [vmem:[#allocation4 + $0x70] sm:$0xff]
    %v8892 = vld [vmem:[#allocation4 + $0x78] sm:$0xff]
    %v8893 = vld [vmem:[#allocation4 + $0x80] sm:$0xff]
    %v8894 = vld [vmem:[#allocation4 + $0x88] sm:$0xff]
    %v8895 = vld [vmem:[#allocation4 + $0x90] sm:$0xff]
    %v8896 = vld [vmem:[#allocation4 + $0x98] sm:$0xff]
    %v8897 = vld [vmem:[#allocation4 + $0xa0] sm:$0xff]
    %v8898 = vld [vmem:[#allocation4 + $0xa8] sm:$0xff]
    %v8899 = vld [vmem:[#allocation4 + $0xb0] sm:$0xff]
    %v8900 = vld [vmem:[#allocation4 + $0xb8] sm:$0xff]
    %v8901 = vld [vmem:[#allocation4 + $0xc0] sm:$0xff]
    %v8902 = vld [vmem:[#allocation4 + $0xc8] sm:$0xff]
    %v8903 = vld [vmem:[#allocation4 + $0xd0] sm:$0xff]
    %v8904 = vld [vmem:[#allocation4 + $0xd8] sm:$0xff]
    %v8905 = vld [vmem:[#allocation4 + $0xe0] sm:$0xff]
    %v8906 = vld [vmem:[#allocation4 + $0xe8] sm:$0xff]
    %v8907 = vld [vmem:[#allocation4 + $0xf0] sm:$0xff]
    %v8908 = vld [vmem:[#allocation4 + $0xf8] sm:$0xff]
    %v8909 = vld [vmem:[#allocation4 + $0x100] sm:$0xff]
    %v8910 = vld [vmem:[#allocation4 + $0x108] sm:$0xff]
    %v8911 = vld [vmem:[#allocation4 + $0x110] sm:$0xff]
    %v8912 = vld [vmem:[#allocation4 + $0x118] sm:$0xff]
    %v8913 = vld [vmem:[#allocation4 + $0x120] sm:$0xff]
    %v8914 = vld [vmem:[#allocation4 + $0x128] sm:$0xff]
    %v8915 = vld [vmem:[#allocation4 + $0x130] sm:$0xff]
    %v8916 = vld [vmem:[#allocation4 + $0x138] sm:$0xff]
    %v8917 = vld [vmem:[#allocation4 + $0x140] sm:$0xff]
    %v8918 = vld [vmem:[#allocation4 + $0x148] sm:$0xff]
    %v8919 = vld [vmem:[#allocation4 + $0x150] sm:$0xff]
    %v8920 = vld [vmem:[#allocation4 + $0x158] sm:$0xff]
    %v8921 = vld [vmem:[#allocation4 + $0x160] sm:$0xff]
    %v8922 = vld [vmem:[#allocation4 + $0x168] sm:$0xff]
    %v8923 = vld [vmem:[#allocation4 + $0x170] sm:$0xff]
    %v8924 = vld [vmem:[#allocation4 + $0x178] sm:$0xff]
    %v8925 = vld [vmem:[#allocation4 + $0x180] sm:$0xff]
    %v8926 = vld [vmem:[#allocation4 + $0x188] sm:$0xff]
    %v8927 = vld [vmem:[#allocation4 + $0x190] sm:$0xff]
    %v8928 = vld [vmem:[#allocation4 + $0x198] sm:$0xff]
    %v8929 = vld [vmem:[#allocation4 + $0x1a0] sm:$0xff]
    %v8930 = vld [vmem:[#allocation4 + $0x1a8] sm:$0xff]
    %v8931 = vld [vmem:[#allocation4 + $0x1b0] sm:$0xff]
    %v8932 = vld [vmem:[#allocation4 + $0x1b8] sm:$0xff]
    %v8933 = vld [vmem:[#allocation4 + $0x1c0] sm:$0xff]
    %v8934 = vld [vmem:[#allocation4 + $0x1c8] sm:$0xff]
    %v8935 = vld [vmem:[#allocation4 + $0x1d0] sm:$0xff]
    %v8936 = vld [vmem:[#allocation4 + $0x1d8] sm:$0xff]
    %v8937 = vld [vmem:[#allocation4 + $0x1e0] sm:$0xff]
    %v8938 = vld [vmem:[#allocation4 + $0x1e8] sm:$0xff]
    %v8939 = vld [vmem:[#allocation4 + $0x1f0] sm:$0xff]
    %v8940 = vld [vmem:[#allocation4 + $0x1f8] sm:$0xff]
    %v8941 = vld [vmem:[%s5] sm:$0xf]
    %v8943 = vlaneseq
    %v8944 = vshrl.u32 %v8943, 7
    %v8945 = vsub.s32 0, %v8944
    %v8946 = vrot.slane %v8941, %v8945
    %v8947 = vlaneseq
    %v8948 = vshrl.u32 %v8947, 7
    %v8949 = vsub.s32 1, %v8948
    %v8950 = vrot.slane %v8941, %v8949
    %v8951 = vlaneseq
    %v8952 = vshrl.u32 %v8951, 7
    %v8953 = vsub.s32 2, %v8952
    %v8954 = vrot.slane %v8941, %v8953
    %v8955 = vlaneseq
    %v8956 = vshrl.u32 %v8955, 7
    %v8957 = vsub.s32 3, %v8956
    %v8958 = vrot.slane %v8941, %v8957
    %v9027 = vunpack.c.l.b16 %v8877
    %v9028 = vunpack.c.h.b16 %v8877
    %v9029 = vunpack.c.l.b16 %v8878
    %v9030 = vunpack.c.h.b16 %v8878
    %v9031 = vunpack.c.l.b16 %v8879
    %v9032 = vunpack.c.h.b16 %v8879
    %v9033 = vunpack.c.l.b16 %v8880
    %v9034 = vunpack.c.h.b16 %v8880
    %v9035 = vunpack.c.l.b16 %v8881
    %v9036 = vunpack.c.h.b16 %v8881
    %v9037 = vunpack.c.l.b16 %v8882
    %v9038 = vunpack.c.h.b16 %v8882
    %v9039 = vunpack.c.l.b16 %v8883
    %v9040 = vunpack.c.h.b16 %v8883
    %v9041 = vunpack.c.l.b16 %v8884
    %v9042 = vunpack.c.h.b16 %v8884
    %v9043 = vunpack.c.l.b16 %v8885
    %v9044 = vunpack.c.h.b16 %v8885
    %v9045 = vunpack.c.l.b16 %v8886
    %v9046 = vunpack.c.h.b16 %v8886
    %v9047 = vunpack.c.l.b16 %v8887
    %v9048 = vunpack.c.h.b16 %v8887
    %v9049 = vunpack.c.l.b16 %v8888
    %v9050 = vunpack.c.h.b16 %v8888
    %v9051 = vunpack.c.l.b16 %v8889
    %v9052 = vunpack.c.h.b16 %v8889
    %v9053 = vunpack.c.l.b16 %v8890
    %v9054 = vunpack.c.h.b16 %v8890
    %v9055 = vunpack.c.l.b16 %v8891
    %v9056 = vunpack.c.h.b16 %v8891
    %v9057 = vunpack.c.l.b16 %v8892
    %v9058 = vunpack.c.h.b16 %v8892
    %v9059 = vunpack.c.l.b16 %v8893
    %v9060 = vunpack.c.h.b16 %v8893
    %v9061 = vunpack.c.l.b16 %v8894
    %v9062 = vunpack.c.h.b16 %v8894
    %v9063 = vunpack.c.l.b16 %v8895
    %v9064 = vunpack.c.h.b16 %v8895
    %v9065 = vunpack.c.l.b16 %v8896
    %v9066 = vunpack.c.h.b16 %v8896
    %v9067 = vunpack.c.l.b16 %v8897
    %v9068 = vunpack.c.h.b16 %v8897
    %v9069 = vunpack.c.l.b16 %v8898
    %v9070 = vunpack.c.h.b16 %v8898
    %v9071 = vunpack.c.l.b16 %v8899
    %v9072 = vunpack.c.h.b16 %v8899
    %v9073 = vunpack.c.l.b16 %v8900
    %v9074 = vunpack.c.h.b16 %v8900
    %v9075 = vunpack.c.l.b16 %v8901
    %v9076 = vunpack.c.h.b16 %v8901
    %v9077 = vunpack.c.l.b16 %v8902
    %v9078 = vunpack.c.h.b16 %v8902
    %v9079 = vunpack.c.l.b16 %v8903
    %v9080 = vunpack.c.h.b16 %v8903
    %v9081 = vunpack.c.l.b16 %v8904
    %v9082 = vunpack.c.h.b16 %v8904
    %v9083 = vunpack.c.l.b16 %v8905
    %v9084 = vunpack.c.h.b16 %v8905
    %v9085 = vunpack.c.l.b16 %v8906
    %v9086 = vunpack.c.h.b16 %v8906
    %v9087 = vunpack.c.l.b16 %v8907
    %v9088 = vunpack.c.h.b16 %v8907
    %v9089 = vunpack.c.l.b16 %v8908
    %v9090 = vunpack.c.h.b16 %v8908
    %v9091 = vunpack.c.l.b16 %v8909
    %v9092 = vunpack.c.h.b16 %v8909
    %v9093 = vunpack.c.l.b16 %v8910
    %v9094 = vunpack.c.h.b16 %v8910
    %v9095 = vunpack.c.l.b16 %v8911
    %v9096 = vunpack.c.h.b16 %v8911
    %v9097 = vunpack.c.l.b16 %v8912
    %v9098 = vunpack.c.h.b16 %v8912
    %v9099 = vunpack.c.l.b16 %v8913
    %v9100 = vunpack.c.h.b16 %v8913
    %v9101 = vunpack.c.l.b16 %v8914
    %v9102 = vunpack.c.h.b16 %v8914
    %v9103 = vunpack.c.l.b16 %v8915
    %v9104 = vunpack.c.h.b16 %v8915
    %v9105 = vunpack.c.l.b16 %v8916
    %v9106 = vunpack.c.h.b16 %v8916
    %v9107 = vunpack.c.l.b16 %v8917
    %v9108 = vunpack.c.h.b16 %v8917
    %v9109 = vunpack.c.l.b16 %v8918
    %v9110 = vunpack.c.h.b16 %v8918
    %v9111 = vunpack.c.l.b16 %v8919
    %v9112 = vunpack.c.h.b16 %v8919
    %v9113 = vunpack.c.l.b16 %v8920
    %v9114 = vunpack.c.h.b16 %v8920
    %v9115 = vunpack.c.l.b16 %v8921
    %v9116 = vunpack.c.h.b16 %v8921
    %v9117 = vunpack.c.l.b16 %v8922
    %v9118 = vunpack.c.h.b16 %v8922
    %v9119 = vunpack.c.l.b16 %v8923
    %v9120 = vunpack.c.h.b16 %v8923
    %v9121 = vunpack.c.l.b16 %v8924
    %v9122 = vunpack.c.h.b16 %v8924
    %v9123 = vunpack.c.l.b16 %v8925
    %v9124 = vunpack.c.h.b16 %v8925
    %v9125 = vunpack.c.l.b16 %v8926
    %v9126 = vunpack.c.h.b16 %v8926
    %v9127 = vunpack.c.l.b16 %v8927
    %v9128 = vunpack.c.h.b16 %v8927
    %v9129 = vunpack.c.l.b16 %v8928
    %v9130 = vunpack.c.h.b16 %v8928
    %v9131 = vunpack.c.l.b16 %v8929
    %v9132 = vunpack.c.h.b16 %v8929
    %v9133 = vunpack.c.l.b16 %v8930
    %v9134 = vunpack.c.h.b16 %v8930
    %v9135 = vunpack.c.l.b16 %v8931
    %v9136 = vunpack.c.h.b16 %v8931
    %v9137 = vunpack.c.l.b16 %v8932
    %v9138 = vunpack.c.h.b16 %v8932
    %v9139 = vunpack.c.l.b16 %v8933
    %v9140 = vunpack.c.h.b16 %v8933
    %v9141 = vunpack.c.l.b16 %v8934
    %v9142 = vunpack.c.h.b16 %v8934
    %v9143 = vunpack.c.l.b16 %v8935
    %v9144 = vunpack.c.h.b16 %v8935
    %v9145 = vunpack.c.l.b16 %v8936
    %v9146 = vunpack.c.h.b16 %v8936
    %v9147 = vunpack.c.l.b16 %v8937
    %v9148 = vunpack.c.h.b16 %v8937
    %v9149 = vunpack.c.l.b16 %v8938
    %v9150 = vunpack.c.h.b16 %v8938
    %v9151 = vunpack.c.l.b16 %v8939
    %v9152 = vunpack.c.h.b16 %v8939
    %v9153 = vunpack.c.l.b16 %v8940
    %v9154 = vunpack.c.h.b16 %v8940
    %v9155 = vpack.c.b16 %v9031, %v9027
    %v9156 = vpack.c.b16 %v9032, %v9028
    %v9157 = vpack.c.b16 %v9033, %v9029
    %v9158 = vpack.c.b16 %v9034, %v9030
    %v9159 = vpack.c.b16 %v9039, %v9035
    %v9160 = vpack.c.b16 %v9040, %v9036
    %v9161 = vpack.c.b16 %v9041, %v9037
    %v9162 = vpack.c.b16 %v9042, %v9038
    %v9163 = vpack.c.b16 %v9047, %v9043
    %v9164 = vpack.c.b16 %v9048, %v9044
    %v9165 = vpack.c.b16 %v9049, %v9045
    %v9166 = vpack.c.b16 %v9050, %v9046
    %v9167 = vpack.c.b16 %v9055, %v9051
    %v9168 = vpack.c.b16 %v9056, %v9052
    %v9169 = vpack.c.b16 %v9057, %v9053
    %v9170 = vpack.c.b16 %v9058, %v9054
    %v9171 = vpack.c.b16 %v9063, %v9059
    %v9172 = vpack.c.b16 %v9064, %v9060
    %v9173 = vpack.c.b16 %v9065, %v9061
    %v9174 = vpack.c.b16 %v9066, %v9062
    %v9175 = vpack.c.b16 %v9071, %v9067
    %v9176 = vpack.c.b16 %v9072, %v9068
    %v9177 = vpack.c.b16 %v9073, %v9069
    %v9178 = vpack.c.b16 %v9074, %v9070
    %v9179 = vpack.c.b16 %v9079, %v9075
    %v9180 = vpack.c.b16 %v9080, %v9076
    %v9181 = vpack.c.b16 %v9081, %v9077
    %v9182 = vpack.c.b16 %v9082, %v9078
    %v9183 = vpack.c.b16 %v9087, %v9083
    %v9184 = vpack.c.b16 %v9088, %v9084
    %v9185 = vpack.c.b16 %v9089, %v9085
    %v9186 = vpack.c.b16 %v9090, %v9086
    %v9187 = vpack.c.b16 %v9095, %v9091
    %v9188 = vpack.c.b16 %v9096, %v9092
    %v9189 = vpack.c.b16 %v9097, %v9093
    %v9190 = vpack.c.b16 %v9098, %v9094
    %v9191 = vpack.c.b16 %v9103, %v9099
    %v9192 = vpack.c.b16 %v9104, %v9100
    %v9193 = vpack.c.b16 %v9105, %v9101
    %v9194 = vpack.c.b16 %v9106, %v9102
    %v9195 = vpack.c.b16 %v9111, %v9107
    %v9196 = vpack.c.b16 %v9112, %v9108
    %v9197 = vpack.c.b16 %v9113, %v9109
    %v9198 = vpack.c.b16 %v9114, %v9110
    %v9199 = vpack.c.b16 %v9119, %v9115
    %v9200 = vpack.c.b16 %v9120, %v9116
    %v9201 = vpack.c.b16 %v9121, %v9117
    %v9202 = vpack.c.b16 %v9122, %v9118
    %v9203 = vpack.c.b16 %v9127, %v9123
    %v9204 = vpack.c.b16 %v9128, %v9124
    %v9205 = vpack.c.b16 %v9129, %v9125
    %v9206 = vpack.c.b16 %v9130, %v9126
    %v9207 = vpack.c.b16 %v9135, %v9131
    %v9208 = vpack.c.b16 %v9136, %v9132
    %v9209 = vpack.c.b16 %v9137, %v9133
    %v9210 = vpack.c.b16 %v9138, %v9134
    %v9211 = vpack.c.b16 %v9143, %v9139
    %v9212 = vpack.c.b16 %v9144, %v9140
    %v9213 = vpack.c.b16 %v9145, %v9141
    %v9214 = vpack.c.b16 %v9146, %v9142
    %v9215 = vpack.c.b16 %v9151, %v9147
    %v9216 = vpack.c.b16 %v9152, %v9148
    %v9217 = vpack.c.b16 %v9153, %v9149
    %v9218 = vpack.c.b16 %v9154, %v9150
    %9283 = vmatprep.subr.bf16.mxu0 %v9156
    %9284 = vmatpush1.bf16.msra.mxu0 %v9155
    %9285 = vmatprep.subr.bf16.mxu0 %v9160
    %9286 = vmatpush1.bf16.msra.mxu0 %v9159
    %9287 = vmatprep.subr.bf16.mxu0 %v9164
    %9288 = vmatpush1.bf16.msra.mxu0 %v9163
    %9289 = vmatprep.subr.bf16.mxu0 %v9168
    %9290 = vmatpush1.bf16.msra.mxu0 %v9167
    %9291 = vmatprep.subr.bf16.mxu0 %v9172
    %9292 = vmatpush1.bf16.msra.mxu0 %v9171
    %9293 = vmatprep.subr.bf16.mxu0 %v9176
    %9294 = vmatpush1.bf16.msra.mxu0 %v9175
    %9295 = vmatprep.subr.bf16.mxu0 %v9180
    %9296 = vmatpush1.bf16.msra.mxu0 %v9179
    %9297 = vmatprep.subr.bf16.mxu0 %v9184
    %9298 = vmatpush1.bf16.msra.mxu0 %v9183
    %9299 = vmatprep.subr.bf16.mxu0 %v9188
    %9300 = vmatpush1.bf16.msra.mxu0 %v9187
    %9301 = vmatprep.subr.bf16.mxu0 %v9192
    %9302 = vmatpush1.bf16.msra.mxu0 %v9191
    %9303 = vmatprep.subr.bf16.mxu0 %v9196
    %9304 = vmatpush1.bf16.msra.mxu0 %v9195
    %9305 = vmatprep.subr.bf16.mxu0 %v9200
    %9306 = vmatpush1.bf16.msra.mxu0 %v9199
    %9307 = vmatprep.subr.bf16.mxu0 %v9204
    %9308 = vmatpush1.bf16.msra.mxu0 %v9203
    %9309 = vmatprep.subr.bf16.mxu0 %v9208
    %9310 = vmatpush1.bf16.msra.mxu0 %v9207
    %9311 = vmatprep.subr.bf16.mxu0 %v9212
    %9312 = vmatpush1.bf16.msra.mxu0 %v9211
    %9313 = vmatprep.subr.bf16.mxu0 %v9216
    %9314 = vmatpush1.bf16.msra.mxu0 %v9215
    %9315 = vmatprep.mubr.bf16.mxu0 %v8135
    %9316 = vmatmul.mubr.bf16.gmra.mrb[0].mxu0 %v8876
    %v9317 = vpop.f32.mrb[0].mxu0
    %v9318 = vadd.f32 %v8946, %v9317
    %v9319 = vpop.f32.mrb[0].mxu0
    %v9320 = vadd.f32 %v8950, %v9319
    %v9321 = vpop.f32.mrb[0].mxu0
    %v9322 = vpop.f32.mrb[0].mxu0
    %9323 = vdwg.mxu0
    %9324 = vmatprep.subr.bf16.mxu0 %v9158
    %9325 = vmatpush1.bf16.msra.mxu0 %v9157
    %9326 = vmatprep.subr.bf16.mxu0 %v9162
    %9327 = vmatpush1.bf16.msra.mxu0 %v9161
    %9328 = vmatprep.subr.bf16.mxu0 %v9166
    %9329 = vmatpush1.bf16.msra.mxu0 %v9165
    %9330 = vmatprep.subr.bf16.mxu0 %v9170
    %9331 = vmatpush1.bf16.msra.mxu0 %v9169
    %9332 = vmatprep.subr.bf16.mxu0 %v9174
    %9333 = vmatpush1.bf16.msra.mxu0 %v9173
    %9334 = vmatprep.subr.bf16.mxu0 %v9178
    %9335 = vmatpush1.bf16.msra.mxu0 %v9177
    %9336 = vmatprep.subr.bf16.mxu0 %v9182
    %9337 = vmatpush1.bf16.msra.mxu0 %v9181
    %9338 = vmatprep.subr.bf16.mxu0 %v9186
    %9339 = vmatpush1.bf16.msra.mxu0 %v9185
    %9340 = vmatprep.subr.bf16.mxu0 %v9190
    %9341 = vmatpush1.bf16.msra.mxu0 %v9189
    %9342 = vmatprep.subr.bf16.mxu0 %v9194
    %9343 = vmatpush1.bf16.msra.mxu0 %v9193
    %9344 = vmatprep.subr.bf16.mxu0 %v9198
    %9345 = vmatpush1.bf16.msra.mxu0 %v9197
    %9346 = vmatprep.subr.bf16.mxu0 %v9202
    %9347 = vmatpush1.bf16.msra.mxu0 %v9201
    %9348 = vmatprep.subr.bf16.mxu0 %v9206
    %9349 = vmatpush1.bf16.msra.mxu0 %v9205
    %9350 = vmatprep.subr.bf16.mxu0 %v9210
    %9351 = vmatpush1.bf16.msra.mxu0 %v9209
    %9352 = vmatprep.subr.bf16.mxu0 %v9214
    %9353 = vmatpush1.bf16.msra.mxu0 %v9213
    %9354 = vmatprep.subr.bf16.mxu0 %v9218
    %9355 = vmatpush1.bf16.msra.mxu0 %v9217
    %9356 = vmatprep.mubr.bf16.mxu0 %v8135
    %9357 = vmatmul.mubr.bf16.gmra.mrb[0].mxu0 %v8876
    %v9358 = vpop.f32.mrb[0].mxu0
    %v9359 = vadd.f32 %v8954, %v9358
    %v9360 = vpop.f32.mrb[0].mxu0
    %v9361 = vadd.f32 %v8958, %v9360
    %v9362 = vpop.f32.mrb[0].mxu0
    %v9363 = vpop.f32.mrb[0].mxu0
    %9364 = vdwg.mxu0
    %v9365 = vxor.u32 %v9318, 2147483648
    %v9366 = vmul.f32 %v9365, 1.442695
    %v9367 = vpow.pop %v9366
    %v9368 = vadd.f32 %v9367, 1.0
    %v9369 = vrcp.pop %v9368
    %v9370 = vmul.f32 1.0, %v9369
    %v9371 = vxor.u32 %v9320, 2147483648
    %v9372 = vmul.f32 %v9371, 1.442695
    %v9373 = vpow.pop %v9372
    %v9374 = vadd.f32 %v9373, 1.0
    %v9375 = vrcp.pop %v9374
    %v9376 = vmul.f32 1.0, %v9375
    %v9377 = vtanh.pop %v9359
    %v9378 = vxor.u32 %v9361, 2147483648
    %v9379 = vmul.f32 %v9378, 1.442695
    %v9380 = vpow.pop %v9379
    %v9381 = vadd.f32 %v9380, 1.0
    %v9382 = vrcp.pop %v9381
    %v9383 = vmul.f32 1.0, %v9382
    %v9384 = vmul.f32 %v9376, %v8132
    %v9385 = vmul.f32 %v9370, %v9377
    %v9386 = vadd.f32 %v9384, %v9385
    %v9387 = vtanh.pop %v9386
    %v9388 = vmul.f32 %v9383, %v9387
    %v9389 = vpack.c.bf16 %v9388, %v9388
    %v9390 = vld [vmem:[%s3116] sm:$0xff]
    %v9391 = vld [vmem:[%s3116 + $0x8] sm:$0xff]
    %v9392 = vld [vmem:[%s3116 + $0x10] sm:$0xff]
    %v9393 = vld [vmem:[%s3116 + $0x18] sm:$0xff]
    %v9394 = vld [vmem:[%s3116 + $0x20] sm:$0xff]
    %v9395 = vld [vmem:[%s3116 + $0x28] sm:$0xff]
    %v9396 = vld [vmem:[%s3116 + $0x30] sm:$0xff]
    %v9397 = vld [vmem:[%s3116 + $0x38] sm:$0xff]
    %v9398 = vld [vmem:[%s3116 + $0x40] sm:$0xff]
    %v9399 = vld [vmem:[%s3116 + $0x48] sm:$0xff]
    %v9400 = vld [vmem:[%s3116 + $0x50] sm:$0xff]
    %v9401 = vld [vmem:[%s3116 + $0x58] sm:$0xff]
    %v9402 = vld [vmem:[%s3116 + $0x60] sm:$0xff]
    %v9403 = vld [vmem:[%s3116 + $0x68] sm:$0xff]
    %v9404 = vld [vmem:[%s3116 + $0x70] sm:$0xff]
    %v9405 = vld [vmem:[%s3116 + $0x78] sm:$0xff]
    %v9406 = vld [vmem:[%s3116 + $0x80] sm:$0xff]
    %v9407 = vld [vmem:[%s3116 + $0x88] sm:$0xff]
    %v9408 = vld [vmem:[%s3116 + $0x90] sm:$0xff]
    %v9409 = vld [vmem:[%s3116 + $0x98] sm:$0xff]
    %v9410 = vld [vmem:[%s3116 + $0xa0] sm:$0xff]
    %v9411 = vld [vmem:[%s3116 + $0xa8] sm:$0xff]
    %v9412 = vld [vmem:[%s3116 + $0xb0] sm:$0xff]
    %v9413 = vld [vmem:[%s3116 + $0xb8] sm:$0xff]
    %v9414 = vld [vmem:[%s3116 + $0xc0] sm:$0xff]
    %v9415 = vld [vmem:[%s3116 + $0xc8] sm:$0xff]
    %v9416 = vld [vmem:[%s3116 + $0xd0] sm:$0xff]
    %v9417 = vld [vmem:[%s3116 + $0xd8] sm:$0xff]
    %v9418 = vld [vmem:[%s3116 + $0xe0] sm:$0xff]
    %v9419 = vld [vmem:[%s3116 + $0xe8] sm:$0xff]
    %v9420 = vld [vmem:[%s3116 + $0xf0] sm:$0xff]
    %v9421 = vld [vmem:[%s3116 + $0xf8] sm:$0xff]
    %v9422 = vld [vmem:[%s3116 + $0x100] sm:$0xff]
    %v9423 = vld [vmem:[%s3116 + $0x108] sm:$0xff]
    %v9424 = vld [vmem:[%s3116 + $0x110] sm:$0xff]
    %v9425 = vld [vmem:[%s3116 + $0x118] sm:$0xff]
    %v9426 = vld [vmem:[%s3116 + $0x120] sm:$0xff]
    %v9427 = vld [vmem:[%s3116 + $0x128] sm:$0xff]
    %v9428 = vld [vmem:[%s3116 + $0x130] sm:$0xff]
    %v9429 = vld [vmem:[%s3116 + $0x138] sm:$0xff]
    %v9430 = vld [vmem:[%s3116 + $0x140] sm:$0xff]
    %v9431 = vld [vmem:[%s3116 + $0x148] sm:$0xff]
    %v9432 = vld [vmem:[%s3116 + $0x150] sm:$0xff]
    %v9433 = vld [vmem:[%s3116 + $0x158] sm:$0xff]
    %v9434 = vld [vmem:[%s3116 + $0x160] sm:$0xff]
    %v9435 = vld [vmem:[%s3116 + $0x168] sm:$0xff]
    %v9436 = vld [vmem:[%s3116 + $0x170] sm:$0xff]
    %v9437 = vld [vmem:[%s3116 + $0x178] sm:$0xff]
    %v9438 = vld [vmem:[%s3116 + $0x180] sm:$0xff]
    %v9439 = vld [vmem:[%s3116 + $0x188] sm:$0xff]
    %v9440 = vld [vmem:[%s3116 + $0x190] sm:$0xff]
    %v9441 = vld [vmem:[%s3116 + $0x198] sm:$0xff]
    %v9442 = vld [vmem:[%s3116 + $0x1a0] sm:$0xff]
    %v9443 = vld [vmem:[%s3116 + $0x1a8] sm:$0xff]
    %v9444 = vld [vmem:[%s3116 + $0x1b0] sm:$0xff]
    %v9445 = vld [vmem:[%s3116 + $0x1b8] sm:$0xff]
    %v9446 = vld [vmem:[%s3116 + $0x1c0] sm:$0xff]
    %v9447 = vld [vmem:[%s3116 + $0x1c8] sm:$0xff]
    %v9448 = vld [vmem:[%s3116 + $0x1d0] sm:$0xff]
    %v9449 = vld [vmem:[%s3116 + $0x1d8] sm:$0xff]
    %v9450 = vld [vmem:[%s3116 + $0x1e0] sm:$0xff]
    %v9451 = vld [vmem:[%s3116 + $0x1e8] sm:$0xff]
    %v9452 = vld [vmem:[%s3116 + $0x1f0] sm:$0xff]
    %v9453 = vld [vmem:[%s3116 + $0x1f8] sm:$0xff]
    %v9454 = vld [vmem:[%s3181] sm:$0xf]
    %v9456 = vlaneseq
    %v9457 = vshrl.u32 %v9456, 7
    %v9458 = vsub.s32 0, %v9457
    %v9459 = vrot.slane %v9454, %v9458
    %v9460 = vlaneseq
    %v9461 = vshrl.u32 %v9460, 7
    %v9462 = vsub.s32 1, %v9461
    %v9463 = vrot.slane %v9454, %v9462
    %v9464 = vlaneseq
    %v9465 = vshrl.u32 %v9464, 7
    %v9466 = vsub.s32 2, %v9465
    %v9467 = vrot.slane %v9454, %v9466
    %v9468 = vlaneseq
    %v9469 = vshrl.u32 %v9468, 7
    %v9470 = vsub.s32 3, %v9469
    %v9471 = vrot.slane %v9454, %v9470
    %v9540 = vunpack.c.l.b16 %v9390
    %v9541 = vunpack.c.h.b16 %v9390
    %v9542 = vunpack.c.l.b16 %v9391
    %v9543 = vunpack.c.h.b16 %v9391
    %v9544 = vunpack.c.l.b16 %v9392
    %v9545 = vunpack.c.h.b16 %v9392
    %v9546 = vunpack.c.l.b16 %v9393
    %v9547 = vunpack.c.h.b16 %v9393
    %v9548 = vunpack.c.l.b16 %v9394
    %v9549 = vunpack.c.h.b16 %v9394
    %v9550 = vunpack.c.l.b16 %v9395
    %v9551 = vunpack.c.h.b16 %v9395
    %v9552 = vunpack.c.l.b16 %v9396
    %v9553 = vunpack.c.h.b16 %v9396
    %v9554 = vunpack.c.l.b16 %v9397
    %v9555 = vunpack.c.h.b16 %v9397
    %v9556 = vunpack.c.l.b16 %v9398
    %v9557 = vunpack.c.h.b16 %v9398
    %v9558 = vunpack.c.l.b16 %v9399
    %v9559 = vunpack.c.h.b16 %v9399
    %v9560 = vunpack.c.l.b16 %v9400
    %v9561 = vunpack.c.h.b16 %v9400
    %v9562 = vunpack.c.l.b16 %v9401
    %v9563 = vunpack.c.h.b16 %v9401
    %v9564 = vunpack.c.l.b16 %v9402
    %v9565 = vunpack.c.h.b16 %v9402
    %v9566 = vunpack.c.l.b16 %v9403
    %v9567 = vunpack.c.h.b16 %v9403
    %v9568 = vunpack.c.l.b16 %v9404
    %v9569 = vunpack.c.h.b16 %v9404
    %v9570 = vunpack.c.l.b16 %v9405
    %v9571 = vunpack.c.h.b16 %v9405
    %v9572 = vunpack.c.l.b16 %v9406
    %v9573 = vunpack.c.h.b16 %v9406
    %v9574 = vunpack.c.l.b16 %v9407
    %v9575 = vunpack.c.h.b16 %v9407
    %v9576 = vunpack.c.l.b16 %v9408
    %v9577 = vunpack.c.h.b16 %v9408
    %v9578 = vunpack.c.l.b16 %v9409
    %v9579 = vunpack.c.h.b16 %v9409
    %v9580 = vunpack.c.l.b16 %v9410
    %v9581 = vunpack.c.h.b16 %v9410
    %v9582 = vunpack.c.l.b16 %v9411
    %v9583 = vunpack.c.h.b16 %v9411
    %v9584 = vunpack.c.l.b16 %v9412
    %v9585 = vunpack.c.h.b16 %v9412
    %v9586 = vunpack.c.l.b16 %v9413
    %v9587 = vunpack.c.h.b16 %v9413
    %v9588 = vunpack.c.l.b16 %v9414
    %v9589 = vunpack.c.h.b16 %v9414
    %v9590 = vunpack.c.l.b16 %v9415
    %v9591 = vunpack.c.h.b16 %v9415
    %v9592 = vunpack.c.l.b16 %v9416
    %v9593 = vunpack.c.h.b16 %v9416
    %v9594 = vunpack.c.l.b16 %v9417
    %v9595 = vunpack.c.h.b16 %v9417
    %v9596 = vunpack.c.l.b16 %v9418
    %v9597 = vunpack.c.h.b16 %v9418
    %v9598 = vunpack.c.l.b16 %v9419
    %v9599 = vunpack.c.h.b16 %v9419
    %v9600 = vunpack.c.l.b16 %v9420
    %v9601 = vunpack.c.h.b16 %v9420
    %v9602 = vunpack.c.l.b16 %v9421
    %v9603 = vunpack.c.h.b16 %v9421
    %v9604 = vunpack.c.l.b16 %v9422
    %v9605 = vunpack.c.h.b16 %v9422
    %v9606 = vunpack.c.l.b16 %v9423
    %v9607 = vunpack.c.h.b16 %v9423
    %v9608 = vunpack.c.l.b16 %v9424
    %v9609 = vunpack.c.h.b16 %v9424
    %v9610 = vunpack.c.l.b16 %v9425
    %v9611 = vunpack.c.h.b16 %v9425
    %v9612 = vunpack.c.l.b16 %v9426
    %v9613 = vunpack.c.h.b16 %v9426
    %v9614 = vunpack.c.l.b16 %v9427
    %v9615 = vunpack.c.h.b16 %v9427
    %v9616 = vunpack.c.l.b16 %v9428
    %v9617 = vunpack.c.h.b16 %v9428
    %v9618 = vunpack.c.l.b16 %v9429
    %v9619 = vunpack.c.h.b16 %v9429
    %v9620 = vunpack.c.l.b16 %v9430
    %v9621 = vunpack.c.h.b16 %v9430
    %v9622 = vunpack.c.l.b16 %v9431
    %v9623 = vunpack.c.h.b16 %v9431
    %v9624 = vunpack.c.l.b16 %v9432
    %v9625 = vunpack.c.h.b16 %v9432
    %v9626 = vunpack.c.l.b16 %v9433
    %v9627 = vunpack.c.h.b16 %v9433
    %v9628 = vunpack.c.l.b16 %v9434
    %v9629 = vunpack.c.h.b16 %v9434
    %v9630 = vunpack.c.l.b16 %v9435
    %v9631 = vunpack.c.h.b16 %v9435
    %v9632 = vunpack.c.l.b16 %v9436
    %v9633 = vunpack.c.h.b16 %v9436
    %v9634 = vunpack.c.l.b16 %v9437
    %v9635 = vunpack.c.h.b16 %v9437
    %v9636 = vunpack.c.l.b16 %v9438
    %v9637 = vunpack.c.h.b16 %v9438
    %v9638 = vunpack.c.l.b16 %v9439
    %v9639 = vunpack.c.h.b16 %v9439
    %v9640 = vunpack.c.l.b16 %v9440
    %v9641 = vunpack.c.h.b16 %v9440
    %v9642 = vunpack.c.l.b16 %v9441
    %v9643 = vunpack.c.h.b16 %v9441
    %v9644 = vunpack.c.l.b16 %v9442
    %v9645 = vunpack.c.h.b16 %v9442
    %v9646 = vunpack.c.l.b16 %v9443
    %v9647 = vunpack.c.h.b16 %v9443
    %v9648 = vunpack.c.l.b16 %v9444
    %v9649 = vunpack.c.h.b16 %v9444
    %v9650 = vunpack.c.l.b16 %v9445
    %v9651 = vunpack.c.h.b16 %v9445
    %v9652 = vunpack.c.l.b16 %v9446
    %v9653 = vunpack.c.h.b16 %v9446
    %v9654 = vunpack.c.l.b16 %v9447
    %v9655 = vunpack.c.h.b16 %v9447
    %v9656 = vunpack.c.l.b16 %v9448
    %v9657 = vunpack.c.h.b16 %v9448
    %v9658 = vunpack.c.l.b16 %v9449
    %v9659 = vunpack.c.h.b16 %v9449
    %v9660 = vunpack.c.l.b16 %v9450
    %v9661 = vunpack.c.h.b16 %v9450
    %v9662 = vunpack.c.l.b16 %v9451
    %v9663 = vunpack.c.h.b16 %v9451
    %v9664 = vunpack.c.l.b16 %v9452
    %v9665 = vunpack.c.h.b16 %v9452
    %v9666 = vunpack.c.l.b16 %v9453
    %v9667 = vunpack.c.h.b16 %v9453
    %v9668 = vpack.c.b16 %v9544, %v9540
    %v9669 = vpack.c.b16 %v9545, %v9541
    %v9670 = vpack.c.b16 %v9546, %v9542
    %v9671 = vpack.c.b16 %v9547, %v9543
    %v9672 = vpack.c.b16 %v9552, %v9548
    %v9673 = vpack.c.b16 %v9553, %v9549
    %v9674 = vpack.c.b16 %v9554, %v9550
    %v9675 = vpack.c.b16 %v9555, %v9551
    %v9676 = vpack.c.b16 %v9560, %v9556
    %v9677 = vpack.c.b16 %v9561, %v9557
    %v9678 = vpack.c.b16 %v9562, %v9558
    %v9679 = vpack.c.b16 %v9563, %v9559
    %v9680 = vpack.c.b16 %v9568, %v9564
    %v9681 = vpack.c.b16 %v9569, %v9565
    %v9682 = vpack.c.b16 %v9570, %v9566
    %v9683 = vpack.c.b16 %v9571, %v9567
    %v9684 = vpack.c.b16 %v9576, %v9572
    %v9685 = vpack.c.b16 %v9577, %v9573
    %v9686 = vpack.c.b16 %v9578, %v9574
    %v9687 = vpack.c.b16 %v9579, %v9575
    %v9688 = vpack.c.b16 %v9584, %v9580
    %v9689 = vpack.c.b16 %v9585, %v9581
    %v9690 = vpack.c.b16 %v9586, %v9582
    %v9691 = vpack.c.b16 %v9587, %v9583
    %v9692 = vpack.c.b16 %v9592, %v9588
    %v9693 = vpack.c.b16 %v9593, %v9589
    %v9694 = vpack.c.b16 %v9594, %v9590
    %v9695 = vpack.c.b16 %v9595, %v9591
    %v9696 = vpack.c.b16 %v9600, %v9596
    %v9697 = vpack.c.b16 %v9601, %v9597
    %v9698 = vpack.c.b16 %v9602, %v9598
    %v9699 = vpack.c.b16 %v9603, %v9599
    %v9700 = vpack.c.b16 %v9608, %v9604
    %v9701 = vpack.c.b16 %v9609, %v9605
    %v9702 = vpack.c.b16 %v9610, %v9606
    %v9703 = vpack.c.b16 %v9611, %v9607
    %v9704 = vpack.c.b16 %v9616, %v9612
    %v9705 = vpack.c.b16 %v9617, %v9613
    %v9706 = vpack.c.b16 %v9618, %v9614
    %v9707 = vpack.c.b16 %v9619, %v9615
    %v9708 = vpack.c.b16 %v9624, %v9620
    %v9709 = vpack.c.b16 %v9625, %v9621
    %v9710 = vpack.c.b16 %v9626, %v9622
    %v9711 = vpack.c.b16 %v9627, %v9623
    %v9712 = vpack.c.b16 %v9632, %v9628
    %v9713 = vpack.c.b16 %v9633, %v9629
    %v9714 = vpack.c.b16 %v9634, %v9630
    %v9715 = vpack.c.b16 %v9635, %v9631
    %v9716 = vpack.c.b16 %v9640, %v9636
    %v9717 = vpack.c.b16 %v9641, %v9637
    %v9718 = vpack.c.b16 %v9642, %v9638
    %v9719 = vpack.c.b16 %v9643, %v9639
    %v9720 = vpack.c.b16 %v9648, %v9644
    %v9721 = vpack.c.b16 %v9649, %v9645
    %v9722 = vpack.c.b16 %v9650, %v9646
    %v9723 = vpack.c.b16 %v9651, %v9647
    %v9724 = vpack.c.b16 %v9656, %v9652
    %v9725 = vpack.c.b16 %v9657, %v9653
    %v9726 = vpack.c.b16 %v9658, %v9654
    %v9727 = vpack.c.b16 %v9659, %v9655
    %v9728 = vpack.c.b16 %v9664, %v9660
    %v9729 = vpack.c.b16 %v9665, %v9661
    %v9730 = vpack.c.b16 %v9666, %v9662
    %v9731 = vpack.c.b16 %v9667, %v9663
    %9796 = vmatprep.subr.bf16.mxu0 %v9669
    %9797 = vmatpush1.bf16.msra.mxu0 %v9668
    %9798 = vmatprep.subr.bf16.mxu0 %v9673
    %9799 = vmatpush1.bf16.msra.mxu0 %v9672
    %9800 = vmatprep.subr.bf16.mxu0 %v9677
    %9801 = vmatpush1.bf16.msra.mxu0 %v9676
    %9802 = vmatprep.subr.bf16.mxu0 %v9681
    %9803 = vmatpush1.bf16.msra.mxu0 %v9680
    %9804 = vmatprep.subr.bf16.mxu0 %v9685
    %9805 = vmatpush1.bf16.msra.mxu0 %v9684
    %9806 = vmatprep.subr.bf16.mxu0 %v9689
    %9807 = vmatpush1.bf16.msra.mxu0 %v9688
    %9808 = vmatprep.subr.bf16.mxu0 %v9693
    %9809 = vmatpush1.bf16.msra.mxu0 %v9692
    %9810 = vmatprep.subr.bf16.mxu0 %v9697
    %9811 = vmatpush1.bf16.msra.mxu0 %v9696
    %9812 = vmatprep.subr.bf16.mxu0 %v9701
    %9813 = vmatpush1.bf16.msra.mxu0 %v9700
    %9814 = vmatprep.subr.bf16.mxu0 %v9705
    %9815 = vmatpush1.bf16.msra.mxu0 %v9704
    %9816 = vmatprep.subr.bf16.mxu0 %v9709
    %9817 = vmatpush1.bf16.msra.mxu0 %v9708
    %9818 = vmatprep.subr.bf16.mxu0 %v9713
    %9819 = vmatpush1.bf16.msra.mxu0 %v9712
    %9820 = vmatprep.subr.bf16.mxu0 %v9717
    %9821 = vmatpush1.bf16.msra.mxu0 %v9716
    %9822 = vmatprep.subr.bf16.mxu0 %v9721
    %9823 = vmatpush1.bf16.msra.mxu0 %v9720
    %9824 = vmatprep.subr.bf16.mxu0 %v9725
    %9825 = vmatpush1.bf16.msra.mxu0 %v9724
    %9826 = vmatprep.subr.bf16.mxu0 %v9729
    %9827 = vmatpush1.bf16.msra.mxu0 %v9728
    %9828 = vmatprep.mubr.bf16.mxu0 %v8648
    %9829 = vmatmul.mubr.bf16.gmra.mrb[0].mxu0 %v9389
    %v9830 = vpop.f32.mrb[0].mxu0
    %v9831 = vadd.f32 %v9459, %v9830
    %v9832 = vpop.f32.mrb[0].mxu0
    %v9833 = vadd.f32 %v9463, %v9832
    %v9834 = vpop.f32.mrb[0].mxu0
    %v9835 = vpop.f32.mrb[0].mxu0
    %9836 = vdwg.mxu0
    %9837 = vmatprep.subr.bf16.mxu0 %v9671
    %9838 = vmatpush1.bf16.msra.mxu0 %v9670
    %9839 = vmatprep.subr.bf16.mxu0 %v9675
    %9840 = vmatpush1.bf16.msra.mxu0 %v9674
    %9841 = vmatprep.subr.bf16.mxu0 %v9679
    %9842 = vmatpush1.bf16.msra.mxu0 %v9678
    %9843 = vmatprep.subr.bf16.mxu0 %v9683
    %9844 = vmatpush1.bf16.msra.mxu0 %v9682
    %9845 = vmatprep.subr.bf16.mxu0 %v9687
    %9846 = vmatpush1.bf16.msra.mxu0 %v9686
    %9847 = vmatprep.subr.bf16.mxu0 %v9691
    %9848 = vmatpush1.bf16.msra.mxu0 %v9690
    %9849 = vmatprep.subr.bf16.mxu0 %v9695
    %9850 = vmatpush1.bf16.msra.mxu0 %v9694
    %9851 = vmatprep.subr.bf16.mxu0 %v9699
    %9852 = vmatpush1.bf16.msra.mxu0 %v9698
    %9853 = vmatprep.subr.bf16.mxu0 %v9703
    %9854 = vmatpush1.bf16.msra.mxu0 %v9702
    %9855 = vmatprep.subr.bf16.mxu0 %v9707
    %9856 = vmatpush1.bf16.msra.mxu0 %v9706
    %9857 = vmatprep.subr.bf16.mxu0 %v9711
    %9858 = vmatpush1.bf16.msra.mxu0 %v9710
    %9859 = vmatprep.subr.bf16.mxu0 %v9715
    %9860 = vmatpush1.bf16.msra.mxu0 %v9714
    %9861 = vmatprep.subr.bf16.mxu0 %v9719
    %9862 = vmatpush1.bf16.msra.mxu0 %v9718
    %9863 = vmatprep.subr.bf16.mxu0 %v9723
    %9864 = vmatpush1.bf16.msra.mxu0 %v9722
    %9865 = vmatprep.subr.bf16.mxu0 %v9727
    %9866 = vmatpush1.bf16.msra.mxu0 %v9726
    %9867 = vmatprep.subr.bf16.mxu0 %v9731
    %9868 = vmatpush1.bf16.msra.mxu0 %v9730
    %9869 = vmatprep.mubr.bf16.mxu0 %v8648
    %9870 = vmatmul.mubr.bf16.gmra.mrb[0].mxu0 %v9389
    %v9871 = vpop.f32.mrb[0].mxu0
    %v9872 = vadd.f32 %v9467, %v9871
    %v9873 = vpop.f32.mrb[0].mxu0
    %v9874 = vadd.f32 %v9471, %v9873
    %v9875 = vpop.f32.mrb[0].mxu0
    %v9876 = vpop.f32.mrb[0].mxu0
    %9877 = vdwg.mxu0
    %v9878 = vxor.u32 %v9831, 2147483648
    %v9879 = vmul.f32 %v9878, 1.442695
    %v9880 = vpow.pop %v9879
    %v9881 = vadd.f32 %v9880, 1.0
    %v9882 = vrcp.pop %v9881
    %v9883 = vmul.f32 1.0, %v9882
    %v9884 = vxor.u32 %v9833, 2147483648
    %v9885 = vmul.f32 %v9884, 1.442695
    %v9886 = vpow.pop %v9885
    %v9887 = vadd.f32 %v9886, 1.0
    %v9888 = vrcp.pop %v9887
    %v9889 = vmul.f32 1.0, %v9888
    %v9890 = vtanh.pop %v9872
    %v9891 = vxor.u32 %v9874, 2147483648
    %v9892 = vmul.f32 %v9891, 1.442695
    %v9893 = vpow.pop %v9892
    %v9894 = vadd.f32 %v9893, 1.0
    %v9895 = vrcp.pop %v9894
    %v9896 = vmul.f32 1.0, %v9895
    %v9897 = vmul.f32 %v9889, %v8645
    %v9898 = vmul.f32 %v9883, %v9890
    %v9899 = vadd.f32 %v9897, %v9898
    %v9900 = vtanh.pop %v9899
    %v9901 = vmul.f32 %v9896, %v9900
    %v9902 = vpack.c.bf16 %v9901, %v9901
    %v9903 = vld [vmem:[%s6] sm:$0xf]
    %v9904 = vld [vmem:[%s6 + $0x4] sm:$0xf]
    %v9905 = vld [vmem:[%s6 + $0x8] sm:$0xf]
    %v9906 = vld [vmem:[%s6 + $0xc] sm:$0xf]
    %v9907 = vld [vmem:[%s6 + $0x10] sm:$0xf]
    %v9908 = vld [vmem:[%s6 + $0x14] sm:$0xf]
    %v9909 = vld [vmem:[%s6 + $0x18] sm:$0xf]
    %v9910 = vld [vmem:[%s6 + $0x1c] sm:$0xf]
    %v9911 = vld [vmem:[%s6 + $0x20] sm:$0xf]
    %v9912 = vld [vmem:[%s6 + $0x24] sm:$0xf]
    %v9913 = vld [vmem:[%s6 + $0x28] sm:$0xf]
    %v9914 = vld [vmem:[%s6 + $0x2c] sm:$0xf]
    %v9915 = vld [vmem:[%s6 + $0x30] sm:$0xf]
    %v9916 = vld [vmem:[%s6 + $0x34] sm:$0xf]
    %v9917 = vld [vmem:[%s6 + $0x38] sm:$0xf]
    %v9918 = vld [vmem:[%s6 + $0x3c] sm:$0xf]
    %v9919 = vld [vmem:[%s7] sm:$0x1]
    %v9921 = vlaneseq
    %v9922 = vshrl.u32 %v9921, 7
    %v9923 = vsub.s32 0, %v9922
    %v9924 = vrot.slane %v9919, %v9923
    %v9942 = vunpack.c.l.b16 %v9903
    %v9943 = vunpack.c.l.b16 %v9904
    %v9944 = vunpack.c.l.b16 %v9905
    %v9945 = vunpack.c.l.b16 %v9906
    %v9946 = vunpack.c.l.b16 %v9907
    %v9947 = vunpack.c.l.b16 %v9908
    %v9948 = vunpack.c.l.b16 %v9909
    %v9949 = vunpack.c.l.b16 %v9910
    %v9950 = vunpack.c.l.b16 %v9911
    %v9951 = vunpack.c.l.b16 %v9912
    %v9952 = vunpack.c.l.b16 %v9913
    %v9953 = vunpack.c.l.b16 %v9914
    %v9954 = vunpack.c.l.b16 %v9915
    %v9955 = vunpack.c.l.b16 %v9916
    %v9956 = vunpack.c.l.b16 %v9917
    %v9957 = vunpack.c.l.b16 %v9918
    %v9958 = vpack.c.b16 %v9943, %v9942
    %v9959 = vpack.c.b16 %v9945, %v9944
    %v9960 = vpack.c.b16 %v9947, %v9946
    %v9961 = vpack.c.b16 %v9949, %v9948
    %v9962 = vpack.c.b16 %v9951, %v9950
    %v9963 = vpack.c.b16 %v9953, %v9952
    %v9964 = vpack.c.b16 %v9955, %v9954
    %v9965 = vpack.c.b16 %v9957, %v9956
    %9974 = vmatprep.subr.bf16.mxu0 0
    %9975 = vmatpush1.bf16.msra.mxu0 %v9958
    %9976 = vmatprep.subr.bf16.mxu0 0
    %9977 = vmatpush1.bf16.msra.mxu0 %v9959
    %9978 = vmatprep.subr.bf16.mxu0 0
    %9979 = vmatpush1.bf16.msra.mxu0 %v9960
    %9980 = vmatprep.subr.bf16.mxu0 0
    %9981 = vmatpush1.bf16.msra.mxu0 %v9961
    %9982 = vmatprep.subr.bf16.mxu0 0
    %9983 = vmatpush1.bf16.msra.mxu0 %v9962
    %9984 = vmatprep.subr.bf16.mxu0 0
    %9985 = vmatpush1.bf16.msra.mxu0 %v9963
    %9986 = vmatprep.subr.bf16.mxu0 0
    %9987 = vmatpush1.bf16.msra.mxu0 %v9964
    %9988 = vmatprep.subr.bf16.mxu0 0
    %9989 = vmatpush1.bf16.msra.mxu0 %v9965
    %9990 = vmatprep.subr.bf16.mxu0 0
    %9991 = vmatpush1.bf16.msra.mxu0 0
    %9992 = vmatprep.subr.bf16.mxu0 0
    %9993 = vmatpush1.bf16.msra.mxu0 0
    %9994 = vmatprep.subr.bf16.mxu0 0
    %9995 = vmatpush1.bf16.msra.mxu0 0
    %9996 = vmatprep.subr.bf16.mxu0 0
    %9997 = vmatpush1.bf16.msra.mxu0 0
    %9998 = vmatprep.subr.bf16.mxu0 0
    %9999 = vmatpush1.bf16.msra.mxu0 0
    %10000 = vmatprep.subr.bf16.mxu0 0
    %10001 = vmatpush1.bf16.msra.mxu0 0
    %10002 = vmatprep.subr.bf16.mxu0 0
    %10003 = vmatpush1.bf16.msra.mxu0 0
    %10004 = vmatprep.subr.bf16.mxu0 0
    %10005 = vmatpush1.bf16.msra.mxu0 0
    %10006 = vmatprep.mubr.bf16.mxu0 0
    %10007 = vmatmul.mubr.bf16.gmra.mrb[0].mxu0 %v9902
    %v10008 = vpop.f32.mrb[0].mxu0
    %v10009 = vadd.f32 %v9924, %v10008
    %v10010 = vpop.f32.mrb[0].mxu0
    %v10011 = vpop.f32.mrb[0].mxu0
    %v10012 = vpop.f32.mrb[0].mxu0
    %10013 = vdwg.mxu0
    %s10014 = scalar_lea.vmem %s9, 40
    %10015 = vst [vmem:[%s10014] sm:$0xff] %v10009
    %10016 = vmax.xlane.f32.xlu0 %v10009
    %v10017 = vpop.xlane.xlu0 %10016
    %vm10018 = vcmp.eq.f32.partialorder %v10009, %v10017
    %v10019 = vsel %vm10018, %v3745, 128.0
    %10020 = vmin.xlane.f32.xlu0 %v10019
    %v10021 = vpop.xlane.xlu0 %10020
    %vm10022 = vcmp.eq.f32.partialorder %v3745, %v10021
    %v10023 = vsel %vm10022, 1, 0
    %v10024 = vcvt.s32.f32 %v10023
    %v10025 = vpack.c.bf16 %v10024, %v10024
    %v10026 = vld [vmem:[%s8] sm:$0xf]
    %v10027 = vld [vmem:[%s8 + $0x4] sm:$0xf]
    %v10028 = vld [vmem:[%s8 + $0x8] sm:$0xf]
    %v10029 = vld [vmem:[%s8 + $0xc] sm:$0xf]
    %v10030 = vld [vmem:[%s8 + $0x10] sm:$0xf]
    %v10031 = vld [vmem:[%s8 + $0x14] sm:$0xf]
    %v10032 = vld [vmem:[%s8 + $0x18] sm:$0xf]
    %v10033 = vld [vmem:[%s8 + $0x1c] sm:$0xf]
    %v10034 = vld [vmem:[%s8 + $0x20] sm:$0xf]
    %v10035 = vld [vmem:[%s8 + $0x24] sm:$0xf]
    %v10036 = vld [vmem:[%s8 + $0x28] sm:$0xf]
    %v10037 = vld [vmem:[%s8 + $0x2c] sm:$0xf]
    %v10038 = vld [vmem:[%s8 + $0x30] sm:$0xf]
    %v10039 = vld [vmem:[%s8 + $0x34] sm:$0xf]
    %v10040 = vld [vmem:[%s8 + $0x38] sm:$0xf]
    %v10041 = vld [vmem:[%s8 + $0x3c] sm:$0xf]
    %v10058 = vunpack.c.l.b16 %v10026
    %v10059 = vunpack.c.l.b16 %v10027
    %v10060 = vunpack.c.l.b16 %v10028
    %v10061 = vunpack.c.l.b16 %v10029
    %v10062 = vunpack.c.l.b16 %v10030
    %v10063 = vunpack.c.l.b16 %v10031
    %v10064 = vunpack.c.l.b16 %v10032
    %v10065 = vunpack.c.l.b16 %v10033
    %v10066 = vunpack.c.l.b16 %v10034
    %v10067 = vunpack.c.l.b16 %v10035
    %v10068 = vunpack.c.l.b16 %v10036
    %v10069 = vunpack.c.l.b16 %v10037
    %v10070 = vunpack.c.l.b16 %v10038
    %v10071 = vunpack.c.l.b16 %v10039
    %v10072 = vunpack.c.l.b16 %v10040
    %v10073 = vunpack.c.l.b16 %v10041
    %v10074 = vpack.c.b16 %v10059, %v10058
    %v10075 = vpack.c.b16 %v10061, %v10060
    %v10076 = vpack.c.b16 %v10063, %v10062
    %v10077 = vpack.c.b16 %v10065, %v10064
    %v10078 = vpack.c.b16 %v10067, %v10066
    %v10079 = vpack.c.b16 %v10069, %v10068
    %v10080 = vpack.c.b16 %v10071, %v10070
    %v10081 = vpack.c.b16 %v10073, %v10072
    %10090 = vmatprep.subr.bf16.mxu0 0
    %10091 = vmatpush1.bf16.msra.mxu0 %v10074
    %10092 = vmatprep.subr.bf16.mxu0 0
    %10093 = vmatpush1.bf16.msra.mxu0 %v10075
    %10094 = vmatprep.subr.bf16.mxu0 0
    %10095 = vmatpush1.bf16.msra.mxu0 %v10076
    %10096 = vmatprep.subr.bf16.mxu0 0
    %10097 = vmatpush1.bf16.msra.mxu0 %v10077
    %10098 = vmatprep.subr.bf16.mxu0 0
    %10099 = vmatpush1.bf16.msra.mxu0 %v10078
    %10100 = vmatprep.subr.bf16.mxu0 0
    %10101 = vmatpush1.bf16.msra.mxu0 %v10079
    %10102 = vmatprep.subr.bf16.mxu0 0
    %10103 = vmatpush1.bf16.msra.mxu0 %v10080
    %10104 = vmatprep.subr.bf16.mxu0 0
    %10105 = vmatpush1.bf16.msra.mxu0 %v10081
    %10106 = vmatprep.subr.bf16.mxu0 0
    %10107 = vmatpush1.bf16.msra.mxu0 0
    %10108 = vmatprep.subr.bf16.mxu0 0
    %10109 = vmatpush1.bf16.msra.mxu0 0
    %10110 = vmatprep.subr.bf16.mxu0 0
    %10111 = vmatpush1.bf16.msra.mxu0 0
    %10112 = vmatprep.subr.bf16.mxu0 0
    %10113 = vmatpush1.bf16.msra.mxu0 0
    %10114 = vmatprep.subr.bf16.mxu0 0
    %10115 = vmatpush1.bf16.msra.mxu0 0
    %10116 = vmatprep.subr.bf16.mxu0 0
    %10117 = vmatpush1.bf16.msra.mxu0 0
    %10118 = vmatprep.subr.bf16.mxu0 0
    %10119 = vmatpush1.bf16.msra.mxu0 0
    %10120 = vmatprep.subr.bf16.mxu0 0
    %10121 = vmatpush1.bf16.msra.mxu0 0
    %10122 = vmatprep.mubr.bf16.mxu0 0
    %10123 = vmatmul.mubr.bf16.gmra.mrb[0].mxu0 %v10025
    %v10124 = vpop.f32.mrb[0].mxu0
    %v10125 = vadd.f32 0.0, %v10124
    %v10126 = vpop.f32.mrb[0].mxu0
    %v10127 = vpop.f32.mrb[0].mxu0
    %v10128 = vpop.f32.mrb[0].mxu0
    %10129 = vdwg.mxu0
    %v10130 = vpack.c.bf16 %v10125, %v10125
    %v10131 = vld [vmem:[#allocation4] sm:$0xff]
    %v10132 = vld [vmem:[#allocation4 + $0x8] sm:$0xff]
    %v10133 = vld [vmem:[#allocation4 + $0x10] sm:$0xff]
    %v10134 = vld [vmem:[#allocation4 + $0x18] sm:$0xff]
    %v10135 = vld [vmem:[#allocation4 + $0x20] sm:$0xff]
    %v10136 = vld [vmem:[#allocation4 + $0x28] sm:$0xff]
    %v10137 = vld [vmem:[#allocation4 + $0x30] sm:$0xff]
    %v10138 = vld [vmem:[#allocation4 + $0x38] sm:$0xff]
    %v10139 = vld [vmem:[#allocation4 + $0x40] sm:$0xff]
    %v10140 = vld [vmem:[#allocation4 + $0x48] sm:$0xff]
    %v10141 = vld [vmem:[#allocation4 + $0x50] sm:$0xff]
    %v10142 = vld [vmem:[#allocation4 + $0x58] sm:$0xff]
    %v10143 = vld [vmem:[#allocation4 + $0x60] sm:$0xff]
    %v10144 = vld [vmem:[#allocation4 + $0x68] sm:$0xff]
    %v10145 = vld [vmem:[#allocation4 + $0x70] sm:$0xff]
    %v10146 = vld [vmem:[#allocation4 + $0x78] sm:$0xff]
    %v10147 = vld [vmem:[#allocation4 + $0x80] sm:$0xff]
    %v10148 = vld [vmem:[#allocation4 + $0x88] sm:$0xff]
    %v10149 = vld [vmem:[#allocation4 + $0x90] sm:$0xff]
    %v10150 = vld [vmem:[#allocation4 + $0x98] sm:$0xff]
    %v10151 = vld [vmem:[#allocation4 + $0xa0] sm:$0xff]
    %v10152 = vld [vmem:[#allocation4 + $0xa8] sm:$0xff]
    %v10153 = vld [vmem:[#allocation4 + $0xb0] sm:$0xff]
    %v10154 = vld [vmem:[#allocation4 + $0xb8] sm:$0xff]
    %v10155 = vld [vmem:[#allocation4 + $0xc0] sm:$0xff]
    %v10156 = vld [vmem:[#allocation4 + $0xc8] sm:$0xff]
    %v10157 = vld [vmem:[#allocation4 + $0xd0] sm:$0xff]
    %v10158 = vld [vmem:[#allocation4 + $0xd8] sm:$0xff]
    %v10159 = vld [vmem:[#allocation4 + $0xe0] sm:$0xff]
    %v10160 = vld [vmem:[#allocation4 + $0xe8] sm:$0xff]
    %v10161 = vld [vmem:[#allocation4 + $0xf0] sm:$0xff]
    %v10162 = vld [vmem:[#allocation4 + $0xf8] sm:$0xff]
    %v10163 = vld [vmem:[#allocation4 + $0x100] sm:$0xff]
    %v10164 = vld [vmem:[#allocation4 + $0x108] sm:$0xff]
    %v10165 = vld [vmem:[#allocation4 + $0x110] sm:$0xff]
    %v10166 = vld [vmem:[#allocation4 + $0x118] sm:$0xff]
    %v10167 = vld [vmem:[#allocation4 + $0x120] sm:$0xff]
    %v10168 = vld [vmem:[#allocation4 + $0x128] sm:$0xff]
    %v10169 = vld [vmem:[#allocation4 + $0x130] sm:$0xff]
    %v10170 = vld [vmem:[#allocation4 + $0x138] sm:$0xff]
    %v10171 = vld [vmem:[#allocation4 + $0x140] sm:$0xff]
    %v10172 = vld [vmem:[#allocation4 + $0x148] sm:$0xff]
    %v10173 = vld [vmem:[#allocation4 + $0x150] sm:$0xff]
    %v10174 = vld [vmem:[#allocation4 + $0x158] sm:$0xff]
    %v10175 = vld [vmem:[#allocation4 + $0x160] sm:$0xff]
    %v10176 = vld [vmem:[#allocation4 + $0x168] sm:$0xff]
    %v10177 = vld [vmem:[#allocation4 + $0x170] sm:$0xff]
    %v10178 = vld [vmem:[#allocation4 + $0x178] sm:$0xff]
    %v10179 = vld [vmem:[#allocation4 + $0x180] sm:$0xff]
    %v10180 = vld [vmem:[#allocation4 + $0x188] sm:$0xff]
    %v10181 = vld [vmem:[#allocation4 + $0x190] sm:$0xff]
    %v10182 = vld [vmem:[#allocation4 + $0x198] sm:$0xff]
    %v10183 = vld [vmem:[#allocation4 + $0x1a0] sm:$0xff]
    %v10184 = vld [vmem:[#allocation4 + $0x1a8] sm:$0xff]
    %v10185 = vld [vmem:[#allocation4 + $0x1b0] sm:$0xff]
    %v10186 = vld [vmem:[#allocation4 + $0x1b8] sm:$0xff]
    %v10187 = vld [vmem:[#allocation4 + $0x1c0] sm:$0xff]
    %v10188 = vld [vmem:[#allocation4 + $0x1c8] sm:$0xff]
    %v10189 = vld [vmem:[#allocation4 + $0x1d0] sm:$0xff]
    %v10190 = vld [vmem:[#allocation4 + $0x1d8] sm:$0xff]
    %v10191 = vld [vmem:[#allocation4 + $0x1e0] sm:$0xff]
    %v10192 = vld [vmem:[#allocation4 + $0x1e8] sm:$0xff]
    %v10193 = vld [vmem:[#allocation4 + $0x1f0] sm:$0xff]
    %v10194 = vld [vmem:[#allocation4 + $0x1f8] sm:$0xff]
    %v10195 = vld [vmem:[%s5] sm:$0xf]
    %v10197 = vlaneseq
    %v10198 = vshrl.u32 %v10197, 7
    %v10199 = vsub.s32 0, %v10198
    %v10200 = vrot.slane %v10195, %v10199
    %v10201 = vlaneseq
    %v10202 = vshrl.u32 %v10201, 7
    %v10203 = vsub.s32 1, %v10202
    %v10204 = vrot.slane %v10195, %v10203
    %v10205 = vlaneseq
    %v10206 = vshrl.u32 %v10205, 7
    %v10207 = vsub.s32 2, %v10206
    %v10208 = vrot.slane %v10195, %v10207
    %v10209 = vlaneseq
    %v10210 = vshrl.u32 %v10209, 7
    %v10211 = vsub.s32 3, %v10210
    %v10212 = vrot.slane %v10195, %v10211
    %v10281 = vunpack.c.l.b16 %v10131
    %v10282 = vunpack.c.h.b16 %v10131
    %v10283 = vunpack.c.l.b16 %v10132
    %v10284 = vunpack.c.h.b16 %v10132
    %v10285 = vunpack.c.l.b16 %v10133
    %v10286 = vunpack.c.h.b16 %v10133
    %v10287 = vunpack.c.l.b16 %v10134
    %v10288 = vunpack.c.h.b16 %v10134
    %v10289 = vunpack.c.l.b16 %v10135
    %v10290 = vunpack.c.h.b16 %v10135
    %v10291 = vunpack.c.l.b16 %v10136
    %v10292 = vunpack.c.h.b16 %v10136
    %v10293 = vunpack.c.l.b16 %v10137
    %v10294 = vunpack.c.h.b16 %v10137
    %v10295 = vunpack.c.l.b16 %v10138
    %v10296 = vunpack.c.h.b16 %v10138
    %v10297 = vunpack.c.l.b16 %v10139
    %v10298 = vunpack.c.h.b16 %v10139
    %v10299 = vunpack.c.l.b16 %v10140
    %v10300 = vunpack.c.h.b16 %v10140
    %v10301 = vunpack.c.l.b16 %v10141
    %v10302 = vunpack.c.h.b16 %v10141
    %v10303 = vunpack.c.l.b16 %v10142
    %v10304 = vunpack.c.h.b16 %v10142
    %v10305 = vunpack.c.l.b16 %v10143
    %v10306 = vunpack.c.h.b16 %v10143
    %v10307 = vunpack.c.l.b16 %v10144
    %v10308 = vunpack.c.h.b16 %v10144
    %v10309 = vunpack.c.l.b16 %v10145
    %v10310 = vunpack.c.h.b16 %v10145
    %v10311 = vunpack.c.l.b16 %v10146
    %v10312 = vunpack.c.h.b16 %v10146
    %v10313 = vunpack.c.l.b16 %v10147
    %v10314 = vunpack.c.h.b16 %v10147
    %v10315 = vunpack.c.l.b16 %v10148
    %v10316 = vunpack.c.h.b16 %v10148
    %v10317 = vunpack.c.l.b16 %v10149
    %v10318 = vunpack.c.h.b16 %v10149
    %v10319 = vunpack.c.l.b16 %v10150
    %v10320 = vunpack.c.h.b16 %v10150
    %v10321 = vunpack.c.l.b16 %v10151
    %v10322 = vunpack.c.h.b16 %v10151
    %v10323 = vunpack.c.l.b16 %v10152
    %v10324 = vunpack.c.h.b16 %v10152
    %v10325 = vunpack.c.l.b16 %v10153
    %v10326 = vunpack.c.h.b16 %v10153
    %v10327 = vunpack.c.l.b16 %v10154
    %v10328 = vunpack.c.h.b16 %v10154
    %v10329 = vunpack.c.l.b16 %v10155
    %v10330 = vunpack.c.h.b16 %v10155
    %v10331 = vunpack.c.l.b16 %v10156
    %v10332 = vunpack.c.h.b16 %v10156
    %v10333 = vunpack.c.l.b16 %v10157
    %v10334 = vunpack.c.h.b16 %v10157
    %v10335 = vunpack.c.l.b16 %v10158
    %v10336 = vunpack.c.h.b16 %v10158
    %v10337 = vunpack.c.l.b16 %v10159
    %v10338 = vunpack.c.h.b16 %v10159
    %v10339 = vunpack.c.l.b16 %v10160
    %v10340 = vunpack.c.h.b16 %v10160
    %v10341 = vunpack.c.l.b16 %v10161
    %v10342 = vunpack.c.h.b16 %v10161
    %v10343 = vunpack.c.l.b16 %v10162
    %v10344 = vunpack.c.h.b16 %v10162
    %v10345 = vunpack.c.l.b16 %v10163
    %v10346 = vunpack.c.h.b16 %v10163
    %v10347 = vunpack.c.l.b16 %v10164
    %v10348 = vunpack.c.h.b16 %v10164
    %v10349 = vunpack.c.l.b16 %v10165
    %v10350 = vunpack.c.h.b16 %v10165
    %v10351 = vunpack.c.l.b16 %v10166
    %v10352 = vunpack.c.h.b16 %v10166
    %v10353 = vunpack.c.l.b16 %v10167
    %v10354 = vunpack.c.h.b16 %v10167
    %v10355 = vunpack.c.l.b16 %v10168
    %v10356 = vunpack.c.h.b16 %v10168
    %v10357 = vunpack.c.l.b16 %v10169
    %v10358 = vunpack.c.h.b16 %v10169
    %v10359 = vunpack.c.l.b16 %v10170
    %v10360 = vunpack.c.h.b16 %v10170
    %v10361 = vunpack.c.l.b16 %v10171
    %v10362 = vunpack.c.h.b16 %v10171
    %v10363 = vunpack.c.l.b16 %v10172
    %v10364 = vunpack.c.h.b16 %v10172
    %v10365 = vunpack.c.l.b16 %v10173
    %v10366 = vunpack.c.h.b16 %v10173
    %v10367 = vunpack.c.l.b16 %v10174
    %v10368 = vunpack.c.h.b16 %v10174
    %v10369 = vunpack.c.l.b16 %v10175
    %v10370 = vunpack.c.h.b16 %v10175
    %v10371 = vunpack.c.l.b16 %v10176
    %v10372 = vunpack.c.h.b16 %v10176
    %v10373 = vunpack.c.l.b16 %v10177
    %v10374 = vunpack.c.h.b16 %v10177
    %v10375 = vunpack.c.l.b16 %v10178
    %v10376 = vunpack.c.h.b16 %v10178
    %v10377 = vunpack.c.l.b16 %v10179
    %v10378 = vunpack.c.h.b16 %v10179
    %v10379 = vunpack.c.l.b16 %v10180
    %v10380 = vunpack.c.h.b16 %v10180
    %v10381 = vunpack.c.l.b16 %v10181
    %v10382 = vunpack.c.h.b16 %v10181
    %v10383 = vunpack.c.l.b16 %v10182
    %v10384 = vunpack.c.h.b16 %v10182
    %v10385 = vunpack.c.l.b16 %v10183
    %v10386 = vunpack.c.h.b16 %v10183
    %v10387 = vunpack.c.l.b16 %v10184
    %v10388 = vunpack.c.h.b16 %v10184
    %v10389 = vunpack.c.l.b16 %v10185
    %v10390 = vunpack.c.h.b16 %v10185
    %v10391 = vunpack.c.l.b16 %v10186
    %v10392 = vunpack.c.h.b16 %v10186
    %v10393 = vunpack.c.l.b16 %v10187
    %v10394 = vunpack.c.h.b16 %v10187
    %v10395 = vunpack.c.l.b16 %v10188
    %v10396 = vunpack.c.h.b16 %v10188
    %v10397 = vunpack.c.l.b16 %v10189
    %v10398 = vunpack.c.h.b16 %v10189
    %v10399 = vunpack.c.l.b16 %v10190
    %v10400 = vunpack.c.h.b16 %v10190
    %v10401 = vunpack.c.l.b16 %v10191
    %v10402 = vunpack.c.h.b16 %v10191
    %v10403 = vunpack.c.l.b16 %v10192
    %v10404 = vunpack.c.h.b16 %v10192
    %v10405 = vunpack.c.l.b16 %v10193
    %v10406 = vunpack.c.h.b16 %v10193
    %v10407 = vunpack.c.l.b16 %v10194
    %v10408 = vunpack.c.h.b16 %v10194
    %v10409 = vpack.c.b16 %v10285, %v10281
    %v10410 = vpack.c.b16 %v10286, %v10282
    %v10411 = vpack.c.b16 %v10287, %v10283
    %v10412 = vpack.c.b16 %v10288, %v10284
    %v10413 = vpack.c.b16 %v10293, %v10289
    %v10414 = vpack.c.b16 %v10294, %v10290
    %v10415 = vpack.c.b16 %v10295, %v10291
    %v10416 = vpack.c.b16 %v10296, %v10292
    %v10417 = vpack.c.b16 %v10301, %v10297
    %v10418 = vpack.c.b16 %v10302, %v10298
    %v10419 = vpack.c.b16 %v10303, %v10299
    %v10420 = vpack.c.b16 %v10304, %v10300
    %v10421 = vpack.c.b16 %v10309, %v10305
    %v10422 = vpack.c.b16 %v10310, %v10306
    %v10423 = vpack.c.b16 %v10311, %v10307
    %v10424 = vpack.c.b16 %v10312, %v10308
    %v10425 = vpack.c.b16 %v10317, %v10313
    %v10426 = vpack.c.b16 %v10318, %v10314
    %v10427 = vpack.c.b16 %v10319, %v10315
    %v10428 = vpack.c.b16 %v10320, %v10316
    %v10429 = vpack.c.b16 %v10325, %v10321
    %v10430 = vpack.c.b16 %v10326, %v10322
    %v10431 = vpack.c.b16 %v10327, %v10323
    %v10432 = vpack.c.b16 %v10328, %v10324
    %v10433 = vpack.c.b16 %v10333, %v10329
    %v10434 = vpack.c.b16 %v10334, %v10330
    %v10435 = vpack.c.b16 %v10335, %v10331
    %v10436 = vpack.c.b16 %v10336, %v10332
    %v10437 = vpack.c.b16 %v10341, %v10337
    %v10438 = vpack.c.b16 %v10342, %v10338
    %v10439 = vpack.c.b16 %v10343, %v10339
    %v10440 = vpack.c.b16 %v10344, %v10340
    %v10441 = vpack.c.b16 %v10349, %v10345
    %v10442 = vpack.c.b16 %v10350, %v10346
    %v10443 = vpack.c.b16 %v10351, %v10347
    %v10444 = vpack.c.b16 %v10352, %v10348
    %v10445 = vpack.c.b16 %v10357, %v10353
    %v10446 = vpack.c.b16 %v10358, %v10354
    %v10447 = vpack.c.b16 %v10359, %v10355
    %v10448 = vpack.c.b16 %v10360, %v10356
    %v10449 = vpack.c.b16 %v10365, %v10361
    %v10450 = vpack.c.b16 %v10366, %v10362
    %v10451 = vpack.c.b16 %v10367, %v10363
    %v10452 = vpack.c.b16 %v10368, %v10364
    %v10453 = vpack.c.b16 %v10373, %v10369
    %v10454 = vpack.c.b16 %v10374, %v10370
    %v10455 = vpack.c.b16 %v10375, %v10371
    %v10456 = vpack.c.b16 %v10376, %v10372
    %v10457 = vpack.c.b16 %v10381, %v10377
    %v10458 = vpack.c.b16 %v10382, %v10378
    %v10459 = vpack.c.b16 %v10383, %v10379
    %v10460 = vpack.c.b16 %v10384, %v10380
    %v10461 = vpack.c.b16 %v10389, %v10385
    %v10462 = vpack.c.b16 %v10390, %v10386
    %v10463 = vpack.c.b16 %v10391, %v10387
    %v10464 = vpack.c.b16 %v10392, %v10388
    %v10465 = vpack.c.b16 %v10397, %v10393
    %v10466 = vpack.c.b16 %v10398, %v10394
    %v10467 = vpack.c.b16 %v10399, %v10395
    %v10468 = vpack.c.b16 %v10400, %v10396
    %v10469 = vpack.c.b16 %v10405, %v10401
    %v10470 = vpack.c.b16 %v10406, %v10402
    %v10471 = vpack.c.b16 %v10407, %v10403
    %v10472 = vpack.c.b16 %v10408, %v10404
    %10537 = vmatprep.subr.bf16.mxu0 %v10410
    %10538 = vmatpush1.bf16.msra.mxu0 %v10409
    %10539 = vmatprep.subr.bf16.mxu0 %v10414
    %10540 = vmatpush1.bf16.msra.mxu0 %v10413
    %10541 = vmatprep.subr.bf16.mxu0 %v10418
    %10542 = vmatpush1.bf16.msra.mxu0 %v10417
    %10543 = vmatprep.subr.bf16.mxu0 %v10422
    %10544 = vmatpush1.bf16.msra.mxu0 %v10421
    %10545 = vmatprep.subr.bf16.mxu0 %v10426
    %10546 = vmatpush1.bf16.msra.mxu0 %v10425
    %10547 = vmatprep.subr.bf16.mxu0 %v10430
    %10548 = vmatpush1.bf16.msra.mxu0 %v10429
    %10549 = vmatprep.subr.bf16.mxu0 %v10434
    %10550 = vmatpush1.bf16.msra.mxu0 %v10433
    %10551 = vmatprep.subr.bf16.mxu0 %v10438
    %10552 = vmatpush1.bf16.msra.mxu0 %v10437
    %10553 = vmatprep.subr.bf16.mxu0 %v10442
    %10554 = vmatpush1.bf16.msra.mxu0 %v10441
    %10555 = vmatprep.subr.bf16.mxu0 %v10446
    %10556 = vmatpush1.bf16.msra.mxu0 %v10445
    %10557 = vmatprep.subr.bf16.mxu0 %v10450
    %10558 = vmatpush1.bf16.msra.mxu0 %v10449
    %10559 = vmatprep.subr.bf16.mxu0 %v10454
    %10560 = vmatpush1.bf16.msra.mxu0 %v10453
    %10561 = vmatprep.subr.bf16.mxu0 %v10458
    %10562 = vmatpush1.bf16.msra.mxu0 %v10457
    %10563 = vmatprep.subr.bf16.mxu0 %v10462
    %10564 = vmatpush1.bf16.msra.mxu0 %v10461
    %10565 = vmatprep.subr.bf16.mxu0 %v10466
    %10566 = vmatpush1.bf16.msra.mxu0 %v10465
    %10567 = vmatprep.subr.bf16.mxu0 %v10470
    %10568 = vmatpush1.bf16.msra.mxu0 %v10469
    %10569 = vmatprep.mubr.bf16.mxu0 %v9389
    %10570 = vmatmul.mubr.bf16.gmra.mrb[0].mxu0 %v10130
    %v10571 = vpop.f32.mrb[0].mxu0
    %v10572 = vadd.f32 %v10200, %v10571
    %v10573 = vpop.f32.mrb[0].mxu0
    %v10574 = vadd.f32 %v10204, %v10573
    %v10575 = vpop.f32.mrb[0].mxu0
    %v10576 = vpop.f32.mrb[0].mxu0
    %10577 = vdwg.mxu0
    %10578 = vmatprep.subr.bf16.mxu0 %v10412
    %10579 = vmatpush1.bf16.msra.mxu0 %v10411
    %10580 = vmatprep.subr.bf16.mxu0 %v10416
    %10581 = vmatpush1.bf16.msra.mxu0 %v10415
    %10582 = vmatprep.subr.bf16.mxu0 %v10420
    %10583 = vmatpush1.bf16.msra.mxu0 %v10419
    %10584 = vmatprep.subr.bf16.mxu0 %v10424
    %10585 = vmatpush1.bf16.msra.mxu0 %v10423
    %10586 = vmatprep.subr.bf16.mxu0 %v10428
    %10587 = vmatpush1.bf16.msra.mxu0 %v10427
    %10588 = vmatprep.subr.bf16.mxu0 %v10432
    %10589 = vmatpush1.bf16.msra.mxu0 %v10431
    %10590 = vmatprep.subr.bf16.mxu0 %v10436
    %10591 = vmatpush1.bf16.msra.mxu0 %v10435
    %10592 = vmatprep.subr.bf16.mxu0 %v10440
    %10593 = vmatpush1.bf16.msra.mxu0 %v10439
    %10594 = vmatprep.subr.bf16.mxu0 %v10444
    %10595 = vmatpush1.bf16.msra.mxu0 %v10443
    %10596 = vmatprep.subr.bf16.mxu0 %v10448
    %10597 = vmatpush1.bf16.msra.mxu0 %v10447
    %10598 = vmatprep.subr.bf16.mxu0 %v10452
    %10599 = vmatpush1.bf16.msra.mxu0 %v10451
    %10600 = vmatprep.subr.bf16.mxu0 %v10456
    %10601 = vmatpush1.bf16.msra.mxu0 %v10455
    %10602 = vmatprep.subr.bf16.mxu0 %v10460
    %10603 = vmatpush1.bf16.msra.mxu0 %v10459
    %10604 = vmatprep.subr.bf16.mxu0 %v10464
    %10605 = vmatpush1.bf16.msra.mxu0 %v10463
    %10606 = vmatprep.subr.bf16.mxu0 %v10468
    %10607 = vmatpush1.bf16.msra.mxu0 %v10467
    %10608 = vmatprep.subr.bf16.mxu0 %v10472
    %10609 = vmatpush1.bf16.msra.mxu0 %v10471
    %10610 = vmatprep.mubr.bf16.mxu0 %v9389
    %10611 = vmatmul.mubr.bf16.gmra.mrb[0].mxu0 %v10130
    %v10612 = vpop.f32.mrb[0].mxu0
    %v10613 = vadd.f32 %v10208, %v10612
    %v10614 = vpop.f32.mrb[0].mxu0
    %v10615 = vadd.f32 %v10212, %v10614
    %v10616 = vpop.f32.mrb[0].mxu0
    %v10617 = vpop.f32.mrb[0].mxu0
    %10618 = vdwg.mxu0
    %v10619 = vxor.u32 %v10572, 2147483648
    %v10620 = vmul.f32 %v10619, 1.442695
    %v10621 = vpow.pop %v10620
    %v10622 = vadd.f32 %v10621, 1.0
    %v10623 = vrcp.pop %v10622
    %v10624 = vmul.f32 1.0, %v10623
    %v10625 = vxor.u32 %v10574, 2147483648
    %v10626 = vmul.f32 %v10625, 1.442695
    %v10627 = vpow.pop %v10626
    %v10628 = vadd.f32 %v10627, 1.0
    %v10629 = vrcp.pop %v10628
    %v10630 = vmul.f32 1.0, %v10629
    %v10631 = vtanh.pop %v10613
    %v10632 = vxor.u32 %v10615, 2147483648
    %v10633 = vmul.f32 %v10632, 1.442695
    %v10634 = vpow.pop %v10633
    %v10635 = vadd.f32 %v10634, 1.0
    %v10636 = vrcp.pop %v10635
    %v10637 = vmul.f32 1.0, %v10636
    %v10638 = vmul.f32 %v10630, %v9386
    %v10639 = vmul.f32 %v10624, %v10631
    %v10640 = vadd.f32 %v10638, %v10639
    %v10641 = vtanh.pop %v10640
    %v10642 = vmul.f32 %v10637, %v10641
    %v10643 = vpack.c.bf16 %v10642, %v10642
    %v10644 = vld [vmem:[%s3116] sm:$0xff]
    %v10645 = vld [vmem:[%s3116 + $0x8] sm:$0xff]
    %v10646 = vld [vmem:[%s3116 + $0x10] sm:$0xff]
    %v10647 = vld [vmem:[%s3116 + $0x18] sm:$0xff]
    %v10648 = vld [vmem:[%s3116 + $0x20] sm:$0xff]
    %v10649 = vld [vmem:[%s3116 + $0x28] sm:$0xff]
    %v10650 = vld [vmem:[%s3116 + $0x30] sm:$0xff]
    %v10651 = vld [vmem:[%s3116 + $0x38] sm:$0xff]
    %v10652 = vld [vmem:[%s3116 + $0x40] sm:$0xff]
    %v10653 = vld [vmem:[%s3116 + $0x48] sm:$0xff]
    %v10654 = vld [vmem:[%s3116 + $0x50] sm:$0xff]
    %v10655 = vld [vmem:[%s3116 + $0x58] sm:$0xff]
    %v10656 = vld [vmem:[%s3116 + $0x60] sm:$0xff]
    %v10657 = vld [vmem:[%s3116 + $0x68] sm:$0xff]
    %v10658 = vld [vmem:[%s3116 + $0x70] sm:$0xff]
    %v10659 = vld [vmem:[%s3116 + $0x78] sm:$0xff]
    %v10660 = vld [vmem:[%s3116 + $0x80] sm:$0xff]
    %v10661 = vld [vmem:[%s3116 + $0x88] sm:$0xff]
    %v10662 = vld [vmem:[%s3116 + $0x90] sm:$0xff]
    %v10663 = vld [vmem:[%s3116 + $0x98] sm:$0xff]
    %v10664 = vld [vmem:[%s3116 + $0xa0] sm:$0xff]
    %v10665 = vld [vmem:[%s3116 + $0xa8] sm:$0xff]
    %v10666 = vld [vmem:[%s3116 + $0xb0] sm:$0xff]
    %v10667 = vld [vmem:[%s3116 + $0xb8] sm:$0xff]
    %v10668 = vld [vmem:[%s3116 + $0xc0] sm:$0xff]
    %v10669 = vld [vmem:[%s3116 + $0xc8] sm:$0xff]
    %v10670 = vld [vmem:[%s3116 + $0xd0] sm:$0xff]
    %v10671 = vld [vmem:[%s3116 + $0xd8] sm:$0xff]
    %v10672 = vld [vmem:[%s3116 + $0xe0] sm:$0xff]
    %v10673 = vld [vmem:[%s3116 + $0xe8] sm:$0xff]
    %v10674 = vld [vmem:[%s3116 + $0xf0] sm:$0xff]
    %v10675 = vld [vmem:[%s3116 + $0xf8] sm:$0xff]
    %v10676 = vld [vmem:[%s3116 + $0x100] sm:$0xff]
    %v10677 = vld [vmem:[%s3116 + $0x108] sm:$0xff]
    %v10678 = vld [vmem:[%s3116 + $0x110] sm:$0xff]
    %v10679 = vld [vmem:[%s3116 + $0x118] sm:$0xff]
    %v10680 = vld [vmem:[%s3116 + $0x120] sm:$0xff]
    %v10681 = vld [vmem:[%s3116 + $0x128] sm:$0xff]
    %v10682 = vld [vmem:[%s3116 + $0x130] sm:$0xff]
    %v10683 = vld [vmem:[%s3116 + $0x138] sm:$0xff]
    %v10684 = vld [vmem:[%s3116 + $0x140] sm:$0xff]
    %v10685 = vld [vmem:[%s3116 + $0x148] sm:$0xff]
    %v10686 = vld [vmem:[%s3116 + $0x150] sm:$0xff]
    %v10687 = vld [vmem:[%s3116 + $0x158] sm:$0xff]
    %v10688 = vld [vmem:[%s3116 + $0x160] sm:$0xff]
    %v10689 = vld [vmem:[%s3116 + $0x168] sm:$0xff]
    %v10690 = vld [vmem:[%s3116 + $0x170] sm:$0xff]
    %v10691 = vld [vmem:[%s3116 + $0x178] sm:$0xff]
    %v10692 = vld [vmem:[%s3116 + $0x180] sm:$0xff]
    %v10693 = vld [vmem:[%s3116 + $0x188] sm:$0xff]
    %v10694 = vld [vmem:[%s3116 + $0x190] sm:$0xff]
    %v10695 = vld [vmem:[%s3116 + $0x198] sm:$0xff]
    %v10696 = vld [vmem:[%s3116 + $0x1a0] sm:$0xff]
    %v10697 = vld [vmem:[%s3116 + $0x1a8] sm:$0xff]
    %v10698 = vld [vmem:[%s3116 + $0x1b0] sm:$0xff]
    %v10699 = vld [vmem:[%s3116 + $0x1b8] sm:$0xff]
    %v10700 = vld [vmem:[%s3116 + $0x1c0] sm:$0xff]
    %v10701 = vld [vmem:[%s3116 + $0x1c8] sm:$0xff]
    %v10702 = vld [vmem:[%s3116 + $0x1d0] sm:$0xff]
    %v10703 = vld [vmem:[%s3116 + $0x1d8] sm:$0xff]
    %v10704 = vld [vmem:[%s3116 + $0x1e0] sm:$0xff]
    %v10705 = vld [vmem:[%s3116 + $0x1e8] sm:$0xff]
    %v10706 = vld [vmem:[%s3116 + $0x1f0] sm:$0xff]
    %v10707 = vld [vmem:[%s3116 + $0x1f8] sm:$0xff]
    %v10708 = vld [vmem:[%s3181] sm:$0xf]
    %v10710 = vlaneseq
    %v10711 = vshrl.u32 %v10710, 7
    %v10712 = vsub.s32 0, %v10711
    %v10713 = vrot.slane %v10708, %v10712
    %v10714 = vlaneseq
    %v10715 = vshrl.u32 %v10714, 7
    %v10716 = vsub.s32 1, %v10715
    %v10717 = vrot.slane %v10708, %v10716
    %v10718 = vlaneseq
    %v10719 = vshrl.u32 %v10718, 7
    %v10720 = vsub.s32 2, %v10719
    %v10721 = vrot.slane %v10708, %v10720
    %v10722 = vlaneseq
    %v10723 = vshrl.u32 %v10722, 7
    %v10724 = vsub.s32 3, %v10723
    %v10725 = vrot.slane %v10708, %v10724
    %v10794 = vunpack.c.l.b16 %v10644
    %v10795 = vunpack.c.h.b16 %v10644
    %v10796 = vunpack.c.l.b16 %v10645
    %v10797 = vunpack.c.h.b16 %v10645
    %v10798 = vunpack.c.l.b16 %v10646
    %v10799 = vunpack.c.h.b16 %v10646
    %v10800 = vunpack.c.l.b16 %v10647
    %v10801 = vunpack.c.h.b16 %v10647
    %v10802 = vunpack.c.l.b16 %v10648
    %v10803 = vunpack.c.h.b16 %v10648
    %v10804 = vunpack.c.l.b16 %v10649
    %v10805 = vunpack.c.h.b16 %v10649
    %v10806 = vunpack.c.l.b16 %v10650
    %v10807 = vunpack.c.h.b16 %v10650
    %v10808 = vunpack.c.l.b16 %v10651
    %v10809 = vunpack.c.h.b16 %v10651
    %v10810 = vunpack.c.l.b16 %v10652
    %v10811 = vunpack.c.h.b16 %v10652
    %v10812 = vunpack.c.l.b16 %v10653
    %v10813 = vunpack.c.h.b16 %v10653
    %v10814 = vunpack.c.l.b16 %v10654
    %v10815 = vunpack.c.h.b16 %v10654
    %v10816 = vunpack.c.l.b16 %v10655
    %v10817 = vunpack.c.h.b16 %v10655
    %v10818 = vunpack.c.l.b16 %v10656
    %v10819 = vunpack.c.h.b16 %v10656
    %v10820 = vunpack.c.l.b16 %v10657
    %v10821 = vunpack.c.h.b16 %v10657
    %v10822 = vunpack.c.l.b16 %v10658
    %v10823 = vunpack.c.h.b16 %v10658
    %v10824 = vunpack.c.l.b16 %v10659
    %v10825 = vunpack.c.h.b16 %v10659
    %v10826 = vunpack.c.l.b16 %v10660
    %v10827 = vunpack.c.h.b16 %v10660
    %v10828 = vunpack.c.l.b16 %v10661
    %v10829 = vunpack.c.h.b16 %v10661
    %v10830 = vunpack.c.l.b16 %v10662
    %v10831 = vunpack.c.h.b16 %v10662
    %v10832 = vunpack.c.l.b16 %v10663
    %v10833 = vunpack.c.h.b16 %v10663
    %v10834 = vunpack.c.l.b16 %v10664
    %v10835 = vunpack.c.h.b16 %v10664
    %v10836 = vunpack.c.l.b16 %v10665
    %v10837 = vunpack.c.h.b16 %v10665
    %v10838 = vunpack.c.l.b16 %v10666
    %v10839 = vunpack.c.h.b16 %v10666
    %v10840 = vunpack.c.l.b16 %v10667
    %v10841 = vunpack.c.h.b16 %v10667
    %v10842 = vunpack.c.l.b16 %v10668
    %v10843 = vunpack.c.h.b16 %v10668
    %v10844 = vunpack.c.l.b16 %v10669
    %v10845 = vunpack.c.h.b16 %v10669
    %v10846 = vunpack.c.l.b16 %v10670
    %v10847 = vunpack.c.h.b16 %v10670
    %v10848 = vunpack.c.l.b16 %v10671
    %v10849 = vunpack.c.h.b16 %v10671
    %v10850 = vunpack.c.l.b16 %v10672
    %v10851 = vunpack.c.h.b16 %v10672
    %v10852 = vunpack.c.l.b16 %v10673
    %v10853 = vunpack.c.h.b16 %v10673
    %v10854 = vunpack.c.l.b16 %v10674
    %v10855 = vunpack.c.h.b16 %v10674
    %v10856 = vunpack.c.l.b16 %v10675
    %v10857 = vunpack.c.h.b16 %v10675
    %v10858 = vunpack.c.l.b16 %v10676
    %v10859 = vunpack.c.h.b16 %v10676
    %v10860 = vunpack.c.l.b16 %v10677
    %v10861 = vunpack.c.h.b16 %v10677
    %v10862 = vunpack.c.l.b16 %v10678
    %v10863 = vunpack.c.h.b16 %v10678
    %v10864 = vunpack.c.l.b16 %v10679
    %v10865 = vunpack.c.h.b16 %v10679
    %v10866 = vunpack.c.l.b16 %v10680
    %v10867 = vunpack.c.h.b16 %v10680
    %v10868 = vunpack.c.l.b16 %v10681
    %v10869 = vunpack.c.h.b16 %v10681
    %v10870 = vunpack.c.l.b16 %v10682
    %v10871 = vunpack.c.h.b16 %v10682
    %v10872 = vunpack.c.l.b16 %v10683
    %v10873 = vunpack.c.h.b16 %v10683
    %v10874 = vunpack.c.l.b16 %v10684
    %v10875 = vunpack.c.h.b16 %v10684
    %v10876 = vunpack.c.l.b16 %v10685
    %v10877 = vunpack.c.h.b16 %v10685
    %v10878 = vunpack.c.l.b16 %v10686
    %v10879 = vunpack.c.h.b16 %v10686
    %v10880 = vunpack.c.l.b16 %v10687
    %v10881 = vunpack.c.h.b16 %v10687
    %v10882 = vunpack.c.l.b16 %v10688
    %v10883 = vunpack.c.h.b16 %v10688
    %v10884 = vunpack.c.l.b16 %v10689
    %v10885 = vunpack.c.h.b16 %v10689
    %v10886 = vunpack.c.l.b16 %v10690
    %v10887 = vunpack.c.h.b16 %v10690
    %v10888 = vunpack.c.l.b16 %v10691
    %v10889 = vunpack.c.h.b16 %v10691
    %v10890 = vunpack.c.l.b16 %v10692
    %v10891 = vunpack.c.h.b16 %v10692
    %v10892 = vunpack.c.l.b16 %v10693
    %v10893 = vunpack.c.h.b16 %v10693
    %v10894 = vunpack.c.l.b16 %v10694
    %v10895 = vunpack.c.h.b16 %v10694
    %v10896 = vunpack.c.l.b16 %v10695
    %v10897 = vunpack.c.h.b16 %v10695
    %v10898 = vunpack.c.l.b16 %v10696
    %v10899 = vunpack.c.h.b16 %v10696
    %v10900 = vunpack.c.l.b16 %v10697
    %v10901 = vunpack.c.h.b16 %v10697
    %v10902 = vunpack.c.l.b16 %v10698
    %v10903 = vunpack.c.h.b16 %v10698
    %v10904 = vunpack.c.l.b16 %v10699
    %v10905 = vunpack.c.h.b16 %v10699
    %v10906 = vunpack.c.l.b16 %v10700
    %v10907 = vunpack.c.h.b16 %v10700
    %v10908 = vunpack.c.l.b16 %v10701
    %v10909 = vunpack.c.h.b16 %v10701
    %v10910 = vunpack.c.l.b16 %v10702
    %v10911 = vunpack.c.h.b16 %v10702
    %v10912 = vunpack.c.l.b16 %v10703
    %v10913 = vunpack.c.h.b16 %v10703
    %v10914 = vunpack.c.l.b16 %v10704
    %v10915 = vunpack.c.h.b16 %v10704
    %v10916 = vunpack.c.l.b16 %v10705
    %v10917 = vunpack.c.h.b16 %v10705
    %v10918 = vunpack.c.l.b16 %v10706
    %v10919 = vunpack.c.h.b16 %v10706
    %v10920 = vunpack.c.l.b16 %v10707
    %v10921 = vunpack.c.h.b16 %v10707
    %v10922 = vpack.c.b16 %v10798, %v10794
    %v10923 = vpack.c.b16 %v10799, %v10795
    %v10924 = vpack.c.b16 %v10800, %v10796
    %v10925 = vpack.c.b16 %v10801, %v10797
    %v10926 = vpack.c.b16 %v10806, %v10802
    %v10927 = vpack.c.b16 %v10807, %v10803
    %v10928 = vpack.c.b16 %v10808, %v10804
    %v10929 = vpack.c.b16 %v10809, %v10805
    %v10930 = vpack.c.b16 %v10814, %v10810
    %v10931 = vpack.c.b16 %v10815, %v10811
    %v10932 = vpack.c.b16 %v10816, %v10812
    %v10933 = vpack.c.b16 %v10817, %v10813
    %v10934 = vpack.c.b16 %v10822, %v10818
    %v10935 = vpack.c.b16 %v10823, %v10819
    %v10936 = vpack.c.b16 %v10824, %v10820
    %v10937 = vpack.c.b16 %v10825, %v10821
    %v10938 = vpack.c.b16 %v10830, %v10826
    %v10939 = vpack.c.b16 %v10831, %v10827
    %v10940 = vpack.c.b16 %v10832, %v10828
    %v10941 = vpack.c.b16 %v10833, %v10829
    %v10942 = vpack.c.b16 %v10838, %v10834
    %v10943 = vpack.c.b16 %v10839, %v10835
    %v10944 = vpack.c.b16 %v10840, %v10836
    %v10945 = vpack.c.b16 %v10841, %v10837
    %v10946 = vpack.c.b16 %v10846, %v10842
    %v10947 = vpack.c.b16 %v10847, %v10843
    %v10948 = vpack.c.b16 %v10848, %v10844
    %v10949 = vpack.c.b16 %v10849, %v10845
    %v10950 = vpack.c.b16 %v10854, %v10850
    %v10951 = vpack.c.b16 %v10855, %v10851
    %v10952 = vpack.c.b16 %v10856, %v10852
    %v10953 = vpack.c.b16 %v10857, %v10853
    %v10954 = vpack.c.b16 %v10862, %v10858
    %v10955 = vpack.c.b16 %v10863, %v10859
    %v10956 = vpack.c.b16 %v10864, %v10860
    %v10957 = vpack.c.b16 %v10865, %v10861
    %v10958 = vpack.c.b16 %v10870, %v10866
    %v10959 = vpack.c.b16 %v10871, %v10867
    %v10960 = vpack.c.b16 %v10872, %v10868
    %v10961 = vpack.c.b16 %v10873, %v10869
    %v10962 = vpack.c.b16 %v10878, %v10874
    %v10963 = vpack.c.b16 %v10879, %v10875
    %v10964 = vpack.c.b16 %v10880, %v10876
    %v10965 = vpack.c.b16 %v10881, %v10877
    %v10966 = vpack.c.b16 %v10886, %v10882
    %v10967 = vpack.c.b16 %v10887, %v10883
    %v10968 = vpack.c.b16 %v10888, %v10884
    %v10969 = vpack.c.b16 %v10889, %v10885
    %v10970 = vpack.c.b16 %v10894, %v10890
    %v10971 = vpack.c.b16 %v10895, %v10891
    %v10972 = vpack.c.b16 %v10896, %v10892
    %v10973 = vpack.c.b16 %v10897, %v10893
    %v10974 = vpack.c.b16 %v10902, %v10898
    %v10975 = vpack.c.b16 %v10903, %v10899
    %v10976 = vpack.c.b16 %v10904, %v10900
    %v10977 = vpack.c.b16 %v10905, %v10901
    %v10978 = vpack.c.b16 %v10910, %v10906
    %v10979 = vpack.c.b16 %v10911, %v10907
    %v10980 = vpack.c.b16 %v10912, %v10908
    %v10981 = vpack.c.b16 %v10913, %v10909
    %v10982 = vpack.c.b16 %v10918, %v10914
    %v10983 = vpack.c.b16 %v10919, %v10915
    %v10984 = vpack.c.b16 %v10920, %v10916
    %v10985 = vpack.c.b16 %v10921, %v10917
    %11050 = vmatprep.subr.bf16.mxu0 %v10923
    %11051 = vmatpush1.bf16.msra.mxu0 %v10922
    %11052 = vmatprep.subr.bf16.mxu0 %v10927
    %11053 = vmatpush1.bf16.msra.mxu0 %v10926
    %11054 = vmatprep.subr.bf16.mxu0 %v10931
    %11055 = vmatpush1.bf16.msra.mxu0 %v10930
    %11056 = vmatprep.subr.bf16.mxu0 %v10935
    %11057 = vmatpush1.bf16.msra.mxu0 %v10934
    %11058 = vmatprep.subr.bf16.mxu0 %v10939
    %11059 = vmatpush1.bf16.msra.mxu0 %v10938
    %11060 = vmatprep.subr.bf16.mxu0 %v10943
    %11061 = vmatpush1.bf16.msra.mxu0 %v10942
    %11062 = vmatprep.subr.bf16.mxu0 %v10947
    %11063 = vmatpush1.bf16.msra.mxu0 %v10946
    %11064 = vmatprep.subr.bf16.mxu0 %v10951
    %11065 = vmatpush1.bf16.msra.mxu0 %v10950
    %11066 = vmatprep.subr.bf16.mxu0 %v10955
    %11067 = vmatpush1.bf16.msra.mxu0 %v10954
    %11068 = vmatprep.subr.bf16.mxu0 %v10959
    %11069 = vmatpush1.bf16.msra.mxu0 %v10958
    %11070 = vmatprep.subr.bf16.mxu0 %v10963
    %11071 = vmatpush1.bf16.msra.mxu0 %v10962
    %11072 = vmatprep.subr.bf16.mxu0 %v10967
    %11073 = vmatpush1.bf16.msra.mxu0 %v10966
    %11074 = vmatprep.subr.bf16.mxu0 %v10971
    %11075 = vmatpush1.bf16.msra.mxu0 %v10970
    %11076 = vmatprep.subr.bf16.mxu0 %v10975
    %11077 = vmatpush1.bf16.msra.mxu0 %v10974
    %11078 = vmatprep.subr.bf16.mxu0 %v10979
    %11079 = vmatpush1.bf16.msra.mxu0 %v10978
    %11080 = vmatprep.subr.bf16.mxu0 %v10983
    %11081 = vmatpush1.bf16.msra.mxu0 %v10982
    %11082 = vmatprep.mubr.bf16.mxu0 %v9902
    %11083 = vmatmul.mubr.bf16.gmra.mrb[0].mxu0 %v10643
    %v11084 = vpop.f32.mrb[0].mxu0
    %v11085 = vadd.f32 %v10713, %v11084
    %v11086 = vpop.f32.mrb[0].mxu0
    %v11087 = vadd.f32 %v10717, %v11086
    %v11088 = vpop.f32.mrb[0].mxu0
    %v11089 = vpop.f32.mrb[0].mxu0
    %11090 = vdwg.mxu0
    %11091 = vmatprep.subr.bf16.mxu0 %v10925
    %11092 = vmatpush1.bf16.msra.mxu0 %v10924
    %11093 = vmatprep.subr.bf16.mxu0 %v10929
    %11094 = vmatpush1.bf16.msra.mxu0 %v10928
    %11095 = vmatprep.subr.bf16.mxu0 %v10933
    %11096 = vmatpush1.bf16.msra.mxu0 %v10932
    %11097 = vmatprep.subr.bf16.mxu0 %v10937
    %11098 = vmatpush1.bf16.msra.mxu0 %v10936
    %11099 = vmatprep.subr.bf16.mxu0 %v10941
    %11100 = vmatpush1.bf16.msra.mxu0 %v10940
    %11101 = vmatprep.subr.bf16.mxu0 %v10945
    %11102 = vmatpush1.bf16.msra.mxu0 %v10944
    %11103 = vmatprep.subr.bf16.mxu0 %v10949
    %11104 = vmatpush1.bf16.msra.mxu0 %v10948
    %11105 = vmatprep.subr.bf16.mxu0 %v10953
    %11106 = vmatpush1.bf16.msra.mxu0 %v10952
    %11107 = vmatprep.subr.bf16.mxu0 %v10957
    %11108 = vmatpush1.bf16.msra.mxu0 %v10956
    %11109 = vmatprep.subr.bf16.mxu0 %v10961
    %11110 = vmatpush1.bf16.msra.mxu0 %v10960
    %11111 = vmatprep.subr.bf16.mxu0 %v10965
    %11112 = vmatpush1.bf16.msra.mxu0 %v10964
    %11113 = vmatprep.subr.bf16.mxu0 %v10969
    %11114 = vmatpush1.bf16.msra.mxu0 %v10968
    %11115 = vmatprep.subr.bf16.mxu0 %v10973
    %11116 = vmatpush1.bf16.msra.mxu0 %v10972
    %11117 = vmatprep.subr.bf16.mxu0 %v10977
    %11118 = vmatpush1.bf16.msra.mxu0 %v10976
    %11119 = vmatprep.subr.bf16.mxu0 %v10981
    %11120 = vmatpush1.bf16.msra.mxu0 %v10980
    %11121 = vmatprep.subr.bf16.mxu0 %v10985
    %11122 = vmatpush1.bf16.msra.mxu0 %v10984
    %11123 = vmatprep.mubr.bf16.mxu0 %v9902
    %11124 = vmatmul.mubr.bf16.gmra.mrb[0].mxu0 %v10643
    %v11125 = vpop.f32.mrb[0].mxu0
    %v11126 = vadd.f32 %v10721, %v11125
    %v11127 = vpop.f32.mrb[0].mxu0
    %v11128 = vadd.f32 %v10725, %v11127
    %v11129 = vpop.f32.mrb[0].mxu0
    %v11130 = vpop.f32.mrb[0].mxu0
    %11131 = vdwg.mxu0
    %v11132 = vxor.u32 %v11085, 2147483648
    %v11133 = vmul.f32 %v11132, 1.442695
    %v11134 = vpow.pop %v11133
    %v11135 = vadd.f32 %v11134, 1.0
    %v11136 = vrcp.pop %v11135
    %v11137 = vmul.f32 1.0, %v11136
    %v11138 = vxor.u32 %v11087, 2147483648
    %v11139 = vmul.f32 %v11138, 1.442695
    %v11140 = vpow.pop %v11139
    %v11141 = vadd.f32 %v11140, 1.0
    %v11142 = vrcp.pop %v11141
    %v11143 = vmul.f32 1.0, %v11142
    %v11144 = vtanh.pop %v11126
    %v11145 = vxor.u32 %v11128, 2147483648
    %v11146 = vmul.f32 %v11145, 1.442695
    %v11147 = vpow.pop %v11146
    %v11148 = vadd.f32 %v11147, 1.0
    %v11149 = vrcp.pop %v11148
    %v11150 = vmul.f32 1.0, %v11149
    %v11151 = vmul.f32 %v11143, %v9899
    %v11152 = vmul.f32 %v11137, %v11144
    %v11153 = vadd.f32 %v11151, %v11152
    %v11154 = vtanh.pop %v11153
    %v11155 = vmul.f32 %v11150, %v11154
    %v11156 = vpack.c.bf16 %v11155, %v11155
    %v11157 = vld [vmem:[%s6] sm:$0xf]
    %v11158 = vld [vmem:[%s6 + $0x4] sm:$0xf]
    %v11159 = vld [vmem:[%s6 + $0x8] sm:$0xf]
    %v11160 = vld [vmem:[%s6 + $0xc] sm:$0xf]
    %v11161 = vld [vmem:[%s6 + $0x10] sm:$0xf]
    %v11162 = vld [vmem:[%s6 + $0x14] sm:$0xf]
    %v11163 = vld [vmem:[%s6 + $0x18] sm:$0xf]
    %v11164 = vld [vmem:[%s6 + $0x1c] sm:$0xf]
    %v11165 = vld [vmem:[%s6 + $0x20] sm:$0xf]
    %v11166 = vld [vmem:[%s6 + $0x24] sm:$0xf]
    %v11167 = vld [vmem:[%s6 + $0x28] sm:$0xf]
    %v11168 = vld [vmem:[%s6 + $0x2c] sm:$0xf]
    %v11169 = vld [vmem:[%s6 + $0x30] sm:$0xf]
    %v11170 = vld [vmem:[%s6 + $0x34] sm:$0xf]
    %v11171 = vld [vmem:[%s6 + $0x38] sm:$0xf]
    %v11172 = vld [vmem:[%s6 + $0x3c] sm:$0xf]
    %v11173 = vld [vmem:[%s7] sm:$0x1]
    %v11175 = vlaneseq
    %v11176 = vshrl.u32 %v11175, 7
    %v11177 = vsub.s32 0, %v11176
    %v11178 = vrot.slane %v11173, %v11177
    %v11196 = vunpack.c.l.b16 %v11157
    %v11197 = vunpack.c.l.b16 %v11158
    %v11198 = vunpack.c.l.b16 %v11159
    %v11199 = vunpack.c.l.b16 %v11160
    %v11200 = vunpack.c.l.b16 %v11161
    %v11201 = vunpack.c.l.b16 %v11162
    %v11202 = vunpack.c.l.b16 %v11163
    %v11203 = vunpack.c.l.b16 %v11164
    %v11204 = vunpack.c.l.b16 %v11165
    %v11205 = vunpack.c.l.b16 %v11166
    %v11206 = vunpack.c.l.b16 %v11167
    %v11207 = vunpack.c.l.b16 %v11168
    %v11208 = vunpack.c.l.b16 %v11169
    %v11209 = vunpack.c.l.b16 %v11170
    %v11210 = vunpack.c.l.b16 %v11171
    %v11211 = vunpack.c.l.b16 %v11172
    %v11212 = vpack.c.b16 %v11197, %v11196
    %v11213 = vpack.c.b16 %v11199, %v11198
    %v11214 = vpack.c.b16 %v11201, %v11200
    %v11215 = vpack.c.b16 %v11203, %v11202
    %v11216 = vpack.c.b16 %v11205, %v11204
    %v11217 = vpack.c.b16 %v11207, %v11206
    %v11218 = vpack.c.b16 %v11209, %v11208
    %v11219 = vpack.c.b16 %v11211, %v11210
    %11228 = vmatprep.subr.bf16.mxu0 0
    %11229 = vmatpush1.bf16.msra.mxu0 %v11212
    %11230 = vmatprep.subr.bf16.mxu0 0
    %11231 = vmatpush1.bf16.msra.mxu0 %v11213
    %11232 = vmatprep.subr.bf16.mxu0 0
    %11233 = vmatpush1.bf16.msra.mxu0 %v11214
    %11234 = vmatprep.subr.bf16.mxu0 0
    %11235 = vmatpush1.bf16.msra.mxu0 %v11215
    %11236 = vmatprep.subr.bf16.mxu0 0
    %11237 = vmatpush1.bf16.msra.mxu0 %v11216
    %11238 = vmatprep.subr.bf16.mxu0 0
    %11239 = vmatpush1.bf16.msra.mxu0 %v11217
    %11240 = vmatprep.subr.bf16.mxu0 0
    %11241 = vmatpush1.bf16.msra.mxu0 %v11218
    %11242 = vmatprep.subr.bf16.mxu0 0
    %11243 = vmatpush1.bf16.msra.mxu0 %v11219
    %11244 = vmatprep.subr.bf16.mxu0 0
    %11245 = vmatpush1.bf16.msra.mxu0 0
    %11246 = vmatprep.subr.bf16.mxu0 0
    %11247 = vmatpush1.bf16.msra.mxu0 0
    %11248 = vmatprep.subr.bf16.mxu0 0
    %11249 = vmatpush1.bf16.msra.mxu0 0
    %11250 = vmatprep.subr.bf16.mxu0 0
    %11251 = vmatpush1.bf16.msra.mxu0 0
    %11252 = vmatprep.subr.bf16.mxu0 0
    %11253 = vmatpush1.bf16.msra.mxu0 0
    %11254 = vmatprep.subr.bf16.mxu0 0
    %11255 = vmatpush1.bf16.msra.mxu0 0
    %11256 = vmatprep.subr.bf16.mxu0 0
    %11257 = vmatpush1.bf16.msra.mxu0 0
    %11258 = vmatprep.subr.bf16.mxu0 0
    %11259 = vmatpush1.bf16.msra.mxu0 0
    %11260 = vmatprep.mubr.bf16.mxu0 0
    %11261 = vmatmul.mubr.bf16.gmra.mrb[0].mxu0 %v11156
    %v11262 = vpop.f32.mrb[0].mxu0
    %v11263 = vadd.f32 %v11178, %v11262
    %v11264 = vpop.f32.mrb[0].mxu0
    %v11265 = vpop.f32.mrb[0].mxu0
    %v11266 = vpop.f32.mrb[0].mxu0
    %11267 = vdwg.mxu0
    %s11268 = scalar_lea.vmem %s9, 48
    %11269 = vst [vmem:[%s11268] sm:$0xff] %v11263
    // Predicated region
    $region46: #{seq2seq_forward.1} parent=1 // pred_check
      _
    $region47: #{seq2seq_forward.1} parent=1 // pred_check_branch
      %11271 = sbr.rel (0) target = $region49
    $region48: #{seq2seq_forward.1} parent=1 // pred_region
      _
    $region49: #{seq2seq_forward.1} parent=1 // pred_fallthru
      _
    // Predicated region
    $region50: #{seq2seq_forward.1} parent=1 // pred_check
      _
    $region51: #{seq2seq_forward.1} parent=1 // pred_check_branch
      %11273 = sbr.rel (0) target = $region53
    $region52: #{seq2seq_forward.1} parent=1 // pred_region
      _
    $region53: #{seq2seq_forward.1} parent=1 // pred_fallthru
      _
    %11274 = vsyncpa [#allocation3], 1
    %11275 = vsyncpa [#allocation5], 1

</llo_original>
